<compile_context>
chip_gen: v6e
topology: v6e:2x2x1
jax: 0.10.0
libtpu: 0.0.40
codegen_flags: <defaults>
</compile_context>

<pallas_src>
import functools

import jax
import jax.numpy as jnp
import numpy as np
from jax import lax
from jax.experimental import pallas as pl
from jax.experimental.pallas import tpu as pltpu

NEG_SLOPE = 0.01          # nn.LeakyReLU default negative_slope
BN_EPS = 1e-5             # nn.BatchNorm2d default eps


def _leaky(x):
    return jnp.where(x >= 0, x, NEG_SLOPE * x)


def _cout_pad(c):
    # Pad the final (stored) conv's output-channel count to >=8 rows so the MXU
    # LHS never has a degenerate M=1; padded rows are zero and never stored.
    return c if c >= 8 else 8


# ----------------------------- fused chain kernel ----------------------------

def _chain_kernel(*refs, blocks, W_img, L_in):
    """Fused chain of conv blocks on one image's flattened canvas.

    Each block: conv2x2(VALID) -> LeakyReLU -> conv2x2(VALID) [-> eval-BN folded]
    [-> LeakyReLU].  The canvas keeps the original row stride W_img; each conv
    shortens the canvas by (W_img + 1) and the valid region shrinks by 1 in each
    spatial dim.  Garbage outside the valid region is never read by valid
    outputs and is sliced away in the wrapper.

    refs layout:
      refs[0]                    x_ref  (1, Cin0, L_in)                VMEM
      refs[1 : 1+4B]             per block: wA (Cmid,4Cin), bA (Cmid,1),
                                            wB (CoutPad,4Cmid), bB (CoutPad,1)
      refs[1+4B : 1+5B]          per-block output canvases (1, Cout_k, L_k)
    blocks: tuple of (cin, cmid, cout, final_lrelu)  -- static.
    """
    n_blocks = len(blocks)
    x_ref = refs[0]
    w_refs = refs[1:1 + 4 * n_blocks]
    o_refs = refs[1 + 4 * n_blocks:]

    def conv(canvas, w_ref, b_ref, cin, lout, lrelu):
        acc = None
        for kh in range(2):
            for kw in range(2):
                s = kh * W_img + kw
                t = kh * 2 + kw
                wt = w_ref[:, t * cin:(t + 1) * cin]        # (CoutP, cin)
                xt = canvas[:, s:s + lout]                  # (cin, lout)
                p = jnp.dot(wt, xt, preferred_element_type=jnp.float32)
                acc = p if acc is None else acc + p
        acc = acc + b_ref[...]                              # (CoutP, 1) broadcast
        return _leaky(acc) if lrelu else acc

    canvas = x_ref[0].astype(jnp.float32)                   # (Cin0, L_in)
    length = L_in
    for k, (cin, cmid, cout, final_lrelu) in enumerate(blocks):
        wa, ba, wb, bb = w_refs[4 * k:4 * k + 4]
        length -= W_img + 1
        hid = conv(canvas, wa, ba, cin, length, True)        # (Cmid, L)
        length -= W_img + 1
        out = conv(hid, wb, bb, cmid, length, final_lrelu)   # (CoutPad, L)
        if cout < out.shape[0]:
            out = out[:cout, :]
        o_refs[k][0] = out.astype(o_refs[k].dtype)
        canvas = out


@functools.lru_cache(maxsize=None)
def _build_chain(batch, cin0, L_in, W_img, blocks, dtype_name):
    dtype = np.dtype(dtype_name)

    in_specs = [pl.BlockSpec((1, cin0, L_in), lambda n: (n, 0, 0))]
    for (cin, cmid, cout, _) in blocks:
        cp = _cout_pad(cout)
        for shp in ((cmid, 4 * cin), (cmid, 1), (cp, 4 * cmid), (cp, 1)):
            in_specs.append(pl.BlockSpec(shp, lambda n: (0, 0)))

    out_shapes, out_specs = [], []
    length = L_in
    for (_, _, cout, _) in blocks:
        length -= 2 * (W_img + 1)
        out_shapes.append(jax.ShapeDtypeStruct((batch, cout, length), dtype))
        out_specs.append(pl.BlockSpec((1, cout, length), lambda n: (n, 0, 0)))

    kernel = functools.partial(_chain_kernel, blocks=blocks, W_img=W_img, L_in=L_in)
    call = pl.pallas_call(
        kernel,
        out_shape=tuple(out_shapes),
        grid=(batch,),
        in_specs=in_specs,
        out_specs=tuple(out_specs),
        compiler_params=pltpu.CompilerParams(dimension_semantics=("parallel",)),
    )
    return jax.jit(call)


# ------------------------------ host-side wiring -----------------------------

def _fold_bn(w, b, p):
    scale = p["gamma"] / jnp.sqrt(p["var"] + BN_EPS)
    return w * scale[:, None, None, None], (b - p["mean"]) * scale + p["beta"]


def _prep_conv(w, b, cout_pad):
    """(Cout, Cin, 2, 2) OIHW -> (CoutPad, 4*Cin) with row layout [tap, ci]."""
    cout, cin = int(w.shape[0]), int(w.shape[1])
    wf = jnp.transpose(w, (0, 2, 3, 1)).reshape(cout, 4 * cin).astype(jnp.float32)
    bf = jnp.reshape(b, (cout, 1)).astype(jnp.float32)
    if cout_pad > cout:
        wf = jnp.concatenate([wf, jnp.zeros((cout_pad - cout, 4 * cin), jnp.float32)], 0)
        bf = jnp.concatenate([bf, jnp.zeros((cout_pad - cout, 1), jnp.float32)], 0)
    return wf, bf


def _prep_block(p):
    cin, cmid, cout = int(p["w1"].shape[1]), int(p["w1"].shape[0]), int(p["w2"].shape[0])
    w2, b2 = p["w2"], p["b2"]
    if "gamma" in p:
        w2, b2 = _fold_bn(w2, b2, p)
    wa, ba = _prep_conv(p["w1"], p["b1"], cmid)
    wb, bb = _prep_conv(w2, b2, _cout_pad(cout))
    return (cin, cmid, cout), [wa, ba, wb, bb]


def _extract_valid(canvas, w_stride, hk, wk):
    """(N, C, L_k) canvas (row stride w_stride) -> dense (N, C, hk, wk)."""
    n, c, lk = canvas.shape
    pad = hk * w_stride - lk
    full = jnp.pad(canvas, ((0, 0), (0, 0), (0, pad)))
    return full.reshape(n, c, hk, w_stride)[:, :, :, :wk]


def run_chain(x, block_params, final_lrelus):
    """x: (N, C, H, W); runs the fused chain; returns list of dense NCHW outputs."""
    n, c, h, w = map(int, x.shape)
    cfgs, weight_args = [], []
    for p, fl in zip(block_params, final_lrelus):
        (cin, cmid, cout), ws = _prep_block(p)
        cfgs.append((cin, cmid, cout, bool(fl)))
        weight_args += ws
    call = _build_chain(n, c, h * w, w, tuple(cfgs), str(x.dtype))
    canvases = call(x.reshape(n, c, h * w), *weight_args)
    outs, hk, wk = [], h, w
    for cv in canvases:
        hk, wk = hk - 2, wk - 2
        outs.append(_extract_valid(cv, w, hk, wk))
    return outs


def epinet_forward(params, x_0d, x_90d, x_45d, x_m45d, batch=None):
    """Mirrors EPINET.forward (the `batch` argument is unused, as in the module)."""
    del batch
    n = x_0d.shape[0]
    # Multistream weights are shared across the 4 directions -> batch-stack them.
    xs = jnp.concatenate([x_0d, x_90d, x_45d, x_m45d], axis=0)        # (4N, C, H, W)
    ms = [params["ms1"], params["ms2"], params["ms3"]]
    a1, a2, a3 = run_chain(xs, ms, [True, True, True])
    x_0d_1, x_0d_2, x_0d_3 = a1[:n], a2[:n], a3[:n]
    x_90d_3 = a3[n:2 * n]
    x_45d_3 = a3[2 * n:3 * n]
    x_m45d_3 = a3[3 * n:]

    x = jnp.concatenate((x_90d_3, x_0d_3, x_45d_3, x_m45d_3), axis=1)

    cc = [params[f"cc{i}"] for i in range(1, 8)] + [params["lc"]]
    cc_outs = run_chain(x, cc, [True] * 7 + [False])
    return (x_0d_1, x_0d_2, x_0d_3, x, *cc_outs)


# --------------------------- pure-JAX reference -------------------------------

def _conv2d_ref(x, w, b):
    dn = ("NCHW", "OIHW", "NCHW")
    y = lax.conv_general_dilated(x, w, (1, 1), "VALID", dimension_numbers=dn,
                                 precision=lax.Precision.HIGHEST)
    return y + b.reshape(1, -1, 1, 1)


def _apply_block_ref(x, p, final_lrelu):
    y = _leaky(_conv2d_ref(x, p["w1"], p["b1"]))
    y = _conv2d_ref(y, p["w2"], p["b2"])
    if "gamma" in p:
        inv = p["gamma"] / jnp.sqrt(p["var"] + BN_EPS)
        y = (y - p["mean"].reshape(1, -1, 1, 1)) * inv.reshape(1, -1, 1, 1) \
            + p["beta"].reshape(1, -1, 1, 1)
    if final_lrelu:
        y = _leaky(y)
    return y


def epinet_forward_ref(params, x_0d, x_90d, x_45d, x_m45d, batch=None):
    del batch

    def stream(x):
        a = _apply_block_ref(x, params["ms1"], True)
        b = _apply_block_ref(a, params["ms2"], True)
        c = _apply_block_ref(b, params["ms3"], True)
        return a, b, c

    x_0d_1, x_0d_2, x_0d_3 = stream(x_0d)
    _, _, x_90d_3 = stream(x_90d)
    _, _, x_45d_3 = stream(x_45d)
    _, _, x_m45d_3 = stream(x_m45d)
    x = jnp.concatenate((x_90d_3, x_0d_3, x_45d_3, x_m45d_3), axis=1)
    outs = [x_0d_1, x_0d_2, x_0d_3, x]
    cur = x
    for i in range(1, 8):
        cur = _apply_block_ref(cur, params[f"cc{i}"], True)
        outs.append(cur)
    outs.append(_apply_block_ref(cur, params["lc"], False))
    return tuple(outs)


# ------------------------------ parameters ------------------------------------

def _conv_params(key, cin, cout, scale=0.2):
    kw, kb = jax.random.split(key)
    w = jax.random.normal(kw, (cout, cin, 2, 2), dtype=jnp.float32) * scale
    b = jax.random.normal(kb, (cout,), dtype=jnp.float32) * 0.1
    return w, b


def _bn_params(key, ch):
    k1, k2, k3, k4 = jax.random.split(key, 4)
    gamma = 1.0 + 0.1 * jax.random.normal(k1, (ch,), dtype=jnp.float32)
    beta = 0.1 * jax.random.normal(k2, (ch,), dtype=jnp.float32)
    mean = 0.1 * jax.random.normal(k3, (ch,), dtype=jnp.float32)
    var = 0.5 + jax.random.uniform(k4, (ch,), dtype=jnp.float32)
    return gamma, beta, mean, var


def _block_params(key, c1_in, c1_out, c2_out, with_bn):
    k1, k2, k3 = jax.random.split(key, 3)
    w1, b1 = _conv_params(k1, c1_in, c1_out)
    w2, b2 = _conv_params(k2, c1_out, c2_out)
    p = dict(w1=w1, b1=b1, w2=w2, b2=b2)
    if with_bn:
        gamma, beta, mean, var = _bn_params(k3, c2_out)
        p.update(gamma=gamma, beta=beta, mean=mean, var=var)
    return p


def make_epinet_params(key, input_ch, filter_num, stream_num):
    fc = filter_num * stream_num
    keys = jax.random.split(key, 11)
    params = {
        "ms1": _block_params(keys[0], input_ch, filter_num, filter_num, True),
        "ms2": _block_params(keys[1], filter_num, filter_num, filter_num, True),
        "ms3": _block_params(keys[2], filter_num, filter_num, filter_num, True),
        "lc": _block_params(keys[10], fc, fc, 1, False),
    }
    for i in range(7):
        params[f"cc{i + 1}"] = _block_params(keys[3 + i], fc, fc, fc, True)
    return params


# --------------------------------- main ----------------------------------------

if __name__ == "__main__":
    N = 2
    input_ch = 4
    filter_num = 4
    stream_num = 4
    H = W = 32        # EPINET removes 22 pixels total; 32 -> final 10x10 output

    key = jax.random.PRNGKey(0)
    kp, k0, k90, k45, km45 = jax.random.split(key, 5)

    params = make_epinet_params(kp, input_ch, filter_num, stream_num)
    x_0d = jax.random.normal(k0, (N, input_ch, H, W), dtype=jnp.float32)
    x_90d = jax.random.normal(k90, (N, input_ch, H, W), dtype=jnp.float32)
    x_45d = jax.random.normal(k45, (N, input_ch, H, W), dtype=jnp.float32)
    x_m45d = jax.random.normal(km45, (N, input_ch, H, W), dtype=jnp.float32)

    fwd = jax.jit(epinet_forward)
    outs = jax.block_until_ready(fwd(params, x_0d, x_90d, x_45d, x_m45d))

    ref_fwd = jax.jit(epinet_forward_ref)
    refs = jax.block_until_ready(ref_fwd(params, x_0d, x_90d, x_45d, x_m45d))

    assert outs[-1].shape == (N, 1, H - 22, W - 22), outs[-1].shape
    for i, (o, r) in enumerate(zip(outs, refs)):
        np.testing.assert_allclose(np.asarray(o), np.asarray(r),
                                   rtol=1e-3, atol=1e-3,
                                   err_msg=f"output {i} mismatch")

    print("KERNEL_OK")
</pallas_src>

<mosaic_0001>
module attributes {stable_mosaic.version = 11 : i64} {
  func.func @_chain_kernel(%arg0: i32, %arg1: memref<1x4x1024xf32, #tpu.memory_space<vmem>>, %arg2: memref<4x16xf32, #tpu.memory_space<vmem>>, %arg3: memref<4x1xf32, #tpu.memory_space<vmem>>, %arg4: memref<8x16xf32, #tpu.memory_space<vmem>>, %arg5: memref<8x1xf32, #tpu.memory_space<vmem>>, %arg6: memref<4x16xf32, #tpu.memory_space<vmem>>, %arg7: memref<4x1xf32, #tpu.memory_space<vmem>>, %arg8: memref<8x16xf32, #tpu.memory_space<vmem>>, %arg9: memref<8x1xf32, #tpu.memory_space<vmem>>, %arg10: memref<4x16xf32, #tpu.memory_space<vmem>>, %arg11: memref<4x1xf32, #tpu.memory_space<vmem>>, %arg12: memref<8x16xf32, #tpu.memory_space<vmem>>, %arg13: memref<8x1xf32, #tpu.memory_space<vmem>>, %arg14: memref<1x4x958xf32, #tpu.memory_space<vmem>>, %arg15: memref<1x4x892xf32, #tpu.memory_space<vmem>>, %arg16: memref<1x4x826xf32, #tpu.memory_space<vmem>>) attributes {dimension_semantics = [#tpu.dimension_semantics<parallel>], iteration_bounds = array<i64: 8>, scalar_prefetch = 0 : i64, scratch_operands = 0 : i64, tpu.core_type = #tpu.core_type<tc>, window_params = [{transform_indices = @transform_0, window_bounds = array<i64: 1, 4, 1024>}, {pipeline_mode = #tpu.pipeline_mode<synchronous>, transform_indices = @transform_1, window_bounds = array<i64: 4, 16>}, {pipeline_mode = #tpu.pipeline_mode<synchronous>, transform_indices = @transform_2, window_bounds = array<i64: 4, 1>}, {pipeline_mode = #tpu.pipeline_mode<synchronous>, transform_indices = @transform_3, window_bounds = array<i64: 8, 16>}, {pipeline_mode = #tpu.pipeline_mode<synchronous>, transform_indices = @transform_4, window_bounds = array<i64: 8, 1>}, {pipeline_mode = #tpu.pipeline_mode<synchronous>, transform_indices = @transform_5, window_bounds = array<i64: 4, 16>}, {pipeline_mode = #tpu.pipeline_mode<synchronous>, transform_indices = @transform_6, window_bounds = array<i64: 4, 1>}, {pipeline_mode = #tpu.pipeline_mode<synchronous>, transform_indices = @transform_7, window_bounds = array<i64: 8, 16>}, {pipeline_mode = #tpu.pipeline_mode<synchronous>, transform_indices = @transform_8, window_bounds = array<i64: 8, 1>}, {pipeline_mode = #tpu.pipeline_mode<synchronous>, transform_indices = @transform_9, window_bounds = array<i64: 4, 16>}, {pipeline_mode = #tpu.pipeline_mode<synchronous>, transform_indices = @transform_10, window_bounds = array<i64: 4, 1>}, {pipeline_mode = #tpu.pipeline_mode<synchronous>, transform_indices = @transform_11, window_bounds = array<i64: 8, 16>}, {pipeline_mode = #tpu.pipeline_mode<synchronous>, transform_indices = @transform_12, window_bounds = array<i64: 8, 1>}, {transform_indices = @transform_13, window_bounds = array<i64: 1, 4, 958>}, {transform_indices = @transform_14, window_bounds = array<i64: 1, 4, 892>}, {transform_indices = @transform_15, window_bounds = array<i64: 1, 4, 826>}]} {
    %c0 = arith.constant 0 : index
    %c0_0 = arith.constant 0 : index
    %c0_1 = arith.constant 0 : index
    %0 = vector.load %arg1[%c0, %c0_0, %c0_1] : memref<1x4x1024xf32, #tpu.memory_space<vmem>>, vector<1x4x1024xf32>
    %1 = vector.shape_cast %0 : vector<1x4x1024xf32> to vector<4x1024xf32>
    %c0_2 = arith.constant 0 : index
    %c0_3 = arith.constant 0 : index
    %2 = vector.load %arg2[%c0_2, %c0_3] : memref<4x16xf32, #tpu.memory_space<vmem>>, vector<4x4xf32>
    %3 = vector.extract_strided_slice %1 {offsets = [0, 0], sizes = [4, 991], strides = [1, 1]} : vector<4x1024xf32> to vector<4x991xf32>
    %cst = arith.constant dense<0.000000e+00> : vector<4x991xf32>
    %4 = tpu.matmul %2, %3, %cst {dimension_numbers = #tpu.dot_dimension_numbers<[1], [0], [0], [1], [0, 0, 1, 1], [], []>} : vector<4x4xf32>, vector<4x991xf32>, vector<4x991xf32> -> vector<4x991xf32>
    %c0_4 = arith.constant 0 : index
    %c4 = arith.constant 4 : index
    %5 = vector.load %arg2[%c0_4, %c4] : memref<4x16xf32, #tpu.memory_space<vmem>>, vector<4x4xf32>
    %6 = vector.extract_strided_slice %1 {offsets = [0, 1], sizes = [4, 991], strides = [1, 1]} : vector<4x1024xf32> to vector<4x991xf32>
    %cst_5 = arith.constant dense<0.000000e+00> : vector<4x991xf32>
    %7 = tpu.matmul %5, %6, %cst_5 {dimension_numbers = #tpu.dot_dimension_numbers<[1], [0], [0], [1], [0, 0, 1, 1], [], []>} : vector<4x4xf32>, vector<4x991xf32>, vector<4x991xf32> -> vector<4x991xf32>
    %8 = arith.addf %4, %7 : vector<4x991xf32>
    %c0_6 = arith.constant 0 : index
    %c8 = arith.constant 8 : index
    %9 = vector.load %arg2[%c0_6, %c8] : memref<4x16xf32, #tpu.memory_space<vmem>>, vector<4x4xf32>
    %10 = vector.extract_strided_slice %1 {offsets = [0, 32], sizes = [4, 991], strides = [1, 1]} : vector<4x1024xf32> to vector<4x991xf32>
    %cst_7 = arith.constant dense<0.000000e+00> : vector<4x991xf32>
    %11 = tpu.matmul %9, %10, %cst_7 {dimension_numbers = #tpu.dot_dimension_numbers<[1], [0], [0], [1], [0, 0, 1, 1], [], []>} : vector<4x4xf32>, vector<4x991xf32>, vector<4x991xf32> -> vector<4x991xf32>
    %12 = arith.addf %8, %11 : vector<4x991xf32>
    %c0_8 = arith.constant 0 : index
    %c12 = arith.constant 12 : index
    %13 = vector.load %arg2[%c0_8, %c12] : memref<4x16xf32, #tpu.memory_space<vmem>>, vector<4x4xf32>
    %14 = vector.extract_strided_slice %1 {offsets = [0, 33], sizes = [4, 991], strides = [1, 1]} : vector<4x1024xf32> to vector<4x991xf32>
    %cst_9 = arith.constant dense<0.000000e+00> : vector<4x991xf32>
    %15 = tpu.matmul %13, %14, %cst_9 {dimension_numbers = #tpu.dot_dimension_numbers<[1], [0], [0], [1], [0, 0, 1, 1], [], []>} : vector<4x4xf32>, vector<4x991xf32>, vector<4x991xf32> -> vector<4x991xf32>
    %16 = arith.addf %12, %15 : vector<4x991xf32>
    %c0_10 = arith.constant 0 : index
    %c0_11 = arith.constant 0 : index
    %17 = vector.load %arg3[%c0_10, %c0_11] : memref<4x1xf32, #tpu.memory_space<vmem>>, vector<4x1xf32>
    %18 = vector.broadcast %17 : vector<4x1xf32> to vector<4x991xf32>
    %19 = arith.addf %16, %18 : vector<4x991xf32>
    %cst_12 = arith.constant 0.000000e+00 : f32
    %20 = vector.broadcast %cst_12 : f32 to vector<4x991xf32>
    %21 = arith.cmpf oge, %19, %20 : vector<4x991xf32>
    %cst_13 = arith.constant 0.00999999977 : f32
    %22 = vector.broadcast %cst_13 : f32 to vector<4x991xf32>
    %23 = arith.mulf %22, %19 : vector<4x991xf32>
    %24 = arith.select %21, %19, %23 : vector<4x991xi1>, vector<4x991xf32>
    %c0_14 = arith.constant 0 : index
    %c0_15 = arith.constant 0 : index
    %25 = vector.load %arg4[%c0_14, %c0_15] : memref<8x16xf32, #tpu.memory_space<vmem>>, vector<8x4xf32>
    %26 = vector.extract_strided_slice %24 {offsets = [0, 0], sizes = [4, 958], strides = [1, 1]} : vector<4x991xf32> to vector<4x958xf32>
    %cst_16 = arith.constant dense<0.000000e+00> : vector<8x958xf32>
    %27 = tpu.matmul %25, %26, %cst_16 {dimension_numbers = #tpu.dot_dimension_numbers<[1], [0], [0], [1], [0, 0, 1, 1], [], []>} : vector<8x4xf32>, vector<4x958xf32>, vector<8x958xf32> -> vector<8x958xf32>
    %c0_17 = arith.constant 0 : index
    %c4_18 = arith.constant 4 : index
    %28 = vector.load %arg4[%c0_17, %c4_18] : memref<8x16xf32, #tpu.memory_space<vmem>>, vector<8x4xf32>
    %29 = vector.extract_strided_slice %24 {offsets = [0, 1], sizes = [4, 958], strides = [1, 1]} : vector<4x991xf32> to vector<4x958xf32>
    %cst_19 = arith.constant dense<0.000000e+00> : vector<8x958xf32>
    %30 = tpu.matmul %28, %29, %cst_19 {dimension_numbers = #tpu.dot_dimension_numbers<[1], [0], [0], [1], [0, 0, 1, 1], [], []>} : vector<8x4xf32>, vector<4x958xf32>, vector<8x958xf32> -> vector<8x958xf32>
    %31 = arith.addf %27, %30 : vector<8x958xf32>
    %c0_20 = arith.constant 0 : index
    %c8_21 = arith.constant 8 : index
    %32 = vector.load %arg4[%c0_20, %c8_21] : memref<8x16xf32, #tpu.memory_space<vmem>>, vector<8x4xf32>
    %33 = vector.extract_strided_slice %24 {offsets = [0, 32], sizes = [4, 958], strides = [1, 1]} : vector<4x991xf32> to vector<4x958xf32>
    %cst_22 = arith.constant dense<0.000000e+00> : vector<8x958xf32>
    %34 = tpu.matmul %32, %33, %cst_22 {dimension_numbers = #tpu.dot_dimension_numbers<[1], [0], [0], [1], [0, 0, 1, 1], [], []>} : vector<8x4xf32>, vector<4x958xf32>, vector<8x958xf32> -> vector<8x958xf32>
    %35 = arith.addf %31, %34 : vector<8x958xf32>
    %c0_23 = arith.constant 0 : index
    %c12_24 = arith.constant 12 : index
    %36 = vector.load %arg4[%c0_23, %c12_24] : memref<8x16xf32, #tpu.memory_space<vmem>>, vector<8x4xf32>
    %37 = vector.extract_strided_slice %24 {offsets = [0, 33], sizes = [4, 958], strides = [1, 1]} : vector<4x991xf32> to vector<4x958xf32>
    %cst_25 = arith.constant dense<0.000000e+00> : vector<8x958xf32>
    %38 = tpu.matmul %36, %37, %cst_25 {dimension_numbers = #tpu.dot_dimension_numbers<[1], [0], [0], [1], [0, 0, 1, 1], [], []>} : vector<8x4xf32>, vector<4x958xf32>, vector<8x958xf32> -> vector<8x958xf32>
    %39 = arith.addf %35, %38 : vector<8x958xf32>
    %c0_26 = arith.constant 0 : index
    %c0_27 = arith.constant 0 : index
    %40 = vector.load %arg5[%c0_26, %c0_27] : memref<8x1xf32, #tpu.memory_space<vmem>>, vector<8x1xf32>
    %41 = vector.broadcast %40 : vector<8x1xf32> to vector<8x958xf32>
    %42 = arith.addf %39, %41 : vector<8x958xf32>
    %cst_28 = arith.constant 0.000000e+00 : f32
    %43 = vector.broadcast %cst_28 : f32 to vector<8x958xf32>
    %44 = arith.cmpf oge, %42, %43 : vector<8x958xf32>
    %cst_29 = arith.constant 0.00999999977 : f32
    %45 = vector.broadcast %cst_29 : f32 to vector<8x958xf32>
    %46 = arith.mulf %45, %42 : vector<8x958xf32>
    %47 = arith.select %44, %42, %46 : vector<8x958xi1>, vector<8x958xf32>
    %48 = vector.extract_strided_slice %47 {offsets = [0, 0], sizes = [4, 958], strides = [1, 1]} : vector<8x958xf32> to vector<4x958xf32>
    %c0_30 = arith.constant 0 : index
    %c0_31 = arith.constant 0 : index
    %c0_32 = arith.constant 0 : index
    %49 = vector.load %arg14[%c0_30, %c0_31, %c0_32] : memref<1x4x958xf32, #tpu.memory_space<vmem>>, vector<1x4x958xf32>
    %50 = vector.shape_cast %49 : vector<1x4x958xf32> to vector<4x958xf32>
    %51 = vector.shape_cast %48 : vector<4x958xf32> to vector<1x4x958xf32>
    tpu.vector_store %arg14[%c0_30, %c0_31, %c0_32], %51 {strides = array<i32>} : memref<1x4x958xf32, #tpu.memory_space<vmem>>, vector<1x4x958xf32>,
    %c0_33 = arith.constant 0 : index
    %c0_34 = arith.constant 0 : index
    %52 = vector.load %arg6[%c0_33, %c0_34] : memref<4x16xf32, #tpu.memory_space<vmem>>, vector<4x4xf32>
    %53 = vector.extract_strided_slice %48 {offsets = [0, 0], sizes = [4, 925], strides = [1, 1]} : vector<4x958xf32> to vector<4x925xf32>
    %cst_35 = arith.constant dense<0.000000e+00> : vector<4x925xf32>
    %54 = tpu.matmul %52, %53, %cst_35 {dimension_numbers = #tpu.dot_dimension_numbers<[1], [0], [0], [1], [0, 0, 1, 1], [], []>} : vector<4x4xf32>, vector<4x925xf32>, vector<4x925xf32> -> vector<4x925xf32>
    %c0_36 = arith.constant 0 : index
    %c4_37 = arith.constant 4 : index
    %55 = vector.load %arg6[%c0_36, %c4_37] : memref<4x16xf32, #tpu.memory_space<vmem>>, vector<4x4xf32>
    %56 = vector.extract_strided_slice %48 {offsets = [0, 1], sizes = [4, 925], strides = [1, 1]} : vector<4x958xf32> to vector<4x925xf32>
    %cst_38 = arith.constant dense<0.000000e+00> : vector<4x925xf32>
    %57 = tpu.matmul %55, %56, %cst_38 {dimension_numbers = #tpu.dot_dimension_numbers<[1], [0], [0], [1], [0, 0, 1, 1], [], []>} : vector<4x4xf32>, vector<4x925xf32>, vector<4x925xf32> -> vector<4x925xf32>
    %58 = arith.addf %54, %57 : vector<4x925xf32>
    %c0_39 = arith.constant 0 : index
    %c8_40 = arith.constant 8 : index
    %59 = vector.load %arg6[%c0_39, %c8_40] : memref<4x16xf32, #tpu.memory_space<vmem>>, vector<4x4xf32>
    %60 = vector.extract_strided_slice %48 {offsets = [0, 32], sizes = [4, 925], strides = [1, 1]} : vector<4x958xf32> to vector<4x925xf32>
    %cst_41 = arith.constant dense<0.000000e+00> : vector<4x925xf32>
    %61 = tpu.matmul %59, %60, %cst_41 {dimension_numbers = #tpu.dot_dimension_numbers<[1], [0], [0], [1], [0, 0, 1, 1], [], []>} : vector<4x4xf32>, vector<4x925xf32>, vector<4x925xf32> -> vector<4x925xf32>
    %62 = arith.addf %58, %61 : vector<4x925xf32>
    %c0_42 = arith.constant 0 : index
    %c12_43 = arith.constant 12 : index
    %63 = vector.load %arg6[%c0_42, %c12_43] : memref<4x16xf32, #tpu.memory_space<vmem>>, vector<4x4xf32>
    %64 = vector.extract_strided_slice %48 {offsets = [0, 33], sizes = [4, 925], strides = [1, 1]} : vector<4x958xf32> to vector<4x925xf32>
    %cst_44 = arith.constant dense<0.000000e+00> : vector<4x925xf32>
    %65 = tpu.matmul %63, %64, %cst_44 {dimension_numbers = #tpu.dot_dimension_numbers<[1], [0], [0], [1], [0, 0, 1, 1], [], []>} : vector<4x4xf32>, vector<4x925xf32>, vector<4x925xf32> -> vector<4x925xf32>
    %66 = arith.addf %62, %65 : vector<4x925xf32>
    %c0_45 = arith.constant 0 : index
    %c0_46 = arith.constant 0 : index
    %67 = vector.load %arg7[%c0_45, %c0_46] : memref<4x1xf32, #tpu.memory_space<vmem>>, vector<4x1xf32>
    %68 = vector.broadcast %67 : vector<4x1xf32> to vector<4x925xf32>
    %69 = arith.addf %66, %68 : vector<4x925xf32>
    %cst_47 = arith.constant 0.000000e+00 : f32
    %70 = vector.broadcast %cst_47 : f32 to vector<4x925xf32>
    %71 = arith.cmpf oge, %69, %70 : vector<4x925xf32>
    %cst_48 = arith.constant 0.00999999977 : f32
    %72 = vector.broadcast %cst_48 : f32 to vector<4x925xf32>
    %73 = arith.mulf %72, %69 : vector<4x925xf32>
    %74 = arith.select %71, %69, %73 : vector<4x925xi1>, vector<4x925xf32>
    %c0_49 = arith.constant 0 : index
    %c0_50 = arith.constant 0 : index
    %75 = vector.load %arg8[%c0_49, %c0_50] : memref<8x16xf32, #tpu.memory_space<vmem>>, vector<8x4xf32>
    %76 = vector.extract_strided_slice %74 {offsets = [0, 0], sizes = [4, 892], strides = [1, 1]} : vector<4x925xf32> to vector<4x892xf32>
    %cst_51 = arith.constant dense<0.000000e+00> : vector<8x892xf32>
    %77 = tpu.matmul %75, %76, %cst_51 {dimension_numbers = #tpu.dot_dimension_numbers<[1], [0], [0], [1], [0, 0, 1, 1], [], []>} : vector<8x4xf32>, vector<4x892xf32>, vector<8x892xf32> -> vector<8x892xf32>
    %c0_52 = arith.constant 0 : index
    %c4_53 = arith.constant 4 : index
    %78 = vector.load %arg8[%c0_52, %c4_53] : memref<8x16xf32, #tpu.memory_space<vmem>>, vector<8x4xf32>
    %79 = vector.extract_strided_slice %74 {offsets = [0, 1], sizes = [4, 892], strides = [1, 1]} : vector<4x925xf32> to vector<4x892xf32>
    %cst_54 = arith.constant dense<0.000000e+00> : vector<8x892xf32>
    %80 = tpu.matmul %78, %79, %cst_54 {dimension_numbers = #tpu.dot_dimension_numbers<[1], [0], [0], [1], [0, 0, 1, 1], [], []>} : vector<8x4xf32>, vector<4x892xf32>, vector<8x892xf32> -> vector<8x892xf32>
    %81 = arith.addf %77, %80 : vector<8x892xf32>
    %c0_55 = arith.constant 0 : index
    %c8_56 = arith.constant 8 : index
    %82 = vector.load %arg8[%c0_55, %c8_56] : memref<8x16xf32, #tpu.memory_space<vmem>>, vector<8x4xf32>
    %83 = vector.extract_strided_slice %74 {offsets = [0, 32], sizes = [4, 892], strides = [1, 1]} : vector<4x925xf32> to vector<4x892xf32>
    %cst_57 = arith.constant dense<0.000000e+00> : vector<8x892xf32>
    %84 = tpu.matmul %82, %83, %cst_57 {dimension_numbers = #tpu.dot_dimension_numbers<[1], [0], [0], [1], [0, 0, 1, 1], [], []>} : vector<8x4xf32>, vector<4x892xf32>, vector<8x892xf32> -> vector<8x892xf32>
    %85 = arith.addf %81, %84 : vector<8x892xf32>
    %c0_58 = arith.constant 0 : index
    %c12_59 = arith.constant 12 : index
    %86 = vector.load %arg8[%c0_58, %c12_59] : memref<8x16xf32, #tpu.memory_space<vmem>>, vector<8x4xf32>
    %87 = vector.extract_strided_slice %74 {offsets = [0, 33], sizes = [4, 892], strides = [1, 1]} : vector<4x925xf32> to vector<4x892xf32>
    %cst_60 = arith.constant dense<0.000000e+00> : vector<8x892xf32>
    %88 = tpu.matmul %86, %87, %cst_60 {dimension_numbers = #tpu.dot_dimension_numbers<[1], [0], [0], [1], [0, 0, 1, 1], [], []>} : vector<8x4xf32>, vector<4x892xf32>, vector<8x892xf32> -> vector<8x892xf32>
    %89 = arith.addf %85, %88 : vector<8x892xf32>
    %c0_61 = arith.constant 0 : index
    %c0_62 = arith.constant 0 : index
    %90 = vector.load %arg9[%c0_61, %c0_62] : memref<8x1xf32, #tpu.memory_space<vmem>>, vector<8x1xf32>
    %91 = vector.broadcast %90 : vector<8x1xf32> to vector<8x892xf32>
    %92 = arith.addf %89, %91 : vector<8x892xf32>
    %cst_63 = arith.constant 0.000000e+00 : f32
    %93 = vector.broadcast %cst_63 : f32 to vector<8x892xf32>
    %94 = arith.cmpf oge, %92, %93 : vector<8x892xf32>
    %cst_64 = arith.constant 0.00999999977 : f32
    %95 = vector.broadcast %cst_64 : f32 to vector<8x892xf32>
    %96 = arith.mulf %95, %92 : vector<8x892xf32>
    %97 = arith.select %94, %92, %96 : vector<8x892xi1>, vector<8x892xf32>
    %98 = vector.extract_strided_slice %97 {offsets = [0, 0], sizes = [4, 892], strides = [1, 1]} : vector<8x892xf32> to vector<4x892xf32>
    %c0_65 = arith.constant 0 : index
    %c0_66 = arith.constant 0 : index
    %c0_67 = arith.constant 0 : index
    %99 = vector.load %arg15[%c0_65, %c0_66, %c0_67] : memref<1x4x892xf32, #tpu.memory_space<vmem>>, vector<1x4x892xf32>
    %100 = vector.shape_cast %99 : vector<1x4x892xf32> to vector<4x892xf32>
    %101 = vector.shape_cast %98 : vector<4x892xf32> to vector<1x4x892xf32>
    tpu.vector_store %arg15[%c0_65, %c0_66, %c0_67], %101 {strides = array<i32>} : memref<1x4x892xf32, #tpu.memory_space<vmem>>, vector<1x4x892xf32>,
    %c0_68 = arith.constant 0 : index
    %c0_69 = arith.constant 0 : index
    %102 = vector.load %arg10[%c0_68, %c0_69] : memref<4x16xf32, #tpu.memory_space<vmem>>, vector<4x4xf32>
    %103 = vector.extract_strided_slice %98 {offsets = [0, 0], sizes = [4, 859], strides = [1, 1]} : vector<4x892xf32> to vector<4x859xf32>
    %cst_70 = arith.constant dense<0.000000e+00> : vector<4x859xf32>
    %104 = tpu.matmul %102, %103, %cst_70 {dimension_numbers = #tpu.dot_dimension_numbers<[1], [0], [0], [1], [0, 0, 1, 1], [], []>} : vector<4x4xf32>, vector<4x859xf32>, vector<4x859xf32> -> vector<4x859xf32>
    %c0_71 = arith.constant 0 : index
    %c4_72 = arith.constant 4 : index
    %105 = vector.load %arg10[%c0_71, %c4_72] : memref<4x16xf32, #tpu.memory_space<vmem>>, vector<4x4xf32>
    %106 = vector.extract_strided_slice %98 {offsets = [0, 1], sizes = [4, 859], strides = [1, 1]} : vector<4x892xf32> to vector<4x859xf32>
    %cst_73 = arith.constant dense<0.000000e+00> : vector<4x859xf32>
    %107 = tpu.matmul %105, %106, %cst_73 {dimension_numbers = #tpu.dot_dimension_numbers<[1], [0], [0], [1], [0, 0, 1, 1], [], []>} : vector<4x4xf32>, vector<4x859xf32>, vector<4x859xf32> -> vector<4x859xf32>
    %108 = arith.addf %104, %107 : vector<4x859xf32>
    %c0_74 = arith.constant 0 : index
    %c8_75 = arith.constant 8 : index
    %109 = vector.load %arg10[%c0_74, %c8_75] : memref<4x16xf32, #tpu.memory_space<vmem>>, vector<4x4xf32>
    %110 = vector.extract_strided_slice %98 {offsets = [0, 32], sizes = [4, 859], strides = [1, 1]} : vector<4x892xf32> to vector<4x859xf32>
    %cst_76 = arith.constant dense<0.000000e+00> : vector<4x859xf32>
    %111 = tpu.matmul %109, %110, %cst_76 {dimension_numbers = #tpu.dot_dimension_numbers<[1], [0], [0], [1], [0, 0, 1, 1], [], []>} : vector<4x4xf32>, vector<4x859xf32>, vector<4x859xf32> -> vector<4x859xf32>
    %112 = arith.addf %108, %111 : vector<4x859xf32>
    %c0_77 = arith.constant 0 : index
    %c12_78 = arith.constant 12 : index
    %113 = vector.load %arg10[%c0_77, %c12_78] : memref<4x16xf32, #tpu.memory_space<vmem>>, vector<4x4xf32>
    %114 = vector.extract_strided_slice %98 {offsets = [0, 33], sizes = [4, 859], strides = [1, 1]} : vector<4x892xf32> to vector<4x859xf32>
    %cst_79 = arith.constant dense<0.000000e+00> : vector<4x859xf32>
    %115 = tpu.matmul %113, %114, %cst_79 {dimension_numbers = #tpu.dot_dimension_numbers<[1], [0], [0], [1], [0, 0, 1, 1], [], []>} : vector<4x4xf32>, vector<4x859xf32>, vector<4x859xf32> -> vector<4x859xf32>
    %116 = arith.addf %112, %115 : vector<4x859xf32>
    %c0_80 = arith.constant 0 : index
    %c0_81 = arith.constant 0 : index
    %117 = vector.load %arg11[%c0_80, %c0_81] : memref<4x1xf32, #tpu.memory_space<vmem>>, vector<4x1xf32>
    %118 = vector.broadcast %117 : vector<4x1xf32> to vector<4x859xf32>
    %119 = arith.addf %116, %118 : vector<4x859xf32>
    %cst_82 = arith.constant 0.000000e+00 : f32
    %120 = vector.broadcast %cst_82 : f32 to vector<4x859xf32>
    %121 = arith.cmpf oge, %119, %120 : vector<4x859xf32>
    %cst_83 = arith.constant 0.00999999977 : f32
    %122 = vector.broadcast %cst_83 : f32 to vector<4x859xf32>
    %123 = arith.mulf %122, %119 : vector<4x859xf32>
    %124 = arith.select %121, %119, %123 : vector<4x859xi1>, vector<4x859xf32>
    %c0_84 = arith.constant 0 : index
    %c0_85 = arith.constant 0 : index
    %125 = vector.load %arg12[%c0_84, %c0_85] : memref<8x16xf32, #tpu.memory_space<vmem>>, vector<8x4xf32>
    %126 = vector.extract_strided_slice %124 {offsets = [0, 0], sizes = [4, 826], strides = [1, 1]} : vector<4x859xf32> to vector<4x826xf32>
    %cst_86 = arith.constant dense<0.000000e+00> : vector<8x826xf32>
    %127 = tpu.matmul %125, %126, %cst_86 {dimension_numbers = #tpu.dot_dimension_numbers<[1], [0], [0], [1], [0, 0, 1, 1], [], []>} : vector<8x4xf32>, vector<4x826xf32>, vector<8x826xf32> -> vector<8x826xf32>
    %c0_87 = arith.constant 0 : index
    %c4_88 = arith.constant 4 : index
    %128 = vector.load %arg12[%c0_87, %c4_88] : memref<8x16xf32, #tpu.memory_space<vmem>>, vector<8x4xf32>
    %129 = vector.extract_strided_slice %124 {offsets = [0, 1], sizes = [4, 826], strides = [1, 1]} : vector<4x859xf32> to vector<4x826xf32>
    %cst_89 = arith.constant dense<0.000000e+00> : vector<8x826xf32>
    %130 = tpu.matmul %128, %129, %cst_89 {dimension_numbers = #tpu.dot_dimension_numbers<[1], [0], [0], [1], [0, 0, 1, 1], [], []>} : vector<8x4xf32>, vector<4x826xf32>, vector<8x826xf32> -> vector<8x826xf32>
    %131 = arith.addf %127, %130 : vector<8x826xf32>
    %c0_90 = arith.constant 0 : index
    %c8_91 = arith.constant 8 : index
    %132 = vector.load %arg12[%c0_90, %c8_91] : memref<8x16xf32, #tpu.memory_space<vmem>>, vector<8x4xf32>
    %133 = vector.extract_strided_slice %124 {offsets = [0, 32], sizes = [4, 826], strides = [1, 1]} : vector<4x859xf32> to vector<4x826xf32>
    %cst_92 = arith.constant dense<0.000000e+00> : vector<8x826xf32>
    %134 = tpu.matmul %132, %133, %cst_92 {dimension_numbers = #tpu.dot_dimension_numbers<[1], [0], [0], [1], [0, 0, 1, 1], [], []>} : vector<8x4xf32>, vector<4x826xf32>, vector<8x826xf32> -> vector<8x826xf32>
    %135 = arith.addf %131, %134 : vector<8x826xf32>
    %c0_93 = arith.constant 0 : index
    %c12_94 = arith.constant 12 : index
    %136 = vector.load %arg12[%c0_93, %c12_94] : memref<8x16xf32, #tpu.memory_space<vmem>>, vector<8x4xf32>
    %137 = vector.extract_strided_slice %124 {offsets = [0, 33], sizes = [4, 826], strides = [1, 1]} : vector<4x859xf32> to vector<4x826xf32>
    %cst_95 = arith.constant dense<0.000000e+00> : vector<8x826xf32>
    %138 = tpu.matmul %136, %137, %cst_95 {dimension_numbers = #tpu.dot_dimension_numbers<[1], [0], [0], [1], [0, 0, 1, 1], [], []>} : vector<8x4xf32>, vector<4x826xf32>, vector<8x826xf32> -> vector<8x826xf32>
    %139 = arith.addf %135, %138 : vector<8x826xf32>
    %c0_96 = arith.constant 0 : index
    %c0_97 = arith.constant 0 : index
    %140 = vector.load %arg13[%c0_96, %c0_97] : memref<8x1xf32, #tpu.memory_space<vmem>>, vector<8x1xf32>
    %141 = vector.broadcast %140 : vector<8x1xf32> to vector<8x826xf32>
    %142 = arith.addf %139, %141 : vector<8x826xf32>
    %cst_98 = arith.constant 0.000000e+00 : f32
    %143 = vector.broadcast %cst_98 : f32 to vector<8x826xf32>
    %144 = arith.cmpf oge, %142, %143 : vector<8x826xf32>
    %cst_99 = arith.constant 0.00999999977 : f32
    %145 = vector.broadcast %cst_99 : f32 to vector<8x826xf32>
    %146 = arith.mulf %145, %142 : vector<8x826xf32>
    %147 = arith.select %144, %142, %146 : vector<8x826xi1>, vector<8x826xf32>
    %148 = vector.extract_strided_slice %147 {offsets = [0, 0], sizes = [4, 826], strides = [1, 1]} : vector<8x826xf32> to vector<4x826xf32>
    %c0_100 = arith.constant 0 : index
    %c0_101 = arith.constant 0 : index
    %c0_102 = arith.constant 0 : index
    %149 = vector.load %arg16[%c0_100, %c0_101, %c0_102] : memref<1x4x826xf32, #tpu.memory_space<vmem>>, vector<1x4x826xf32>
    %150 = vector.shape_cast %149 : vector<1x4x826xf32> to vector<4x826xf32>
    %151 = vector.shape_cast %148 : vector<4x826xf32> to vector<1x4x826xf32>
    tpu.vector_store %arg16[%c0_100, %c0_101, %c0_102], %151 {strides = array<i32>} : memref<1x4x826xf32, #tpu.memory_space<vmem>>, vector<1x4x826xf32>,
    return
  }
  func.func @transform_0(%arg0: i32) -> (i32, i32, i32) {
    %c0_i32 = arith.constant 0 : i32
    %c0_i32_0 = arith.constant 0 : i32
    %c0_i32_1 = arith.constant 0 : i32
    return %arg0, %c0_i32, %c0_i32_0 : i32, i32, i32
  }
  func.func @transform_1(%arg0: i32) -> (i32, i32) {
    %c0_i32 = arith.constant 0 : i32
    %c0_i32_0 = arith.constant 0 : i32
    %c0_i32_1 = arith.constant 0 : i32
    return %c0_i32, %c0_i32_0 : i32, i32
  }
  func.func @transform_2(%arg0: i32) -> (i32, i32) {
    %c0_i32 = arith.constant 0 : i32
    %c0_i32_0 = arith.constant 0 : i32
    %c0_i32_1 = arith.constant 0 : i32
    return %c0_i32, %c0_i32_0 : i32, i32
  }
  func.func @transform_3(%arg0: i32) -> (i32, i32) {
    %c0_i32 = arith.constant 0 : i32
    %c0_i32_0 = arith.constant 0 : i32
    %c0_i32_1 = arith.constant 0 : i32
    return %c0_i32, %c0_i32_0 : i32, i32
  }
  func.func @transform_4(%arg0: i32) -> (i32, i32) {
    %c0_i32 = arith.constant 0 : i32
    %c0_i32_0 = arith.constant 0 : i32
    %c0_i32_1 = arith.constant 0 : i32
    return %c0_i32, %c0_i32_0 : i32, i32
  }
  func.func @transform_5(%arg0: i32) -> (i32, i32) {
    %c0_i32 = arith.constant 0 : i32
    %c0_i32_0 = arith.constant 0 : i32
    %c0_i32_1 = arith.constant 0 : i32
    return %c0_i32, %c0_i32_0 : i32, i32
  }
  func.func @transform_6(%arg0: i32) -> (i32, i32) {
    %c0_i32 = arith.constant 0 : i32
    %c0_i32_0 = arith.constant 0 : i32
    %c0_i32_1 = arith.constant 0 : i32
    return %c0_i32, %c0_i32_0 : i32, i32
  }
  func.func @transform_7(%arg0: i32) -> (i32, i32) {
    %c0_i32 = arith.constant 0 : i32
    %c0_i32_0 = arith.constant 0 : i32
    %c0_i32_1 = arith.constant 0 : i32
    return %c0_i32, %c0_i32_0 : i32, i32
  }
  func.func @transform_8(%arg0: i32) -> (i32, i32) {
    %c0_i32 = arith.constant 0 : i32
    %c0_i32_0 = arith.constant 0 : i32
    %c0_i32_1 = arith.constant 0 : i32
    return %c0_i32, %c0_i32_0 : i32, i32
  }
  func.func @transform_9(%arg0: i32) -> (i32, i32) {
    %c0_i32 = arith.constant 0 : i32
    %c0_i32_0 = arith.constant 0 : i32
    %c0_i32_1 = arith.constant 0 : i32
    return %c0_i32, %c0_i32_0 : i32, i32
  }
  func.func @transform_10(%arg0: i32) -> (i32, i32) {
    %c0_i32 = arith.constant 0 : i32
    %c0_i32_0 = arith.constant 0 : i32
    %c0_i32_1 = arith.constant 0 : i32
    return %c0_i32, %c0_i32_0 : i32, i32
  }
  func.func @transform_11(%arg0: i32) -> (i32, i32) {
    %c0_i32 = arith.constant 0 : i32
    %c0_i32_0 = arith.constant 0 : i32
    %c0_i32_1 = arith.constant 0 : i32
    return %c0_i32, %c0_i32_0 : i32, i32
  }
  func.func @transform_12(%arg0: i32) -> (i32, i32) {
    %c0_i32 = arith.constant 0 : i32
    %c0_i32_0 = arith.constant 0 : i32
    %c0_i32_1 = arith.constant 0 : i32
    return %c0_i32, %c0_i32_0 : i32, i32
  }
  func.func @transform_13(%arg0: i32) -> (i32, i32, i32) {
    %c0_i32 = arith.constant 0 : i32
    %c0_i32_0 = arith.constant 0 : i32
    %c0_i32_1 = arith.constant 0 : i32
    return %arg0, %c0_i32, %c0_i32_0 : i32, i32, i32
  }
  func.func @transform_14(%arg0: i32) -> (i32, i32, i32) {
    %c0_i32 = arith.constant 0 : i32
    %c0_i32_0 = arith.constant 0 : i32
    %c0_i32_1 = arith.constant 0 : i32
    return %arg0, %c0_i32, %c0_i32_0 : i32, i32, i32
  }
  func.func @transform_15(%arg0: i32) -> (i32, i32, i32) {
    %c0_i32 = arith.constant 0 : i32
    %c0_i32_0 = arith.constant 0 : i32
    %c0_i32_1 = arith.constant 0 : i32
    return %arg0, %c0_i32, %c0_i32_0 : i32, i32, i32
  }
}

</mosaic_0001>

<llo_original>
// kernel: tpu_custom_call.1
$region0: #{tpu_custom_call.1}
  #allocation0 [shape = 'u32[]', space=smem, size = 0x4, offset = 0x4, fixed_abs, tag = 'smem constant byte address 0x4 - core index']
  #allocation1 [shape = 'u32[144,128]{1,0:T(1,128)}', space=vmem, size = 0x12000, scoped, tag = 'internal scratch']
  %s0 = inlined_call_operand.hbm [shape: f32[8,4,1024], index: 0, kind: input, shape index: {}]
  %s1 = inlined_call_operand.vmem [shape: f32[4,16], index: 1, kind: input, shape index: {}]
  %s2 = inlined_call_operand.vmem [shape: f32[4,1], index: 2, kind: input, shape index: {}]
  %s3 = inlined_call_operand.vmem [shape: f32[8,16], index: 3, kind: input, shape index: {}]
  %s4 = inlined_call_operand.vmem [shape: f32[8,1], index: 4, kind: input, shape index: {}]
  %s5 = inlined_call_operand.vmem [shape: f32[4,16], index: 5, kind: input, shape index: {}]
  %s6 = inlined_call_operand.vmem [shape: f32[4,1], index: 6, kind: input, shape index: {}]
  %s7 = inlined_call_operand.vmem [shape: f32[8,16], index: 7, kind: input, shape index: {}]
  %s8 = inlined_call_operand.vmem [shape: f32[8,1], index: 8, kind: input, shape index: {}]
  %s9 = inlined_call_operand.vmem [shape: f32[4,16], index: 9, kind: input, shape index: {}]
  %s10 = inlined_call_operand.vmem [shape: f32[4,1], index: 10, kind: input, shape index: {}]
  %s11 = inlined_call_operand.vmem [shape: f32[8,16], index: 11, kind: input, shape index: {}]
  %s12 = inlined_call_operand.vmem [shape: f32[8,1], index: 12, kind: input, shape index: {}]
  %s13 = inlined_call_operand.hbm [shape: f32[8,4,958], index: 13, kind: output, shape index: {0}]
  %s14 = inlined_call_operand.hbm [shape: f32[8,4,892], index: 14, kind: output, shape index: {1}]
  %s15 = inlined_call_operand.hbm [shape: f32[8,4,826], index: 15, kind: output, shape index: {2}]
  %16 = xla_tuple %s13, %s14, %s15
  %s17 = sld [smem:[#allocation0]]
  $region105: #{tpu_custom_call.1} parent=0
    _
  %s19 = ssub.s32 1, %s17
  %s20 = scalar_select 0, %s19, %s17
  $region1: #{tpu_custom_call.1} parent=0
    #allocation2 [shape = 'u8[32768]{0}', space=vmem, size = 0x8000, scoped, tag = 'input window, operand 0']
    #allocation3 [shape = 's32[2]{0}', space=sflag, size = 0x8, scoped, tag = 'scoped memory for tpu_custom_call.1']
    #allocation4 [shape = 's32[2]{0}', space=sflag, size = 0x8, scoped, tag = 'scoped memory for tpu_custom_call.1']
    #allocation5 [shape = 'u8[32768]{0}', space=vmem, size = 0x8000, scoped, tag = 'output window, operand 0']
    #allocation6 [shape = 'u8[28672]{0}', space=vmem, size = 0x7000, scoped, tag = 'output window, operand 1']
    #allocation7 [shape = 's32[2]{0}', space=sflag, size = 0x8, scoped, tag = 'scoped memory for tpu_custom_call.1']
    #allocation8 [shape = 'u8[28672]{0}', space=vmem, size = 0x7000, scoped, tag = 'output window, operand 2']
    %21 = vsyncpa [#allocation3], 0
    %s22 = scalar_lea.sflag [#allocation3], 1
    %23 = vsyncpa %s22, 0
    %24 = vsyncpa [#allocation4], 0
    %s25 = scalar_lea.sflag [#allocation4], 1
    %26 = vsyncpa %s25, 0
    %27 = vsyncpa [#allocation7], 0
    %s28 = scalar_lea.sflag [#allocation7], 1
    %29 = vsyncpa %s28, 0
    loop: start=0, step=1, limit=10
    $region2: #{tpu_custom_call.1} parent=1 // loop_pre_header
      _
    $region3: #{tpu_custom_call.1} parent=1 // loop_header
      %s31 = sphi 0, %s35
      %p32 = scmp.ge.s32.totalorder %s31, 10
      %s41 = sphi 0, %s43
      %s44 = sphi 0, %s41
      %s45 = sphi 0, %s44
      %s61 = sphi 0, %s45
      %s65 = sphi 0, %s65
      %s67 = sphi 0, %s65
      %s68 = sphi 0, %s67
      %s82 = sphi 0, %s68
      %s86 = sphi 0, %s86
      %s88 = sphi 0, %s86
      %s89 = sphi 0, %s88
      %s103 = sphi 0, %s89
      %s107 = sphi 0, %s107
      %s109 = sphi 0, %s107
      %s110 = sphi 0, %s109
      %s124 = sphi 0, %s110
      %s128 = sphi 0, %s128
      %s130 = sphi 0, %s128
      %s131 = sphi 0, %s130
      %s145 = sphi 0, %s131
      %s149 = sphi 0, %s149
      %s151 = sphi 0, %s149
      %s152 = sphi 0, %s151
      %s166 = sphi 0, %s152
      %s170 = sphi 0, %s170
      %s172 = sphi 0, %s170
      %s173 = sphi 0, %s172
      %s187 = sphi 0, %s173
      %s191 = sphi 0, %s191
      %s193 = sphi 0, %s191
      %s194 = sphi 0, %s193
      %s208 = sphi 0, %s194
      %s212 = sphi 0, %s212
      %s214 = sphi 0, %s212
      %s215 = sphi 0, %s214
      %s229 = sphi 0, %s215
      %s233 = sphi 0, %s233
      %s235 = sphi 0, %s233
      %s236 = sphi 0, %s235
      %s250 = sphi 0, %s236
      %s254 = sphi 0, %s254
      %s256 = sphi 0, %s254
      %s257 = sphi 0, %s256
      %s271 = sphi 0, %s257
      %s275 = sphi 0, %s275
      %s277 = sphi 0, %s275
      %s278 = sphi 0, %s277
      %s292 = sphi 0, %s278
      %s296 = sphi 0, %s296
      %s298 = sphi 0, %s296
      %s299 = sphi 0, %s298
      %s313 = sphi 0, %s299
      %s319 = sphi 0, %s321
      %s322 = sphi 0, %s319
      %s323 = sphi 0, %s322
      %s339 = sphi 0, %s323
      %s345 = sphi 0, %s347
      %s348 = sphi 0, %s345
      %s349 = sphi 0, %s348
      %s365 = sphi 0, %s349
      %s371 = sphi 0, %s373
      %s374 = sphi 0, %s371
      %s375 = sphi 0, %s374
      %s391 = sphi 0, %s375
    $region4: #{tpu_custom_call.1} parent=1 // loop_header_branch
      %34 = sbr.rel (%p32) target = $region8
    $region5: #{tpu_custom_call.1} parent=1 // loop_body
      %s36 = ssub.s32 %s31, 1
      %s37 = ssub.s32 %s31, 2
      %s38 = sadd.s32 %s31, 1
      %s39 = ssub.s32 %s31, %s38
      %p40 = scmp.eq.s32.totalorder %s39, 0
      %s42 = sadd.s32 %s41, 1
      %s43 = scalar_select %p40, %s41, %s42
      %p46 = pneg %p40
      %p47 = scmp.eq.s32.totalorder %s31, 7
      %p48 = por %p46, %p47
      %p49 = scmp.ne.s32.totalorder %s41, %s44
      %p50 = scmp.eq.s32.totalorder %s31, 0
      %p51 = por %p49, %p50
      %p52 = scmp.ne.s32.totalorder %s41, %s44
      %p53 = scmp.eq.s32.totalorder %s36, 7
      %p54 = por %p52, %p53
      %p55 = scmp.ne.s32.totalorder %s44, %s45
      %p56 = scmp.eq.s32.totalorder %s36, 0
      %p57 = por %p55, %p56
      %p58 = scmp.ne.s32.totalorder %s44, %s45
      %p59 = scmp.eq.s32.totalorder %s37, 7
      %p60 = por %p58, %p59
      %p62 = scmp.ne.s32.totalorder %s45, %s61
      %p63 = scmp.eq.s32.totalorder %s37, 0
      %p64 = por %p62, %p63
      %s66 = sadd.s32 %s65, 1
      %p69 = scmp.eq.s32.totalorder %s31, 7
      %p70 = scmp.ne.s32.totalorder %s65, %s67
      %p71 = scmp.eq.s32.totalorder %s31, 0
      %p72 = por %p70, %p71
      %p73 = scmp.ne.s32.totalorder %s65, %s67
      %p74 = scmp.eq.s32.totalorder %s36, 7
      %p75 = por %p73, %p74
      %p76 = scmp.ne.s32.totalorder %s67, %s68
      %p77 = scmp.eq.s32.totalorder %s36, 0
      %p78 = por %p76, %p77
      %p79 = scmp.ne.s32.totalorder %s67, %s68
      %p80 = scmp.eq.s32.totalorder %s37, 7
      %p81 = por %p79, %p80
      %p83 = scmp.ne.s32.totalorder %s68, %s82
      %p84 = scmp.eq.s32.totalorder %s37, 0
      %p85 = por %p83, %p84
      %s87 = sadd.s32 %s86, 1
      %p90 = scmp.eq.s32.totalorder %s31, 7
      %p91 = scmp.ne.s32.totalorder %s86, %s88
      %p92 = scmp.eq.s32.totalorder %s31, 0
      %p93 = por %p91, %p92
      %p94 = scmp.ne.s32.totalorder %s86, %s88
      %p95 = scmp.eq.s32.totalorder %s36, 7
      %p96 = por %p94, %p95
      %p97 = scmp.ne.s32.totalorder %s88, %s89
      %p98 = scmp.eq.s32.totalorder %s36, 0
      %p99 = por %p97, %p98
      %p100 = scmp.ne.s32.totalorder %s88, %s89
      %p101 = scmp.eq.s32.totalorder %s37, 7
      %p102 = por %p100, %p101
      %p104 = scmp.ne.s32.totalorder %s89, %s103
      %p105 = scmp.eq.s32.totalorder %s37, 0
      %p106 = por %p104, %p105
      %s108 = sadd.s32 %s107, 1
      %p111 = scmp.eq.s32.totalorder %s31, 7
      %p112 = scmp.ne.s32.totalorder %s107, %s109
      %p113 = scmp.eq.s32.totalorder %s31, 0
      %p114 = por %p112, %p113
      %p115 = scmp.ne.s32.totalorder %s107, %s109
      %p116 = scmp.eq.s32.totalorder %s36, 7
      %p117 = por %p115, %p116
      %p118 = scmp.ne.s32.totalorder %s109, %s110
      %p119 = scmp.eq.s32.totalorder %s36, 0
      %p120 = por %p118, %p119
      %p121 = scmp.ne.s32.totalorder %s109, %s110
      %p122 = scmp.eq.s32.totalorder %s37, 7
      %p123 = por %p121, %p122
      %p125 = scmp.ne.s32.totalorder %s110, %s124
      %p126 = scmp.eq.s32.totalorder %s37, 0
      %p127 = por %p125, %p126
      %s129 = sadd.s32 %s128, 1
      %p132 = scmp.eq.s32.totalorder %s31, 7
      %p133 = scmp.ne.s32.totalorder %s128, %s130
      %p134 = scmp.eq.s32.totalorder %s31, 0
      %p135 = por %p133, %p134
      %p136 = scmp.ne.s32.totalorder %s128, %s130
      %p137 = scmp.eq.s32.totalorder %s36, 7
      %p138 = por %p136, %p137
      %p139 = scmp.ne.s32.totalorder %s130, %s131
      %p140 = scmp.eq.s32.totalorder %s36, 0
      %p141 = por %p139, %p140
      %p142 = scmp.ne.s32.totalorder %s130, %s131
      %p143 = scmp.eq.s32.totalorder %s37, 7
      %p144 = por %p142, %p143
      %p146 = scmp.ne.s32.totalorder %s131, %s145
      %p147 = scmp.eq.s32.totalorder %s37, 0
      %p148 = por %p146, %p147
      %s150 = sadd.s32 %s149, 1
      %p153 = scmp.eq.s32.totalorder %s31, 7
      %p154 = scmp.ne.s32.totalorder %s149, %s151
      %p155 = scmp.eq.s32.totalorder %s31, 0
      %p156 = por %p154, %p155
      %p157 = scmp.ne.s32.totalorder %s149, %s151
      %p158 = scmp.eq.s32.totalorder %s36, 7
      %p159 = por %p157, %p158
      %p160 = scmp.ne.s32.totalorder %s151, %s152
      %p161 = scmp.eq.s32.totalorder %s36, 0
      %p162 = por %p160, %p161
      %p163 = scmp.ne.s32.totalorder %s151, %s152
      %p164 = scmp.eq.s32.totalorder %s37, 7
      %p165 = por %p163, %p164
      %p167 = scmp.ne.s32.totalorder %s152, %s166
      %p168 = scmp.eq.s32.totalorder %s37, 0
      %p169 = por %p167, %p168
      %s171 = sadd.s32 %s170, 1
      %p174 = scmp.eq.s32.totalorder %s31, 7
      %p175 = scmp.ne.s32.totalorder %s170, %s172
      %p176 = scmp.eq.s32.totalorder %s31, 0
      %p177 = por %p175, %p176
      %p178 = scmp.ne.s32.totalorder %s170, %s172
      %p179 = scmp.eq.s32.totalorder %s36, 7
      %p180 = por %p178, %p179
      %p181 = scmp.ne.s32.totalorder %s172, %s173
      %p182 = scmp.eq.s32.totalorder %s36, 0
      %p183 = por %p181, %p182
      %p184 = scmp.ne.s32.totalorder %s172, %s173
      %p185 = scmp.eq.s32.totalorder %s37, 7
      %p186 = por %p184, %p185
      %p188 = scmp.ne.s32.totalorder %s173, %s187
      %p189 = scmp.eq.s32.totalorder %s37, 0
      %p190 = por %p188, %p189
      %s192 = sadd.s32 %s191, 1
      %p195 = scmp.eq.s32.totalorder %s31, 7
      %p196 = scmp.ne.s32.totalorder %s191, %s193
      %p197 = scmp.eq.s32.totalorder %s31, 0
      %p198 = por %p196, %p197
      %p199 = scmp.ne.s32.totalorder %s191, %s193
      %p200 = scmp.eq.s32.totalorder %s36, 7
      %p201 = por %p199, %p200
      %p202 = scmp.ne.s32.totalorder %s193, %s194
      %p203 = scmp.eq.s32.totalorder %s36, 0
      %p204 = por %p202, %p203
      %p205 = scmp.ne.s32.totalorder %s193, %s194
      %p206 = scmp.eq.s32.totalorder %s37, 7
      %p207 = por %p205, %p206
      %p209 = scmp.ne.s32.totalorder %s194, %s208
      %p210 = scmp.eq.s32.totalorder %s37, 0
      %p211 = por %p209, %p210
      %s213 = sadd.s32 %s212, 1
      %p216 = scmp.eq.s32.totalorder %s31, 7
      %p217 = scmp.ne.s32.totalorder %s212, %s214
      %p218 = scmp.eq.s32.totalorder %s31, 0
      %p219 = por %p217, %p218
      %p220 = scmp.ne.s32.totalorder %s212, %s214
      %p221 = scmp.eq.s32.totalorder %s36, 7
      %p222 = por %p220, %p221
      %p223 = scmp.ne.s32.totalorder %s214, %s215
      %p224 = scmp.eq.s32.totalorder %s36, 0
      %p225 = por %p223, %p224
      %p226 = scmp.ne.s32.totalorder %s214, %s215
      %p227 = scmp.eq.s32.totalorder %s37, 7
      %p228 = por %p226, %p227
      %p230 = scmp.ne.s32.totalorder %s215, %s229
      %p231 = scmp.eq.s32.totalorder %s37, 0
      %p232 = por %p230, %p231
      %s234 = sadd.s32 %s233, 1
      %p237 = scmp.eq.s32.totalorder %s31, 7
      %p238 = scmp.ne.s32.totalorder %s233, %s235
      %p239 = scmp.eq.s32.totalorder %s31, 0
      %p240 = por %p238, %p239
      %p241 = scmp.ne.s32.totalorder %s233, %s235
      %p242 = scmp.eq.s32.totalorder %s36, 7
      %p243 = por %p241, %p242
      %p244 = scmp.ne.s32.totalorder %s235, %s236
      %p245 = scmp.eq.s32.totalorder %s36, 0
      %p246 = por %p244, %p245
      %p247 = scmp.ne.s32.totalorder %s235, %s236
      %p248 = scmp.eq.s32.totalorder %s37, 7
      %p249 = por %p247, %p248
      %p251 = scmp.ne.s32.totalorder %s236, %s250
      %p252 = scmp.eq.s32.totalorder %s37, 0
      %p253 = por %p251, %p252
      %s255 = sadd.s32 %s254, 1
      %p258 = scmp.eq.s32.totalorder %s31, 7
      %p259 = scmp.ne.s32.totalorder %s254, %s256
      %p260 = scmp.eq.s32.totalorder %s31, 0
      %p261 = por %p259, %p260
      %p262 = scmp.ne.s32.totalorder %s254, %s256
      %p263 = scmp.eq.s32.totalorder %s36, 7
      %p264 = por %p262, %p263
      %p265 = scmp.ne.s32.totalorder %s256, %s257
      %p266 = scmp.eq.s32.totalorder %s36, 0
      %p267 = por %p265, %p266
      %p268 = scmp.ne.s32.totalorder %s256, %s257
      %p269 = scmp.eq.s32.totalorder %s37, 7
      %p270 = por %p268, %p269
      %p272 = scmp.ne.s32.totalorder %s257, %s271
      %p273 = scmp.eq.s32.totalorder %s37, 0
      %p274 = por %p272, %p273
      %s276 = sadd.s32 %s275, 1
      %p279 = scmp.eq.s32.totalorder %s31, 7
      %p280 = scmp.ne.s32.totalorder %s275, %s277
      %p281 = scmp.eq.s32.totalorder %s31, 0
      %p282 = por %p280, %p281
      %p283 = scmp.ne.s32.totalorder %s275, %s277
      %p284 = scmp.eq.s32.totalorder %s36, 7
      %p285 = por %p283, %p284
      %p286 = scmp.ne.s32.totalorder %s277, %s278
      %p287 = scmp.eq.s32.totalorder %s36, 0
      %p288 = por %p286, %p287
      %p289 = scmp.ne.s32.totalorder %s277, %s278
      %p290 = scmp.eq.s32.totalorder %s37, 7
      %p291 = por %p289, %p290
      %p293 = scmp.ne.s32.totalorder %s278, %s292
      %p294 = scmp.eq.s32.totalorder %s37, 0
      %p295 = por %p293, %p294
      %s297 = sadd.s32 %s296, 1
      %p300 = scmp.eq.s32.totalorder %s31, 7
      %p301 = scmp.ne.s32.totalorder %s296, %s298
      %p302 = scmp.eq.s32.totalorder %s31, 0
      %p303 = por %p301, %p302
      %p304 = scmp.ne.s32.totalorder %s296, %s298
      %p305 = scmp.eq.s32.totalorder %s36, 7
      %p306 = por %p304, %p305
      %p307 = scmp.ne.s32.totalorder %s298, %s299
      %p308 = scmp.eq.s32.totalorder %s36, 0
      %p309 = por %p307, %p308
      %p310 = scmp.ne.s32.totalorder %s298, %s299
      %p311 = scmp.eq.s32.totalorder %s37, 7
      %p312 = por %p310, %p311
      %p314 = scmp.ne.s32.totalorder %s299, %s313
      %p315 = scmp.eq.s32.totalorder %s37, 0
      %p316 = por %p314, %p315
      %s317 = ssub.s32 %s31, %s38
      %p318 = scmp.eq.s32.totalorder %s317, 0
      %s320 = sadd.s32 %s319, 1
      %s321 = scalar_select %p318, %s319, %s320
      %p324 = pneg %p318
      %p325 = scmp.eq.s32.totalorder %s31, 7
      %p326 = por %p324, %p325
      %p327 = scmp.ne.s32.totalorder %s319, %s322
      %p328 = scmp.eq.s32.totalorder %s31, 0
      %p329 = por %p327, %p328
      %p330 = scmp.ne.s32.totalorder %s319, %s322
      %p331 = scmp.eq.s32.totalorder %s36, 7
      %p332 = por %p330, %p331
      %p333 = scmp.ne.s32.totalorder %s322, %s323
      %p334 = scmp.eq.s32.totalorder %s36, 0
      %p335 = por %p333, %p334
      %p336 = scmp.ne.s32.totalorder %s322, %s323
      %p337 = scmp.eq.s32.totalorder %s37, 7
      %p338 = por %p336, %p337
      %p340 = scmp.ne.s32.totalorder %s323, %s339
      %p341 = scmp.eq.s32.totalorder %s37, 0
      %p342 = por %p340, %p341
      %s343 = ssub.s32 %s31, %s38
      %p344 = scmp.eq.s32.totalorder %s343, 0
      %s346 = sadd.s32 %s345, 1
      %s347 = scalar_select %p344, %s345, %s346
      %p350 = pneg %p344
      %p351 = scmp.eq.s32.totalorder %s31, 7
      %p352 = por %p350, %p351
      %p353 = scmp.ne.s32.totalorder %s345, %s348
      %p354 = scmp.eq.s32.totalorder %s31, 0
      %p355 = por %p353, %p354
      %p356 = scmp.ne.s32.totalorder %s345, %s348
      %p357 = scmp.eq.s32.totalorder %s36, 7
      %p358 = por %p356, %p357
      %p359 = scmp.ne.s32.totalorder %s348, %s349
      %p360 = scmp.eq.s32.totalorder %s36, 0
      %p361 = por %p359, %p360
      %p362 = scmp.ne.s32.totalorder %s348, %s349
      %p363 = scmp.eq.s32.totalorder %s37, 7
      %p364 = por %p362, %p363
      %p366 = scmp.ne.s32.totalorder %s349, %s365
      %p367 = scmp.eq.s32.totalorder %s37, 0
      %p368 = por %p366, %p367
      %s369 = ssub.s32 %s31, %s38
      %p370 = scmp.eq.s32.totalorder %s369, 0
      %s372 = sadd.s32 %s371, 1
      %s373 = scalar_select %p370, %s371, %s372
      %p376 = pneg %p370
      %p377 = scmp.eq.s32.totalorder %s31, 7
      %p378 = por %p376, %p377
      %p379 = scmp.ne.s32.totalorder %s371, %s374
      %p380 = scmp.eq.s32.totalorder %s31, 0
      %p381 = por %p379, %p380
      %p382 = scmp.ne.s32.totalorder %s371, %s374
      %p383 = scmp.eq.s32.totalorder %s36, 7
      %p384 = por %p382, %p383
      %p385 = scmp.ne.s32.totalorder %s374, %s375
      %p386 = scmp.eq.s32.totalorder %s36, 0
      %p387 = por %p385, %p386
      %p388 = scmp.ne.s32.totalorder %s374, %s375
      %p389 = scmp.eq.s32.totalorder %s37, 7
      %p390 = por %p388, %p389
      %p392 = scmp.ne.s32.totalorder %s375, %s391
      %p393 = scmp.eq.s32.totalorder %s37, 0
      %p394 = por %p392, %p393
      %p395 = scmp.le.s32.totalorder 1, %s31
      %p396 = scmp.lt.s32.totalorder %s31, 9
      %p397 = pnand %p395, %p396
      %p398 = pneg %p397
      // Predicated region
      $region9: #{tpu_custom_call.1} parent=5 // pred_check
        _
      $region10: #{tpu_custom_call.1} parent=5 // pred_check_branch
        %400 = sbr.rel (%p397) target = $region12
      $region11: #{tpu_custom_call.1} parent=5 // pred_region
        %s401 = ssub.s32 %s31, 1
        // Predicated region
        $region13: #{tpu_custom_call.1} parent=11 // pred_check
          %p402 = pneg %p78
        $region14: #{tpu_custom_call.1} parent=11 // pred_check_branch
          %404 = sbr.rel (%p402) target = $region16
        $region15: #{tpu_custom_call.1} parent=11 // pred_region
          _
        $region16: #{tpu_custom_call.1} parent=11 // pred_fallthru
          _
        // Predicated region
        $region17: #{tpu_custom_call.1} parent=11 // pred_check
          %p405 = pneg %p99
        $region18: #{tpu_custom_call.1} parent=11 // pred_check_branch
          %407 = sbr.rel (%p405) target = $region20
        $region19: #{tpu_custom_call.1} parent=11 // pred_region
          _
        $region20: #{tpu_custom_call.1} parent=11 // pred_fallthru
          _
        // Predicated region
        $region21: #{tpu_custom_call.1} parent=11 // pred_check
          %p408 = pneg %p120
        $region22: #{tpu_custom_call.1} parent=11 // pred_check_branch
          %410 = sbr.rel (%p408) target = $region24
        $region23: #{tpu_custom_call.1} parent=11 // pred_region
          _
        $region24: #{tpu_custom_call.1} parent=11 // pred_fallthru
          _
        // Predicated region
        $region25: #{tpu_custom_call.1} parent=11 // pred_check
          %p411 = pneg %p141
        $region26: #{tpu_custom_call.1} parent=11 // pred_check_branch
          %413 = sbr.rel (%p411) target = $region28
        $region27: #{tpu_custom_call.1} parent=11 // pred_region
          _
        $region28: #{tpu_custom_call.1} parent=11 // pred_fallthru
          _
        // Predicated region
        $region29: #{tpu_custom_call.1} parent=11 // pred_check
          %p414 = pneg %p162
        $region30: #{tpu_custom_call.1} parent=11 // pred_check_branch
          %416 = sbr.rel (%p414) target = $region32
        $region31: #{tpu_custom_call.1} parent=11 // pred_region
          _
        $region32: #{tpu_custom_call.1} parent=11 // pred_fallthru
          _
        // Predicated region
        $region33: #{tpu_custom_call.1} parent=11 // pred_check
          %p417 = pneg %p183
        $region34: #{tpu_custom_call.1} parent=11 // pred_check_branch
          %419 = sbr.rel (%p417) target = $region36
        $region35: #{tpu_custom_call.1} parent=11 // pred_region
          _
        $region36: #{tpu_custom_call.1} parent=11 // pred_fallthru
          _
        // Predicated region
        $region37: #{tpu_custom_call.1} parent=11 // pred_check
          %p420 = pneg %p204
        $region38: #{tpu_custom_call.1} parent=11 // pred_check_branch
          %422 = sbr.rel (%p420) target = $region40
        $region39: #{tpu_custom_call.1} parent=11 // pred_region
          _
        $region40: #{tpu_custom_call.1} parent=11 // pred_fallthru
          _
        // Predicated region
        $region41: #{tpu_custom_call.1} parent=11 // pred_check
          %p423 = pneg %p225
        $region42: #{tpu_custom_call.1} parent=11 // pred_check_branch
          %425 = sbr.rel (%p423) target = $region44
        $region43: #{tpu_custom_call.1} parent=11 // pred_region
          _
        $region44: #{tpu_custom_call.1} parent=11 // pred_fallthru
          _
        // Predicated region
        $region45: #{tpu_custom_call.1} parent=11 // pred_check
          %p426 = pneg %p246
        $region46: #{tpu_custom_call.1} parent=11 // pred_check_branch
          %428 = sbr.rel (%p426) target = $region48
        $region47: #{tpu_custom_call.1} parent=11 // pred_region
          _
        $region48: #{tpu_custom_call.1} parent=11 // pred_fallthru
          _
        // Predicated region
        $region49: #{tpu_custom_call.1} parent=11 // pred_check
          %p429 = pneg %p267
        $region50: #{tpu_custom_call.1} parent=11 // pred_check_branch
          %431 = sbr.rel (%p429) target = $region52
        $region51: #{tpu_custom_call.1} parent=11 // pred_region
          _
        $region52: #{tpu_custom_call.1} parent=11 // pred_fallthru
          _
        // Predicated region
        $region53: #{tpu_custom_call.1} parent=11 // pred_check
          %p432 = pneg %p288
        $region54: #{tpu_custom_call.1} parent=11 // pred_check_branch
          %434 = sbr.rel (%p432) target = $region56
        $region55: #{tpu_custom_call.1} parent=11 // pred_region
          _
        $region56: #{tpu_custom_call.1} parent=11 // pred_fallthru
          _
        // Predicated region
        $region57: #{tpu_custom_call.1} parent=11 // pred_check
          %p435 = pneg %p309
        $region58: #{tpu_custom_call.1} parent=11 // pred_check_branch
          %437 = sbr.rel (%p435) target = $region60
        $region59: #{tpu_custom_call.1} parent=11 // pred_region
          _
        $region60: #{tpu_custom_call.1} parent=11 // pred_fallthru
          _
      $region12: #{tpu_custom_call.1} parent=5 // pred_fallthru
        _
      %p438 = scmp.lt.s32.totalorder %s31, 8
      // Predicated region
      $region61: #{tpu_custom_call.1} parent=5 // pred_check
        %p439 = pneg %p438
      $region62: #{tpu_custom_call.1} parent=5 // pred_check_branch
        %441 = sbr.rel (%p439) target = $region64
      $region63: #{tpu_custom_call.1} parent=5 // pred_region
        // Predicated region
        $region65: #{tpu_custom_call.1} parent=63 // pred_check
          %p442 = pneg %p51
        $region66: #{tpu_custom_call.1} parent=63 // pred_check_branch
          %444 = sbr.rel (%p442) target = $region68
        $region67: #{tpu_custom_call.1} parent=63 // pred_region
          %s445 = sand.u32 %s41, 1
          %s446 = scalar_lea.sflag [#allocation3], %s445
          %s447 = sand.u32 %s41, 1
          %s448 = smul.addr %s447, 32
          %s449 = scalar_lea.vmem [#allocation2], %s448
          %s451 = ssub.s32 512, 512
          %452 = vsyncadd %s446, %s451
          %s453 = smul.addr %s31, 8
          %s454 = smul.addr %s453, 64
          %s455 = scalar_lea.hbm %s0, %s454
          %s457 = sshll.u32 %s449, 4
          %s458 = int_to_ptr.vmem [resolvable:$true] %s457
          %460 = dma.hbm_to_vmem [thread:$0]  %s455, 512, %s458, %s446
        $region68: #{tpu_custom_call.1} parent=63 // pred_fallthru
          _
      $region64: #{tpu_custom_call.1} parent=5 // pred_fallthru
        _
      %p461 = scmp.le.s32.totalorder 1, %s31
      %p462 = scmp.lt.s32.totalorder %s31, 9
      %p463 = pnand %p461, %p462
      %p464 = pneg %p463
      // Predicated region
      $region69: #{tpu_custom_call.1} parent=5 // pred_check
        _
      $region70: #{tpu_custom_call.1} parent=5 // pred_check_branch
        %466 = sbr.rel (%p463) target = $region72
      $region71: #{tpu_custom_call.1} parent=5 // pred_region
        %s467 = ssub.s32 %s31, 1
        %s468 = sand.u32 %s44, 1
        %s469 = scalar_lea.sflag [#allocation3], %s468
        %s470 = sand.u32 %s44, 1
        %s471 = smul.addr %s470, 32
        %s472 = scalar_lea.vmem [#allocation2], %s471
        // Predicated region
        $region73: #{tpu_custom_call.1} parent=71 // pred_check
          %p473 = pneg %p57
        $region74: #{tpu_custom_call.1} parent=71 // pred_check_branch
          %475 = sbr.rel (%p473) target = $region76
        $region75: #{tpu_custom_call.1} parent=71 // pred_region
          %476 = dma.done %s469, 512
        $region76: #{tpu_custom_call.1} parent=71 // pred_fallthru
          _
        %s477 = sand.u32 %s44, 1
        %s478 = scalar_lea.sflag [#allocation3], %s477
        %s479 = sand.u32 %s44, 1
        %s480 = smul.addr %s479, 32
        %s481 = scalar_lea.vmem [#allocation2], %s480
        %p482 = pneg %p57
        %p483 = pneg %p54
        %p484 = pneg %p78
        %p485 = pneg %p75
        %p486 = pneg %p99
        %p487 = pneg %p96
        %p488 = pneg %p120
        %p489 = pneg %p117
        %p490 = pneg %p141
        %p491 = pneg %p138
        %p492 = pneg %p162
        %p493 = pneg %p159
        %p494 = pneg %p183
        %p495 = pneg %p180
        %p496 = pneg %p204
        %p497 = pneg %p201
        %p498 = pneg %p225
        %p499 = pneg %p222
        %p500 = pneg %p246
        %p501 = pneg %p243
        %p502 = pneg %p267
        %p503 = pneg %p264
        %p504 = pneg %p288
        %p505 = pneg %p285
        %p506 = pneg %p309
        %p507 = pneg %p306
        %p508 = pneg %p335
        %p509 = pneg %p332
        %s510 = sand.u32 %s322, 1
        %s511 = scalar_lea.sflag [#allocation4], %s510
        %s512 = sand.u32 %s322, 1
        %s513 = smul.addr %s512, 32
        %s514 = scalar_lea.vmem [#allocation5], %s513
        %p515 = pneg %p361
        %p516 = pneg %p358
        %s517 = sand.u32 %s36, 1
        %s518 = scalar_lea.sflag [#allocation7], %s517
        %s519 = sand.u32 %s348, 1
        %s520 = smul.addr %s519, 28
        %s521 = scalar_lea.vmem [#allocation6], %s520
        %p522 = pneg %p387
        %p523 = pneg %p384
        %s524 = sand.u32 %s36, 1
        %s525 = scalar_lea.sflag [#allocation7], %s524
        %s526 = sand.u32 %s374, 1
        %s527 = smul.addr %s526, 28
        %s528 = scalar_lea.vmem [#allocation8], %s527
        %v529 = vld [vmem:[%s472] sm:$0xff]
        %v530 = vld [vmem:[%s472 + $0x8] sm:$0xff]
        %v531 = vld [vmem:[%s472 + $0x10] sm:$0xff]
        %v532 = vld [vmem:[%s472 + $0x18] sm:$0xff]
        %v533 = vld [vmem:[%s1] sm:$0xf]
        %535 = vrot.lane.b32.xlu0 %v533, 124
        %v536 = vpop.permute.xlu0 %535
        %v541 = vcombine.high %v529, %v529
        %v542 = vcombine.high %v530, %v530
        %v543 = vcombine.high %v531, %v531
        %v544 = vcombine.high %v532, %v532
        %545 = vrot.lane.b32.xlu0 %v529, 127
        %v546 = vpop.permute.xlu0 %545
        %547 = vrot.lane.b32.xlu0 %v541, 127
        %v548 = vpop.permute.xlu0 %547
        %549 = vrot.lane.b32.xlu0 %v530, 127
        %v550 = vpop.permute.xlu0 %549
        %551 = vrot.lane.b32.xlu0 %v542, 127
        %v552 = vpop.permute.xlu0 %551
        %553 = vrot.lane.b32.xlu0 %v531, 127
        %v554 = vpop.permute.xlu0 %553
        %555 = vrot.lane.b32.xlu0 %v543, 127
        %v556 = vpop.permute.xlu0 %555
        %557 = vrot.lane.b32.xlu0 %v532, 127
        %v558 = vpop.permute.xlu0 %557
        %559 = vrot.lane.b32.xlu0 %v544, 127
        %v560 = vpop.permute.xlu0 %559
        %vm561 = vcmask 1039360
        %v562 = vsel %vm561, %v546, %v548
        %v563 = vsel %vm561, %v548, %v550
        %v564 = vsel %vm561, %v550, %v552
        %v565 = vsel %vm561, %v552, %v554
        %v566 = vsel %vm561, %v554, %v556
        %v567 = vsel %vm561, %v556, %v558
        %v568 = vsel %vm561, %v558, %v560
        %vm569 = vcmask 31744
        %v570 = vsel %vm569, %v536, 0
        %vm572 = vcmask 1043456
        %v573 = vsel %vm572, %v562, 0
        %v575 = vsel %vm572, %v563, 0
        %v577 = vsel %vm572, %v564, 0
        %v579 = vsel %vm572, %v565, 0
        %v581 = vsel %vm572, %v566, 0
        %v583 = vsel %vm572, %v567, 0
        %v585 = vsel %vm572, %v568, 0
        %v587 = vsel %vm572, %v560, 0
        %589 = vmatprep.subr.mxu0 0.0
        %590 = vmatpush1.msra.mxu0 0.0
        %591 = vmatprep.subr.mxu0 0.0
        %592 = vmatpush1.msra.mxu0 0.0
        %593 = vmatprep.subr.mxu0 0.0
        %594 = vmatpush1.msra.mxu0 0.0
        %595 = vmatprep.subr.mxu0 0.0
        %596 = vmatpush1.msra.mxu0 0.0
        %597 = vmatprep.subr.mxu0 0.0
        %598 = vmatpush1.msra.mxu0 0.0
        %599 = vmatprep.subr.mxu0 0.0
        %600 = vmatpush1.msra.mxu0 0.0
        %601 = vmatprep.subr.mxu0 0.0
        %602 = vmatpush1.msra.mxu0 0.0
        %603 = vmatprep.subr.mxu0 0.0
        %604 = vmatpush1.msra.mxu0 0.0
        %605 = vmatprep.subr.mxu0 0.0
        %606 = vmatpush1.msra.mxu0 0.0
        %607 = vmatprep.subr.mxu0 0.0
        %608 = vmatpush1.msra.mxu0 0.0
        %609 = vmatprep.subr.mxu0 0.0
        %610 = vmatpush1.msra.mxu0 0.0
        %611 = vmatprep.subr.mxu0 0.0
        %612 = vmatpush1.msra.mxu0 0.0
        %613 = vmatprep.subr.mxu0 0.0
        %614 = vmatpush1.msra.mxu0 0.0
        %615 = vmatprep.subr.mxu0 0.0
        %616 = vmatpush1.msra.mxu0 0.0
        %617 = vmatprep.subr.mxu0 0.0
        %618 = vmatpush1.msra.mxu0 0.0
        %619 = vmatprep.subr.mxu0 %v575
        %620 = vmatpush1.msra.mxu0 %v573
        %621 = vmatprep.subr.mxu0 0.0
        %622 = vmatpush2.msra.mxu0 0.0
        %623 = vmatprep.subr.mxu0 0.0
        %624 = vmatpush2.msra.mxu0 0.0
        %625 = vmatprep.subr.mxu0 0.0
        %626 = vmatpush2.msra.mxu0 0.0
        %627 = vmatprep.subr.mxu0 0.0
        %628 = vmatpush2.msra.mxu0 0.0
        %629 = vmatprep.subr.mxu0 0.0
        %630 = vmatpush2.msra.mxu0 0.0
        %631 = vmatprep.subr.mxu0 0.0
        %632 = vmatpush2.msra.mxu0 0.0
        %633 = vmatprep.subr.mxu0 0.0
        %634 = vmatpush2.msra.mxu0 0.0
        %635 = vmatprep.subr.mxu0 0.0
        %636 = vmatpush2.msra.mxu0 0.0
        %637 = vmatprep.subr.mxu0 0.0
        %638 = vmatpush2.msra.mxu0 0.0
        %639 = vmatprep.subr.mxu0 0.0
        %640 = vmatpush2.msra.mxu0 0.0
        %641 = vmatprep.subr.mxu0 0.0
        %642 = vmatpush2.msra.mxu0 0.0
        %643 = vmatprep.subr.mxu0 0.0
        %644 = vmatpush2.msra.mxu0 0.0
        %645 = vmatprep.subr.mxu0 0.0
        %646 = vmatpush2.msra.mxu0 0.0
        %647 = vmatprep.subr.mxu0 0.0
        %648 = vmatpush2.msra.mxu0 0.0
        %649 = vmatprep.subr.mxu0 0.0
        %650 = vmatpush2.msra.mxu0 0.0
        %651 = vmatprep.subr.mxu0 0.0
        %652 = vmatpush2.msra.mxu0 0.0
        %653 = vmatprep.mubr.f32.mxu0 0.0
        %654 = vmatmul.mubr.f32.gmra.mxu0 %v570
        %v655 = vpop.f32.mrf.mxu0
        %v656 = vadd.f32 0.0, %v655
        %v657 = vpop.f32.mrf.mxu0
        %v658 = vadd.f32 0.0, %v657
        %659 = vdwg.mxu0
        %660 = vmatprep.subr.mxu0 0.0
        %661 = vmatpush1.msra.mxu0 0.0
        %662 = vmatprep.subr.mxu0 0.0
        %663 = vmatpush1.msra.mxu0 0.0
        %664 = vmatprep.subr.mxu0 0.0
        %665 = vmatpush1.msra.mxu0 0.0
        %666 = vmatprep.subr.mxu0 0.0
        %667 = vmatpush1.msra.mxu0 0.0
        %668 = vmatprep.subr.mxu0 0.0
        %669 = vmatpush1.msra.mxu0 0.0
        %670 = vmatprep.subr.mxu0 0.0
        %671 = vmatpush1.msra.mxu0 0.0
        %672 = vmatprep.subr.mxu0 0.0
        %673 = vmatpush1.msra.mxu0 0.0
        %674 = vmatprep.subr.mxu0 0.0
        %675 = vmatpush1.msra.mxu0 0.0
        %676 = vmatprep.subr.mxu0 0.0
        %677 = vmatpush1.msra.mxu0 0.0
        %678 = vmatprep.subr.mxu0 0.0
        %679 = vmatpush1.msra.mxu0 0.0
        %680 = vmatprep.subr.mxu0 0.0
        %681 = vmatpush1.msra.mxu0 0.0
        %682 = vmatprep.subr.mxu0 0.0
        %683 = vmatpush1.msra.mxu0 0.0
        %684 = vmatprep.subr.mxu0 0.0
        %685 = vmatpush1.msra.mxu0 0.0
        %686 = vmatprep.subr.mxu0 0.0
        %687 = vmatpush1.msra.mxu0 0.0
        %688 = vmatprep.subr.mxu0 0.0
        %689 = vmatpush1.msra.mxu0 0.0
        %690 = vmatprep.subr.mxu0 %v579
        %691 = vmatpush1.msra.mxu0 %v577
        %692 = vmatprep.subr.mxu0 0.0
        %693 = vmatpush2.msra.mxu0 0.0
        %694 = vmatprep.subr.mxu0 0.0
        %695 = vmatpush2.msra.mxu0 0.0
        %696 = vmatprep.subr.mxu0 0.0
        %697 = vmatpush2.msra.mxu0 0.0
        %698 = vmatprep.subr.mxu0 0.0
        %699 = vmatpush2.msra.mxu0 0.0
        %700 = vmatprep.subr.mxu0 0.0
        %701 = vmatpush2.msra.mxu0 0.0
        %702 = vmatprep.subr.mxu0 0.0
        %703 = vmatpush2.msra.mxu0 0.0
        %704 = vmatprep.subr.mxu0 0.0
        %705 = vmatpush2.msra.mxu0 0.0
        %706 = vmatprep.subr.mxu0 0.0
        %707 = vmatpush2.msra.mxu0 0.0
        %708 = vmatprep.subr.mxu0 0.0
        %709 = vmatpush2.msra.mxu0 0.0
        %710 = vmatprep.subr.mxu0 0.0
        %711 = vmatpush2.msra.mxu0 0.0
        %712 = vmatprep.subr.mxu0 0.0
        %713 = vmatpush2.msra.mxu0 0.0
        %714 = vmatprep.subr.mxu0 0.0
        %715 = vmatpush2.msra.mxu0 0.0
        %716 = vmatprep.subr.mxu0 0.0
        %717 = vmatpush2.msra.mxu0 0.0
        %718 = vmatprep.subr.mxu0 0.0
        %719 = vmatpush2.msra.mxu0 0.0
        %720 = vmatprep.subr.mxu0 0.0
        %721 = vmatpush2.msra.mxu0 0.0
        %722 = vmatprep.subr.mxu0 0.0
        %723 = vmatpush2.msra.mxu0 0.0
        %724 = vmatprep.mubr.f32.mxu0 0.0
        %725 = vmatmul.mubr.f32.gmra.mxu0 %v570
        %v726 = vpop.f32.mrf.mxu0
        %v727 = vadd.f32 0.0, %v726
        %v728 = vpop.f32.mrf.mxu0
        %v729 = vadd.f32 0.0, %v728
        %730 = vdwg.mxu0
        %731 = vmatprep.subr.mxu0 0.0
        %732 = vmatpush1.msra.mxu0 0.0
        %733 = vmatprep.subr.mxu0 0.0
        %734 = vmatpush1.msra.mxu0 0.0
        %735 = vmatprep.subr.mxu0 0.0
        %736 = vmatpush1.msra.mxu0 0.0
        %737 = vmatprep.subr.mxu0 0.0
        %738 = vmatpush1.msra.mxu0 0.0
        %739 = vmatprep.subr.mxu0 0.0
        %740 = vmatpush1.msra.mxu0 0.0
        %741 = vmatprep.subr.mxu0 0.0
        %742 = vmatpush1.msra.mxu0 0.0
        %743 = vmatprep.subr.mxu0 0.0
        %744 = vmatpush1.msra.mxu0 0.0
        %745 = vmatprep.subr.mxu0 0.0
        %746 = vmatpush1.msra.mxu0 0.0
        %747 = vmatprep.subr.mxu0 0.0
        %748 = vmatpush1.msra.mxu0 0.0
        %749 = vmatprep.subr.mxu0 0.0
        %750 = vmatpush1.msra.mxu0 0.0
        %751 = vmatprep.subr.mxu0 0.0
        %752 = vmatpush1.msra.mxu0 0.0
        %753 = vmatprep.subr.mxu0 0.0
        %754 = vmatpush1.msra.mxu0 0.0
        %755 = vmatprep.subr.mxu0 0.0
        %756 = vmatpush1.msra.mxu0 0.0
        %757 = vmatprep.subr.mxu0 0.0
        %758 = vmatpush1.msra.mxu0 0.0
        %759 = vmatprep.subr.mxu0 0.0
        %760 = vmatpush1.msra.mxu0 0.0
        %761 = vmatprep.subr.mxu0 %v583
        %762 = vmatpush1.msra.mxu0 %v581
        %763 = vmatprep.subr.mxu0 0.0
        %764 = vmatpush2.msra.mxu0 0.0
        %765 = vmatprep.subr.mxu0 0.0
        %766 = vmatpush2.msra.mxu0 0.0
        %767 = vmatprep.subr.mxu0 0.0
        %768 = vmatpush2.msra.mxu0 0.0
        %769 = vmatprep.subr.mxu0 0.0
        %770 = vmatpush2.msra.mxu0 0.0
        %771 = vmatprep.subr.mxu0 0.0
        %772 = vmatpush2.msra.mxu0 0.0
        %773 = vmatprep.subr.mxu0 0.0
        %774 = vmatpush2.msra.mxu0 0.0
        %775 = vmatprep.subr.mxu0 0.0
        %776 = vmatpush2.msra.mxu0 0.0
        %777 = vmatprep.subr.mxu0 0.0
        %778 = vmatpush2.msra.mxu0 0.0
        %779 = vmatprep.subr.mxu0 0.0
        %780 = vmatpush2.msra.mxu0 0.0
        %781 = vmatprep.subr.mxu0 0.0
        %782 = vmatpush2.msra.mxu0 0.0
        %783 = vmatprep.subr.mxu0 0.0
        %784 = vmatpush2.msra.mxu0 0.0
        %785 = vmatprep.subr.mxu0 0.0
        %786 = vmatpush2.msra.mxu0 0.0
        %787 = vmatprep.subr.mxu0 0.0
        %788 = vmatpush2.msra.mxu0 0.0
        %789 = vmatprep.subr.mxu0 0.0
        %790 = vmatpush2.msra.mxu0 0.0
        %791 = vmatprep.subr.mxu0 0.0
        %792 = vmatpush2.msra.mxu0 0.0
        %793 = vmatprep.subr.mxu0 0.0
        %794 = vmatpush2.msra.mxu0 0.0
        %795 = vmatprep.mubr.f32.mxu0 0.0
        %796 = vmatmul.mubr.f32.gmra.mxu0 %v570
        %v797 = vpop.f32.mrf.mxu0
        %v798 = vadd.f32 0.0, %v797
        %v799 = vpop.f32.mrf.mxu0
        %v800 = vadd.f32 0.0, %v799
        %801 = vdwg.mxu0
        %802 = vmatprep.subr.mxu0 0.0
        %803 = vmatpush1.msra.mxu0 0.0
        %804 = vmatprep.subr.mxu0 0.0
        %805 = vmatpush1.msra.mxu0 0.0
        %806 = vmatprep.subr.mxu0 0.0
        %807 = vmatpush1.msra.mxu0 0.0
        %808 = vmatprep.subr.mxu0 0.0
        %809 = vmatpush1.msra.mxu0 0.0
        %810 = vmatprep.subr.mxu0 0.0
        %811 = vmatpush1.msra.mxu0 0.0
        %812 = vmatprep.subr.mxu0 0.0
        %813 = vmatpush1.msra.mxu0 0.0
        %814 = vmatprep.subr.mxu0 0.0
        %815 = vmatpush1.msra.mxu0 0.0
        %816 = vmatprep.subr.mxu0 0.0
        %817 = vmatpush1.msra.mxu0 0.0
        %818 = vmatprep.subr.mxu0 0.0
        %819 = vmatpush1.msra.mxu0 0.0
        %820 = vmatprep.subr.mxu0 0.0
        %821 = vmatpush1.msra.mxu0 0.0
        %822 = vmatprep.subr.mxu0 0.0
        %823 = vmatpush1.msra.mxu0 0.0
        %824 = vmatprep.subr.mxu0 0.0
        %825 = vmatpush1.msra.mxu0 0.0
        %826 = vmatprep.subr.mxu0 0.0
        %827 = vmatpush1.msra.mxu0 0.0
        %828 = vmatprep.subr.mxu0 0.0
        %829 = vmatpush1.msra.mxu0 0.0
        %830 = vmatprep.subr.mxu0 0.0
        %831 = vmatpush1.msra.mxu0 0.0
        %832 = vmatprep.subr.mxu0 %v587
        %833 = vmatpush1.msra.mxu0 %v585
        %834 = vmatprep.subr.mxu0 0.0
        %835 = vmatpush2.msra.mxu0 0.0
        %836 = vmatprep.subr.mxu0 0.0
        %837 = vmatpush2.msra.mxu0 0.0
        %838 = vmatprep.subr.mxu0 0.0
        %839 = vmatpush2.msra.mxu0 0.0
        %840 = vmatprep.subr.mxu0 0.0
        %841 = vmatpush2.msra.mxu0 0.0
        %842 = vmatprep.subr.mxu0 0.0
        %843 = vmatpush2.msra.mxu0 0.0
        %844 = vmatprep.subr.mxu0 0.0
        %845 = vmatpush2.msra.mxu0 0.0
        %846 = vmatprep.subr.mxu0 0.0
        %847 = vmatpush2.msra.mxu0 0.0
        %848 = vmatprep.subr.mxu0 0.0
        %849 = vmatpush2.msra.mxu0 0.0
        %850 = vmatprep.subr.mxu0 0.0
        %851 = vmatpush2.msra.mxu0 0.0
        %852 = vmatprep.subr.mxu0 0.0
        %853 = vmatpush2.msra.mxu0 0.0
        %854 = vmatprep.subr.mxu0 0.0
        %855 = vmatpush2.msra.mxu0 0.0
        %856 = vmatprep.subr.mxu0 0.0
        %857 = vmatpush2.msra.mxu0 0.0
        %858 = vmatprep.subr.mxu0 0.0
        %859 = vmatpush2.msra.mxu0 0.0
        %860 = vmatprep.subr.mxu0 0.0
        %861 = vmatpush2.msra.mxu0 0.0
        %862 = vmatprep.subr.mxu0 0.0
        %863 = vmatpush2.msra.mxu0 0.0
        %864 = vmatprep.subr.mxu0 0.0
        %865 = vmatpush2.msra.mxu0 0.0
        %866 = vmatprep.mubr.f32.mxu0 0.0
        %867 = vmatmul.mubr.f32.gmra.mxu0 %v570
        %v868 = vpop.f32.mrf.mxu0
        %v869 = vadd.f32 0.0, %v868
        %v870 = vpop.f32.mrf.mxu0
        %v871 = vadd.f32 0.0, %v870
        %872 = vdwg.mxu0
        %v873 = vsel %vm569, %v533, 0
        %v875 = vsel %vm572, %v529, 0
        %v877 = vsel %vm572, %v541, 0
        %v879 = vsel %vm572, %v530, 0
        %v881 = vsel %vm572, %v542, 0
        %v883 = vsel %vm572, %v531, 0
        %v885 = vsel %vm572, %v543, 0
        %v887 = vsel %vm572, %v532, 0
        %v889 = vsel %vm572, %v544, 0
        %891 = vmatprep.subr.mxu0 0.0
        %892 = vmatpush1.msra.mxu0 0.0
        %893 = vmatprep.subr.mxu0 0.0
        %894 = vmatpush1.msra.mxu0 0.0
        %895 = vmatprep.subr.mxu0 0.0
        %896 = vmatpush1.msra.mxu0 0.0
        %897 = vmatprep.subr.mxu0 0.0
        %898 = vmatpush1.msra.mxu0 0.0
        %899 = vmatprep.subr.mxu0 0.0
        %900 = vmatpush1.msra.mxu0 0.0
        %901 = vmatprep.subr.mxu0 0.0
        %902 = vmatpush1.msra.mxu0 0.0
        %903 = vmatprep.subr.mxu0 0.0
        %904 = vmatpush1.msra.mxu0 0.0
        %905 = vmatprep.subr.mxu0 0.0
        %906 = vmatpush1.msra.mxu0 0.0
        %907 = vmatprep.subr.mxu0 0.0
        %908 = vmatpush1.msra.mxu0 0.0
        %909 = vmatprep.subr.mxu0 0.0
        %910 = vmatpush1.msra.mxu0 0.0
        %911 = vmatprep.subr.mxu0 0.0
        %912 = vmatpush1.msra.mxu0 0.0
        %913 = vmatprep.subr.mxu0 0.0
        %914 = vmatpush1.msra.mxu0 0.0
        %915 = vmatprep.subr.mxu0 0.0
        %916 = vmatpush1.msra.mxu0 0.0
        %917 = vmatprep.subr.mxu0 0.0
        %918 = vmatpush1.msra.mxu0 0.0
        %919 = vmatprep.subr.mxu0 0.0
        %920 = vmatpush1.msra.mxu0 0.0
        %921 = vmatprep.subr.mxu0 %v877
        %922 = vmatpush1.msra.mxu0 %v875
        %923 = vmatprep.subr.mxu0 0.0
        %924 = vmatpush2.msra.mxu0 0.0
        %925 = vmatprep.subr.mxu0 0.0
        %926 = vmatpush2.msra.mxu0 0.0
        %927 = vmatprep.subr.mxu0 0.0
        %928 = vmatpush2.msra.mxu0 0.0
        %929 = vmatprep.subr.mxu0 0.0
        %930 = vmatpush2.msra.mxu0 0.0
        %931 = vmatprep.subr.mxu0 0.0
        %932 = vmatpush2.msra.mxu0 0.0
        %933 = vmatprep.subr.mxu0 0.0
        %934 = vmatpush2.msra.mxu0 0.0
        %935 = vmatprep.subr.mxu0 0.0
        %936 = vmatpush2.msra.mxu0 0.0
        %937 = vmatprep.subr.mxu0 0.0
        %938 = vmatpush2.msra.mxu0 0.0
        %939 = vmatprep.subr.mxu0 0.0
        %940 = vmatpush2.msra.mxu0 0.0
        %941 = vmatprep.subr.mxu0 0.0
        %942 = vmatpush2.msra.mxu0 0.0
        %943 = vmatprep.subr.mxu0 0.0
        %944 = vmatpush2.msra.mxu0 0.0
        %945 = vmatprep.subr.mxu0 0.0
        %946 = vmatpush2.msra.mxu0 0.0
        %947 = vmatprep.subr.mxu0 0.0
        %948 = vmatpush2.msra.mxu0 0.0
        %949 = vmatprep.subr.mxu0 0.0
        %950 = vmatpush2.msra.mxu0 0.0
        %951 = vmatprep.subr.mxu0 0.0
        %952 = vmatpush2.msra.mxu0 0.0
        %953 = vmatprep.subr.mxu0 0.0
        %954 = vmatpush2.msra.mxu0 0.0
        %955 = vmatprep.mubr.f32.mxu0 0.0
        %956 = vmatmul.mubr.f32.gmra.mxu0 %v873
        %v957 = vpop.f32.mrf.mxu0
        %v958 = vadd.f32 %v656, %v957
        %v959 = vpop.f32.mrf.mxu0
        %v960 = vadd.f32 %v658, %v959
        %961 = vdwg.mxu0
        %962 = vmatprep.subr.mxu0 0.0
        %963 = vmatpush1.msra.mxu0 0.0
        %964 = vmatprep.subr.mxu0 0.0
        %965 = vmatpush1.msra.mxu0 0.0
        %966 = vmatprep.subr.mxu0 0.0
        %967 = vmatpush1.msra.mxu0 0.0
        %968 = vmatprep.subr.mxu0 0.0
        %969 = vmatpush1.msra.mxu0 0.0
        %970 = vmatprep.subr.mxu0 0.0
        %971 = vmatpush1.msra.mxu0 0.0
        %972 = vmatprep.subr.mxu0 0.0
        %973 = vmatpush1.msra.mxu0 0.0
        %974 = vmatprep.subr.mxu0 0.0
        %975 = vmatpush1.msra.mxu0 0.0
        %976 = vmatprep.subr.mxu0 0.0
        %977 = vmatpush1.msra.mxu0 0.0
        %978 = vmatprep.subr.mxu0 0.0
        %979 = vmatpush1.msra.mxu0 0.0
        %980 = vmatprep.subr.mxu0 0.0
        %981 = vmatpush1.msra.mxu0 0.0
        %982 = vmatprep.subr.mxu0 0.0
        %983 = vmatpush1.msra.mxu0 0.0
        %984 = vmatprep.subr.mxu0 0.0
        %985 = vmatpush1.msra.mxu0 0.0
        %986 = vmatprep.subr.mxu0 0.0
        %987 = vmatpush1.msra.mxu0 0.0
        %988 = vmatprep.subr.mxu0 0.0
        %989 = vmatpush1.msra.mxu0 0.0
        %990 = vmatprep.subr.mxu0 0.0
        %991 = vmatpush1.msra.mxu0 0.0
        %992 = vmatprep.subr.mxu0 %v881
        %993 = vmatpush1.msra.mxu0 %v879
        %994 = vmatprep.subr.mxu0 0.0
        %995 = vmatpush2.msra.mxu0 0.0
        %996 = vmatprep.subr.mxu0 0.0
        %997 = vmatpush2.msra.mxu0 0.0
        %998 = vmatprep.subr.mxu0 0.0
        %999 = vmatpush2.msra.mxu0 0.0
        %1000 = vmatprep.subr.mxu0 0.0
        %1001 = vmatpush2.msra.mxu0 0.0
        %1002 = vmatprep.subr.mxu0 0.0
        %1003 = vmatpush2.msra.mxu0 0.0
        %1004 = vmatprep.subr.mxu0 0.0
        %1005 = vmatpush2.msra.mxu0 0.0
        %1006 = vmatprep.subr.mxu0 0.0
        %1007 = vmatpush2.msra.mxu0 0.0
        %1008 = vmatprep.subr.mxu0 0.0
        %1009 = vmatpush2.msra.mxu0 0.0
        %1010 = vmatprep.subr.mxu0 0.0
        %1011 = vmatpush2.msra.mxu0 0.0
        %1012 = vmatprep.subr.mxu0 0.0
        %1013 = vmatpush2.msra.mxu0 0.0
        %1014 = vmatprep.subr.mxu0 0.0
        %1015 = vmatpush2.msra.mxu0 0.0
        %1016 = vmatprep.subr.mxu0 0.0
        %1017 = vmatpush2.msra.mxu0 0.0
        %1018 = vmatprep.subr.mxu0 0.0
        %1019 = vmatpush2.msra.mxu0 0.0
        %1020 = vmatprep.subr.mxu0 0.0
        %1021 = vmatpush2.msra.mxu0 0.0
        %1022 = vmatprep.subr.mxu0 0.0
        %1023 = vmatpush2.msra.mxu0 0.0
        %1024 = vmatprep.subr.mxu0 0.0
        %1025 = vmatpush2.msra.mxu0 0.0
        %1026 = vmatprep.mubr.f32.mxu0 0.0
        %1027 = vmatmul.mubr.f32.gmra.mxu0 %v873
        %v1028 = vpop.f32.mrf.mxu0
        %v1029 = vadd.f32 %v727, %v1028
        %v1030 = vpop.f32.mrf.mxu0
        %v1031 = vadd.f32 %v729, %v1030
        %1032 = vdwg.mxu0
        %1033 = vmatprep.subr.mxu0 0.0
        %1034 = vmatpush1.msra.mxu0 0.0
        %1035 = vmatprep.subr.mxu0 0.0
        %1036 = vmatpush1.msra.mxu0 0.0
        %1037 = vmatprep.subr.mxu0 0.0
        %1038 = vmatpush1.msra.mxu0 0.0
        %1039 = vmatprep.subr.mxu0 0.0
        %1040 = vmatpush1.msra.mxu0 0.0
        %1041 = vmatprep.subr.mxu0 0.0
        %1042 = vmatpush1.msra.mxu0 0.0
        %1043 = vmatprep.subr.mxu0 0.0
        %1044 = vmatpush1.msra.mxu0 0.0
        %1045 = vmatprep.subr.mxu0 0.0
        %1046 = vmatpush1.msra.mxu0 0.0
        %1047 = vmatprep.subr.mxu0 0.0
        %1048 = vmatpush1.msra.mxu0 0.0
        %1049 = vmatprep.subr.mxu0 0.0
        %1050 = vmatpush1.msra.mxu0 0.0
        %1051 = vmatprep.subr.mxu0 0.0
        %1052 = vmatpush1.msra.mxu0 0.0
        %1053 = vmatprep.subr.mxu0 0.0
        %1054 = vmatpush1.msra.mxu0 0.0
        %1055 = vmatprep.subr.mxu0 0.0
        %1056 = vmatpush1.msra.mxu0 0.0
        %1057 = vmatprep.subr.mxu0 0.0
        %1058 = vmatpush1.msra.mxu0 0.0
        %1059 = vmatprep.subr.mxu0 0.0
        %1060 = vmatpush1.msra.mxu0 0.0
        %1061 = vmatprep.subr.mxu0 0.0
        %1062 = vmatpush1.msra.mxu0 0.0
        %1063 = vmatprep.subr.mxu0 %v885
        %1064 = vmatpush1.msra.mxu0 %v883
        %1065 = vmatprep.subr.mxu0 0.0
        %1066 = vmatpush2.msra.mxu0 0.0
        %1067 = vmatprep.subr.mxu0 0.0
        %1068 = vmatpush2.msra.mxu0 0.0
        %1069 = vmatprep.subr.mxu0 0.0
        %1070 = vmatpush2.msra.mxu0 0.0
        %1071 = vmatprep.subr.mxu0 0.0
        %1072 = vmatpush2.msra.mxu0 0.0
        %1073 = vmatprep.subr.mxu0 0.0
        %1074 = vmatpush2.msra.mxu0 0.0
        %1075 = vmatprep.subr.mxu0 0.0
        %1076 = vmatpush2.msra.mxu0 0.0
        %1077 = vmatprep.subr.mxu0 0.0
        %1078 = vmatpush2.msra.mxu0 0.0
        %1079 = vmatprep.subr.mxu0 0.0
        %1080 = vmatpush2.msra.mxu0 0.0
        %1081 = vmatprep.subr.mxu0 0.0
        %1082 = vmatpush2.msra.mxu0 0.0
        %1083 = vmatprep.subr.mxu0 0.0
        %1084 = vmatpush2.msra.mxu0 0.0
        %1085 = vmatprep.subr.mxu0 0.0
        %1086 = vmatpush2.msra.mxu0 0.0
        %1087 = vmatprep.subr.mxu0 0.0
        %1088 = vmatpush2.msra.mxu0 0.0
        %1089 = vmatprep.subr.mxu0 0.0
        %1090 = vmatpush2.msra.mxu0 0.0
        %1091 = vmatprep.subr.mxu0 0.0
        %1092 = vmatpush2.msra.mxu0 0.0
        %1093 = vmatprep.subr.mxu0 0.0
        %1094 = vmatpush2.msra.mxu0 0.0
        %1095 = vmatprep.subr.mxu0 0.0
        %1096 = vmatpush2.msra.mxu0 0.0
        %1097 = vmatprep.mubr.f32.mxu0 0.0
        %1098 = vmatmul.mubr.f32.gmra.mxu0 %v873
        %v1099 = vpop.f32.mrf.mxu0
        %v1100 = vadd.f32 %v798, %v1099
        %v1101 = vpop.f32.mrf.mxu0
        %v1102 = vadd.f32 %v800, %v1101
        %1103 = vdwg.mxu0
        %1104 = vmatprep.subr.mxu0 0.0
        %1105 = vmatpush1.msra.mxu0 0.0
        %1106 = vmatprep.subr.mxu0 0.0
        %1107 = vmatpush1.msra.mxu0 0.0
        %1108 = vmatprep.subr.mxu0 0.0
        %1109 = vmatpush1.msra.mxu0 0.0
        %1110 = vmatprep.subr.mxu0 0.0
        %1111 = vmatpush1.msra.mxu0 0.0
        %1112 = vmatprep.subr.mxu0 0.0
        %1113 = vmatpush1.msra.mxu0 0.0
        %1114 = vmatprep.subr.mxu0 0.0
        %1115 = vmatpush1.msra.mxu0 0.0
        %1116 = vmatprep.subr.mxu0 0.0
        %1117 = vmatpush1.msra.mxu0 0.0
        %1118 = vmatprep.subr.mxu0 0.0
        %1119 = vmatpush1.msra.mxu0 0.0
        %1120 = vmatprep.subr.mxu0 0.0
        %1121 = vmatpush1.msra.mxu0 0.0
        %1122 = vmatprep.subr.mxu0 0.0
        %1123 = vmatpush1.msra.mxu0 0.0
        %1124 = vmatprep.subr.mxu0 0.0
        %1125 = vmatpush1.msra.mxu0 0.0
        %1126 = vmatprep.subr.mxu0 0.0
        %1127 = vmatpush1.msra.mxu0 0.0
        %1128 = vmatprep.subr.mxu0 0.0
        %1129 = vmatpush1.msra.mxu0 0.0
        %1130 = vmatprep.subr.mxu0 0.0
        %1131 = vmatpush1.msra.mxu0 0.0
        %1132 = vmatprep.subr.mxu0 0.0
        %1133 = vmatpush1.msra.mxu0 0.0
        %1134 = vmatprep.subr.mxu0 %v889
        %1135 = vmatpush1.msra.mxu0 %v887
        %1136 = vmatprep.subr.mxu0 0.0
        %1137 = vmatpush2.msra.mxu0 0.0
        %1138 = vmatprep.subr.mxu0 0.0
        %1139 = vmatpush2.msra.mxu0 0.0
        %1140 = vmatprep.subr.mxu0 0.0
        %1141 = vmatpush2.msra.mxu0 0.0
        %1142 = vmatprep.subr.mxu0 0.0
        %1143 = vmatpush2.msra.mxu0 0.0
        %1144 = vmatprep.subr.mxu0 0.0
        %1145 = vmatpush2.msra.mxu0 0.0
        %1146 = vmatprep.subr.mxu0 0.0
        %1147 = vmatpush2.msra.mxu0 0.0
        %1148 = vmatprep.subr.mxu0 0.0
        %1149 = vmatpush2.msra.mxu0 0.0
        %1150 = vmatprep.subr.mxu0 0.0
        %1151 = vmatpush2.msra.mxu0 0.0
        %1152 = vmatprep.subr.mxu0 0.0
        %1153 = vmatpush2.msra.mxu0 0.0
        %1154 = vmatprep.subr.mxu0 0.0
        %1155 = vmatpush2.msra.mxu0 0.0
        %1156 = vmatprep.subr.mxu0 0.0
        %1157 = vmatpush2.msra.mxu0 0.0
        %1158 = vmatprep.subr.mxu0 0.0
        %1159 = vmatpush2.msra.mxu0 0.0
        %1160 = vmatprep.subr.mxu0 0.0
        %1161 = vmatpush2.msra.mxu0 0.0
        %1162 = vmatprep.subr.mxu0 0.0
        %1163 = vmatpush2.msra.mxu0 0.0
        %1164 = vmatprep.subr.mxu0 0.0
        %1165 = vmatpush2.msra.mxu0 0.0
        %1166 = vmatprep.subr.mxu0 0.0
        %1167 = vmatpush2.msra.mxu0 0.0
        %1168 = vmatprep.mubr.f32.mxu0 0.0
        %1169 = vmatmul.mubr.f32.gmra.mxu0 %v873
        %v1170 = vpop.f32.mrf.mxu0
        %v1171 = vadd.f32 %v869, %v1170
        %v1172 = vpop.f32.mrf.mxu0
        %v1173 = vadd.f32 %v871, %v1172
        %1174 = vdwg.mxu0
        %v1175 = vld [vmem:[%s1] sm:$0xf]
        %1177 = vrot.lane.b32.xlu0 %v1175, 120
        %v1178 = vpop.permute.xlu0 %1177
        %1179 = vrot.lane.b32.xlu0 %v529, 96
        %v1180 = vpop.permute.xlu0 %1179
        %1181 = vrot.lane.b32.xlu0 %v541, 96
        %v1182 = vpop.permute.xlu0 %1181
        %1183 = vrot.lane.b32.xlu0 %v530, 96
        %v1184 = vpop.permute.xlu0 %1183
        %1185 = vrot.lane.b32.xlu0 %v542, 96
        %v1186 = vpop.permute.xlu0 %1185
        %1187 = vrot.lane.b32.xlu0 %v531, 96
        %v1188 = vpop.permute.xlu0 %1187
        %1189 = vrot.lane.b32.xlu0 %v543, 96
        %v1190 = vpop.permute.xlu0 %1189
        %1191 = vrot.lane.b32.xlu0 %v532, 96
        %v1192 = vpop.permute.xlu0 %1191
        %1193 = vrot.lane.b32.xlu0 %v544, 96
        %v1194 = vpop.permute.xlu0 %1193
        %vm1195 = vcmask 785408
        %v1196 = vsel %vm1195, %v1180, %v1182
        %v1197 = vsel %vm1195, %v1182, %v1184
        %v1198 = vsel %vm1195, %v1184, %v1186
        %v1199 = vsel %vm1195, %v1186, %v1188
        %v1200 = vsel %vm1195, %v1188, %v1190
        %v1201 = vsel %vm1195, %v1190, %v1192
        %v1202 = vsel %vm1195, %v1192, %v1194
        %v1203 = vsel %vm569, %v1178, 0
        %v1205 = vsel %vm572, %v1196, 0
        %v1207 = vsel %vm572, %v1197, 0
        %v1209 = vsel %vm572, %v1198, 0
        %v1211 = vsel %vm572, %v1199, 0
        %v1213 = vsel %vm572, %v1200, 0
        %v1215 = vsel %vm572, %v1201, 0
        %v1217 = vsel %vm572, %v1202, 0
        %v1219 = vsel %vm572, %v1194, 0
        %1221 = vmatprep.subr.mxu0 0.0
        %1222 = vmatpush1.msra.mxu0 0.0
        %1223 = vmatprep.subr.mxu0 0.0
        %1224 = vmatpush1.msra.mxu0 0.0
        %1225 = vmatprep.subr.mxu0 0.0
        %1226 = vmatpush1.msra.mxu0 0.0
        %1227 = vmatprep.subr.mxu0 0.0
        %1228 = vmatpush1.msra.mxu0 0.0
        %1229 = vmatprep.subr.mxu0 0.0
        %1230 = vmatpush1.msra.mxu0 0.0
        %1231 = vmatprep.subr.mxu0 0.0
        %1232 = vmatpush1.msra.mxu0 0.0
        %1233 = vmatprep.subr.mxu0 0.0
        %1234 = vmatpush1.msra.mxu0 0.0
        %1235 = vmatprep.subr.mxu0 0.0
        %1236 = vmatpush1.msra.mxu0 0.0
        %1237 = vmatprep.subr.mxu0 0.0
        %1238 = vmatpush1.msra.mxu0 0.0
        %1239 = vmatprep.subr.mxu0 0.0
        %1240 = vmatpush1.msra.mxu0 0.0
        %1241 = vmatprep.subr.mxu0 0.0
        %1242 = vmatpush1.msra.mxu0 0.0
        %1243 = vmatprep.subr.mxu0 0.0
        %1244 = vmatpush1.msra.mxu0 0.0
        %1245 = vmatprep.subr.mxu0 0.0
        %1246 = vmatpush1.msra.mxu0 0.0
        %1247 = vmatprep.subr.mxu0 0.0
        %1248 = vmatpush1.msra.mxu0 0.0
        %1249 = vmatprep.subr.mxu0 0.0
        %1250 = vmatpush1.msra.mxu0 0.0
        %1251 = vmatprep.subr.mxu0 %v1207
        %1252 = vmatpush1.msra.mxu0 %v1205
        %1253 = vmatprep.subr.mxu0 0.0
        %1254 = vmatpush2.msra.mxu0 0.0
        %1255 = vmatprep.subr.mxu0 0.0
        %1256 = vmatpush2.msra.mxu0 0.0
        %1257 = vmatprep.subr.mxu0 0.0
        %1258 = vmatpush2.msra.mxu0 0.0
        %1259 = vmatprep.subr.mxu0 0.0
        %1260 = vmatpush2.msra.mxu0 0.0
        %1261 = vmatprep.subr.mxu0 0.0
        %1262 = vmatpush2.msra.mxu0 0.0
        %1263 = vmatprep.subr.mxu0 0.0
        %1264 = vmatpush2.msra.mxu0 0.0
        %1265 = vmatprep.subr.mxu0 0.0
        %1266 = vmatpush2.msra.mxu0 0.0
        %1267 = vmatprep.subr.mxu0 0.0
        %1268 = vmatpush2.msra.mxu0 0.0
        %1269 = vmatprep.subr.mxu0 0.0
        %1270 = vmatpush2.msra.mxu0 0.0
        %1271 = vmatprep.subr.mxu0 0.0
        %1272 = vmatpush2.msra.mxu0 0.0
        %1273 = vmatprep.subr.mxu0 0.0
        %1274 = vmatpush2.msra.mxu0 0.0
        %1275 = vmatprep.subr.mxu0 0.0
        %1276 = vmatpush2.msra.mxu0 0.0
        %1277 = vmatprep.subr.mxu0 0.0
        %1278 = vmatpush2.msra.mxu0 0.0
        %1279 = vmatprep.subr.mxu0 0.0
        %1280 = vmatpush2.msra.mxu0 0.0
        %1281 = vmatprep.subr.mxu0 0.0
        %1282 = vmatpush2.msra.mxu0 0.0
        %1283 = vmatprep.subr.mxu0 0.0
        %1284 = vmatpush2.msra.mxu0 0.0
        %1285 = vmatprep.mubr.f32.mxu0 0.0
        %1286 = vmatmul.mubr.f32.gmra.mxu0 %v1203
        %v1287 = vpop.f32.mrf.mxu0
        %v1288 = vadd.f32 0.0, %v1287
        %v1289 = vpop.f32.mrf.mxu0
        %v1290 = vadd.f32 0.0, %v1289
        %1291 = vdwg.mxu0
        %1292 = vmatprep.subr.mxu0 0.0
        %1293 = vmatpush1.msra.mxu0 0.0
        %1294 = vmatprep.subr.mxu0 0.0
        %1295 = vmatpush1.msra.mxu0 0.0
        %1296 = vmatprep.subr.mxu0 0.0
        %1297 = vmatpush1.msra.mxu0 0.0
        %1298 = vmatprep.subr.mxu0 0.0
        %1299 = vmatpush1.msra.mxu0 0.0
        %1300 = vmatprep.subr.mxu0 0.0
        %1301 = vmatpush1.msra.mxu0 0.0
        %1302 = vmatprep.subr.mxu0 0.0
        %1303 = vmatpush1.msra.mxu0 0.0
        %1304 = vmatprep.subr.mxu0 0.0
        %1305 = vmatpush1.msra.mxu0 0.0
        %1306 = vmatprep.subr.mxu0 0.0
        %1307 = vmatpush1.msra.mxu0 0.0
        %1308 = vmatprep.subr.mxu0 0.0
        %1309 = vmatpush1.msra.mxu0 0.0
        %1310 = vmatprep.subr.mxu0 0.0
        %1311 = vmatpush1.msra.mxu0 0.0
        %1312 = vmatprep.subr.mxu0 0.0
        %1313 = vmatpush1.msra.mxu0 0.0
        %1314 = vmatprep.subr.mxu0 0.0
        %1315 = vmatpush1.msra.mxu0 0.0
        %1316 = vmatprep.subr.mxu0 0.0
        %1317 = vmatpush1.msra.mxu0 0.0
        %1318 = vmatprep.subr.mxu0 0.0
        %1319 = vmatpush1.msra.mxu0 0.0
        %1320 = vmatprep.subr.mxu0 0.0
        %1321 = vmatpush1.msra.mxu0 0.0
        %1322 = vmatprep.subr.mxu0 %v1211
        %1323 = vmatpush1.msra.mxu0 %v1209
        %1324 = vmatprep.subr.mxu0 0.0
        %1325 = vmatpush2.msra.mxu0 0.0
        %1326 = vmatprep.subr.mxu0 0.0
        %1327 = vmatpush2.msra.mxu0 0.0
        %1328 = vmatprep.subr.mxu0 0.0
        %1329 = vmatpush2.msra.mxu0 0.0
        %1330 = vmatprep.subr.mxu0 0.0
        %1331 = vmatpush2.msra.mxu0 0.0
        %1332 = vmatprep.subr.mxu0 0.0
        %1333 = vmatpush2.msra.mxu0 0.0
        %1334 = vmatprep.subr.mxu0 0.0
        %1335 = vmatpush2.msra.mxu0 0.0
        %1336 = vmatprep.subr.mxu0 0.0
        %1337 = vmatpush2.msra.mxu0 0.0
        %1338 = vmatprep.subr.mxu0 0.0
        %1339 = vmatpush2.msra.mxu0 0.0
        %1340 = vmatprep.subr.mxu0 0.0
        %1341 = vmatpush2.msra.mxu0 0.0
        %1342 = vmatprep.subr.mxu0 0.0
        %1343 = vmatpush2.msra.mxu0 0.0
        %1344 = vmatprep.subr.mxu0 0.0
        %1345 = vmatpush2.msra.mxu0 0.0
        %1346 = vmatprep.subr.mxu0 0.0
        %1347 = vmatpush2.msra.mxu0 0.0
        %1348 = vmatprep.subr.mxu0 0.0
        %1349 = vmatpush2.msra.mxu0 0.0
        %1350 = vmatprep.subr.mxu0 0.0
        %1351 = vmatpush2.msra.mxu0 0.0
        %1352 = vmatprep.subr.mxu0 0.0
        %1353 = vmatpush2.msra.mxu0 0.0
        %1354 = vmatprep.subr.mxu0 0.0
        %1355 = vmatpush2.msra.mxu0 0.0
        %1356 = vmatprep.mubr.f32.mxu0 0.0
        %1357 = vmatmul.mubr.f32.gmra.mxu0 %v1203
        %v1358 = vpop.f32.mrf.mxu0
        %v1359 = vadd.f32 0.0, %v1358
        %v1360 = vpop.f32.mrf.mxu0
        %v1361 = vadd.f32 0.0, %v1360
        %1362 = vdwg.mxu0
        %1363 = vmatprep.subr.mxu0 0.0
        %1364 = vmatpush1.msra.mxu0 0.0
        %1365 = vmatprep.subr.mxu0 0.0
        %1366 = vmatpush1.msra.mxu0 0.0
        %1367 = vmatprep.subr.mxu0 0.0
        %1368 = vmatpush1.msra.mxu0 0.0
        %1369 = vmatprep.subr.mxu0 0.0
        %1370 = vmatpush1.msra.mxu0 0.0
        %1371 = vmatprep.subr.mxu0 0.0
        %1372 = vmatpush1.msra.mxu0 0.0
        %1373 = vmatprep.subr.mxu0 0.0
        %1374 = vmatpush1.msra.mxu0 0.0
        %1375 = vmatprep.subr.mxu0 0.0
        %1376 = vmatpush1.msra.mxu0 0.0
        %1377 = vmatprep.subr.mxu0 0.0
        %1378 = vmatpush1.msra.mxu0 0.0
        %1379 = vmatprep.subr.mxu0 0.0
        %1380 = vmatpush1.msra.mxu0 0.0
        %1381 = vmatprep.subr.mxu0 0.0
        %1382 = vmatpush1.msra.mxu0 0.0
        %1383 = vmatprep.subr.mxu0 0.0
        %1384 = vmatpush1.msra.mxu0 0.0
        %1385 = vmatprep.subr.mxu0 0.0
        %1386 = vmatpush1.msra.mxu0 0.0
        %1387 = vmatprep.subr.mxu0 0.0
        %1388 = vmatpush1.msra.mxu0 0.0
        %1389 = vmatprep.subr.mxu0 0.0
        %1390 = vmatpush1.msra.mxu0 0.0
        %1391 = vmatprep.subr.mxu0 0.0
        %1392 = vmatpush1.msra.mxu0 0.0
        %1393 = vmatprep.subr.mxu0 %v1215
        %1394 = vmatpush1.msra.mxu0 %v1213
        %1395 = vmatprep.subr.mxu0 0.0
        %1396 = vmatpush2.msra.mxu0 0.0
        %1397 = vmatprep.subr.mxu0 0.0
        %1398 = vmatpush2.msra.mxu0 0.0
        %1399 = vmatprep.subr.mxu0 0.0
        %1400 = vmatpush2.msra.mxu0 0.0
        %1401 = vmatprep.subr.mxu0 0.0
        %1402 = vmatpush2.msra.mxu0 0.0
        %1403 = vmatprep.subr.mxu0 0.0
        %1404 = vmatpush2.msra.mxu0 0.0
        %1405 = vmatprep.subr.mxu0 0.0
        %1406 = vmatpush2.msra.mxu0 0.0
        %1407 = vmatprep.subr.mxu0 0.0
        %1408 = vmatpush2.msra.mxu0 0.0
        %1409 = vmatprep.subr.mxu0 0.0
        %1410 = vmatpush2.msra.mxu0 0.0
        %1411 = vmatprep.subr.mxu0 0.0
        %1412 = vmatpush2.msra.mxu0 0.0
        %1413 = vmatprep.subr.mxu0 0.0
        %1414 = vmatpush2.msra.mxu0 0.0
        %1415 = vmatprep.subr.mxu0 0.0
        %1416 = vmatpush2.msra.mxu0 0.0
        %1417 = vmatprep.subr.mxu0 0.0
        %1418 = vmatpush2.msra.mxu0 0.0
        %1419 = vmatprep.subr.mxu0 0.0
        %1420 = vmatpush2.msra.mxu0 0.0
        %1421 = vmatprep.subr.mxu0 0.0
        %1422 = vmatpush2.msra.mxu0 0.0
        %1423 = vmatprep.subr.mxu0 0.0
        %1424 = vmatpush2.msra.mxu0 0.0
        %1425 = vmatprep.subr.mxu0 0.0
        %1426 = vmatpush2.msra.mxu0 0.0
        %1427 = vmatprep.mubr.f32.mxu0 0.0
        %1428 = vmatmul.mubr.f32.gmra.mxu0 %v1203
        %v1429 = vpop.f32.mrf.mxu0
        %v1430 = vadd.f32 0.0, %v1429
        %v1431 = vpop.f32.mrf.mxu0
        %v1432 = vadd.f32 0.0, %v1431
        %1433 = vdwg.mxu0
        %1434 = vmatprep.subr.mxu0 0.0
        %1435 = vmatpush1.msra.mxu0 0.0
        %1436 = vmatprep.subr.mxu0 0.0
        %1437 = vmatpush1.msra.mxu0 0.0
        %1438 = vmatprep.subr.mxu0 0.0
        %1439 = vmatpush1.msra.mxu0 0.0
        %1440 = vmatprep.subr.mxu0 0.0
        %1441 = vmatpush1.msra.mxu0 0.0
        %1442 = vmatprep.subr.mxu0 0.0
        %1443 = vmatpush1.msra.mxu0 0.0
        %1444 = vmatprep.subr.mxu0 0.0
        %1445 = vmatpush1.msra.mxu0 0.0
        %1446 = vmatprep.subr.mxu0 0.0
        %1447 = vmatpush1.msra.mxu0 0.0
        %1448 = vmatprep.subr.mxu0 0.0
        %1449 = vmatpush1.msra.mxu0 0.0
        %1450 = vmatprep.subr.mxu0 0.0
        %1451 = vmatpush1.msra.mxu0 0.0
        %1452 = vmatprep.subr.mxu0 0.0
        %1453 = vmatpush1.msra.mxu0 0.0
        %1454 = vmatprep.subr.mxu0 0.0
        %1455 = vmatpush1.msra.mxu0 0.0
        %1456 = vmatprep.subr.mxu0 0.0
        %1457 = vmatpush1.msra.mxu0 0.0
        %1458 = vmatprep.subr.mxu0 0.0
        %1459 = vmatpush1.msra.mxu0 0.0
        %1460 = vmatprep.subr.mxu0 0.0
        %1461 = vmatpush1.msra.mxu0 0.0
        %1462 = vmatprep.subr.mxu0 0.0
        %1463 = vmatpush1.msra.mxu0 0.0
        %1464 = vmatprep.subr.mxu0 %v1219
        %1465 = vmatpush1.msra.mxu0 %v1217
        %1466 = vmatprep.subr.mxu0 0.0
        %1467 = vmatpush2.msra.mxu0 0.0
        %1468 = vmatprep.subr.mxu0 0.0
        %1469 = vmatpush2.msra.mxu0 0.0
        %1470 = vmatprep.subr.mxu0 0.0
        %1471 = vmatpush2.msra.mxu0 0.0
        %1472 = vmatprep.subr.mxu0 0.0
        %1473 = vmatpush2.msra.mxu0 0.0
        %1474 = vmatprep.subr.mxu0 0.0
        %1475 = vmatpush2.msra.mxu0 0.0
        %1476 = vmatprep.subr.mxu0 0.0
        %1477 = vmatpush2.msra.mxu0 0.0
        %1478 = vmatprep.subr.mxu0 0.0
        %1479 = vmatpush2.msra.mxu0 0.0
        %1480 = vmatprep.subr.mxu0 0.0
        %1481 = vmatpush2.msra.mxu0 0.0
        %1482 = vmatprep.subr.mxu0 0.0
        %1483 = vmatpush2.msra.mxu0 0.0
        %1484 = vmatprep.subr.mxu0 0.0
        %1485 = vmatpush2.msra.mxu0 0.0
        %1486 = vmatprep.subr.mxu0 0.0
        %1487 = vmatpush2.msra.mxu0 0.0
        %1488 = vmatprep.subr.mxu0 0.0
        %1489 = vmatpush2.msra.mxu0 0.0
        %1490 = vmatprep.subr.mxu0 0.0
        %1491 = vmatpush2.msra.mxu0 0.0
        %1492 = vmatprep.subr.mxu0 0.0
        %1493 = vmatpush2.msra.mxu0 0.0
        %1494 = vmatprep.subr.mxu0 0.0
        %1495 = vmatpush2.msra.mxu0 0.0
        %1496 = vmatprep.subr.mxu0 0.0
        %1497 = vmatpush2.msra.mxu0 0.0
        %1498 = vmatprep.mubr.f32.mxu0 0.0
        %1499 = vmatmul.mubr.f32.gmra.mxu0 %v1203
        %v1500 = vpop.f32.mrf.mxu0
        %v1501 = vadd.f32 0.0, %v1500
        %v1502 = vpop.f32.mrf.mxu0
        %v1503 = vadd.f32 0.0, %v1502
        %1504 = vdwg.mxu0
        %v1505 = vadd.f32 %v958, %v1288
        %v1506 = vadd.f32 %v960, %v1290
        %v1507 = vadd.f32 %v1029, %v1359
        %v1508 = vadd.f32 %v1031, %v1361
        %v1509 = vadd.f32 %v1100, %v1430
        %v1510 = vadd.f32 %v1102, %v1432
        %v1511 = vadd.f32 %v1171, %v1501
        %v1512 = vadd.f32 %v1173, %v1503
        %v1513 = vld [vmem:[%s1] sm:$0xf]
        %1515 = vrot.lane.b32.xlu0 %v1513, 116
        %v1516 = vpop.permute.xlu0 %1515
        %1517 = vrot.lane.b32.xlu0 %v529, 95
        %v1518 = vpop.permute.xlu0 %1517
        %1519 = vrot.lane.b32.xlu0 %v541, 95
        %v1520 = vpop.permute.xlu0 %1519
        %1521 = vrot.lane.b32.xlu0 %v530, 95
        %v1522 = vpop.permute.xlu0 %1521
        %1523 = vrot.lane.b32.xlu0 %v542, 95
        %v1524 = vpop.permute.xlu0 %1523
        %1525 = vrot.lane.b32.xlu0 %v531, 95
        %v1526 = vpop.permute.xlu0 %1525
        %1527 = vrot.lane.b32.xlu0 %v543, 95
        %v1528 = vpop.permute.xlu0 %1527
        %1529 = vrot.lane.b32.xlu0 %v532, 95
        %v1530 = vpop.permute.xlu0 %1529
        %1531 = vrot.lane.b32.xlu0 %v544, 95
        %v1532 = vpop.permute.xlu0 %1531
        %vm1533 = vcmask 777216
        %v1534 = vsel %vm1533, %v1518, %v1520
        %v1535 = vsel %vm1533, %v1520, %v1522
        %v1536 = vsel %vm1533, %v1522, %v1524
        %v1537 = vsel %vm1533, %v1524, %v1526
        %v1538 = vsel %vm1533, %v1526, %v1528
        %v1539 = vsel %vm1533, %v1528, %v1530
        %v1540 = vsel %vm1533, %v1530, %v1532
        %v1541 = vsel %vm569, %v1516, 0
        %v1543 = vsel %vm572, %v1534, 0
        %v1545 = vsel %vm572, %v1535, 0
        %v1547 = vsel %vm572, %v1536, 0
        %v1549 = vsel %vm572, %v1537, 0
        %v1551 = vsel %vm572, %v1538, 0
        %v1553 = vsel %vm572, %v1539, 0
        %v1555 = vsel %vm572, %v1540, 0
        %v1557 = vsel %vm572, %v1532, 0
        %1559 = vmatprep.subr.mxu0 0.0
        %1560 = vmatpush1.msra.mxu0 0.0
        %1561 = vmatprep.subr.mxu0 0.0
        %1562 = vmatpush1.msra.mxu0 0.0
        %1563 = vmatprep.subr.mxu0 0.0
        %1564 = vmatpush1.msra.mxu0 0.0
        %1565 = vmatprep.subr.mxu0 0.0
        %1566 = vmatpush1.msra.mxu0 0.0
        %1567 = vmatprep.subr.mxu0 0.0
        %1568 = vmatpush1.msra.mxu0 0.0
        %1569 = vmatprep.subr.mxu0 0.0
        %1570 = vmatpush1.msra.mxu0 0.0
        %1571 = vmatprep.subr.mxu0 0.0
        %1572 = vmatpush1.msra.mxu0 0.0
        %1573 = vmatprep.subr.mxu0 0.0
        %1574 = vmatpush1.msra.mxu0 0.0
        %1575 = vmatprep.subr.mxu0 0.0
        %1576 = vmatpush1.msra.mxu0 0.0
        %1577 = vmatprep.subr.mxu0 0.0
        %1578 = vmatpush1.msra.mxu0 0.0
        %1579 = vmatprep.subr.mxu0 0.0
        %1580 = vmatpush1.msra.mxu0 0.0
        %1581 = vmatprep.subr.mxu0 0.0
        %1582 = vmatpush1.msra.mxu0 0.0
        %1583 = vmatprep.subr.mxu0 0.0
        %1584 = vmatpush1.msra.mxu0 0.0
        %1585 = vmatprep.subr.mxu0 0.0
        %1586 = vmatpush1.msra.mxu0 0.0
        %1587 = vmatprep.subr.mxu0 0.0
        %1588 = vmatpush1.msra.mxu0 0.0
        %1589 = vmatprep.subr.mxu0 %v1545
        %1590 = vmatpush1.msra.mxu0 %v1543
        %1591 = vmatprep.subr.mxu0 0.0
        %1592 = vmatpush2.msra.mxu0 0.0
        %1593 = vmatprep.subr.mxu0 0.0
        %1594 = vmatpush2.msra.mxu0 0.0
        %1595 = vmatprep.subr.mxu0 0.0
        %1596 = vmatpush2.msra.mxu0 0.0
        %1597 = vmatprep.subr.mxu0 0.0
        %1598 = vmatpush2.msra.mxu0 0.0
        %1599 = vmatprep.subr.mxu0 0.0
        %1600 = vmatpush2.msra.mxu0 0.0
        %1601 = vmatprep.subr.mxu0 0.0
        %1602 = vmatpush2.msra.mxu0 0.0
        %1603 = vmatprep.subr.mxu0 0.0
        %1604 = vmatpush2.msra.mxu0 0.0
        %1605 = vmatprep.subr.mxu0 0.0
        %1606 = vmatpush2.msra.mxu0 0.0
        %1607 = vmatprep.subr.mxu0 0.0
        %1608 = vmatpush2.msra.mxu0 0.0
        %1609 = vmatprep.subr.mxu0 0.0
        %1610 = vmatpush2.msra.mxu0 0.0
        %1611 = vmatprep.subr.mxu0 0.0
        %1612 = vmatpush2.msra.mxu0 0.0
        %1613 = vmatprep.subr.mxu0 0.0
        %1614 = vmatpush2.msra.mxu0 0.0
        %1615 = vmatprep.subr.mxu0 0.0
        %1616 = vmatpush2.msra.mxu0 0.0
        %1617 = vmatprep.subr.mxu0 0.0
        %1618 = vmatpush2.msra.mxu0 0.0
        %1619 = vmatprep.subr.mxu0 0.0
        %1620 = vmatpush2.msra.mxu0 0.0
        %1621 = vmatprep.subr.mxu0 0.0
        %1622 = vmatpush2.msra.mxu0 0.0
        %1623 = vmatprep.mubr.f32.mxu0 0.0
        %1624 = vmatmul.mubr.f32.gmra.mxu0 %v1541
        %v1625 = vpop.f32.mrf.mxu0
        %v1626 = vadd.f32 0.0, %v1625
        %v1627 = vpop.f32.mrf.mxu0
        %v1628 = vadd.f32 0.0, %v1627
        %1629 = vdwg.mxu0
        %1630 = vmatprep.subr.mxu0 0.0
        %1631 = vmatpush1.msra.mxu0 0.0
        %1632 = vmatprep.subr.mxu0 0.0
        %1633 = vmatpush1.msra.mxu0 0.0
        %1634 = vmatprep.subr.mxu0 0.0
        %1635 = vmatpush1.msra.mxu0 0.0
        %1636 = vmatprep.subr.mxu0 0.0
        %1637 = vmatpush1.msra.mxu0 0.0
        %1638 = vmatprep.subr.mxu0 0.0
        %1639 = vmatpush1.msra.mxu0 0.0
        %1640 = vmatprep.subr.mxu0 0.0
        %1641 = vmatpush1.msra.mxu0 0.0
        %1642 = vmatprep.subr.mxu0 0.0
        %1643 = vmatpush1.msra.mxu0 0.0
        %1644 = vmatprep.subr.mxu0 0.0
        %1645 = vmatpush1.msra.mxu0 0.0
        %1646 = vmatprep.subr.mxu0 0.0
        %1647 = vmatpush1.msra.mxu0 0.0
        %1648 = vmatprep.subr.mxu0 0.0
        %1649 = vmatpush1.msra.mxu0 0.0
        %1650 = vmatprep.subr.mxu0 0.0
        %1651 = vmatpush1.msra.mxu0 0.0
        %1652 = vmatprep.subr.mxu0 0.0
        %1653 = vmatpush1.msra.mxu0 0.0
        %1654 = vmatprep.subr.mxu0 0.0
        %1655 = vmatpush1.msra.mxu0 0.0
        %1656 = vmatprep.subr.mxu0 0.0
        %1657 = vmatpush1.msra.mxu0 0.0
        %1658 = vmatprep.subr.mxu0 0.0
        %1659 = vmatpush1.msra.mxu0 0.0
        %1660 = vmatprep.subr.mxu0 %v1549
        %1661 = vmatpush1.msra.mxu0 %v1547
        %1662 = vmatprep.subr.mxu0 0.0
        %1663 = vmatpush2.msra.mxu0 0.0
        %1664 = vmatprep.subr.mxu0 0.0
        %1665 = vmatpush2.msra.mxu0 0.0
        %1666 = vmatprep.subr.mxu0 0.0
        %1667 = vmatpush2.msra.mxu0 0.0
        %1668 = vmatprep.subr.mxu0 0.0
        %1669 = vmatpush2.msra.mxu0 0.0
        %1670 = vmatprep.subr.mxu0 0.0
        %1671 = vmatpush2.msra.mxu0 0.0
        %1672 = vmatprep.subr.mxu0 0.0
        %1673 = vmatpush2.msra.mxu0 0.0
        %1674 = vmatprep.subr.mxu0 0.0
        %1675 = vmatpush2.msra.mxu0 0.0
        %1676 = vmatprep.subr.mxu0 0.0
        %1677 = vmatpush2.msra.mxu0 0.0
        %1678 = vmatprep.subr.mxu0 0.0
        %1679 = vmatpush2.msra.mxu0 0.0
        %1680 = vmatprep.subr.mxu0 0.0
        %1681 = vmatpush2.msra.mxu0 0.0
        %1682 = vmatprep.subr.mxu0 0.0
        %1683 = vmatpush2.msra.mxu0 0.0
        %1684 = vmatprep.subr.mxu0 0.0
        %1685 = vmatpush2.msra.mxu0 0.0
        %1686 = vmatprep.subr.mxu0 0.0
        %1687 = vmatpush2.msra.mxu0 0.0
        %1688 = vmatprep.subr.mxu0 0.0
        %1689 = vmatpush2.msra.mxu0 0.0
        %1690 = vmatprep.subr.mxu0 0.0
        %1691 = vmatpush2.msra.mxu0 0.0
        %1692 = vmatprep.subr.mxu0 0.0
        %1693 = vmatpush2.msra.mxu0 0.0
        %1694 = vmatprep.mubr.f32.mxu0 0.0
        %1695 = vmatmul.mubr.f32.gmra.mxu0 %v1541
        %v1696 = vpop.f32.mrf.mxu0
        %v1697 = vadd.f32 0.0, %v1696
        %v1698 = vpop.f32.mrf.mxu0
        %v1699 = vadd.f32 0.0, %v1698
        %1700 = vdwg.mxu0
        %1701 = vmatprep.subr.mxu0 0.0
        %1702 = vmatpush1.msra.mxu0 0.0
        %1703 = vmatprep.subr.mxu0 0.0
        %1704 = vmatpush1.msra.mxu0 0.0
        %1705 = vmatprep.subr.mxu0 0.0
        %1706 = vmatpush1.msra.mxu0 0.0
        %1707 = vmatprep.subr.mxu0 0.0
        %1708 = vmatpush1.msra.mxu0 0.0
        %1709 = vmatprep.subr.mxu0 0.0
        %1710 = vmatpush1.msra.mxu0 0.0
        %1711 = vmatprep.subr.mxu0 0.0
        %1712 = vmatpush1.msra.mxu0 0.0
        %1713 = vmatprep.subr.mxu0 0.0
        %1714 = vmatpush1.msra.mxu0 0.0
        %1715 = vmatprep.subr.mxu0 0.0
        %1716 = vmatpush1.msra.mxu0 0.0
        %1717 = vmatprep.subr.mxu0 0.0
        %1718 = vmatpush1.msra.mxu0 0.0
        %1719 = vmatprep.subr.mxu0 0.0
        %1720 = vmatpush1.msra.mxu0 0.0
        %1721 = vmatprep.subr.mxu0 0.0
        %1722 = vmatpush1.msra.mxu0 0.0
        %1723 = vmatprep.subr.mxu0 0.0
        %1724 = vmatpush1.msra.mxu0 0.0
        %1725 = vmatprep.subr.mxu0 0.0
        %1726 = vmatpush1.msra.mxu0 0.0
        %1727 = vmatprep.subr.mxu0 0.0
        %1728 = vmatpush1.msra.mxu0 0.0
        %1729 = vmatprep.subr.mxu0 0.0
        %1730 = vmatpush1.msra.mxu0 0.0
        %1731 = vmatprep.subr.mxu0 %v1553
        %1732 = vmatpush1.msra.mxu0 %v1551
        %1733 = vmatprep.subr.mxu0 0.0
        %1734 = vmatpush2.msra.mxu0 0.0
        %1735 = vmatprep.subr.mxu0 0.0
        %1736 = vmatpush2.msra.mxu0 0.0
        %1737 = vmatprep.subr.mxu0 0.0
        %1738 = vmatpush2.msra.mxu0 0.0
        %1739 = vmatprep.subr.mxu0 0.0
        %1740 = vmatpush2.msra.mxu0 0.0
        %1741 = vmatprep.subr.mxu0 0.0
        %1742 = vmatpush2.msra.mxu0 0.0
        %1743 = vmatprep.subr.mxu0 0.0
        %1744 = vmatpush2.msra.mxu0 0.0
        %1745 = vmatprep.subr.mxu0 0.0
        %1746 = vmatpush2.msra.mxu0 0.0
        %1747 = vmatprep.subr.mxu0 0.0
        %1748 = vmatpush2.msra.mxu0 0.0
        %1749 = vmatprep.subr.mxu0 0.0
        %1750 = vmatpush2.msra.mxu0 0.0
        %1751 = vmatprep.subr.mxu0 0.0
        %1752 = vmatpush2.msra.mxu0 0.0
        %1753 = vmatprep.subr.mxu0 0.0
        %1754 = vmatpush2.msra.mxu0 0.0
        %1755 = vmatprep.subr.mxu0 0.0
        %1756 = vmatpush2.msra.mxu0 0.0
        %1757 = vmatprep.subr.mxu0 0.0
        %1758 = vmatpush2.msra.mxu0 0.0
        %1759 = vmatprep.subr.mxu0 0.0
        %1760 = vmatpush2.msra.mxu0 0.0
        %1761 = vmatprep.subr.mxu0 0.0
        %1762 = vmatpush2.msra.mxu0 0.0
        %1763 = vmatprep.subr.mxu0 0.0
        %1764 = vmatpush2.msra.mxu0 0.0
        %1765 = vmatprep.mubr.f32.mxu0 0.0
        %1766 = vmatmul.mubr.f32.gmra.mxu0 %v1541
        %v1767 = vpop.f32.mrf.mxu0
        %v1768 = vadd.f32 0.0, %v1767
        %v1769 = vpop.f32.mrf.mxu0
        %v1770 = vadd.f32 0.0, %v1769
        %1771 = vdwg.mxu0
        %1772 = vmatprep.subr.mxu0 0.0
        %1773 = vmatpush1.msra.mxu0 0.0
        %1774 = vmatprep.subr.mxu0 0.0
        %1775 = vmatpush1.msra.mxu0 0.0
        %1776 = vmatprep.subr.mxu0 0.0
        %1777 = vmatpush1.msra.mxu0 0.0
        %1778 = vmatprep.subr.mxu0 0.0
        %1779 = vmatpush1.msra.mxu0 0.0
        %1780 = vmatprep.subr.mxu0 0.0
        %1781 = vmatpush1.msra.mxu0 0.0
        %1782 = vmatprep.subr.mxu0 0.0
        %1783 = vmatpush1.msra.mxu0 0.0
        %1784 = vmatprep.subr.mxu0 0.0
        %1785 = vmatpush1.msra.mxu0 0.0
        %1786 = vmatprep.subr.mxu0 0.0
        %1787 = vmatpush1.msra.mxu0 0.0
        %1788 = vmatprep.subr.mxu0 0.0
        %1789 = vmatpush1.msra.mxu0 0.0
        %1790 = vmatprep.subr.mxu0 0.0
        %1791 = vmatpush1.msra.mxu0 0.0
        %1792 = vmatprep.subr.mxu0 0.0
        %1793 = vmatpush1.msra.mxu0 0.0
        %1794 = vmatprep.subr.mxu0 0.0
        %1795 = vmatpush1.msra.mxu0 0.0
        %1796 = vmatprep.subr.mxu0 0.0
        %1797 = vmatpush1.msra.mxu0 0.0
        %1798 = vmatprep.subr.mxu0 0.0
        %1799 = vmatpush1.msra.mxu0 0.0
        %1800 = vmatprep.subr.mxu0 0.0
        %1801 = vmatpush1.msra.mxu0 0.0
        %1802 = vmatprep.subr.mxu0 %v1557
        %1803 = vmatpush1.msra.mxu0 %v1555
        %1804 = vmatprep.subr.mxu0 0.0
        %1805 = vmatpush2.msra.mxu0 0.0
        %1806 = vmatprep.subr.mxu0 0.0
        %1807 = vmatpush2.msra.mxu0 0.0
        %1808 = vmatprep.subr.mxu0 0.0
        %1809 = vmatpush2.msra.mxu0 0.0
        %1810 = vmatprep.subr.mxu0 0.0
        %1811 = vmatpush2.msra.mxu0 0.0
        %1812 = vmatprep.subr.mxu0 0.0
        %1813 = vmatpush2.msra.mxu0 0.0
        %1814 = vmatprep.subr.mxu0 0.0
        %1815 = vmatpush2.msra.mxu0 0.0
        %1816 = vmatprep.subr.mxu0 0.0
        %1817 = vmatpush2.msra.mxu0 0.0
        %1818 = vmatprep.subr.mxu0 0.0
        %1819 = vmatpush2.msra.mxu0 0.0
        %1820 = vmatprep.subr.mxu0 0.0
        %1821 = vmatpush2.msra.mxu0 0.0
        %1822 = vmatprep.subr.mxu0 0.0
        %1823 = vmatpush2.msra.mxu0 0.0
        %1824 = vmatprep.subr.mxu0 0.0
        %1825 = vmatpush2.msra.mxu0 0.0
        %1826 = vmatprep.subr.mxu0 0.0
        %1827 = vmatpush2.msra.mxu0 0.0
        %1828 = vmatprep.subr.mxu0 0.0
        %1829 = vmatpush2.msra.mxu0 0.0
        %1830 = vmatprep.subr.mxu0 0.0
        %1831 = vmatpush2.msra.mxu0 0.0
        %1832 = vmatprep.subr.mxu0 0.0
        %1833 = vmatpush2.msra.mxu0 0.0
        %1834 = vmatprep.subr.mxu0 0.0
        %1835 = vmatpush2.msra.mxu0 0.0
        %1836 = vmatprep.mubr.f32.mxu0 0.0
        %1837 = vmatmul.mubr.f32.gmra.mxu0 %v1541
        %v1838 = vpop.f32.mrf.mxu0
        %v1839 = vadd.f32 0.0, %v1838
        %v1840 = vpop.f32.mrf.mxu0
        %v1841 = vadd.f32 0.0, %v1840
        %1842 = vdwg.mxu0
        %v1843 = vadd.f32 %v1505, %v1626
        %v1844 = vadd.f32 %v1506, %v1628
        %v1845 = vadd.f32 %v1507, %v1697
        %v1846 = vadd.f32 %v1508, %v1699
        %v1847 = vadd.f32 %v1509, %v1768
        %v1848 = vadd.f32 %v1510, %v1770
        %v1849 = vadd.f32 %v1511, %v1839
        %v1850 = vadd.f32 %v1512, %v1841
        %v1851 = vld [vmem:[%s2] sm:$0xf]
        %1853 = vset.pattern.permute.xlu0 0
        %1854 = vperm.xlu0 %1853, %v1851
        %v1855 = vpop.permute.xlu0 %1854
        %v1857 = vadd.f32 %v1843, %v1855
        %v1858 = vadd.f32 %v1844, %v1855
        %v1859 = vadd.f32 %v1845, %v1855
        %v1860 = vadd.f32 %v1846, %v1855
        %v1861 = vadd.f32 %v1847, %v1855
        %v1862 = vadd.f32 %v1848, %v1855
        %v1863 = vadd.f32 %v1849, %v1855
        %v1864 = vadd.f32 %v1850, %v1855
        %vm1865 = vcmp.ge.f32.partialorder %v1857, 0.0
        %vm1866 = vcmp.ge.f32.partialorder %v1858, 0.0
        %vm1867 = vcmp.ge.f32.partialorder %v1859, 0.0
        %vm1868 = vcmp.ge.f32.partialorder %v1860, 0.0
        %vm1869 = vcmp.ge.f32.partialorder %v1861, 0.0
        %vm1870 = vcmp.ge.f32.partialorder %v1862, 0.0
        %vm1871 = vcmp.ge.f32.partialorder %v1863, 0.0
        %vm1872 = vcmp.ge.f32.partialorder %v1864, 0.0
        %v1873 = vmul.f32 %v1857, 0.01
        %v1874 = vmul.f32 %v1858, 0.01
        %v1875 = vmul.f32 %v1859, 0.01
        %v1876 = vmul.f32 %v1860, 0.01
        %v1877 = vmul.f32 %v1861, 0.01
        %v1878 = vmul.f32 %v1862, 0.01
        %v1879 = vmul.f32 %v1863, 0.01
        %v1880 = vmul.f32 %v1864, 0.01
        %v1881 = vsel %vm1865, %v1857, %v1873
        %v1882 = vsel %vm1866, %v1858, %v1874
        %v1883 = vsel %vm1867, %v1859, %v1875
        %v1884 = vsel %vm1868, %v1860, %v1876
        %v1885 = vsel %vm1869, %v1861, %v1877
        %v1886 = vsel %vm1870, %v1862, %v1878
        %v1887 = vsel %vm1871, %v1863, %v1879
        %v1888 = vsel %vm1872, %v1864, %v1880
        %v1889 = vld [vmem:[%s3] sm:$0xff]
        %1891 = vrot.lane.b32.xlu0 %v1889, 124
        %v1892 = vpop.permute.xlu0 %1891
        %1901 = vrot.lane.b32.xlu0 %v1881, 127
        %v1902 = vpop.permute.xlu0 %1901
        %1903 = vrot.lane.b32.xlu0 %v1882, 127
        %v1904 = vpop.permute.xlu0 %1903
        %1905 = vrot.lane.b32.xlu0 %v1883, 127
        %v1906 = vpop.permute.xlu0 %1905
        %1907 = vrot.lane.b32.xlu0 %v1884, 127
        %v1908 = vpop.permute.xlu0 %1907
        %1909 = vrot.lane.b32.xlu0 %v1885, 127
        %v1910 = vpop.permute.xlu0 %1909
        %1911 = vrot.lane.b32.xlu0 %v1886, 127
        %v1912 = vpop.permute.xlu0 %1911
        %1913 = vrot.lane.b32.xlu0 %v1887, 127
        %v1914 = vpop.permute.xlu0 %1913
        %1915 = vrot.lane.b32.xlu0 %v1888, 127
        %v1916 = vpop.permute.xlu0 %1915
        %v1917 = vsel %vm561, %v1902, %v1904
        %v1918 = vsel %vm561, %v1904, %v1906
        %v1919 = vsel %vm561, %v1906, %v1908
        %v1920 = vsel %vm561, %v1908, %v1910
        %v1921 = vsel %vm561, %v1910, %v1912
        %v1922 = vsel %vm561, %v1912, %v1914
        %v1923 = vsel %vm561, %v1914, %v1916
        %v1924 = vsel %vm569, %v1892, 0
        %v1926 = vsel %vm572, %v1917, 0
        %v1928 = vsel %vm572, %v1918, 0
        %v1930 = vsel %vm572, %v1919, 0
        %v1932 = vsel %vm572, %v1920, 0
        %v1934 = vsel %vm572, %v1921, 0
        %v1936 = vsel %vm572, %v1922, 0
        %v1938 = vsel %vm572, %v1923, 0
        %v1940 = vsel %vm572, %v1916, 0
        %1942 = vmatprep.subr.mxu0 0.0
        %1943 = vmatpush1.msra.mxu0 0.0
        %1944 = vmatprep.subr.mxu0 0.0
        %1945 = vmatpush1.msra.mxu0 0.0
        %1946 = vmatprep.subr.mxu0 0.0
        %1947 = vmatpush1.msra.mxu0 0.0
        %1948 = vmatprep.subr.mxu0 0.0
        %1949 = vmatpush1.msra.mxu0 0.0
        %1950 = vmatprep.subr.mxu0 0.0
        %1951 = vmatpush1.msra.mxu0 0.0
        %1952 = vmatprep.subr.mxu0 0.0
        %1953 = vmatpush1.msra.mxu0 0.0
        %1954 = vmatprep.subr.mxu0 0.0
        %1955 = vmatpush1.msra.mxu0 0.0
        %1956 = vmatprep.subr.mxu0 0.0
        %1957 = vmatpush1.msra.mxu0 0.0
        %1958 = vmatprep.subr.mxu0 0.0
        %1959 = vmatpush1.msra.mxu0 0.0
        %1960 = vmatprep.subr.mxu0 0.0
        %1961 = vmatpush1.msra.mxu0 0.0
        %1962 = vmatprep.subr.mxu0 0.0
        %1963 = vmatpush1.msra.mxu0 0.0
        %1964 = vmatprep.subr.mxu0 0.0
        %1965 = vmatpush1.msra.mxu0 0.0
        %1966 = vmatprep.subr.mxu0 0.0
        %1967 = vmatpush1.msra.mxu0 0.0
        %1968 = vmatprep.subr.mxu0 0.0
        %1969 = vmatpush1.msra.mxu0 0.0
        %1970 = vmatprep.subr.mxu0 0.0
        %1971 = vmatpush1.msra.mxu0 0.0
        %1972 = vmatprep.subr.mxu0 %v1928
        %1973 = vmatpush1.msra.mxu0 %v1926
        %1974 = vmatprep.subr.mxu0 0.0
        %1975 = vmatpush2.msra.mxu0 0.0
        %1976 = vmatprep.subr.mxu0 0.0
        %1977 = vmatpush2.msra.mxu0 0.0
        %1978 = vmatprep.subr.mxu0 0.0
        %1979 = vmatpush2.msra.mxu0 0.0
        %1980 = vmatprep.subr.mxu0 0.0
        %1981 = vmatpush2.msra.mxu0 0.0
        %1982 = vmatprep.subr.mxu0 0.0
        %1983 = vmatpush2.msra.mxu0 0.0
        %1984 = vmatprep.subr.mxu0 0.0
        %1985 = vmatpush2.msra.mxu0 0.0
        %1986 = vmatprep.subr.mxu0 0.0
        %1987 = vmatpush2.msra.mxu0 0.0
        %1988 = vmatprep.subr.mxu0 0.0
        %1989 = vmatpush2.msra.mxu0 0.0
        %1990 = vmatprep.subr.mxu0 0.0
        %1991 = vmatpush2.msra.mxu0 0.0
        %1992 = vmatprep.subr.mxu0 0.0
        %1993 = vmatpush2.msra.mxu0 0.0
        %1994 = vmatprep.subr.mxu0 0.0
        %1995 = vmatpush2.msra.mxu0 0.0
        %1996 = vmatprep.subr.mxu0 0.0
        %1997 = vmatpush2.msra.mxu0 0.0
        %1998 = vmatprep.subr.mxu0 0.0
        %1999 = vmatpush2.msra.mxu0 0.0
        %2000 = vmatprep.subr.mxu0 0.0
        %2001 = vmatpush2.msra.mxu0 0.0
        %2002 = vmatprep.subr.mxu0 0.0
        %2003 = vmatpush2.msra.mxu0 0.0
        %2004 = vmatprep.subr.mxu0 0.0
        %2005 = vmatpush2.msra.mxu0 0.0
        %2006 = vmatprep.mubr.f32.mxu0 0.0
        %2007 = vmatmul.mubr.f32.gmra.mxu0 %v1924
        %v2008 = vpop.f32.mrf.mxu0
        %v2009 = vadd.f32 0.0, %v2008
        %v2010 = vpop.f32.mrf.mxu0
        %v2011 = vadd.f32 0.0, %v2010
        %2012 = vdwg.mxu0
        %2013 = vmatprep.subr.mxu0 0.0
        %2014 = vmatpush1.msra.mxu0 0.0
        %2015 = vmatprep.subr.mxu0 0.0
        %2016 = vmatpush1.msra.mxu0 0.0
        %2017 = vmatprep.subr.mxu0 0.0
        %2018 = vmatpush1.msra.mxu0 0.0
        %2019 = vmatprep.subr.mxu0 0.0
        %2020 = vmatpush1.msra.mxu0 0.0
        %2021 = vmatprep.subr.mxu0 0.0
        %2022 = vmatpush1.msra.mxu0 0.0
        %2023 = vmatprep.subr.mxu0 0.0
        %2024 = vmatpush1.msra.mxu0 0.0
        %2025 = vmatprep.subr.mxu0 0.0
        %2026 = vmatpush1.msra.mxu0 0.0
        %2027 = vmatprep.subr.mxu0 0.0
        %2028 = vmatpush1.msra.mxu0 0.0
        %2029 = vmatprep.subr.mxu0 0.0
        %2030 = vmatpush1.msra.mxu0 0.0
        %2031 = vmatprep.subr.mxu0 0.0
        %2032 = vmatpush1.msra.mxu0 0.0
        %2033 = vmatprep.subr.mxu0 0.0
        %2034 = vmatpush1.msra.mxu0 0.0
        %2035 = vmatprep.subr.mxu0 0.0
        %2036 = vmatpush1.msra.mxu0 0.0
        %2037 = vmatprep.subr.mxu0 0.0
        %2038 = vmatpush1.msra.mxu0 0.0
        %2039 = vmatprep.subr.mxu0 0.0
        %2040 = vmatpush1.msra.mxu0 0.0
        %2041 = vmatprep.subr.mxu0 0.0
        %2042 = vmatpush1.msra.mxu0 0.0
        %2043 = vmatprep.subr.mxu0 %v1932
        %2044 = vmatpush1.msra.mxu0 %v1930
        %2045 = vmatprep.subr.mxu0 0.0
        %2046 = vmatpush2.msra.mxu0 0.0
        %2047 = vmatprep.subr.mxu0 0.0
        %2048 = vmatpush2.msra.mxu0 0.0
        %2049 = vmatprep.subr.mxu0 0.0
        %2050 = vmatpush2.msra.mxu0 0.0
        %2051 = vmatprep.subr.mxu0 0.0
        %2052 = vmatpush2.msra.mxu0 0.0
        %2053 = vmatprep.subr.mxu0 0.0
        %2054 = vmatpush2.msra.mxu0 0.0
        %2055 = vmatprep.subr.mxu0 0.0
        %2056 = vmatpush2.msra.mxu0 0.0
        %2057 = vmatprep.subr.mxu0 0.0
        %2058 = vmatpush2.msra.mxu0 0.0
        %2059 = vmatprep.subr.mxu0 0.0
        %2060 = vmatpush2.msra.mxu0 0.0
        %2061 = vmatprep.subr.mxu0 0.0
        %2062 = vmatpush2.msra.mxu0 0.0
        %2063 = vmatprep.subr.mxu0 0.0
        %2064 = vmatpush2.msra.mxu0 0.0
        %2065 = vmatprep.subr.mxu0 0.0
        %2066 = vmatpush2.msra.mxu0 0.0
        %2067 = vmatprep.subr.mxu0 0.0
        %2068 = vmatpush2.msra.mxu0 0.0
        %2069 = vmatprep.subr.mxu0 0.0
        %2070 = vmatpush2.msra.mxu0 0.0
        %2071 = vmatprep.subr.mxu0 0.0
        %2072 = vmatpush2.msra.mxu0 0.0
        %2073 = vmatprep.subr.mxu0 0.0
        %2074 = vmatpush2.msra.mxu0 0.0
        %2075 = vmatprep.subr.mxu0 0.0
        %2076 = vmatpush2.msra.mxu0 0.0
        %2077 = vmatprep.mubr.f32.mxu0 0.0
        %2078 = vmatmul.mubr.f32.gmra.mxu0 %v1924
        %v2079 = vpop.f32.mrf.mxu0
        %v2080 = vadd.f32 0.0, %v2079
        %v2081 = vpop.f32.mrf.mxu0
        %v2082 = vadd.f32 0.0, %v2081
        %2083 = vdwg.mxu0
        %2084 = vmatprep.subr.mxu0 0.0
        %2085 = vmatpush1.msra.mxu0 0.0
        %2086 = vmatprep.subr.mxu0 0.0
        %2087 = vmatpush1.msra.mxu0 0.0
        %2088 = vmatprep.subr.mxu0 0.0
        %2089 = vmatpush1.msra.mxu0 0.0
        %2090 = vmatprep.subr.mxu0 0.0
        %2091 = vmatpush1.msra.mxu0 0.0
        %2092 = vmatprep.subr.mxu0 0.0
        %2093 = vmatpush1.msra.mxu0 0.0
        %2094 = vmatprep.subr.mxu0 0.0
        %2095 = vmatpush1.msra.mxu0 0.0
        %2096 = vmatprep.subr.mxu0 0.0
        %2097 = vmatpush1.msra.mxu0 0.0
        %2098 = vmatprep.subr.mxu0 0.0
        %2099 = vmatpush1.msra.mxu0 0.0
        %2100 = vmatprep.subr.mxu0 0.0
        %2101 = vmatpush1.msra.mxu0 0.0
        %2102 = vmatprep.subr.mxu0 0.0
        %2103 = vmatpush1.msra.mxu0 0.0
        %2104 = vmatprep.subr.mxu0 0.0
        %2105 = vmatpush1.msra.mxu0 0.0
        %2106 = vmatprep.subr.mxu0 0.0
        %2107 = vmatpush1.msra.mxu0 0.0
        %2108 = vmatprep.subr.mxu0 0.0
        %2109 = vmatpush1.msra.mxu0 0.0
        %2110 = vmatprep.subr.mxu0 0.0
        %2111 = vmatpush1.msra.mxu0 0.0
        %2112 = vmatprep.subr.mxu0 0.0
        %2113 = vmatpush1.msra.mxu0 0.0
        %2114 = vmatprep.subr.mxu0 %v1936
        %2115 = vmatpush1.msra.mxu0 %v1934
        %2116 = vmatprep.subr.mxu0 0.0
        %2117 = vmatpush2.msra.mxu0 0.0
        %2118 = vmatprep.subr.mxu0 0.0
        %2119 = vmatpush2.msra.mxu0 0.0
        %2120 = vmatprep.subr.mxu0 0.0
        %2121 = vmatpush2.msra.mxu0 0.0
        %2122 = vmatprep.subr.mxu0 0.0
        %2123 = vmatpush2.msra.mxu0 0.0
        %2124 = vmatprep.subr.mxu0 0.0
        %2125 = vmatpush2.msra.mxu0 0.0
        %2126 = vmatprep.subr.mxu0 0.0
        %2127 = vmatpush2.msra.mxu0 0.0
        %2128 = vmatprep.subr.mxu0 0.0
        %2129 = vmatpush2.msra.mxu0 0.0
        %2130 = vmatprep.subr.mxu0 0.0
        %2131 = vmatpush2.msra.mxu0 0.0
        %2132 = vmatprep.subr.mxu0 0.0
        %2133 = vmatpush2.msra.mxu0 0.0
        %2134 = vmatprep.subr.mxu0 0.0
        %2135 = vmatpush2.msra.mxu0 0.0
        %2136 = vmatprep.subr.mxu0 0.0
        %2137 = vmatpush2.msra.mxu0 0.0
        %2138 = vmatprep.subr.mxu0 0.0
        %2139 = vmatpush2.msra.mxu0 0.0
        %2140 = vmatprep.subr.mxu0 0.0
        %2141 = vmatpush2.msra.mxu0 0.0
        %2142 = vmatprep.subr.mxu0 0.0
        %2143 = vmatpush2.msra.mxu0 0.0
        %2144 = vmatprep.subr.mxu0 0.0
        %2145 = vmatpush2.msra.mxu0 0.0
        %2146 = vmatprep.subr.mxu0 0.0
        %2147 = vmatpush2.msra.mxu0 0.0
        %2148 = vmatprep.mubr.f32.mxu0 0.0
        %2149 = vmatmul.mubr.f32.gmra.mxu0 %v1924
        %v2150 = vpop.f32.mrf.mxu0
        %v2151 = vadd.f32 0.0, %v2150
        %v2152 = vpop.f32.mrf.mxu0
        %v2153 = vadd.f32 0.0, %v2152
        %2154 = vdwg.mxu0
        %2155 = vmatprep.subr.mxu0 0.0
        %2156 = vmatpush1.msra.mxu0 0.0
        %2157 = vmatprep.subr.mxu0 0.0
        %2158 = vmatpush1.msra.mxu0 0.0
        %2159 = vmatprep.subr.mxu0 0.0
        %2160 = vmatpush1.msra.mxu0 0.0
        %2161 = vmatprep.subr.mxu0 0.0
        %2162 = vmatpush1.msra.mxu0 0.0
        %2163 = vmatprep.subr.mxu0 0.0
        %2164 = vmatpush1.msra.mxu0 0.0
        %2165 = vmatprep.subr.mxu0 0.0
        %2166 = vmatpush1.msra.mxu0 0.0
        %2167 = vmatprep.subr.mxu0 0.0
        %2168 = vmatpush1.msra.mxu0 0.0
        %2169 = vmatprep.subr.mxu0 0.0
        %2170 = vmatpush1.msra.mxu0 0.0
        %2171 = vmatprep.subr.mxu0 0.0
        %2172 = vmatpush1.msra.mxu0 0.0
        %2173 = vmatprep.subr.mxu0 0.0
        %2174 = vmatpush1.msra.mxu0 0.0
        %2175 = vmatprep.subr.mxu0 0.0
        %2176 = vmatpush1.msra.mxu0 0.0
        %2177 = vmatprep.subr.mxu0 0.0
        %2178 = vmatpush1.msra.mxu0 0.0
        %2179 = vmatprep.subr.mxu0 0.0
        %2180 = vmatpush1.msra.mxu0 0.0
        %2181 = vmatprep.subr.mxu0 0.0
        %2182 = vmatpush1.msra.mxu0 0.0
        %2183 = vmatprep.subr.mxu0 0.0
        %2184 = vmatpush1.msra.mxu0 0.0
        %2185 = vmatprep.subr.mxu0 %v1940
        %2186 = vmatpush1.msra.mxu0 %v1938
        %2187 = vmatprep.subr.mxu0 0.0
        %2188 = vmatpush2.msra.mxu0 0.0
        %2189 = vmatprep.subr.mxu0 0.0
        %2190 = vmatpush2.msra.mxu0 0.0
        %2191 = vmatprep.subr.mxu0 0.0
        %2192 = vmatpush2.msra.mxu0 0.0
        %2193 = vmatprep.subr.mxu0 0.0
        %2194 = vmatpush2.msra.mxu0 0.0
        %2195 = vmatprep.subr.mxu0 0.0
        %2196 = vmatpush2.msra.mxu0 0.0
        %2197 = vmatprep.subr.mxu0 0.0
        %2198 = vmatpush2.msra.mxu0 0.0
        %2199 = vmatprep.subr.mxu0 0.0
        %2200 = vmatpush2.msra.mxu0 0.0
        %2201 = vmatprep.subr.mxu0 0.0
        %2202 = vmatpush2.msra.mxu0 0.0
        %2203 = vmatprep.subr.mxu0 0.0
        %2204 = vmatpush2.msra.mxu0 0.0
        %2205 = vmatprep.subr.mxu0 0.0
        %2206 = vmatpush2.msra.mxu0 0.0
        %2207 = vmatprep.subr.mxu0 0.0
        %2208 = vmatpush2.msra.mxu0 0.0
        %2209 = vmatprep.subr.mxu0 0.0
        %2210 = vmatpush2.msra.mxu0 0.0
        %2211 = vmatprep.subr.mxu0 0.0
        %2212 = vmatpush2.msra.mxu0 0.0
        %2213 = vmatprep.subr.mxu0 0.0
        %2214 = vmatpush2.msra.mxu0 0.0
        %2215 = vmatprep.subr.mxu0 0.0
        %2216 = vmatpush2.msra.mxu0 0.0
        %2217 = vmatprep.subr.mxu0 0.0
        %2218 = vmatpush2.msra.mxu0 0.0
        %2219 = vmatprep.mubr.f32.mxu0 0.0
        %2220 = vmatmul.mubr.f32.gmra.mxu0 %v1924
        %v2221 = vpop.f32.mrf.mxu0
        %v2222 = vadd.f32 0.0, %v2221
        %v2223 = vpop.f32.mrf.mxu0
        %v2224 = vadd.f32 0.0, %v2223
        %2225 = vdwg.mxu0
        %v2226 = vsel %vm569, %v1889, 0
        %v2228 = vsel %vm572, %v1881, 0
        %v2230 = vsel %vm572, %v1882, 0
        %v2232 = vsel %vm572, %v1883, 0
        %v2234 = vsel %vm572, %v1884, 0
        %v2236 = vsel %vm572, %v1885, 0
        %v2238 = vsel %vm572, %v1886, 0
        %v2240 = vsel %vm572, %v1887, 0
        %v2242 = vsel %vm572, %v1888, 0
        %2244 = vmatprep.subr.mxu0 0.0
        %2245 = vmatpush1.msra.mxu0 0.0
        %2246 = vmatprep.subr.mxu0 0.0
        %2247 = vmatpush1.msra.mxu0 0.0
        %2248 = vmatprep.subr.mxu0 0.0
        %2249 = vmatpush1.msra.mxu0 0.0
        %2250 = vmatprep.subr.mxu0 0.0
        %2251 = vmatpush1.msra.mxu0 0.0
        %2252 = vmatprep.subr.mxu0 0.0
        %2253 = vmatpush1.msra.mxu0 0.0
        %2254 = vmatprep.subr.mxu0 0.0
        %2255 = vmatpush1.msra.mxu0 0.0
        %2256 = vmatprep.subr.mxu0 0.0
        %2257 = vmatpush1.msra.mxu0 0.0
        %2258 = vmatprep.subr.mxu0 0.0
        %2259 = vmatpush1.msra.mxu0 0.0
        %2260 = vmatprep.subr.mxu0 0.0
        %2261 = vmatpush1.msra.mxu0 0.0
        %2262 = vmatprep.subr.mxu0 0.0
        %2263 = vmatpush1.msra.mxu0 0.0
        %2264 = vmatprep.subr.mxu0 0.0
        %2265 = vmatpush1.msra.mxu0 0.0
        %2266 = vmatprep.subr.mxu0 0.0
        %2267 = vmatpush1.msra.mxu0 0.0
        %2268 = vmatprep.subr.mxu0 0.0
        %2269 = vmatpush1.msra.mxu0 0.0
        %2270 = vmatprep.subr.mxu0 0.0
        %2271 = vmatpush1.msra.mxu0 0.0
        %2272 = vmatprep.subr.mxu0 0.0
        %2273 = vmatpush1.msra.mxu0 0.0
        %2274 = vmatprep.subr.mxu0 %v2230
        %2275 = vmatpush1.msra.mxu0 %v2228
        %2276 = vmatprep.subr.mxu0 0.0
        %2277 = vmatpush2.msra.mxu0 0.0
        %2278 = vmatprep.subr.mxu0 0.0
        %2279 = vmatpush2.msra.mxu0 0.0
        %2280 = vmatprep.subr.mxu0 0.0
        %2281 = vmatpush2.msra.mxu0 0.0
        %2282 = vmatprep.subr.mxu0 0.0
        %2283 = vmatpush2.msra.mxu0 0.0
        %2284 = vmatprep.subr.mxu0 0.0
        %2285 = vmatpush2.msra.mxu0 0.0
        %2286 = vmatprep.subr.mxu0 0.0
        %2287 = vmatpush2.msra.mxu0 0.0
        %2288 = vmatprep.subr.mxu0 0.0
        %2289 = vmatpush2.msra.mxu0 0.0
        %2290 = vmatprep.subr.mxu0 0.0
        %2291 = vmatpush2.msra.mxu0 0.0
        %2292 = vmatprep.subr.mxu0 0.0
        %2293 = vmatpush2.msra.mxu0 0.0
        %2294 = vmatprep.subr.mxu0 0.0
        %2295 = vmatpush2.msra.mxu0 0.0
        %2296 = vmatprep.subr.mxu0 0.0
        %2297 = vmatpush2.msra.mxu0 0.0
        %2298 = vmatprep.subr.mxu0 0.0
        %2299 = vmatpush2.msra.mxu0 0.0
        %2300 = vmatprep.subr.mxu0 0.0
        %2301 = vmatpush2.msra.mxu0 0.0
        %2302 = vmatprep.subr.mxu0 0.0
        %2303 = vmatpush2.msra.mxu0 0.0
        %2304 = vmatprep.subr.mxu0 0.0
        %2305 = vmatpush2.msra.mxu0 0.0
        %2306 = vmatprep.subr.mxu0 0.0
        %2307 = vmatpush2.msra.mxu0 0.0
        %2308 = vmatprep.mubr.f32.mxu0 0.0
        %2309 = vmatmul.mubr.f32.gmra.mxu0 %v2226
        %v2310 = vpop.f32.mrf.mxu0
        %v2311 = vadd.f32 %v2009, %v2310
        %v2312 = vpop.f32.mrf.mxu0
        %v2313 = vadd.f32 %v2011, %v2312
        %2314 = vdwg.mxu0
        %2315 = vmatprep.subr.mxu0 0.0
        %2316 = vmatpush1.msra.mxu0 0.0
        %2317 = vmatprep.subr.mxu0 0.0
        %2318 = vmatpush1.msra.mxu0 0.0
        %2319 = vmatprep.subr.mxu0 0.0
        %2320 = vmatpush1.msra.mxu0 0.0
        %2321 = vmatprep.subr.mxu0 0.0
        %2322 = vmatpush1.msra.mxu0 0.0
        %2323 = vmatprep.subr.mxu0 0.0
        %2324 = vmatpush1.msra.mxu0 0.0
        %2325 = vmatprep.subr.mxu0 0.0
        %2326 = vmatpush1.msra.mxu0 0.0
        %2327 = vmatprep.subr.mxu0 0.0
        %2328 = vmatpush1.msra.mxu0 0.0
        %2329 = vmatprep.subr.mxu0 0.0
        %2330 = vmatpush1.msra.mxu0 0.0
        %2331 = vmatprep.subr.mxu0 0.0
        %2332 = vmatpush1.msra.mxu0 0.0
        %2333 = vmatprep.subr.mxu0 0.0
        %2334 = vmatpush1.msra.mxu0 0.0
        %2335 = vmatprep.subr.mxu0 0.0
        %2336 = vmatpush1.msra.mxu0 0.0
        %2337 = vmatprep.subr.mxu0 0.0
        %2338 = vmatpush1.msra.mxu0 0.0
        %2339 = vmatprep.subr.mxu0 0.0
        %2340 = vmatpush1.msra.mxu0 0.0
        %2341 = vmatprep.subr.mxu0 0.0
        %2342 = vmatpush1.msra.mxu0 0.0
        %2343 = vmatprep.subr.mxu0 0.0
        %2344 = vmatpush1.msra.mxu0 0.0
        %2345 = vmatprep.subr.mxu0 %v2234
        %2346 = vmatpush1.msra.mxu0 %v2232
        %2347 = vmatprep.subr.mxu0 0.0
        %2348 = vmatpush2.msra.mxu0 0.0
        %2349 = vmatprep.subr.mxu0 0.0
        %2350 = vmatpush2.msra.mxu0 0.0
        %2351 = vmatprep.subr.mxu0 0.0
        %2352 = vmatpush2.msra.mxu0 0.0
        %2353 = vmatprep.subr.mxu0 0.0
        %2354 = vmatpush2.msra.mxu0 0.0
        %2355 = vmatprep.subr.mxu0 0.0
        %2356 = vmatpush2.msra.mxu0 0.0
        %2357 = vmatprep.subr.mxu0 0.0
        %2358 = vmatpush2.msra.mxu0 0.0
        %2359 = vmatprep.subr.mxu0 0.0
        %2360 = vmatpush2.msra.mxu0 0.0
        %2361 = vmatprep.subr.mxu0 0.0
        %2362 = vmatpush2.msra.mxu0 0.0
        %2363 = vmatprep.subr.mxu0 0.0
        %2364 = vmatpush2.msra.mxu0 0.0
        %2365 = vmatprep.subr.mxu0 0.0
        %2366 = vmatpush2.msra.mxu0 0.0
        %2367 = vmatprep.subr.mxu0 0.0
        %2368 = vmatpush2.msra.mxu0 0.0
        %2369 = vmatprep.subr.mxu0 0.0
        %2370 = vmatpush2.msra.mxu0 0.0
        %2371 = vmatprep.subr.mxu0 0.0
        %2372 = vmatpush2.msra.mxu0 0.0
        %2373 = vmatprep.subr.mxu0 0.0
        %2374 = vmatpush2.msra.mxu0 0.0
        %2375 = vmatprep.subr.mxu0 0.0
        %2376 = vmatpush2.msra.mxu0 0.0
        %2377 = vmatprep.subr.mxu0 0.0
        %2378 = vmatpush2.msra.mxu0 0.0
        %2379 = vmatprep.mubr.f32.mxu0 0.0
        %2380 = vmatmul.mubr.f32.gmra.mxu0 %v2226
        %v2381 = vpop.f32.mrf.mxu0
        %v2382 = vadd.f32 %v2080, %v2381
        %v2383 = vpop.f32.mrf.mxu0
        %v2384 = vadd.f32 %v2082, %v2383
        %2385 = vdwg.mxu0
        %2386 = vmatprep.subr.mxu0 0.0
        %2387 = vmatpush1.msra.mxu0 0.0
        %2388 = vmatprep.subr.mxu0 0.0
        %2389 = vmatpush1.msra.mxu0 0.0
        %2390 = vmatprep.subr.mxu0 0.0
        %2391 = vmatpush1.msra.mxu0 0.0
        %2392 = vmatprep.subr.mxu0 0.0
        %2393 = vmatpush1.msra.mxu0 0.0
        %2394 = vmatprep.subr.mxu0 0.0
        %2395 = vmatpush1.msra.mxu0 0.0
        %2396 = vmatprep.subr.mxu0 0.0
        %2397 = vmatpush1.msra.mxu0 0.0
        %2398 = vmatprep.subr.mxu0 0.0
        %2399 = vmatpush1.msra.mxu0 0.0
        %2400 = vmatprep.subr.mxu0 0.0
        %2401 = vmatpush1.msra.mxu0 0.0
        %2402 = vmatprep.subr.mxu0 0.0
        %2403 = vmatpush1.msra.mxu0 0.0
        %2404 = vmatprep.subr.mxu0 0.0
        %2405 = vmatpush1.msra.mxu0 0.0
        %2406 = vmatprep.subr.mxu0 0.0
        %2407 = vmatpush1.msra.mxu0 0.0
        %2408 = vmatprep.subr.mxu0 0.0
        %2409 = vmatpush1.msra.mxu0 0.0
        %2410 = vmatprep.subr.mxu0 0.0
        %2411 = vmatpush1.msra.mxu0 0.0
        %2412 = vmatprep.subr.mxu0 0.0
        %2413 = vmatpush1.msra.mxu0 0.0
        %2414 = vmatprep.subr.mxu0 0.0
        %2415 = vmatpush1.msra.mxu0 0.0
        %2416 = vmatprep.subr.mxu0 %v2238
        %2417 = vmatpush1.msra.mxu0 %v2236
        %2418 = vmatprep.subr.mxu0 0.0
        %2419 = vmatpush2.msra.mxu0 0.0
        %2420 = vmatprep.subr.mxu0 0.0
        %2421 = vmatpush2.msra.mxu0 0.0
        %2422 = vmatprep.subr.mxu0 0.0
        %2423 = vmatpush2.msra.mxu0 0.0
        %2424 = vmatprep.subr.mxu0 0.0
        %2425 = vmatpush2.msra.mxu0 0.0
        %2426 = vmatprep.subr.mxu0 0.0
        %2427 = vmatpush2.msra.mxu0 0.0
        %2428 = vmatprep.subr.mxu0 0.0
        %2429 = vmatpush2.msra.mxu0 0.0
        %2430 = vmatprep.subr.mxu0 0.0
        %2431 = vmatpush2.msra.mxu0 0.0
        %2432 = vmatprep.subr.mxu0 0.0
        %2433 = vmatpush2.msra.mxu0 0.0
        %2434 = vmatprep.subr.mxu0 0.0
        %2435 = vmatpush2.msra.mxu0 0.0
        %2436 = vmatprep.subr.mxu0 0.0
        %2437 = vmatpush2.msra.mxu0 0.0
        %2438 = vmatprep.subr.mxu0 0.0
        %2439 = vmatpush2.msra.mxu0 0.0
        %2440 = vmatprep.subr.mxu0 0.0
        %2441 = vmatpush2.msra.mxu0 0.0
        %2442 = vmatprep.subr.mxu0 0.0
        %2443 = vmatpush2.msra.mxu0 0.0
        %2444 = vmatprep.subr.mxu0 0.0
        %2445 = vmatpush2.msra.mxu0 0.0
        %2446 = vmatprep.subr.mxu0 0.0
        %2447 = vmatpush2.msra.mxu0 0.0
        %2448 = vmatprep.subr.mxu0 0.0
        %2449 = vmatpush2.msra.mxu0 0.0
        %2450 = vmatprep.mubr.f32.mxu0 0.0
        %2451 = vmatmul.mubr.f32.gmra.mxu0 %v2226
        %v2452 = vpop.f32.mrf.mxu0
        %v2453 = vadd.f32 %v2151, %v2452
        %v2454 = vpop.f32.mrf.mxu0
        %v2455 = vadd.f32 %v2153, %v2454
        %2456 = vdwg.mxu0
        %2457 = vmatprep.subr.mxu0 0.0
        %2458 = vmatpush1.msra.mxu0 0.0
        %2459 = vmatprep.subr.mxu0 0.0
        %2460 = vmatpush1.msra.mxu0 0.0
        %2461 = vmatprep.subr.mxu0 0.0
        %2462 = vmatpush1.msra.mxu0 0.0
        %2463 = vmatprep.subr.mxu0 0.0
        %2464 = vmatpush1.msra.mxu0 0.0
        %2465 = vmatprep.subr.mxu0 0.0
        %2466 = vmatpush1.msra.mxu0 0.0
        %2467 = vmatprep.subr.mxu0 0.0
        %2468 = vmatpush1.msra.mxu0 0.0
        %2469 = vmatprep.subr.mxu0 0.0
        %2470 = vmatpush1.msra.mxu0 0.0
        %2471 = vmatprep.subr.mxu0 0.0
        %2472 = vmatpush1.msra.mxu0 0.0
        %2473 = vmatprep.subr.mxu0 0.0
        %2474 = vmatpush1.msra.mxu0 0.0
        %2475 = vmatprep.subr.mxu0 0.0
        %2476 = vmatpush1.msra.mxu0 0.0
        %2477 = vmatprep.subr.mxu0 0.0
        %2478 = vmatpush1.msra.mxu0 0.0
        %2479 = vmatprep.subr.mxu0 0.0
        %2480 = vmatpush1.msra.mxu0 0.0
        %2481 = vmatprep.subr.mxu0 0.0
        %2482 = vmatpush1.msra.mxu0 0.0
        %2483 = vmatprep.subr.mxu0 0.0
        %2484 = vmatpush1.msra.mxu0 0.0
        %2485 = vmatprep.subr.mxu0 0.0
        %2486 = vmatpush1.msra.mxu0 0.0
        %2487 = vmatprep.subr.mxu0 %v2242
        %2488 = vmatpush1.msra.mxu0 %v2240
        %2489 = vmatprep.subr.mxu0 0.0
        %2490 = vmatpush2.msra.mxu0 0.0
        %2491 = vmatprep.subr.mxu0 0.0
        %2492 = vmatpush2.msra.mxu0 0.0
        %2493 = vmatprep.subr.mxu0 0.0
        %2494 = vmatpush2.msra.mxu0 0.0
        %2495 = vmatprep.subr.mxu0 0.0
        %2496 = vmatpush2.msra.mxu0 0.0
        %2497 = vmatprep.subr.mxu0 0.0
        %2498 = vmatpush2.msra.mxu0 0.0
        %2499 = vmatprep.subr.mxu0 0.0
        %2500 = vmatpush2.msra.mxu0 0.0
        %2501 = vmatprep.subr.mxu0 0.0
        %2502 = vmatpush2.msra.mxu0 0.0
        %2503 = vmatprep.subr.mxu0 0.0
        %2504 = vmatpush2.msra.mxu0 0.0
        %2505 = vmatprep.subr.mxu0 0.0
        %2506 = vmatpush2.msra.mxu0 0.0
        %2507 = vmatprep.subr.mxu0 0.0
        %2508 = vmatpush2.msra.mxu0 0.0
        %2509 = vmatprep.subr.mxu0 0.0
        %2510 = vmatpush2.msra.mxu0 0.0
        %2511 = vmatprep.subr.mxu0 0.0
        %2512 = vmatpush2.msra.mxu0 0.0
        %2513 = vmatprep.subr.mxu0 0.0
        %2514 = vmatpush2.msra.mxu0 0.0
        %2515 = vmatprep.subr.mxu0 0.0
        %2516 = vmatpush2.msra.mxu0 0.0
        %2517 = vmatprep.subr.mxu0 0.0
        %2518 = vmatpush2.msra.mxu0 0.0
        %2519 = vmatprep.subr.mxu0 0.0
        %2520 = vmatpush2.msra.mxu0 0.0
        %2521 = vmatprep.mubr.f32.mxu0 0.0
        %2522 = vmatmul.mubr.f32.gmra.mxu0 %v2226
        %v2523 = vpop.f32.mrf.mxu0
        %v2524 = vadd.f32 %v2222, %v2523
        %v2525 = vpop.f32.mrf.mxu0
        %v2526 = vadd.f32 %v2224, %v2525
        %2527 = vdwg.mxu0
        %2528 = vrot.lane.b32.xlu0 %v1889, 120
        %v2529 = vpop.permute.xlu0 %2528
        %2530 = vrot.lane.b32.xlu0 %v1881, 96
        %v2531 = vpop.permute.xlu0 %2530
        %2532 = vrot.lane.b32.xlu0 %v1882, 96
        %v2533 = vpop.permute.xlu0 %2532
        %2534 = vrot.lane.b32.xlu0 %v1883, 96
        %v2535 = vpop.permute.xlu0 %2534
        %2536 = vrot.lane.b32.xlu0 %v1884, 96
        %v2537 = vpop.permute.xlu0 %2536
        %2538 = vrot.lane.b32.xlu0 %v1885, 96
        %v2539 = vpop.permute.xlu0 %2538
        %2540 = vrot.lane.b32.xlu0 %v1886, 96
        %v2541 = vpop.permute.xlu0 %2540
        %2542 = vrot.lane.b32.xlu0 %v1887, 96
        %v2543 = vpop.permute.xlu0 %2542
        %2544 = vrot.lane.b32.xlu0 %v1888, 96
        %v2545 = vpop.permute.xlu0 %2544
        %v2546 = vsel %vm1195, %v2531, %v2533
        %v2547 = vsel %vm1195, %v2533, %v2535
        %v2548 = vsel %vm1195, %v2535, %v2537
        %v2549 = vsel %vm1195, %v2537, %v2539
        %v2550 = vsel %vm1195, %v2539, %v2541
        %v2551 = vsel %vm1195, %v2541, %v2543
        %v2552 = vsel %vm1195, %v2543, %v2545
        %v2553 = vsel %vm569, %v2529, 0
        %v2555 = vsel %vm572, %v2546, 0
        %v2557 = vsel %vm572, %v2547, 0
        %v2559 = vsel %vm572, %v2548, 0
        %v2561 = vsel %vm572, %v2549, 0
        %v2563 = vsel %vm572, %v2550, 0
        %v2565 = vsel %vm572, %v2551, 0
        %v2567 = vsel %vm572, %v2552, 0
        %v2569 = vsel %vm572, %v2545, 0
        %2571 = vmatprep.subr.mxu0 0.0
        %2572 = vmatpush1.msra.mxu0 0.0
        %2573 = vmatprep.subr.mxu0 0.0
        %2574 = vmatpush1.msra.mxu0 0.0
        %2575 = vmatprep.subr.mxu0 0.0
        %2576 = vmatpush1.msra.mxu0 0.0
        %2577 = vmatprep.subr.mxu0 0.0
        %2578 = vmatpush1.msra.mxu0 0.0
        %2579 = vmatprep.subr.mxu0 0.0
        %2580 = vmatpush1.msra.mxu0 0.0
        %2581 = vmatprep.subr.mxu0 0.0
        %2582 = vmatpush1.msra.mxu0 0.0
        %2583 = vmatprep.subr.mxu0 0.0
        %2584 = vmatpush1.msra.mxu0 0.0
        %2585 = vmatprep.subr.mxu0 0.0
        %2586 = vmatpush1.msra.mxu0 0.0
        %2587 = vmatprep.subr.mxu0 0.0
        %2588 = vmatpush1.msra.mxu0 0.0
        %2589 = vmatprep.subr.mxu0 0.0
        %2590 = vmatpush1.msra.mxu0 0.0
        %2591 = vmatprep.subr.mxu0 0.0
        %2592 = vmatpush1.msra.mxu0 0.0
        %2593 = vmatprep.subr.mxu0 0.0
        %2594 = vmatpush1.msra.mxu0 0.0
        %2595 = vmatprep.subr.mxu0 0.0
        %2596 = vmatpush1.msra.mxu0 0.0
        %2597 = vmatprep.subr.mxu0 0.0
        %2598 = vmatpush1.msra.mxu0 0.0
        %2599 = vmatprep.subr.mxu0 0.0
        %2600 = vmatpush1.msra.mxu0 0.0
        %2601 = vmatprep.subr.mxu0 %v2557
        %2602 = vmatpush1.msra.mxu0 %v2555
        %2603 = vmatprep.subr.mxu0 0.0
        %2604 = vmatpush2.msra.mxu0 0.0
        %2605 = vmatprep.subr.mxu0 0.0
        %2606 = vmatpush2.msra.mxu0 0.0
        %2607 = vmatprep.subr.mxu0 0.0
        %2608 = vmatpush2.msra.mxu0 0.0
        %2609 = vmatprep.subr.mxu0 0.0
        %2610 = vmatpush2.msra.mxu0 0.0
        %2611 = vmatprep.subr.mxu0 0.0
        %2612 = vmatpush2.msra.mxu0 0.0
        %2613 = vmatprep.subr.mxu0 0.0
        %2614 = vmatpush2.msra.mxu0 0.0
        %2615 = vmatprep.subr.mxu0 0.0
        %2616 = vmatpush2.msra.mxu0 0.0
        %2617 = vmatprep.subr.mxu0 0.0
        %2618 = vmatpush2.msra.mxu0 0.0
        %2619 = vmatprep.subr.mxu0 0.0
        %2620 = vmatpush2.msra.mxu0 0.0
        %2621 = vmatprep.subr.mxu0 0.0
        %2622 = vmatpush2.msra.mxu0 0.0
        %2623 = vmatprep.subr.mxu0 0.0
        %2624 = vmatpush2.msra.mxu0 0.0
        %2625 = vmatprep.subr.mxu0 0.0
        %2626 = vmatpush2.msra.mxu0 0.0
        %2627 = vmatprep.subr.mxu0 0.0
        %2628 = vmatpush2.msra.mxu0 0.0
        %2629 = vmatprep.subr.mxu0 0.0
        %2630 = vmatpush2.msra.mxu0 0.0
        %2631 = vmatprep.subr.mxu0 0.0
        %2632 = vmatpush2.msra.mxu0 0.0
        %2633 = vmatprep.subr.mxu0 0.0
        %2634 = vmatpush2.msra.mxu0 0.0
        %2635 = vmatprep.mubr.f32.mxu0 0.0
        %2636 = vmatmul.mubr.f32.gmra.mxu0 %v2553
        %v2637 = vpop.f32.mrf.mxu0
        %v2638 = vadd.f32 0.0, %v2637
        %v2639 = vpop.f32.mrf.mxu0
        %v2640 = vadd.f32 0.0, %v2639
        %2641 = vdwg.mxu0
        %2642 = vmatprep.subr.mxu0 0.0
        %2643 = vmatpush1.msra.mxu0 0.0
        %2644 = vmatprep.subr.mxu0 0.0
        %2645 = vmatpush1.msra.mxu0 0.0
        %2646 = vmatprep.subr.mxu0 0.0
        %2647 = vmatpush1.msra.mxu0 0.0
        %2648 = vmatprep.subr.mxu0 0.0
        %2649 = vmatpush1.msra.mxu0 0.0
        %2650 = vmatprep.subr.mxu0 0.0
        %2651 = vmatpush1.msra.mxu0 0.0
        %2652 = vmatprep.subr.mxu0 0.0
        %2653 = vmatpush1.msra.mxu0 0.0
        %2654 = vmatprep.subr.mxu0 0.0
        %2655 = vmatpush1.msra.mxu0 0.0
        %2656 = vmatprep.subr.mxu0 0.0
        %2657 = vmatpush1.msra.mxu0 0.0
        %2658 = vmatprep.subr.mxu0 0.0
        %2659 = vmatpush1.msra.mxu0 0.0
        %2660 = vmatprep.subr.mxu0 0.0
        %2661 = vmatpush1.msra.mxu0 0.0
        %2662 = vmatprep.subr.mxu0 0.0
        %2663 = vmatpush1.msra.mxu0 0.0
        %2664 = vmatprep.subr.mxu0 0.0
        %2665 = vmatpush1.msra.mxu0 0.0
        %2666 = vmatprep.subr.mxu0 0.0
        %2667 = vmatpush1.msra.mxu0 0.0
        %2668 = vmatprep.subr.mxu0 0.0
        %2669 = vmatpush1.msra.mxu0 0.0
        %2670 = vmatprep.subr.mxu0 0.0
        %2671 = vmatpush1.msra.mxu0 0.0
        %2672 = vmatprep.subr.mxu0 %v2561
        %2673 = vmatpush1.msra.mxu0 %v2559
        %2674 = vmatprep.subr.mxu0 0.0
        %2675 = vmatpush2.msra.mxu0 0.0
        %2676 = vmatprep.subr.mxu0 0.0
        %2677 = vmatpush2.msra.mxu0 0.0
        %2678 = vmatprep.subr.mxu0 0.0
        %2679 = vmatpush2.msra.mxu0 0.0
        %2680 = vmatprep.subr.mxu0 0.0
        %2681 = vmatpush2.msra.mxu0 0.0
        %2682 = vmatprep.subr.mxu0 0.0
        %2683 = vmatpush2.msra.mxu0 0.0
        %2684 = vmatprep.subr.mxu0 0.0
        %2685 = vmatpush2.msra.mxu0 0.0
        %2686 = vmatprep.subr.mxu0 0.0
        %2687 = vmatpush2.msra.mxu0 0.0
        %2688 = vmatprep.subr.mxu0 0.0
        %2689 = vmatpush2.msra.mxu0 0.0
        %2690 = vmatprep.subr.mxu0 0.0
        %2691 = vmatpush2.msra.mxu0 0.0
        %2692 = vmatprep.subr.mxu0 0.0
        %2693 = vmatpush2.msra.mxu0 0.0
        %2694 = vmatprep.subr.mxu0 0.0
        %2695 = vmatpush2.msra.mxu0 0.0
        %2696 = vmatprep.subr.mxu0 0.0
        %2697 = vmatpush2.msra.mxu0 0.0
        %2698 = vmatprep.subr.mxu0 0.0
        %2699 = vmatpush2.msra.mxu0 0.0
        %2700 = vmatprep.subr.mxu0 0.0
        %2701 = vmatpush2.msra.mxu0 0.0
        %2702 = vmatprep.subr.mxu0 0.0
        %2703 = vmatpush2.msra.mxu0 0.0
        %2704 = vmatprep.subr.mxu0 0.0
        %2705 = vmatpush2.msra.mxu0 0.0
        %2706 = vmatprep.mubr.f32.mxu0 0.0
        %2707 = vmatmul.mubr.f32.gmra.mxu0 %v2553
        %v2708 = vpop.f32.mrf.mxu0
        %v2709 = vadd.f32 0.0, %v2708
        %v2710 = vpop.f32.mrf.mxu0
        %v2711 = vadd.f32 0.0, %v2710
        %2712 = vdwg.mxu0
        %2713 = vmatprep.subr.mxu0 0.0
        %2714 = vmatpush1.msra.mxu0 0.0
        %2715 = vmatprep.subr.mxu0 0.0
        %2716 = vmatpush1.msra.mxu0 0.0
        %2717 = vmatprep.subr.mxu0 0.0
        %2718 = vmatpush1.msra.mxu0 0.0
        %2719 = vmatprep.subr.mxu0 0.0
        %2720 = vmatpush1.msra.mxu0 0.0
        %2721 = vmatprep.subr.mxu0 0.0
        %2722 = vmatpush1.msra.mxu0 0.0
        %2723 = vmatprep.subr.mxu0 0.0
        %2724 = vmatpush1.msra.mxu0 0.0
        %2725 = vmatprep.subr.mxu0 0.0
        %2726 = vmatpush1.msra.mxu0 0.0
        %2727 = vmatprep.subr.mxu0 0.0
        %2728 = vmatpush1.msra.mxu0 0.0
        %2729 = vmatprep.subr.mxu0 0.0
        %2730 = vmatpush1.msra.mxu0 0.0
        %2731 = vmatprep.subr.mxu0 0.0
        %2732 = vmatpush1.msra.mxu0 0.0
        %2733 = vmatprep.subr.mxu0 0.0
        %2734 = vmatpush1.msra.mxu0 0.0
        %2735 = vmatprep.subr.mxu0 0.0
        %2736 = vmatpush1.msra.mxu0 0.0
        %2737 = vmatprep.subr.mxu0 0.0
        %2738 = vmatpush1.msra.mxu0 0.0
        %2739 = vmatprep.subr.mxu0 0.0
        %2740 = vmatpush1.msra.mxu0 0.0
        %2741 = vmatprep.subr.mxu0 0.0
        %2742 = vmatpush1.msra.mxu0 0.0
        %2743 = vmatprep.subr.mxu0 %v2565
        %2744 = vmatpush1.msra.mxu0 %v2563
        %2745 = vmatprep.subr.mxu0 0.0
        %2746 = vmatpush2.msra.mxu0 0.0
        %2747 = vmatprep.subr.mxu0 0.0
        %2748 = vmatpush2.msra.mxu0 0.0
        %2749 = vmatprep.subr.mxu0 0.0
        %2750 = vmatpush2.msra.mxu0 0.0
        %2751 = vmatprep.subr.mxu0 0.0
        %2752 = vmatpush2.msra.mxu0 0.0
        %2753 = vmatprep.subr.mxu0 0.0
        %2754 = vmatpush2.msra.mxu0 0.0
        %2755 = vmatprep.subr.mxu0 0.0
        %2756 = vmatpush2.msra.mxu0 0.0
        %2757 = vmatprep.subr.mxu0 0.0
        %2758 = vmatpush2.msra.mxu0 0.0
        %2759 = vmatprep.subr.mxu0 0.0
        %2760 = vmatpush2.msra.mxu0 0.0
        %2761 = vmatprep.subr.mxu0 0.0
        %2762 = vmatpush2.msra.mxu0 0.0
        %2763 = vmatprep.subr.mxu0 0.0
        %2764 = vmatpush2.msra.mxu0 0.0
        %2765 = vmatprep.subr.mxu0 0.0
        %2766 = vmatpush2.msra.mxu0 0.0
        %2767 = vmatprep.subr.mxu0 0.0
        %2768 = vmatpush2.msra.mxu0 0.0
        %2769 = vmatprep.subr.mxu0 0.0
        %2770 = vmatpush2.msra.mxu0 0.0
        %2771 = vmatprep.subr.mxu0 0.0
        %2772 = vmatpush2.msra.mxu0 0.0
        %2773 = vmatprep.subr.mxu0 0.0
        %2774 = vmatpush2.msra.mxu0 0.0
        %2775 = vmatprep.subr.mxu0 0.0
        %2776 = vmatpush2.msra.mxu0 0.0
        %2777 = vmatprep.mubr.f32.mxu0 0.0
        %2778 = vmatmul.mubr.f32.gmra.mxu0 %v2553
        %v2779 = vpop.f32.mrf.mxu0
        %v2780 = vadd.f32 0.0, %v2779
        %v2781 = vpop.f32.mrf.mxu0
        %v2782 = vadd.f32 0.0, %v2781
        %2783 = vdwg.mxu0
        %2784 = vmatprep.subr.mxu0 0.0
        %2785 = vmatpush1.msra.mxu0 0.0
        %2786 = vmatprep.subr.mxu0 0.0
        %2787 = vmatpush1.msra.mxu0 0.0
        %2788 = vmatprep.subr.mxu0 0.0
        %2789 = vmatpush1.msra.mxu0 0.0
        %2790 = vmatprep.subr.mxu0 0.0
        %2791 = vmatpush1.msra.mxu0 0.0
        %2792 = vmatprep.subr.mxu0 0.0
        %2793 = vmatpush1.msra.mxu0 0.0
        %2794 = vmatprep.subr.mxu0 0.0
        %2795 = vmatpush1.msra.mxu0 0.0
        %2796 = vmatprep.subr.mxu0 0.0
        %2797 = vmatpush1.msra.mxu0 0.0
        %2798 = vmatprep.subr.mxu0 0.0
        %2799 = vmatpush1.msra.mxu0 0.0
        %2800 = vmatprep.subr.mxu0 0.0
        %2801 = vmatpush1.msra.mxu0 0.0
        %2802 = vmatprep.subr.mxu0 0.0
        %2803 = vmatpush1.msra.mxu0 0.0
        %2804 = vmatprep.subr.mxu0 0.0
        %2805 = vmatpush1.msra.mxu0 0.0
        %2806 = vmatprep.subr.mxu0 0.0
        %2807 = vmatpush1.msra.mxu0 0.0
        %2808 = vmatprep.subr.mxu0 0.0
        %2809 = vmatpush1.msra.mxu0 0.0
        %2810 = vmatprep.subr.mxu0 0.0
        %2811 = vmatpush1.msra.mxu0 0.0
        %2812 = vmatprep.subr.mxu0 0.0
        %2813 = vmatpush1.msra.mxu0 0.0
        %2814 = vmatprep.subr.mxu0 %v2569
        %2815 = vmatpush1.msra.mxu0 %v2567
        %2816 = vmatprep.subr.mxu0 0.0
        %2817 = vmatpush2.msra.mxu0 0.0
        %2818 = vmatprep.subr.mxu0 0.0
        %2819 = vmatpush2.msra.mxu0 0.0
        %2820 = vmatprep.subr.mxu0 0.0
        %2821 = vmatpush2.msra.mxu0 0.0
        %2822 = vmatprep.subr.mxu0 0.0
        %2823 = vmatpush2.msra.mxu0 0.0
        %2824 = vmatprep.subr.mxu0 0.0
        %2825 = vmatpush2.msra.mxu0 0.0
        %2826 = vmatprep.subr.mxu0 0.0
        %2827 = vmatpush2.msra.mxu0 0.0
        %2828 = vmatprep.subr.mxu0 0.0
        %2829 = vmatpush2.msra.mxu0 0.0
        %2830 = vmatprep.subr.mxu0 0.0
        %2831 = vmatpush2.msra.mxu0 0.0
        %2832 = vmatprep.subr.mxu0 0.0
        %2833 = vmatpush2.msra.mxu0 0.0
        %2834 = vmatprep.subr.mxu0 0.0
        %2835 = vmatpush2.msra.mxu0 0.0
        %2836 = vmatprep.subr.mxu0 0.0
        %2837 = vmatpush2.msra.mxu0 0.0
        %2838 = vmatprep.subr.mxu0 0.0
        %2839 = vmatpush2.msra.mxu0 0.0
        %2840 = vmatprep.subr.mxu0 0.0
        %2841 = vmatpush2.msra.mxu0 0.0
        %2842 = vmatprep.subr.mxu0 0.0
        %2843 = vmatpush2.msra.mxu0 0.0
        %2844 = vmatprep.subr.mxu0 0.0
        %2845 = vmatpush2.msra.mxu0 0.0
        %2846 = vmatprep.subr.mxu0 0.0
        %2847 = vmatpush2.msra.mxu0 0.0
        %2848 = vmatprep.mubr.f32.mxu0 0.0
        %2849 = vmatmul.mubr.f32.gmra.mxu0 %v2553
        %v2850 = vpop.f32.mrf.mxu0
        %v2851 = vadd.f32 0.0, %v2850
        %v2852 = vpop.f32.mrf.mxu0
        %v2853 = vadd.f32 0.0, %v2852
        %2854 = vdwg.mxu0
        %v2855 = vadd.f32 %v2311, %v2638
        %v2856 = vadd.f32 %v2313, %v2640
        %v2857 = vadd.f32 %v2382, %v2709
        %v2858 = vadd.f32 %v2384, %v2711
        %v2859 = vadd.f32 %v2453, %v2780
        %v2860 = vadd.f32 %v2455, %v2782
        %v2861 = vadd.f32 %v2524, %v2851
        %v2862 = vadd.f32 %v2526, %v2853
        %2863 = vrot.lane.b32.xlu0 %v1889, 116
        %v2864 = vpop.permute.xlu0 %2863
        %2865 = vrot.lane.b32.xlu0 %v1881, 95
        %v2866 = vpop.permute.xlu0 %2865
        %2867 = vrot.lane.b32.xlu0 %v1882, 95
        %v2868 = vpop.permute.xlu0 %2867
        %2869 = vrot.lane.b32.xlu0 %v1883, 95
        %v2870 = vpop.permute.xlu0 %2869
        %2871 = vrot.lane.b32.xlu0 %v1884, 95
        %v2872 = vpop.permute.xlu0 %2871
        %2873 = vrot.lane.b32.xlu0 %v1885, 95
        %v2874 = vpop.permute.xlu0 %2873
        %2875 = vrot.lane.b32.xlu0 %v1886, 95
        %v2876 = vpop.permute.xlu0 %2875
        %2877 = vrot.lane.b32.xlu0 %v1887, 95
        %v2878 = vpop.permute.xlu0 %2877
        %2879 = vrot.lane.b32.xlu0 %v1888, 95
        %v2880 = vpop.permute.xlu0 %2879
        %v2881 = vsel %vm1533, %v2866, %v2868
        %v2882 = vsel %vm1533, %v2868, %v2870
        %v2883 = vsel %vm1533, %v2870, %v2872
        %v2884 = vsel %vm1533, %v2872, %v2874
        %v2885 = vsel %vm1533, %v2874, %v2876
        %v2886 = vsel %vm1533, %v2876, %v2878
        %v2887 = vsel %vm1533, %v2878, %v2880
        %v2888 = vsel %vm569, %v2864, 0
        %v2890 = vsel %vm572, %v2881, 0
        %v2892 = vsel %vm572, %v2882, 0
        %v2894 = vsel %vm572, %v2883, 0
        %v2896 = vsel %vm572, %v2884, 0
        %v2898 = vsel %vm572, %v2885, 0
        %v2900 = vsel %vm572, %v2886, 0
        %v2902 = vsel %vm572, %v2887, 0
        %v2904 = vsel %vm572, %v2880, 0
        %2906 = vmatprep.subr.mxu0 0.0
        %2907 = vmatpush1.msra.mxu0 0.0
        %2908 = vmatprep.subr.mxu0 0.0
        %2909 = vmatpush1.msra.mxu0 0.0
        %2910 = vmatprep.subr.mxu0 0.0
        %2911 = vmatpush1.msra.mxu0 0.0
        %2912 = vmatprep.subr.mxu0 0.0
        %2913 = vmatpush1.msra.mxu0 0.0
        %2914 = vmatprep.subr.mxu0 0.0
        %2915 = vmatpush1.msra.mxu0 0.0
        %2916 = vmatprep.subr.mxu0 0.0
        %2917 = vmatpush1.msra.mxu0 0.0
        %2918 = vmatprep.subr.mxu0 0.0
        %2919 = vmatpush1.msra.mxu0 0.0
        %2920 = vmatprep.subr.mxu0 0.0
        %2921 = vmatpush1.msra.mxu0 0.0
        %2922 = vmatprep.subr.mxu0 0.0
        %2923 = vmatpush1.msra.mxu0 0.0
        %2924 = vmatprep.subr.mxu0 0.0
        %2925 = vmatpush1.msra.mxu0 0.0
        %2926 = vmatprep.subr.mxu0 0.0
        %2927 = vmatpush1.msra.mxu0 0.0
        %2928 = vmatprep.subr.mxu0 0.0
        %2929 = vmatpush1.msra.mxu0 0.0
        %2930 = vmatprep.subr.mxu0 0.0
        %2931 = vmatpush1.msra.mxu0 0.0
        %2932 = vmatprep.subr.mxu0 0.0
        %2933 = vmatpush1.msra.mxu0 0.0
        %2934 = vmatprep.subr.mxu0 0.0
        %2935 = vmatpush1.msra.mxu0 0.0
        %2936 = vmatprep.subr.mxu0 %v2892
        %2937 = vmatpush1.msra.mxu0 %v2890
        %2938 = vmatprep.subr.mxu0 0.0
        %2939 = vmatpush2.msra.mxu0 0.0
        %2940 = vmatprep.subr.mxu0 0.0
        %2941 = vmatpush2.msra.mxu0 0.0
        %2942 = vmatprep.subr.mxu0 0.0
        %2943 = vmatpush2.msra.mxu0 0.0
        %2944 = vmatprep.subr.mxu0 0.0
        %2945 = vmatpush2.msra.mxu0 0.0
        %2946 = vmatprep.subr.mxu0 0.0
        %2947 = vmatpush2.msra.mxu0 0.0
        %2948 = vmatprep.subr.mxu0 0.0
        %2949 = vmatpush2.msra.mxu0 0.0
        %2950 = vmatprep.subr.mxu0 0.0
        %2951 = vmatpush2.msra.mxu0 0.0
        %2952 = vmatprep.subr.mxu0 0.0
        %2953 = vmatpush2.msra.mxu0 0.0
        %2954 = vmatprep.subr.mxu0 0.0
        %2955 = vmatpush2.msra.mxu0 0.0
        %2956 = vmatprep.subr.mxu0 0.0
        %2957 = vmatpush2.msra.mxu0 0.0
        %2958 = vmatprep.subr.mxu0 0.0
        %2959 = vmatpush2.msra.mxu0 0.0
        %2960 = vmatprep.subr.mxu0 0.0
        %2961 = vmatpush2.msra.mxu0 0.0
        %2962 = vmatprep.subr.mxu0 0.0
        %2963 = vmatpush2.msra.mxu0 0.0
        %2964 = vmatprep.subr.mxu0 0.0
        %2965 = vmatpush2.msra.mxu0 0.0
        %2966 = vmatprep.subr.mxu0 0.0
        %2967 = vmatpush2.msra.mxu0 0.0
        %2968 = vmatprep.subr.mxu0 0.0
        %2969 = vmatpush2.msra.mxu0 0.0
        %2970 = vmatprep.mubr.f32.mxu0 0.0
        %2971 = vmatmul.mubr.f32.gmra.mxu0 %v2888
        %v2972 = vpop.f32.mrf.mxu0
        %v2973 = vadd.f32 0.0, %v2972
        %v2974 = vpop.f32.mrf.mxu0
        %v2975 = vadd.f32 0.0, %v2974
        %2976 = vdwg.mxu0
        %2977 = vmatprep.subr.mxu0 0.0
        %2978 = vmatpush1.msra.mxu0 0.0
        %2979 = vmatprep.subr.mxu0 0.0
        %2980 = vmatpush1.msra.mxu0 0.0
        %2981 = vmatprep.subr.mxu0 0.0
        %2982 = vmatpush1.msra.mxu0 0.0
        %2983 = vmatprep.subr.mxu0 0.0
        %2984 = vmatpush1.msra.mxu0 0.0
        %2985 = vmatprep.subr.mxu0 0.0
        %2986 = vmatpush1.msra.mxu0 0.0
        %2987 = vmatprep.subr.mxu0 0.0
        %2988 = vmatpush1.msra.mxu0 0.0
        %2989 = vmatprep.subr.mxu0 0.0
        %2990 = vmatpush1.msra.mxu0 0.0
        %2991 = vmatprep.subr.mxu0 0.0
        %2992 = vmatpush1.msra.mxu0 0.0
        %2993 = vmatprep.subr.mxu0 0.0
        %2994 = vmatpush1.msra.mxu0 0.0
        %2995 = vmatprep.subr.mxu0 0.0
        %2996 = vmatpush1.msra.mxu0 0.0
        %2997 = vmatprep.subr.mxu0 0.0
        %2998 = vmatpush1.msra.mxu0 0.0
        %2999 = vmatprep.subr.mxu0 0.0
        %3000 = vmatpush1.msra.mxu0 0.0
        %3001 = vmatprep.subr.mxu0 0.0
        %3002 = vmatpush1.msra.mxu0 0.0
        %3003 = vmatprep.subr.mxu0 0.0
        %3004 = vmatpush1.msra.mxu0 0.0
        %3005 = vmatprep.subr.mxu0 0.0
        %3006 = vmatpush1.msra.mxu0 0.0
        %3007 = vmatprep.subr.mxu0 %v2896
        %3008 = vmatpush1.msra.mxu0 %v2894
        %3009 = vmatprep.subr.mxu0 0.0
        %3010 = vmatpush2.msra.mxu0 0.0
        %3011 = vmatprep.subr.mxu0 0.0
        %3012 = vmatpush2.msra.mxu0 0.0
        %3013 = vmatprep.subr.mxu0 0.0
        %3014 = vmatpush2.msra.mxu0 0.0
        %3015 = vmatprep.subr.mxu0 0.0
        %3016 = vmatpush2.msra.mxu0 0.0
        %3017 = vmatprep.subr.mxu0 0.0
        %3018 = vmatpush2.msra.mxu0 0.0
        %3019 = vmatprep.subr.mxu0 0.0
        %3020 = vmatpush2.msra.mxu0 0.0
        %3021 = vmatprep.subr.mxu0 0.0
        %3022 = vmatpush2.msra.mxu0 0.0
        %3023 = vmatprep.subr.mxu0 0.0
        %3024 = vmatpush2.msra.mxu0 0.0
        %3025 = vmatprep.subr.mxu0 0.0
        %3026 = vmatpush2.msra.mxu0 0.0
        %3027 = vmatprep.subr.mxu0 0.0
        %3028 = vmatpush2.msra.mxu0 0.0
        %3029 = vmatprep.subr.mxu0 0.0
        %3030 = vmatpush2.msra.mxu0 0.0
        %3031 = vmatprep.subr.mxu0 0.0
        %3032 = vmatpush2.msra.mxu0 0.0
        %3033 = vmatprep.subr.mxu0 0.0
        %3034 = vmatpush2.msra.mxu0 0.0
        %3035 = vmatprep.subr.mxu0 0.0
        %3036 = vmatpush2.msra.mxu0 0.0
        %3037 = vmatprep.subr.mxu0 0.0
        %3038 = vmatpush2.msra.mxu0 0.0
        %3039 = vmatprep.subr.mxu0 0.0
        %3040 = vmatpush2.msra.mxu0 0.0
        %3041 = vmatprep.mubr.f32.mxu0 0.0
        %3042 = vmatmul.mubr.f32.gmra.mxu0 %v2888
        %v3043 = vpop.f32.mrf.mxu0
        %v3044 = vadd.f32 0.0, %v3043
        %v3045 = vpop.f32.mrf.mxu0
        %v3046 = vadd.f32 0.0, %v3045
        %3047 = vdwg.mxu0
        %3048 = vmatprep.subr.mxu0 0.0
        %3049 = vmatpush1.msra.mxu0 0.0
        %3050 = vmatprep.subr.mxu0 0.0
        %3051 = vmatpush1.msra.mxu0 0.0
        %3052 = vmatprep.subr.mxu0 0.0
        %3053 = vmatpush1.msra.mxu0 0.0
        %3054 = vmatprep.subr.mxu0 0.0
        %3055 = vmatpush1.msra.mxu0 0.0
        %3056 = vmatprep.subr.mxu0 0.0
        %3057 = vmatpush1.msra.mxu0 0.0
        %3058 = vmatprep.subr.mxu0 0.0
        %3059 = vmatpush1.msra.mxu0 0.0
        %3060 = vmatprep.subr.mxu0 0.0
        %3061 = vmatpush1.msra.mxu0 0.0
        %3062 = vmatprep.subr.mxu0 0.0
        %3063 = vmatpush1.msra.mxu0 0.0
        %3064 = vmatprep.subr.mxu0 0.0
        %3065 = vmatpush1.msra.mxu0 0.0
        %3066 = vmatprep.subr.mxu0 0.0
        %3067 = vmatpush1.msra.mxu0 0.0
        %3068 = vmatprep.subr.mxu0 0.0
        %3069 = vmatpush1.msra.mxu0 0.0
        %3070 = vmatprep.subr.mxu0 0.0
        %3071 = vmatpush1.msra.mxu0 0.0
        %3072 = vmatprep.subr.mxu0 0.0
        %3073 = vmatpush1.msra.mxu0 0.0
        %3074 = vmatprep.subr.mxu0 0.0
        %3075 = vmatpush1.msra.mxu0 0.0
        %3076 = vmatprep.subr.mxu0 0.0
        %3077 = vmatpush1.msra.mxu0 0.0
        %3078 = vmatprep.subr.mxu0 %v2900
        %3079 = vmatpush1.msra.mxu0 %v2898
        %3080 = vmatprep.subr.mxu0 0.0
        %3081 = vmatpush2.msra.mxu0 0.0
        %3082 = vmatprep.subr.mxu0 0.0
        %3083 = vmatpush2.msra.mxu0 0.0
        %3084 = vmatprep.subr.mxu0 0.0
        %3085 = vmatpush2.msra.mxu0 0.0
        %3086 = vmatprep.subr.mxu0 0.0
        %3087 = vmatpush2.msra.mxu0 0.0
        %3088 = vmatprep.subr.mxu0 0.0
        %3089 = vmatpush2.msra.mxu0 0.0
        %3090 = vmatprep.subr.mxu0 0.0
        %3091 = vmatpush2.msra.mxu0 0.0
        %3092 = vmatprep.subr.mxu0 0.0
        %3093 = vmatpush2.msra.mxu0 0.0
        %3094 = vmatprep.subr.mxu0 0.0
        %3095 = vmatpush2.msra.mxu0 0.0
        %3096 = vmatprep.subr.mxu0 0.0
        %3097 = vmatpush2.msra.mxu0 0.0
        %3098 = vmatprep.subr.mxu0 0.0
        %3099 = vmatpush2.msra.mxu0 0.0
        %3100 = vmatprep.subr.mxu0 0.0
        %3101 = vmatpush2.msra.mxu0 0.0
        %3102 = vmatprep.subr.mxu0 0.0
        %3103 = vmatpush2.msra.mxu0 0.0
        %3104 = vmatprep.subr.mxu0 0.0
        %3105 = vmatpush2.msra.mxu0 0.0
        %3106 = vmatprep.subr.mxu0 0.0
        %3107 = vmatpush2.msra.mxu0 0.0
        %3108 = vmatprep.subr.mxu0 0.0
        %3109 = vmatpush2.msra.mxu0 0.0
        %3110 = vmatprep.subr.mxu0 0.0
        %3111 = vmatpush2.msra.mxu0 0.0
        %3112 = vmatprep.mubr.f32.mxu0 0.0
        %3113 = vmatmul.mubr.f32.gmra.mxu0 %v2888
        %v3114 = vpop.f32.mrf.mxu0
        %v3115 = vadd.f32 0.0, %v3114
        %v3116 = vpop.f32.mrf.mxu0
        %v3117 = vadd.f32 0.0, %v3116
        %3118 = vdwg.mxu0
        %3119 = vmatprep.subr.mxu0 0.0
        %3120 = vmatpush1.msra.mxu0 0.0
        %3121 = vmatprep.subr.mxu0 0.0
        %3122 = vmatpush1.msra.mxu0 0.0
        %3123 = vmatprep.subr.mxu0 0.0
        %3124 = vmatpush1.msra.mxu0 0.0
        %3125 = vmatprep.subr.mxu0 0.0
        %3126 = vmatpush1.msra.mxu0 0.0
        %3127 = vmatprep.subr.mxu0 0.0
        %3128 = vmatpush1.msra.mxu0 0.0
        %3129 = vmatprep.subr.mxu0 0.0
        %3130 = vmatpush1.msra.mxu0 0.0
        %3131 = vmatprep.subr.mxu0 0.0
        %3132 = vmatpush1.msra.mxu0 0.0
        %3133 = vmatprep.subr.mxu0 0.0
        %3134 = vmatpush1.msra.mxu0 0.0
        %3135 = vmatprep.subr.mxu0 0.0
        %3136 = vmatpush1.msra.mxu0 0.0
        %3137 = vmatprep.subr.mxu0 0.0
        %3138 = vmatpush1.msra.mxu0 0.0
        %3139 = vmatprep.subr.mxu0 0.0
        %3140 = vmatpush1.msra.mxu0 0.0
        %3141 = vmatprep.subr.mxu0 0.0
        %3142 = vmatpush1.msra.mxu0 0.0
        %3143 = vmatprep.subr.mxu0 0.0
        %3144 = vmatpush1.msra.mxu0 0.0
        %3145 = vmatprep.subr.mxu0 0.0
        %3146 = vmatpush1.msra.mxu0 0.0
        %3147 = vmatprep.subr.mxu0 0.0
        %3148 = vmatpush1.msra.mxu0 0.0
        %3149 = vmatprep.subr.mxu0 %v2904
        %3150 = vmatpush1.msra.mxu0 %v2902
        %3151 = vmatprep.subr.mxu0 0.0
        %3152 = vmatpush2.msra.mxu0 0.0
        %3153 = vmatprep.subr.mxu0 0.0
        %3154 = vmatpush2.msra.mxu0 0.0
        %3155 = vmatprep.subr.mxu0 0.0
        %3156 = vmatpush2.msra.mxu0 0.0
        %3157 = vmatprep.subr.mxu0 0.0
        %3158 = vmatpush2.msra.mxu0 0.0
        %3159 = vmatprep.subr.mxu0 0.0
        %3160 = vmatpush2.msra.mxu0 0.0
        %3161 = vmatprep.subr.mxu0 0.0
        %3162 = vmatpush2.msra.mxu0 0.0
        %3163 = vmatprep.subr.mxu0 0.0
        %3164 = vmatpush2.msra.mxu0 0.0
        %3165 = vmatprep.subr.mxu0 0.0
        %3166 = vmatpush2.msra.mxu0 0.0
        %3167 = vmatprep.subr.mxu0 0.0
        %3168 = vmatpush2.msra.mxu0 0.0
        %3169 = vmatprep.subr.mxu0 0.0
        %3170 = vmatpush2.msra.mxu0 0.0
        %3171 = vmatprep.subr.mxu0 0.0
        %3172 = vmatpush2.msra.mxu0 0.0
        %3173 = vmatprep.subr.mxu0 0.0
        %3174 = vmatpush2.msra.mxu0 0.0
        %3175 = vmatprep.subr.mxu0 0.0
        %3176 = vmatpush2.msra.mxu0 0.0
        %3177 = vmatprep.subr.mxu0 0.0
        %3178 = vmatpush2.msra.mxu0 0.0
        %3179 = vmatprep.subr.mxu0 0.0
        %3180 = vmatpush2.msra.mxu0 0.0
        %3181 = vmatprep.subr.mxu0 0.0
        %3182 = vmatpush2.msra.mxu0 0.0
        %3183 = vmatprep.mubr.f32.mxu0 0.0
        %3184 = vmatmul.mubr.f32.gmra.mxu0 %v2888
        %v3185 = vpop.f32.mrf.mxu0
        %v3186 = vadd.f32 0.0, %v3185
        %v3187 = vpop.f32.mrf.mxu0
        %v3188 = vadd.f32 0.0, %v3187
        %3189 = vdwg.mxu0
        %v3190 = vadd.f32 %v2855, %v2973
        %v3191 = vadd.f32 %v2856, %v2975
        %v3192 = vadd.f32 %v2857, %v3044
        %v3193 = vadd.f32 %v2858, %v3046
        %v3194 = vadd.f32 %v2859, %v3115
        %v3195 = vadd.f32 %v2860, %v3117
        %v3196 = vadd.f32 %v2861, %v3186
        %v3197 = vadd.f32 %v2862, %v3188
        %v3198 = vld [vmem:[%s4] sm:$0xff]
        %3200 = vset.pattern.permute.xlu0 0
        %3201 = vperm.xlu0 %3200, %v3198
        %v3202 = vpop.permute.xlu0 %3201
        %v3204 = vadd.f32 %v3190, %v3202
        %v3205 = vadd.f32 %v3191, %v3202
        %v3206 = vadd.f32 %v3192, %v3202
        %v3207 = vadd.f32 %v3193, %v3202
        %v3208 = vadd.f32 %v3194, %v3202
        %v3209 = vadd.f32 %v3195, %v3202
        %v3210 = vadd.f32 %v3196, %v3202
        %v3211 = vadd.f32 %v3197, %v3202
        %vm3212 = vcmp.ge.f32.partialorder %v3204, 0.0
        %vm3213 = vcmp.ge.f32.partialorder %v3205, 0.0
        %vm3214 = vcmp.ge.f32.partialorder %v3206, 0.0
        %vm3215 = vcmp.ge.f32.partialorder %v3207, 0.0
        %vm3216 = vcmp.ge.f32.partialorder %v3208, 0.0
        %vm3217 = vcmp.ge.f32.partialorder %v3209, 0.0
        %vm3218 = vcmp.ge.f32.partialorder %v3210, 0.0
        %vm3219 = vcmp.ge.f32.partialorder %v3211, 0.0
        %v3220 = vmul.f32 %v3204, 0.01
        %v3221 = vmul.f32 %v3205, 0.01
        %v3222 = vmul.f32 %v3206, 0.01
        %v3223 = vmul.f32 %v3207, 0.01
        %v3224 = vmul.f32 %v3208, 0.01
        %v3225 = vmul.f32 %v3209, 0.01
        %v3226 = vmul.f32 %v3210, 0.01
        %v3227 = vmul.f32 %v3211, 0.01
        %v3228 = vsel %vm3212, %v3204, %v3220
        %v3229 = vsel %vm3213, %v3205, %v3221
        %v3230 = vsel %vm3214, %v3206, %v3222
        %v3231 = vsel %vm3215, %v3207, %v3223
        %v3232 = vsel %vm3216, %v3208, %v3224
        %v3233 = vsel %vm3217, %v3209, %v3225
        %v3234 = vsel %vm3218, %v3210, %v3226
        %v3235 = vsel %vm3219, %v3211, %v3227
        %v3244 = vcombine.low %v3228, %v3229
        %v3245 = vcombine.low %v3230, %v3231
        %v3246 = vcombine.low %v3232, %v3233
        %v3247 = vcombine.low %v3234, %v3235
        %3252 = vst [vmem:[%s514] sm:$0xff] %v3244
        %3253 = vst [vmem:[%s514 + $0x8] sm:$0xff] %v3245
        %3254 = vst [vmem:[%s514 + $0x10] sm:$0xff] %v3246
        %vm3255 = vcmask 506884
        %vm3256 = vmor %vm3255, %vm572
        %3257 = vst.msk [vmem:[%s514 + $0x18] sm:$0xff] %vm3256, %v3247
        %v3258 = vld [vmem:[%s5] sm:$0xf]
        %3260 = vrot.lane.b32.xlu0 %v3258, 124
        %v3261 = vpop.permute.xlu0 %3260
        %3262 = vrot.lane.b32.xlu0 %v3228, 127
        %v3263 = vpop.permute.xlu0 %3262
        %3264 = vrot.lane.b32.xlu0 %v3229, 127
        %v3265 = vpop.permute.xlu0 %3264
        %3266 = vrot.lane.b32.xlu0 %v3230, 127
        %v3267 = vpop.permute.xlu0 %3266
        %3268 = vrot.lane.b32.xlu0 %v3231, 127
        %v3269 = vpop.permute.xlu0 %3268
        %3270 = vrot.lane.b32.xlu0 %v3232, 127
        %v3271 = vpop.permute.xlu0 %3270
        %3272 = vrot.lane.b32.xlu0 %v3233, 127
        %v3273 = vpop.permute.xlu0 %3272
        %3274 = vrot.lane.b32.xlu0 %v3234, 127
        %v3275 = vpop.permute.xlu0 %3274
        %3276 = vrot.lane.b32.xlu0 %v3235, 127
        %v3277 = vpop.permute.xlu0 %3276
        %v3278 = vsel %vm561, %v3263, %v3265
        %v3279 = vsel %vm561, %v3265, %v3267
        %v3280 = vsel %vm561, %v3267, %v3269
        %v3281 = vsel %vm561, %v3269, %v3271
        %v3282 = vsel %vm561, %v3271, %v3273
        %v3283 = vsel %vm561, %v3273, %v3275
        %v3284 = vsel %vm561, %v3275, %v3277
        %v3285 = vsel %vm569, %v3261, 0
        %v3287 = vsel %vm572, %v3278, 0
        %v3289 = vsel %vm572, %v3279, 0
        %v3291 = vsel %vm572, %v3280, 0
        %v3293 = vsel %vm572, %v3281, 0
        %v3295 = vsel %vm572, %v3282, 0
        %v3297 = vsel %vm572, %v3283, 0
        %v3299 = vsel %vm572, %v3284, 0
        %v3301 = vsel %vm572, %v3277, 0
        %3303 = vmatprep.subr.mxu0 0.0
        %3304 = vmatpush1.msra.mxu0 0.0
        %3305 = vmatprep.subr.mxu0 0.0
        %3306 = vmatpush1.msra.mxu0 0.0
        %3307 = vmatprep.subr.mxu0 0.0
        %3308 = vmatpush1.msra.mxu0 0.0
        %3309 = vmatprep.subr.mxu0 0.0
        %3310 = vmatpush1.msra.mxu0 0.0
        %3311 = vmatprep.subr.mxu0 0.0
        %3312 = vmatpush1.msra.mxu0 0.0
        %3313 = vmatprep.subr.mxu0 0.0
        %3314 = vmatpush1.msra.mxu0 0.0
        %3315 = vmatprep.subr.mxu0 0.0
        %3316 = vmatpush1.msra.mxu0 0.0
        %3317 = vmatprep.subr.mxu0 0.0
        %3318 = vmatpush1.msra.mxu0 0.0
        %3319 = vmatprep.subr.mxu0 0.0
        %3320 = vmatpush1.msra.mxu0 0.0
        %3321 = vmatprep.subr.mxu0 0.0
        %3322 = vmatpush1.msra.mxu0 0.0
        %3323 = vmatprep.subr.mxu0 0.0
        %3324 = vmatpush1.msra.mxu0 0.0
        %3325 = vmatprep.subr.mxu0 0.0
        %3326 = vmatpush1.msra.mxu0 0.0
        %3327 = vmatprep.subr.mxu0 0.0
        %3328 = vmatpush1.msra.mxu0 0.0
        %3329 = vmatprep.subr.mxu0 0.0
        %3330 = vmatpush1.msra.mxu0 0.0
        %3331 = vmatprep.subr.mxu0 0.0
        %3332 = vmatpush1.msra.mxu0 0.0
        %3333 = vmatprep.subr.mxu0 %v3289
        %3334 = vmatpush1.msra.mxu0 %v3287
        %3335 = vmatprep.subr.mxu0 0.0
        %3336 = vmatpush2.msra.mxu0 0.0
        %3337 = vmatprep.subr.mxu0 0.0
        %3338 = vmatpush2.msra.mxu0 0.0
        %3339 = vmatprep.subr.mxu0 0.0
        %3340 = vmatpush2.msra.mxu0 0.0
        %3341 = vmatprep.subr.mxu0 0.0
        %3342 = vmatpush2.msra.mxu0 0.0
        %3343 = vmatprep.subr.mxu0 0.0
        %3344 = vmatpush2.msra.mxu0 0.0
        %3345 = vmatprep.subr.mxu0 0.0
        %3346 = vmatpush2.msra.mxu0 0.0
        %3347 = vmatprep.subr.mxu0 0.0
        %3348 = vmatpush2.msra.mxu0 0.0
        %3349 = vmatprep.subr.mxu0 0.0
        %3350 = vmatpush2.msra.mxu0 0.0
        %3351 = vmatprep.subr.mxu0 0.0
        %3352 = vmatpush2.msra.mxu0 0.0
        %3353 = vmatprep.subr.mxu0 0.0
        %3354 = vmatpush2.msra.mxu0 0.0
        %3355 = vmatprep.subr.mxu0 0.0
        %3356 = vmatpush2.msra.mxu0 0.0
        %3357 = vmatprep.subr.mxu0 0.0
        %3358 = vmatpush2.msra.mxu0 0.0
        %3359 = vmatprep.subr.mxu0 0.0
        %3360 = vmatpush2.msra.mxu0 0.0
        %3361 = vmatprep.subr.mxu0 0.0
        %3362 = vmatpush2.msra.mxu0 0.0
        %3363 = vmatprep.subr.mxu0 0.0
        %3364 = vmatpush2.msra.mxu0 0.0
        %3365 = vmatprep.subr.mxu0 0.0
        %3366 = vmatpush2.msra.mxu0 0.0
        %3367 = vmatprep.mubr.f32.mxu0 0.0
        %3368 = vmatmul.mubr.f32.gmra.mxu0 %v3285
        %v3369 = vpop.f32.mrf.mxu0
        %v3370 = vadd.f32 0.0, %v3369
        %v3371 = vpop.f32.mrf.mxu0
        %v3372 = vadd.f32 0.0, %v3371
        %3373 = vdwg.mxu0
        %3374 = vmatprep.subr.mxu0 0.0
        %3375 = vmatpush1.msra.mxu0 0.0
        %3376 = vmatprep.subr.mxu0 0.0
        %3377 = vmatpush1.msra.mxu0 0.0
        %3378 = vmatprep.subr.mxu0 0.0
        %3379 = vmatpush1.msra.mxu0 0.0
        %3380 = vmatprep.subr.mxu0 0.0
        %3381 = vmatpush1.msra.mxu0 0.0
        %3382 = vmatprep.subr.mxu0 0.0
        %3383 = vmatpush1.msra.mxu0 0.0
        %3384 = vmatprep.subr.mxu0 0.0
        %3385 = vmatpush1.msra.mxu0 0.0
        %3386 = vmatprep.subr.mxu0 0.0
        %3387 = vmatpush1.msra.mxu0 0.0
        %3388 = vmatprep.subr.mxu0 0.0
        %3389 = vmatpush1.msra.mxu0 0.0
        %3390 = vmatprep.subr.mxu0 0.0
        %3391 = vmatpush1.msra.mxu0 0.0
        %3392 = vmatprep.subr.mxu0 0.0
        %3393 = vmatpush1.msra.mxu0 0.0
        %3394 = vmatprep.subr.mxu0 0.0
        %3395 = vmatpush1.msra.mxu0 0.0
        %3396 = vmatprep.subr.mxu0 0.0
        %3397 = vmatpush1.msra.mxu0 0.0
        %3398 = vmatprep.subr.mxu0 0.0
        %3399 = vmatpush1.msra.mxu0 0.0
        %3400 = vmatprep.subr.mxu0 0.0
        %3401 = vmatpush1.msra.mxu0 0.0
        %3402 = vmatprep.subr.mxu0 0.0
        %3403 = vmatpush1.msra.mxu0 0.0
        %3404 = vmatprep.subr.mxu0 %v3293
        %3405 = vmatpush1.msra.mxu0 %v3291
        %3406 = vmatprep.subr.mxu0 0.0
        %3407 = vmatpush2.msra.mxu0 0.0
        %3408 = vmatprep.subr.mxu0 0.0
        %3409 = vmatpush2.msra.mxu0 0.0
        %3410 = vmatprep.subr.mxu0 0.0
        %3411 = vmatpush2.msra.mxu0 0.0
        %3412 = vmatprep.subr.mxu0 0.0
        %3413 = vmatpush2.msra.mxu0 0.0
        %3414 = vmatprep.subr.mxu0 0.0
        %3415 = vmatpush2.msra.mxu0 0.0
        %3416 = vmatprep.subr.mxu0 0.0
        %3417 = vmatpush2.msra.mxu0 0.0
        %3418 = vmatprep.subr.mxu0 0.0
        %3419 = vmatpush2.msra.mxu0 0.0
        %3420 = vmatprep.subr.mxu0 0.0
        %3421 = vmatpush2.msra.mxu0 0.0
        %3422 = vmatprep.subr.mxu0 0.0
        %3423 = vmatpush2.msra.mxu0 0.0
        %3424 = vmatprep.subr.mxu0 0.0
        %3425 = vmatpush2.msra.mxu0 0.0
        %3426 = vmatprep.subr.mxu0 0.0
        %3427 = vmatpush2.msra.mxu0 0.0
        %3428 = vmatprep.subr.mxu0 0.0
        %3429 = vmatpush2.msra.mxu0 0.0
        %3430 = vmatprep.subr.mxu0 0.0
        %3431 = vmatpush2.msra.mxu0 0.0
        %3432 = vmatprep.subr.mxu0 0.0
        %3433 = vmatpush2.msra.mxu0 0.0
        %3434 = vmatprep.subr.mxu0 0.0
        %3435 = vmatpush2.msra.mxu0 0.0
        %3436 = vmatprep.subr.mxu0 0.0
        %3437 = vmatpush2.msra.mxu0 0.0
        %3438 = vmatprep.mubr.f32.mxu0 0.0
        %3439 = vmatmul.mubr.f32.gmra.mxu0 %v3285
        %v3440 = vpop.f32.mrf.mxu0
        %v3441 = vadd.f32 0.0, %v3440
        %v3442 = vpop.f32.mrf.mxu0
        %v3443 = vadd.f32 0.0, %v3442
        %3444 = vdwg.mxu0
        %3445 = vmatprep.subr.mxu0 0.0
        %3446 = vmatpush1.msra.mxu0 0.0
        %3447 = vmatprep.subr.mxu0 0.0
        %3448 = vmatpush1.msra.mxu0 0.0
        %3449 = vmatprep.subr.mxu0 0.0
        %3450 = vmatpush1.msra.mxu0 0.0
        %3451 = vmatprep.subr.mxu0 0.0
        %3452 = vmatpush1.msra.mxu0 0.0
        %3453 = vmatprep.subr.mxu0 0.0
        %3454 = vmatpush1.msra.mxu0 0.0
        %3455 = vmatprep.subr.mxu0 0.0
        %3456 = vmatpush1.msra.mxu0 0.0
        %3457 = vmatprep.subr.mxu0 0.0
        %3458 = vmatpush1.msra.mxu0 0.0
        %3459 = vmatprep.subr.mxu0 0.0
        %3460 = vmatpush1.msra.mxu0 0.0
        %3461 = vmatprep.subr.mxu0 0.0
        %3462 = vmatpush1.msra.mxu0 0.0
        %3463 = vmatprep.subr.mxu0 0.0
        %3464 = vmatpush1.msra.mxu0 0.0
        %3465 = vmatprep.subr.mxu0 0.0
        %3466 = vmatpush1.msra.mxu0 0.0
        %3467 = vmatprep.subr.mxu0 0.0
        %3468 = vmatpush1.msra.mxu0 0.0
        %3469 = vmatprep.subr.mxu0 0.0
        %3470 = vmatpush1.msra.mxu0 0.0
        %3471 = vmatprep.subr.mxu0 0.0
        %3472 = vmatpush1.msra.mxu0 0.0
        %3473 = vmatprep.subr.mxu0 0.0
        %3474 = vmatpush1.msra.mxu0 0.0
        %3475 = vmatprep.subr.mxu0 %v3297
        %3476 = vmatpush1.msra.mxu0 %v3295
        %3477 = vmatprep.subr.mxu0 0.0
        %3478 = vmatpush2.msra.mxu0 0.0
        %3479 = vmatprep.subr.mxu0 0.0
        %3480 = vmatpush2.msra.mxu0 0.0
        %3481 = vmatprep.subr.mxu0 0.0
        %3482 = vmatpush2.msra.mxu0 0.0
        %3483 = vmatprep.subr.mxu0 0.0
        %3484 = vmatpush2.msra.mxu0 0.0
        %3485 = vmatprep.subr.mxu0 0.0
        %3486 = vmatpush2.msra.mxu0 0.0
        %3487 = vmatprep.subr.mxu0 0.0
        %3488 = vmatpush2.msra.mxu0 0.0
        %3489 = vmatprep.subr.mxu0 0.0
        %3490 = vmatpush2.msra.mxu0 0.0
        %3491 = vmatprep.subr.mxu0 0.0
        %3492 = vmatpush2.msra.mxu0 0.0
        %3493 = vmatprep.subr.mxu0 0.0
        %3494 = vmatpush2.msra.mxu0 0.0
        %3495 = vmatprep.subr.mxu0 0.0
        %3496 = vmatpush2.msra.mxu0 0.0
        %3497 = vmatprep.subr.mxu0 0.0
        %3498 = vmatpush2.msra.mxu0 0.0
        %3499 = vmatprep.subr.mxu0 0.0
        %3500 = vmatpush2.msra.mxu0 0.0
        %3501 = vmatprep.subr.mxu0 0.0
        %3502 = vmatpush2.msra.mxu0 0.0
        %3503 = vmatprep.subr.mxu0 0.0
        %3504 = vmatpush2.msra.mxu0 0.0
        %3505 = vmatprep.subr.mxu0 0.0
        %3506 = vmatpush2.msra.mxu0 0.0
        %3507 = vmatprep.subr.mxu0 0.0
        %3508 = vmatpush2.msra.mxu0 0.0
        %3509 = vmatprep.mubr.f32.mxu0 0.0
        %3510 = vmatmul.mubr.f32.gmra.mxu0 %v3285
        %v3511 = vpop.f32.mrf.mxu0
        %v3512 = vadd.f32 0.0, %v3511
        %v3513 = vpop.f32.mrf.mxu0
        %v3514 = vadd.f32 0.0, %v3513
        %3515 = vdwg.mxu0
        %3516 = vmatprep.subr.mxu0 0.0
        %3517 = vmatpush1.msra.mxu0 0.0
        %3518 = vmatprep.subr.mxu0 0.0
        %3519 = vmatpush1.msra.mxu0 0.0
        %3520 = vmatprep.subr.mxu0 0.0
        %3521 = vmatpush1.msra.mxu0 0.0
        %3522 = vmatprep.subr.mxu0 0.0
        %3523 = vmatpush1.msra.mxu0 0.0
        %3524 = vmatprep.subr.mxu0 0.0
        %3525 = vmatpush1.msra.mxu0 0.0
        %3526 = vmatprep.subr.mxu0 0.0
        %3527 = vmatpush1.msra.mxu0 0.0
        %3528 = vmatprep.subr.mxu0 0.0
        %3529 = vmatpush1.msra.mxu0 0.0
        %3530 = vmatprep.subr.mxu0 0.0
        %3531 = vmatpush1.msra.mxu0 0.0
        %3532 = vmatprep.subr.mxu0 0.0
        %3533 = vmatpush1.msra.mxu0 0.0
        %3534 = vmatprep.subr.mxu0 0.0
        %3535 = vmatpush1.msra.mxu0 0.0
        %3536 = vmatprep.subr.mxu0 0.0
        %3537 = vmatpush1.msra.mxu0 0.0
        %3538 = vmatprep.subr.mxu0 0.0
        %3539 = vmatpush1.msra.mxu0 0.0
        %3540 = vmatprep.subr.mxu0 0.0
        %3541 = vmatpush1.msra.mxu0 0.0
        %3542 = vmatprep.subr.mxu0 0.0
        %3543 = vmatpush1.msra.mxu0 0.0
        %3544 = vmatprep.subr.mxu0 0.0
        %3545 = vmatpush1.msra.mxu0 0.0
        %3546 = vmatprep.subr.mxu0 %v3301
        %3547 = vmatpush1.msra.mxu0 %v3299
        %3548 = vmatprep.subr.mxu0 0.0
        %3549 = vmatpush2.msra.mxu0 0.0
        %3550 = vmatprep.subr.mxu0 0.0
        %3551 = vmatpush2.msra.mxu0 0.0
        %3552 = vmatprep.subr.mxu0 0.0
        %3553 = vmatpush2.msra.mxu0 0.0
        %3554 = vmatprep.subr.mxu0 0.0
        %3555 = vmatpush2.msra.mxu0 0.0
        %3556 = vmatprep.subr.mxu0 0.0
        %3557 = vmatpush2.msra.mxu0 0.0
        %3558 = vmatprep.subr.mxu0 0.0
        %3559 = vmatpush2.msra.mxu0 0.0
        %3560 = vmatprep.subr.mxu0 0.0
        %3561 = vmatpush2.msra.mxu0 0.0
        %3562 = vmatprep.subr.mxu0 0.0
        %3563 = vmatpush2.msra.mxu0 0.0
        %3564 = vmatprep.subr.mxu0 0.0
        %3565 = vmatpush2.msra.mxu0 0.0
        %3566 = vmatprep.subr.mxu0 0.0
        %3567 = vmatpush2.msra.mxu0 0.0
        %3568 = vmatprep.subr.mxu0 0.0
        %3569 = vmatpush2.msra.mxu0 0.0
        %3570 = vmatprep.subr.mxu0 0.0
        %3571 = vmatpush2.msra.mxu0 0.0
        %3572 = vmatprep.subr.mxu0 0.0
        %3573 = vmatpush2.msra.mxu0 0.0
        %3574 = vmatprep.subr.mxu0 0.0
        %3575 = vmatpush2.msra.mxu0 0.0
        %3576 = vmatprep.subr.mxu0 0.0
        %3577 = vmatpush2.msra.mxu0 0.0
        %3578 = vmatprep.subr.mxu0 0.0
        %3579 = vmatpush2.msra.mxu0 0.0
        %3580 = vmatprep.mubr.f32.mxu0 0.0
        %3581 = vmatmul.mubr.f32.gmra.mxu0 %v3285
        %v3582 = vpop.f32.mrf.mxu0
        %v3583 = vadd.f32 0.0, %v3582
        %v3584 = vpop.f32.mrf.mxu0
        %v3585 = vadd.f32 0.0, %v3584
        %3586 = vdwg.mxu0
        %v3587 = vsel %vm569, %v3258, 0
        %v3589 = vsel %vm572, %v3228, 0
        %v3591 = vsel %vm572, %v3229, 0
        %v3593 = vsel %vm572, %v3230, 0
        %v3595 = vsel %vm572, %v3231, 0
        %v3597 = vsel %vm572, %v3232, 0
        %v3599 = vsel %vm572, %v3233, 0
        %v3601 = vsel %vm572, %v3234, 0
        %v3603 = vsel %vm572, %v3235, 0
        %3605 = vmatprep.subr.mxu0 0.0
        %3606 = vmatpush1.msra.mxu0 0.0
        %3607 = vmatprep.subr.mxu0 0.0
        %3608 = vmatpush1.msra.mxu0 0.0
        %3609 = vmatprep.subr.mxu0 0.0
        %3610 = vmatpush1.msra.mxu0 0.0
        %3611 = vmatprep.subr.mxu0 0.0
        %3612 = vmatpush1.msra.mxu0 0.0
        %3613 = vmatprep.subr.mxu0 0.0
        %3614 = vmatpush1.msra.mxu0 0.0
        %3615 = vmatprep.subr.mxu0 0.0
        %3616 = vmatpush1.msra.mxu0 0.0
        %3617 = vmatprep.subr.mxu0 0.0
        %3618 = vmatpush1.msra.mxu0 0.0
        %3619 = vmatprep.subr.mxu0 0.0
        %3620 = vmatpush1.msra.mxu0 0.0
        %3621 = vmatprep.subr.mxu0 0.0
        %3622 = vmatpush1.msra.mxu0 0.0
        %3623 = vmatprep.subr.mxu0 0.0
        %3624 = vmatpush1.msra.mxu0 0.0
        %3625 = vmatprep.subr.mxu0 0.0
        %3626 = vmatpush1.msra.mxu0 0.0
        %3627 = vmatprep.subr.mxu0 0.0
        %3628 = vmatpush1.msra.mxu0 0.0
        %3629 = vmatprep.subr.mxu0 0.0
        %3630 = vmatpush1.msra.mxu0 0.0
        %3631 = vmatprep.subr.mxu0 0.0
        %3632 = vmatpush1.msra.mxu0 0.0
        %3633 = vmatprep.subr.mxu0 0.0
        %3634 = vmatpush1.msra.mxu0 0.0
        %3635 = vmatprep.subr.mxu0 %v3591
        %3636 = vmatpush1.msra.mxu0 %v3589
        %3637 = vmatprep.subr.mxu0 0.0
        %3638 = vmatpush2.msra.mxu0 0.0
        %3639 = vmatprep.subr.mxu0 0.0
        %3640 = vmatpush2.msra.mxu0 0.0
        %3641 = vmatprep.subr.mxu0 0.0
        %3642 = vmatpush2.msra.mxu0 0.0
        %3643 = vmatprep.subr.mxu0 0.0
        %3644 = vmatpush2.msra.mxu0 0.0
        %3645 = vmatprep.subr.mxu0 0.0
        %3646 = vmatpush2.msra.mxu0 0.0
        %3647 = vmatprep.subr.mxu0 0.0
        %3648 = vmatpush2.msra.mxu0 0.0
        %3649 = vmatprep.subr.mxu0 0.0
        %3650 = vmatpush2.msra.mxu0 0.0
        %3651 = vmatprep.subr.mxu0 0.0
        %3652 = vmatpush2.msra.mxu0 0.0
        %3653 = vmatprep.subr.mxu0 0.0
        %3654 = vmatpush2.msra.mxu0 0.0
        %3655 = vmatprep.subr.mxu0 0.0
        %3656 = vmatpush2.msra.mxu0 0.0
        %3657 = vmatprep.subr.mxu0 0.0
        %3658 = vmatpush2.msra.mxu0 0.0
        %3659 = vmatprep.subr.mxu0 0.0
        %3660 = vmatpush2.msra.mxu0 0.0
        %3661 = vmatprep.subr.mxu0 0.0
        %3662 = vmatpush2.msra.mxu0 0.0
        %3663 = vmatprep.subr.mxu0 0.0
        %3664 = vmatpush2.msra.mxu0 0.0
        %3665 = vmatprep.subr.mxu0 0.0
        %3666 = vmatpush2.msra.mxu0 0.0
        %3667 = vmatprep.subr.mxu0 0.0
        %3668 = vmatpush2.msra.mxu0 0.0
        %3669 = vmatprep.mubr.f32.mxu0 0.0
        %3670 = vmatmul.mubr.f32.gmra.mxu0 %v3587
        %v3671 = vpop.f32.mrf.mxu0
        %v3672 = vadd.f32 %v3370, %v3671
        %v3673 = vpop.f32.mrf.mxu0
        %v3674 = vadd.f32 %v3372, %v3673
        %3675 = vdwg.mxu0
        %3676 = vmatprep.subr.mxu0 0.0
        %3677 = vmatpush1.msra.mxu0 0.0
        %3678 = vmatprep.subr.mxu0 0.0
        %3679 = vmatpush1.msra.mxu0 0.0
        %3680 = vmatprep.subr.mxu0 0.0
        %3681 = vmatpush1.msra.mxu0 0.0
        %3682 = vmatprep.subr.mxu0 0.0
        %3683 = vmatpush1.msra.mxu0 0.0
        %3684 = vmatprep.subr.mxu0 0.0
        %3685 = vmatpush1.msra.mxu0 0.0
        %3686 = vmatprep.subr.mxu0 0.0
        %3687 = vmatpush1.msra.mxu0 0.0
        %3688 = vmatprep.subr.mxu0 0.0
        %3689 = vmatpush1.msra.mxu0 0.0
        %3690 = vmatprep.subr.mxu0 0.0
        %3691 = vmatpush1.msra.mxu0 0.0
        %3692 = vmatprep.subr.mxu0 0.0
        %3693 = vmatpush1.msra.mxu0 0.0
        %3694 = vmatprep.subr.mxu0 0.0
        %3695 = vmatpush1.msra.mxu0 0.0
        %3696 = vmatprep.subr.mxu0 0.0
        %3697 = vmatpush1.msra.mxu0 0.0
        %3698 = vmatprep.subr.mxu0 0.0
        %3699 = vmatpush1.msra.mxu0 0.0
        %3700 = vmatprep.subr.mxu0 0.0
        %3701 = vmatpush1.msra.mxu0 0.0
        %3702 = vmatprep.subr.mxu0 0.0
        %3703 = vmatpush1.msra.mxu0 0.0
        %3704 = vmatprep.subr.mxu0 0.0
        %3705 = vmatpush1.msra.mxu0 0.0
        %3706 = vmatprep.subr.mxu0 %v3595
        %3707 = vmatpush1.msra.mxu0 %v3593
        %3708 = vmatprep.subr.mxu0 0.0
        %3709 = vmatpush2.msra.mxu0 0.0
        %3710 = vmatprep.subr.mxu0 0.0
        %3711 = vmatpush2.msra.mxu0 0.0
        %3712 = vmatprep.subr.mxu0 0.0
        %3713 = vmatpush2.msra.mxu0 0.0
        %3714 = vmatprep.subr.mxu0 0.0
        %3715 = vmatpush2.msra.mxu0 0.0
        %3716 = vmatprep.subr.mxu0 0.0
        %3717 = vmatpush2.msra.mxu0 0.0
        %3718 = vmatprep.subr.mxu0 0.0
        %3719 = vmatpush2.msra.mxu0 0.0
        %3720 = vmatprep.subr.mxu0 0.0
        %3721 = vmatpush2.msra.mxu0 0.0
        %3722 = vmatprep.subr.mxu0 0.0
        %3723 = vmatpush2.msra.mxu0 0.0
        %3724 = vmatprep.subr.mxu0 0.0
        %3725 = vmatpush2.msra.mxu0 0.0
        %3726 = vmatprep.subr.mxu0 0.0
        %3727 = vmatpush2.msra.mxu0 0.0
        %3728 = vmatprep.subr.mxu0 0.0
        %3729 = vmatpush2.msra.mxu0 0.0
        %3730 = vmatprep.subr.mxu0 0.0
        %3731 = vmatpush2.msra.mxu0 0.0
        %3732 = vmatprep.subr.mxu0 0.0
        %3733 = vmatpush2.msra.mxu0 0.0
        %3734 = vmatprep.subr.mxu0 0.0
        %3735 = vmatpush2.msra.mxu0 0.0
        %3736 = vmatprep.subr.mxu0 0.0
        %3737 = vmatpush2.msra.mxu0 0.0
        %3738 = vmatprep.subr.mxu0 0.0
        %3739 = vmatpush2.msra.mxu0 0.0
        %3740 = vmatprep.mubr.f32.mxu0 0.0
        %3741 = vmatmul.mubr.f32.gmra.mxu0 %v3587
        %v3742 = vpop.f32.mrf.mxu0
        %v3743 = vadd.f32 %v3441, %v3742
        %v3744 = vpop.f32.mrf.mxu0
        %v3745 = vadd.f32 %v3443, %v3744
        %3746 = vdwg.mxu0
        %3747 = vmatprep.subr.mxu0 0.0
        %3748 = vmatpush1.msra.mxu0 0.0
        %3749 = vmatprep.subr.mxu0 0.0
        %3750 = vmatpush1.msra.mxu0 0.0
        %3751 = vmatprep.subr.mxu0 0.0
        %3752 = vmatpush1.msra.mxu0 0.0
        %3753 = vmatprep.subr.mxu0 0.0
        %3754 = vmatpush1.msra.mxu0 0.0
        %3755 = vmatprep.subr.mxu0 0.0
        %3756 = vmatpush1.msra.mxu0 0.0
        %3757 = vmatprep.subr.mxu0 0.0
        %3758 = vmatpush1.msra.mxu0 0.0
        %3759 = vmatprep.subr.mxu0 0.0
        %3760 = vmatpush1.msra.mxu0 0.0
        %3761 = vmatprep.subr.mxu0 0.0
        %3762 = vmatpush1.msra.mxu0 0.0
        %3763 = vmatprep.subr.mxu0 0.0
        %3764 = vmatpush1.msra.mxu0 0.0
        %3765 = vmatprep.subr.mxu0 0.0
        %3766 = vmatpush1.msra.mxu0 0.0
        %3767 = vmatprep.subr.mxu0 0.0
        %3768 = vmatpush1.msra.mxu0 0.0
        %3769 = vmatprep.subr.mxu0 0.0
        %3770 = vmatpush1.msra.mxu0 0.0
        %3771 = vmatprep.subr.mxu0 0.0
        %3772 = vmatpush1.msra.mxu0 0.0
        %3773 = vmatprep.subr.mxu0 0.0
        %3774 = vmatpush1.msra.mxu0 0.0
        %3775 = vmatprep.subr.mxu0 0.0
        %3776 = vmatpush1.msra.mxu0 0.0
        %3777 = vmatprep.subr.mxu0 %v3599
        %3778 = vmatpush1.msra.mxu0 %v3597
        %3779 = vmatprep.subr.mxu0 0.0
        %3780 = vmatpush2.msra.mxu0 0.0
        %3781 = vmatprep.subr.mxu0 0.0
        %3782 = vmatpush2.msra.mxu0 0.0
        %3783 = vmatprep.subr.mxu0 0.0
        %3784 = vmatpush2.msra.mxu0 0.0
        %3785 = vmatprep.subr.mxu0 0.0
        %3786 = vmatpush2.msra.mxu0 0.0
        %3787 = vmatprep.subr.mxu0 0.0
        %3788 = vmatpush2.msra.mxu0 0.0
        %3789 = vmatprep.subr.mxu0 0.0
        %3790 = vmatpush2.msra.mxu0 0.0
        %3791 = vmatprep.subr.mxu0 0.0
        %3792 = vmatpush2.msra.mxu0 0.0
        %3793 = vmatprep.subr.mxu0 0.0
        %3794 = vmatpush2.msra.mxu0 0.0
        %3795 = vmatprep.subr.mxu0 0.0
        %3796 = vmatpush2.msra.mxu0 0.0
        %3797 = vmatprep.subr.mxu0 0.0
        %3798 = vmatpush2.msra.mxu0 0.0
        %3799 = vmatprep.subr.mxu0 0.0
        %3800 = vmatpush2.msra.mxu0 0.0
        %3801 = vmatprep.subr.mxu0 0.0
        %3802 = vmatpush2.msra.mxu0 0.0
        %3803 = vmatprep.subr.mxu0 0.0
        %3804 = vmatpush2.msra.mxu0 0.0
        %3805 = vmatprep.subr.mxu0 0.0
        %3806 = vmatpush2.msra.mxu0 0.0
        %3807 = vmatprep.subr.mxu0 0.0
        %3808 = vmatpush2.msra.mxu0 0.0
        %3809 = vmatprep.subr.mxu0 0.0
        %3810 = vmatpush2.msra.mxu0 0.0
        %3811 = vmatprep.mubr.f32.mxu0 0.0
        %3812 = vmatmul.mubr.f32.gmra.mxu0 %v3587
        %v3813 = vpop.f32.mrf.mxu0
        %v3814 = vadd.f32 %v3512, %v3813
        %v3815 = vpop.f32.mrf.mxu0
        %v3816 = vadd.f32 %v3514, %v3815
        %3817 = vdwg.mxu0
        %3818 = vmatprep.subr.mxu0 0.0
        %3819 = vmatpush1.msra.mxu0 0.0
        %3820 = vmatprep.subr.mxu0 0.0
        %3821 = vmatpush1.msra.mxu0 0.0
        %3822 = vmatprep.subr.mxu0 0.0
        %3823 = vmatpush1.msra.mxu0 0.0
        %3824 = vmatprep.subr.mxu0 0.0
        %3825 = vmatpush1.msra.mxu0 0.0
        %3826 = vmatprep.subr.mxu0 0.0
        %3827 = vmatpush1.msra.mxu0 0.0
        %3828 = vmatprep.subr.mxu0 0.0
        %3829 = vmatpush1.msra.mxu0 0.0
        %3830 = vmatprep.subr.mxu0 0.0
        %3831 = vmatpush1.msra.mxu0 0.0
        %3832 = vmatprep.subr.mxu0 0.0
        %3833 = vmatpush1.msra.mxu0 0.0
        %3834 = vmatprep.subr.mxu0 0.0
        %3835 = vmatpush1.msra.mxu0 0.0
        %3836 = vmatprep.subr.mxu0 0.0
        %3837 = vmatpush1.msra.mxu0 0.0
        %3838 = vmatprep.subr.mxu0 0.0
        %3839 = vmatpush1.msra.mxu0 0.0
        %3840 = vmatprep.subr.mxu0 0.0
        %3841 = vmatpush1.msra.mxu0 0.0
        %3842 = vmatprep.subr.mxu0 0.0
        %3843 = vmatpush1.msra.mxu0 0.0
        %3844 = vmatprep.subr.mxu0 0.0
        %3845 = vmatpush1.msra.mxu0 0.0
        %3846 = vmatprep.subr.mxu0 0.0
        %3847 = vmatpush1.msra.mxu0 0.0
        %3848 = vmatprep.subr.mxu0 %v3603
        %3849 = vmatpush1.msra.mxu0 %v3601
        %3850 = vmatprep.subr.mxu0 0.0
        %3851 = vmatpush2.msra.mxu0 0.0
        %3852 = vmatprep.subr.mxu0 0.0
        %3853 = vmatpush2.msra.mxu0 0.0
        %3854 = vmatprep.subr.mxu0 0.0
        %3855 = vmatpush2.msra.mxu0 0.0
        %3856 = vmatprep.subr.mxu0 0.0
        %3857 = vmatpush2.msra.mxu0 0.0
        %3858 = vmatprep.subr.mxu0 0.0
        %3859 = vmatpush2.msra.mxu0 0.0
        %3860 = vmatprep.subr.mxu0 0.0
        %3861 = vmatpush2.msra.mxu0 0.0
        %3862 = vmatprep.subr.mxu0 0.0
        %3863 = vmatpush2.msra.mxu0 0.0
        %3864 = vmatprep.subr.mxu0 0.0
        %3865 = vmatpush2.msra.mxu0 0.0
        %3866 = vmatprep.subr.mxu0 0.0
        %3867 = vmatpush2.msra.mxu0 0.0
        %3868 = vmatprep.subr.mxu0 0.0
        %3869 = vmatpush2.msra.mxu0 0.0
        %3870 = vmatprep.subr.mxu0 0.0
        %3871 = vmatpush2.msra.mxu0 0.0
        %3872 = vmatprep.subr.mxu0 0.0
        %3873 = vmatpush2.msra.mxu0 0.0
        %3874 = vmatprep.subr.mxu0 0.0
        %3875 = vmatpush2.msra.mxu0 0.0
        %3876 = vmatprep.subr.mxu0 0.0
        %3877 = vmatpush2.msra.mxu0 0.0
        %3878 = vmatprep.subr.mxu0 0.0
        %3879 = vmatpush2.msra.mxu0 0.0
        %3880 = vmatprep.subr.mxu0 0.0
        %3881 = vmatpush2.msra.mxu0 0.0
        %3882 = vmatprep.mubr.f32.mxu0 0.0
        %3883 = vmatmul.mubr.f32.gmra.mxu0 %v3587
        %v3884 = vpop.f32.mrf.mxu0
        %v3885 = vadd.f32 %v3583, %v3884
        %v3886 = vpop.f32.mrf.mxu0
        %v3887 = vadd.f32 %v3585, %v3886
        %3888 = vdwg.mxu0
        %3889 = vrot.lane.b32.xlu0 %v3258, 120
        %v3890 = vpop.permute.xlu0 %3889
        %3891 = vrot.lane.b32.xlu0 %v3228, 96
        %v3892 = vpop.permute.xlu0 %3891
        %3893 = vrot.lane.b32.xlu0 %v3229, 96
        %v3894 = vpop.permute.xlu0 %3893
        %3895 = vrot.lane.b32.xlu0 %v3230, 96
        %v3896 = vpop.permute.xlu0 %3895
        %3897 = vrot.lane.b32.xlu0 %v3231, 96
        %v3898 = vpop.permute.xlu0 %3897
        %3899 = vrot.lane.b32.xlu0 %v3232, 96
        %v3900 = vpop.permute.xlu0 %3899
        %3901 = vrot.lane.b32.xlu0 %v3233, 96
        %v3902 = vpop.permute.xlu0 %3901
        %3903 = vrot.lane.b32.xlu0 %v3234, 96
        %v3904 = vpop.permute.xlu0 %3903
        %3905 = vrot.lane.b32.xlu0 %v3235, 96
        %v3906 = vpop.permute.xlu0 %3905
        %v3907 = vsel %vm1195, %v3892, %v3894
        %v3908 = vsel %vm1195, %v3894, %v3896
        %v3909 = vsel %vm1195, %v3896, %v3898
        %v3910 = vsel %vm1195, %v3898, %v3900
        %v3911 = vsel %vm1195, %v3900, %v3902
        %v3912 = vsel %vm1195, %v3902, %v3904
        %v3913 = vsel %vm1195, %v3904, %v3906
        %v3914 = vsel %vm569, %v3890, 0
        %v3916 = vsel %vm572, %v3907, 0
        %v3918 = vsel %vm572, %v3908, 0
        %v3920 = vsel %vm572, %v3909, 0
        %v3922 = vsel %vm572, %v3910, 0
        %v3924 = vsel %vm572, %v3911, 0
        %v3926 = vsel %vm572, %v3912, 0
        %v3928 = vsel %vm572, %v3913, 0
        %v3930 = vsel %vm572, %v3906, 0
        %3932 = vmatprep.subr.mxu0 0.0
        %3933 = vmatpush1.msra.mxu0 0.0
        %3934 = vmatprep.subr.mxu0 0.0
        %3935 = vmatpush1.msra.mxu0 0.0
        %3936 = vmatprep.subr.mxu0 0.0
        %3937 = vmatpush1.msra.mxu0 0.0
        %3938 = vmatprep.subr.mxu0 0.0
        %3939 = vmatpush1.msra.mxu0 0.0
        %3940 = vmatprep.subr.mxu0 0.0
        %3941 = vmatpush1.msra.mxu0 0.0
        %3942 = vmatprep.subr.mxu0 0.0
        %3943 = vmatpush1.msra.mxu0 0.0
        %3944 = vmatprep.subr.mxu0 0.0
        %3945 = vmatpush1.msra.mxu0 0.0
        %3946 = vmatprep.subr.mxu0 0.0
        %3947 = vmatpush1.msra.mxu0 0.0
        %3948 = vmatprep.subr.mxu0 0.0
        %3949 = vmatpush1.msra.mxu0 0.0
        %3950 = vmatprep.subr.mxu0 0.0
        %3951 = vmatpush1.msra.mxu0 0.0
        %3952 = vmatprep.subr.mxu0 0.0
        %3953 = vmatpush1.msra.mxu0 0.0
        %3954 = vmatprep.subr.mxu0 0.0
        %3955 = vmatpush1.msra.mxu0 0.0
        %3956 = vmatprep.subr.mxu0 0.0
        %3957 = vmatpush1.msra.mxu0 0.0
        %3958 = vmatprep.subr.mxu0 0.0
        %3959 = vmatpush1.msra.mxu0 0.0
        %3960 = vmatprep.subr.mxu0 0.0
        %3961 = vmatpush1.msra.mxu0 0.0
        %3962 = vmatprep.subr.mxu0 %v3918
        %3963 = vmatpush1.msra.mxu0 %v3916
        %3964 = vmatprep.subr.mxu0 0.0
        %3965 = vmatpush2.msra.mxu0 0.0
        %3966 = vmatprep.subr.mxu0 0.0
        %3967 = vmatpush2.msra.mxu0 0.0
        %3968 = vmatprep.subr.mxu0 0.0
        %3969 = vmatpush2.msra.mxu0 0.0
        %3970 = vmatprep.subr.mxu0 0.0
        %3971 = vmatpush2.msra.mxu0 0.0
        %3972 = vmatprep.subr.mxu0 0.0
        %3973 = vmatpush2.msra.mxu0 0.0
        %3974 = vmatprep.subr.mxu0 0.0
        %3975 = vmatpush2.msra.mxu0 0.0
        %3976 = vmatprep.subr.mxu0 0.0
        %3977 = vmatpush2.msra.mxu0 0.0
        %3978 = vmatprep.subr.mxu0 0.0
        %3979 = vmatpush2.msra.mxu0 0.0
        %3980 = vmatprep.subr.mxu0 0.0
        %3981 = vmatpush2.msra.mxu0 0.0
        %3982 = vmatprep.subr.mxu0 0.0
        %3983 = vmatpush2.msra.mxu0 0.0
        %3984 = vmatprep.subr.mxu0 0.0
        %3985 = vmatpush2.msra.mxu0 0.0
        %3986 = vmatprep.subr.mxu0 0.0
        %3987 = vmatpush2.msra.mxu0 0.0
        %3988 = vmatprep.subr.mxu0 0.0
        %3989 = vmatpush2.msra.mxu0 0.0
        %3990 = vmatprep.subr.mxu0 0.0
        %3991 = vmatpush2.msra.mxu0 0.0
        %3992 = vmatprep.subr.mxu0 0.0
        %3993 = vmatpush2.msra.mxu0 0.0
        %3994 = vmatprep.subr.mxu0 0.0
        %3995 = vmatpush2.msra.mxu0 0.0
        %3996 = vmatprep.mubr.f32.mxu0 0.0
        %3997 = vmatmul.mubr.f32.gmra.mxu0 %v3914
        %v3998 = vpop.f32.mrf.mxu0
        %v3999 = vadd.f32 0.0, %v3998
        %v4000 = vpop.f32.mrf.mxu0
        %v4001 = vadd.f32 0.0, %v4000
        %4002 = vdwg.mxu0
        %4003 = vmatprep.subr.mxu0 0.0
        %4004 = vmatpush1.msra.mxu0 0.0
        %4005 = vmatprep.subr.mxu0 0.0
        %4006 = vmatpush1.msra.mxu0 0.0
        %4007 = vmatprep.subr.mxu0 0.0
        %4008 = vmatpush1.msra.mxu0 0.0
        %4009 = vmatprep.subr.mxu0 0.0
        %4010 = vmatpush1.msra.mxu0 0.0
        %4011 = vmatprep.subr.mxu0 0.0
        %4012 = vmatpush1.msra.mxu0 0.0
        %4013 = vmatprep.subr.mxu0 0.0
        %4014 = vmatpush1.msra.mxu0 0.0
        %4015 = vmatprep.subr.mxu0 0.0
        %4016 = vmatpush1.msra.mxu0 0.0
        %4017 = vmatprep.subr.mxu0 0.0
        %4018 = vmatpush1.msra.mxu0 0.0
        %4019 = vmatprep.subr.mxu0 0.0
        %4020 = vmatpush1.msra.mxu0 0.0
        %4021 = vmatprep.subr.mxu0 0.0
        %4022 = vmatpush1.msra.mxu0 0.0
        %4023 = vmatprep.subr.mxu0 0.0
        %4024 = vmatpush1.msra.mxu0 0.0
        %4025 = vmatprep.subr.mxu0 0.0
        %4026 = vmatpush1.msra.mxu0 0.0
        %4027 = vmatprep.subr.mxu0 0.0
        %4028 = vmatpush1.msra.mxu0 0.0
        %4029 = vmatprep.subr.mxu0 0.0
        %4030 = vmatpush1.msra.mxu0 0.0
        %4031 = vmatprep.subr.mxu0 0.0
        %4032 = vmatpush1.msra.mxu0 0.0
        %4033 = vmatprep.subr.mxu0 %v3922
        %4034 = vmatpush1.msra.mxu0 %v3920
        %4035 = vmatprep.subr.mxu0 0.0
        %4036 = vmatpush2.msra.mxu0 0.0
        %4037 = vmatprep.subr.mxu0 0.0
        %4038 = vmatpush2.msra.mxu0 0.0
        %4039 = vmatprep.subr.mxu0 0.0
        %4040 = vmatpush2.msra.mxu0 0.0
        %4041 = vmatprep.subr.mxu0 0.0
        %4042 = vmatpush2.msra.mxu0 0.0
        %4043 = vmatprep.subr.mxu0 0.0
        %4044 = vmatpush2.msra.mxu0 0.0
        %4045 = vmatprep.subr.mxu0 0.0
        %4046 = vmatpush2.msra.mxu0 0.0
        %4047 = vmatprep.subr.mxu0 0.0
        %4048 = vmatpush2.msra.mxu0 0.0
        %4049 = vmatprep.subr.mxu0 0.0
        %4050 = vmatpush2.msra.mxu0 0.0
        %4051 = vmatprep.subr.mxu0 0.0
        %4052 = vmatpush2.msra.mxu0 0.0
        %4053 = vmatprep.subr.mxu0 0.0
        %4054 = vmatpush2.msra.mxu0 0.0
        %4055 = vmatprep.subr.mxu0 0.0
        %4056 = vmatpush2.msra.mxu0 0.0
        %4057 = vmatprep.subr.mxu0 0.0
        %4058 = vmatpush2.msra.mxu0 0.0
        %4059 = vmatprep.subr.mxu0 0.0
        %4060 = vmatpush2.msra.mxu0 0.0
        %4061 = vmatprep.subr.mxu0 0.0
        %4062 = vmatpush2.msra.mxu0 0.0
        %4063 = vmatprep.subr.mxu0 0.0
        %4064 = vmatpush2.msra.mxu0 0.0
        %4065 = vmatprep.subr.mxu0 0.0
        %4066 = vmatpush2.msra.mxu0 0.0
        %4067 = vmatprep.mubr.f32.mxu0 0.0
        %4068 = vmatmul.mubr.f32.gmra.mxu0 %v3914
        %v4069 = vpop.f32.mrf.mxu0
        %v4070 = vadd.f32 0.0, %v4069
        %v4071 = vpop.f32.mrf.mxu0
        %v4072 = vadd.f32 0.0, %v4071
        %4073 = vdwg.mxu0
        %4074 = vmatprep.subr.mxu0 0.0
        %4075 = vmatpush1.msra.mxu0 0.0
        %4076 = vmatprep.subr.mxu0 0.0
        %4077 = vmatpush1.msra.mxu0 0.0
        %4078 = vmatprep.subr.mxu0 0.0
        %4079 = vmatpush1.msra.mxu0 0.0
        %4080 = vmatprep.subr.mxu0 0.0
        %4081 = vmatpush1.msra.mxu0 0.0
        %4082 = vmatprep.subr.mxu0 0.0
        %4083 = vmatpush1.msra.mxu0 0.0
        %4084 = vmatprep.subr.mxu0 0.0
        %4085 = vmatpush1.msra.mxu0 0.0
        %4086 = vmatprep.subr.mxu0 0.0
        %4087 = vmatpush1.msra.mxu0 0.0
        %4088 = vmatprep.subr.mxu0 0.0
        %4089 = vmatpush1.msra.mxu0 0.0
        %4090 = vmatprep.subr.mxu0 0.0
        %4091 = vmatpush1.msra.mxu0 0.0
        %4092 = vmatprep.subr.mxu0 0.0
        %4093 = vmatpush1.msra.mxu0 0.0
        %4094 = vmatprep.subr.mxu0 0.0
        %4095 = vmatpush1.msra.mxu0 0.0
        %4096 = vmatprep.subr.mxu0 0.0
        %4097 = vmatpush1.msra.mxu0 0.0
        %4098 = vmatprep.subr.mxu0 0.0
        %4099 = vmatpush1.msra.mxu0 0.0
        %4100 = vmatprep.subr.mxu0 0.0
        %4101 = vmatpush1.msra.mxu0 0.0
        %4102 = vmatprep.subr.mxu0 0.0
        %4103 = vmatpush1.msra.mxu0 0.0
        %4104 = vmatprep.subr.mxu0 %v3926
        %4105 = vmatpush1.msra.mxu0 %v3924
        %4106 = vmatprep.subr.mxu0 0.0
        %4107 = vmatpush2.msra.mxu0 0.0
        %4108 = vmatprep.subr.mxu0 0.0
        %4109 = vmatpush2.msra.mxu0 0.0
        %4110 = vmatprep.subr.mxu0 0.0
        %4111 = vmatpush2.msra.mxu0 0.0
        %4112 = vmatprep.subr.mxu0 0.0
        %4113 = vmatpush2.msra.mxu0 0.0
        %4114 = vmatprep.subr.mxu0 0.0
        %4115 = vmatpush2.msra.mxu0 0.0
        %4116 = vmatprep.subr.mxu0 0.0
        %4117 = vmatpush2.msra.mxu0 0.0
        %4118 = vmatprep.subr.mxu0 0.0
        %4119 = vmatpush2.msra.mxu0 0.0
        %4120 = vmatprep.subr.mxu0 0.0
        %4121 = vmatpush2.msra.mxu0 0.0
        %4122 = vmatprep.subr.mxu0 0.0
        %4123 = vmatpush2.msra.mxu0 0.0
        %4124 = vmatprep.subr.mxu0 0.0
        %4125 = vmatpush2.msra.mxu0 0.0
        %4126 = vmatprep.subr.mxu0 0.0
        %4127 = vmatpush2.msra.mxu0 0.0
        %4128 = vmatprep.subr.mxu0 0.0
        %4129 = vmatpush2.msra.mxu0 0.0
        %4130 = vmatprep.subr.mxu0 0.0
        %4131 = vmatpush2.msra.mxu0 0.0
        %4132 = vmatprep.subr.mxu0 0.0
        %4133 = vmatpush2.msra.mxu0 0.0
        %4134 = vmatprep.subr.mxu0 0.0
        %4135 = vmatpush2.msra.mxu0 0.0
        %4136 = vmatprep.subr.mxu0 0.0
        %4137 = vmatpush2.msra.mxu0 0.0
        %4138 = vmatprep.mubr.f32.mxu0 0.0
        %4139 = vmatmul.mubr.f32.gmra.mxu0 %v3914
        %v4140 = vpop.f32.mrf.mxu0
        %v4141 = vadd.f32 0.0, %v4140
        %v4142 = vpop.f32.mrf.mxu0
        %v4143 = vadd.f32 0.0, %v4142
        %4144 = vdwg.mxu0
        %4145 = vmatprep.subr.mxu0 0.0
        %4146 = vmatpush1.msra.mxu0 0.0
        %4147 = vmatprep.subr.mxu0 0.0
        %4148 = vmatpush1.msra.mxu0 0.0
        %4149 = vmatprep.subr.mxu0 0.0
        %4150 = vmatpush1.msra.mxu0 0.0
        %4151 = vmatprep.subr.mxu0 0.0
        %4152 = vmatpush1.msra.mxu0 0.0
        %4153 = vmatprep.subr.mxu0 0.0
        %4154 = vmatpush1.msra.mxu0 0.0
        %4155 = vmatprep.subr.mxu0 0.0
        %4156 = vmatpush1.msra.mxu0 0.0
        %4157 = vmatprep.subr.mxu0 0.0
        %4158 = vmatpush1.msra.mxu0 0.0
        %4159 = vmatprep.subr.mxu0 0.0
        %4160 = vmatpush1.msra.mxu0 0.0
        %4161 = vmatprep.subr.mxu0 0.0
        %4162 = vmatpush1.msra.mxu0 0.0
        %4163 = vmatprep.subr.mxu0 0.0
        %4164 = vmatpush1.msra.mxu0 0.0
        %4165 = vmatprep.subr.mxu0 0.0
        %4166 = vmatpush1.msra.mxu0 0.0
        %4167 = vmatprep.subr.mxu0 0.0
        %4168 = vmatpush1.msra.mxu0 0.0
        %4169 = vmatprep.subr.mxu0 0.0
        %4170 = vmatpush1.msra.mxu0 0.0
        %4171 = vmatprep.subr.mxu0 0.0
        %4172 = vmatpush1.msra.mxu0 0.0
        %4173 = vmatprep.subr.mxu0 0.0
        %4174 = vmatpush1.msra.mxu0 0.0
        %4175 = vmatprep.subr.mxu0 %v3930
        %4176 = vmatpush1.msra.mxu0 %v3928
        %4177 = vmatprep.subr.mxu0 0.0
        %4178 = vmatpush2.msra.mxu0 0.0
        %4179 = vmatprep.subr.mxu0 0.0
        %4180 = vmatpush2.msra.mxu0 0.0
        %4181 = vmatprep.subr.mxu0 0.0
        %4182 = vmatpush2.msra.mxu0 0.0
        %4183 = vmatprep.subr.mxu0 0.0
        %4184 = vmatpush2.msra.mxu0 0.0
        %4185 = vmatprep.subr.mxu0 0.0
        %4186 = vmatpush2.msra.mxu0 0.0
        %4187 = vmatprep.subr.mxu0 0.0
        %4188 = vmatpush2.msra.mxu0 0.0
        %4189 = vmatprep.subr.mxu0 0.0
        %4190 = vmatpush2.msra.mxu0 0.0
        %4191 = vmatprep.subr.mxu0 0.0
        %4192 = vmatpush2.msra.mxu0 0.0
        %4193 = vmatprep.subr.mxu0 0.0
        %4194 = vmatpush2.msra.mxu0 0.0
        %4195 = vmatprep.subr.mxu0 0.0
        %4196 = vmatpush2.msra.mxu0 0.0
        %4197 = vmatprep.subr.mxu0 0.0
        %4198 = vmatpush2.msra.mxu0 0.0
        %4199 = vmatprep.subr.mxu0 0.0
        %4200 = vmatpush2.msra.mxu0 0.0
        %4201 = vmatprep.subr.mxu0 0.0
        %4202 = vmatpush2.msra.mxu0 0.0
        %4203 = vmatprep.subr.mxu0 0.0
        %4204 = vmatpush2.msra.mxu0 0.0
        %4205 = vmatprep.subr.mxu0 0.0
        %4206 = vmatpush2.msra.mxu0 0.0
        %4207 = vmatprep.subr.mxu0 0.0
        %4208 = vmatpush2.msra.mxu0 0.0
        %4209 = vmatprep.mubr.f32.mxu0 0.0
        %4210 = vmatmul.mubr.f32.gmra.mxu0 %v3914
        %v4211 = vpop.f32.mrf.mxu0
        %v4212 = vadd.f32 0.0, %v4211
        %v4213 = vpop.f32.mrf.mxu0
        %v4214 = vadd.f32 0.0, %v4213
        %4215 = vdwg.mxu0
        %v4216 = vadd.f32 %v3672, %v3999
        %v4217 = vadd.f32 %v3674, %v4001
        %v4218 = vadd.f32 %v3743, %v4070
        %v4219 = vadd.f32 %v3745, %v4072
        %v4220 = vadd.f32 %v3814, %v4141
        %v4221 = vadd.f32 %v3816, %v4143
        %v4222 = vadd.f32 %v3885, %v4212
        %v4223 = vadd.f32 %v3887, %v4214
        %4224 = vrot.lane.b32.xlu0 %v3258, 116
        %v4225 = vpop.permute.xlu0 %4224
        %4226 = vrot.lane.b32.xlu0 %v3228, 95
        %v4227 = vpop.permute.xlu0 %4226
        %4228 = vrot.lane.b32.xlu0 %v3229, 95
        %v4229 = vpop.permute.xlu0 %4228
        %4230 = vrot.lane.b32.xlu0 %v3230, 95
        %v4231 = vpop.permute.xlu0 %4230
        %4232 = vrot.lane.b32.xlu0 %v3231, 95
        %v4233 = vpop.permute.xlu0 %4232
        %4234 = vrot.lane.b32.xlu0 %v3232, 95
        %v4235 = vpop.permute.xlu0 %4234
        %4236 = vrot.lane.b32.xlu0 %v3233, 95
        %v4237 = vpop.permute.xlu0 %4236
        %4238 = vrot.lane.b32.xlu0 %v3234, 95
        %v4239 = vpop.permute.xlu0 %4238
        %4240 = vrot.lane.b32.xlu0 %v3235, 95
        %v4241 = vpop.permute.xlu0 %4240
        %v4242 = vsel %vm1533, %v4227, %v4229
        %v4243 = vsel %vm1533, %v4229, %v4231
        %v4244 = vsel %vm1533, %v4231, %v4233
        %v4245 = vsel %vm1533, %v4233, %v4235
        %v4246 = vsel %vm1533, %v4235, %v4237
        %v4247 = vsel %vm1533, %v4237, %v4239
        %v4248 = vsel %vm1533, %v4239, %v4241
        %v4249 = vsel %vm569, %v4225, 0
        %v4251 = vsel %vm572, %v4242, 0
        %v4253 = vsel %vm572, %v4243, 0
        %v4255 = vsel %vm572, %v4244, 0
        %v4257 = vsel %vm572, %v4245, 0
        %v4259 = vsel %vm572, %v4246, 0
        %v4261 = vsel %vm572, %v4247, 0
        %v4263 = vsel %vm572, %v4248, 0
        %v4265 = vsel %vm572, %v4241, 0
        %4267 = vmatprep.subr.mxu0 0.0
        %4268 = vmatpush1.msra.mxu0 0.0
        %4269 = vmatprep.subr.mxu0 0.0
        %4270 = vmatpush1.msra.mxu0 0.0
        %4271 = vmatprep.subr.mxu0 0.0
        %4272 = vmatpush1.msra.mxu0 0.0
        %4273 = vmatprep.subr.mxu0 0.0
        %4274 = vmatpush1.msra.mxu0 0.0
        %4275 = vmatprep.subr.mxu0 0.0
        %4276 = vmatpush1.msra.mxu0 0.0
        %4277 = vmatprep.subr.mxu0 0.0
        %4278 = vmatpush1.msra.mxu0 0.0
        %4279 = vmatprep.subr.mxu0 0.0
        %4280 = vmatpush1.msra.mxu0 0.0
        %4281 = vmatprep.subr.mxu0 0.0
        %4282 = vmatpush1.msra.mxu0 0.0
        %4283 = vmatprep.subr.mxu0 0.0
        %4284 = vmatpush1.msra.mxu0 0.0
        %4285 = vmatprep.subr.mxu0 0.0
        %4286 = vmatpush1.msra.mxu0 0.0
        %4287 = vmatprep.subr.mxu0 0.0
        %4288 = vmatpush1.msra.mxu0 0.0
        %4289 = vmatprep.subr.mxu0 0.0
        %4290 = vmatpush1.msra.mxu0 0.0
        %4291 = vmatprep.subr.mxu0 0.0
        %4292 = vmatpush1.msra.mxu0 0.0
        %4293 = vmatprep.subr.mxu0 0.0
        %4294 = vmatpush1.msra.mxu0 0.0
        %4295 = vmatprep.subr.mxu0 0.0
        %4296 = vmatpush1.msra.mxu0 0.0
        %4297 = vmatprep.subr.mxu0 %v4253
        %4298 = vmatpush1.msra.mxu0 %v4251
        %4299 = vmatprep.subr.mxu0 0.0
        %4300 = vmatpush2.msra.mxu0 0.0
        %4301 = vmatprep.subr.mxu0 0.0
        %4302 = vmatpush2.msra.mxu0 0.0
        %4303 = vmatprep.subr.mxu0 0.0
        %4304 = vmatpush2.msra.mxu0 0.0
        %4305 = vmatprep.subr.mxu0 0.0
        %4306 = vmatpush2.msra.mxu0 0.0
        %4307 = vmatprep.subr.mxu0 0.0
        %4308 = vmatpush2.msra.mxu0 0.0
        %4309 = vmatprep.subr.mxu0 0.0
        %4310 = vmatpush2.msra.mxu0 0.0
        %4311 = vmatprep.subr.mxu0 0.0
        %4312 = vmatpush2.msra.mxu0 0.0
        %4313 = vmatprep.subr.mxu0 0.0
        %4314 = vmatpush2.msra.mxu0 0.0
        %4315 = vmatprep.subr.mxu0 0.0
        %4316 = vmatpush2.msra.mxu0 0.0
        %4317 = vmatprep.subr.mxu0 0.0
        %4318 = vmatpush2.msra.mxu0 0.0
        %4319 = vmatprep.subr.mxu0 0.0
        %4320 = vmatpush2.msra.mxu0 0.0
        %4321 = vmatprep.subr.mxu0 0.0
        %4322 = vmatpush2.msra.mxu0 0.0
        %4323 = vmatprep.subr.mxu0 0.0
        %4324 = vmatpush2.msra.mxu0 0.0
        %4325 = vmatprep.subr.mxu0 0.0
        %4326 = vmatpush2.msra.mxu0 0.0
        %4327 = vmatprep.subr.mxu0 0.0
        %4328 = vmatpush2.msra.mxu0 0.0
        %4329 = vmatprep.subr.mxu0 0.0
        %4330 = vmatpush2.msra.mxu0 0.0
        %4331 = vmatprep.mubr.f32.mxu0 0.0
        %4332 = vmatmul.mubr.f32.gmra.mxu0 %v4249
        %v4333 = vpop.f32.mrf.mxu0
        %v4334 = vadd.f32 0.0, %v4333
        %v4335 = vpop.f32.mrf.mxu0
        %v4336 = vadd.f32 0.0, %v4335
        %4337 = vdwg.mxu0
        %4338 = vmatprep.subr.mxu0 0.0
        %4339 = vmatpush1.msra.mxu0 0.0
        %4340 = vmatprep.subr.mxu0 0.0
        %4341 = vmatpush1.msra.mxu0 0.0
        %4342 = vmatprep.subr.mxu0 0.0
        %4343 = vmatpush1.msra.mxu0 0.0
        %4344 = vmatprep.subr.mxu0 0.0
        %4345 = vmatpush1.msra.mxu0 0.0
        %4346 = vmatprep.subr.mxu0 0.0
        %4347 = vmatpush1.msra.mxu0 0.0
        %4348 = vmatprep.subr.mxu0 0.0
        %4349 = vmatpush1.msra.mxu0 0.0
        %4350 = vmatprep.subr.mxu0 0.0
        %4351 = vmatpush1.msra.mxu0 0.0
        %4352 = vmatprep.subr.mxu0 0.0
        %4353 = vmatpush1.msra.mxu0 0.0
        %4354 = vmatprep.subr.mxu0 0.0
        %4355 = vmatpush1.msra.mxu0 0.0
        %4356 = vmatprep.subr.mxu0 0.0
        %4357 = vmatpush1.msra.mxu0 0.0
        %4358 = vmatprep.subr.mxu0 0.0
        %4359 = vmatpush1.msra.mxu0 0.0
        %4360 = vmatprep.subr.mxu0 0.0
        %4361 = vmatpush1.msra.mxu0 0.0
        %4362 = vmatprep.subr.mxu0 0.0
        %4363 = vmatpush1.msra.mxu0 0.0
        %4364 = vmatprep.subr.mxu0 0.0
        %4365 = vmatpush1.msra.mxu0 0.0
        %4366 = vmatprep.subr.mxu0 0.0
        %4367 = vmatpush1.msra.mxu0 0.0
        %4368 = vmatprep.subr.mxu0 %v4257
        %4369 = vmatpush1.msra.mxu0 %v4255
        %4370 = vmatprep.subr.mxu0 0.0
        %4371 = vmatpush2.msra.mxu0 0.0
        %4372 = vmatprep.subr.mxu0 0.0
        %4373 = vmatpush2.msra.mxu0 0.0
        %4374 = vmatprep.subr.mxu0 0.0
        %4375 = vmatpush2.msra.mxu0 0.0
        %4376 = vmatprep.subr.mxu0 0.0
        %4377 = vmatpush2.msra.mxu0 0.0
        %4378 = vmatprep.subr.mxu0 0.0
        %4379 = vmatpush2.msra.mxu0 0.0
        %4380 = vmatprep.subr.mxu0 0.0
        %4381 = vmatpush2.msra.mxu0 0.0
        %4382 = vmatprep.subr.mxu0 0.0
        %4383 = vmatpush2.msra.mxu0 0.0
        %4384 = vmatprep.subr.mxu0 0.0
        %4385 = vmatpush2.msra.mxu0 0.0
        %4386 = vmatprep.subr.mxu0 0.0
        %4387 = vmatpush2.msra.mxu0 0.0
        %4388 = vmatprep.subr.mxu0 0.0
        %4389 = vmatpush2.msra.mxu0 0.0
        %4390 = vmatprep.subr.mxu0 0.0
        %4391 = vmatpush2.msra.mxu0 0.0
        %4392 = vmatprep.subr.mxu0 0.0
        %4393 = vmatpush2.msra.mxu0 0.0
        %4394 = vmatprep.subr.mxu0 0.0
        %4395 = vmatpush2.msra.mxu0 0.0
        %4396 = vmatprep.subr.mxu0 0.0
        %4397 = vmatpush2.msra.mxu0 0.0
        %4398 = vmatprep.subr.mxu0 0.0
        %4399 = vmatpush2.msra.mxu0 0.0
        %4400 = vmatprep.subr.mxu0 0.0
        %4401 = vmatpush2.msra.mxu0 0.0
        %4402 = vmatprep.mubr.f32.mxu0 0.0
        %4403 = vmatmul.mubr.f32.gmra.mxu0 %v4249
        %v4404 = vpop.f32.mrf.mxu0
        %v4405 = vadd.f32 0.0, %v4404
        %v4406 = vpop.f32.mrf.mxu0
        %v4407 = vadd.f32 0.0, %v4406
        %4408 = vdwg.mxu0
        %4409 = vmatprep.subr.mxu0 0.0
        %4410 = vmatpush1.msra.mxu0 0.0
        %4411 = vmatprep.subr.mxu0 0.0
        %4412 = vmatpush1.msra.mxu0 0.0
        %4413 = vmatprep.subr.mxu0 0.0
        %4414 = vmatpush1.msra.mxu0 0.0
        %4415 = vmatprep.subr.mxu0 0.0
        %4416 = vmatpush1.msra.mxu0 0.0
        %4417 = vmatprep.subr.mxu0 0.0
        %4418 = vmatpush1.msra.mxu0 0.0
        %4419 = vmatprep.subr.mxu0 0.0
        %4420 = vmatpush1.msra.mxu0 0.0
        %4421 = vmatprep.subr.mxu0 0.0
        %4422 = vmatpush1.msra.mxu0 0.0
        %4423 = vmatprep.subr.mxu0 0.0
        %4424 = vmatpush1.msra.mxu0 0.0
        %4425 = vmatprep.subr.mxu0 0.0
        %4426 = vmatpush1.msra.mxu0 0.0
        %4427 = vmatprep.subr.mxu0 0.0
        %4428 = vmatpush1.msra.mxu0 0.0
        %4429 = vmatprep.subr.mxu0 0.0
        %4430 = vmatpush1.msra.mxu0 0.0
        %4431 = vmatprep.subr.mxu0 0.0
        %4432 = vmatpush1.msra.mxu0 0.0
        %4433 = vmatprep.subr.mxu0 0.0
        %4434 = vmatpush1.msra.mxu0 0.0
        %4435 = vmatprep.subr.mxu0 0.0
        %4436 = vmatpush1.msra.mxu0 0.0
        %4437 = vmatprep.subr.mxu0 0.0
        %4438 = vmatpush1.msra.mxu0 0.0
        %4439 = vmatprep.subr.mxu0 %v4261
        %4440 = vmatpush1.msra.mxu0 %v4259
        %4441 = vmatprep.subr.mxu0 0.0
        %4442 = vmatpush2.msra.mxu0 0.0
        %4443 = vmatprep.subr.mxu0 0.0
        %4444 = vmatpush2.msra.mxu0 0.0
        %4445 = vmatprep.subr.mxu0 0.0
        %4446 = vmatpush2.msra.mxu0 0.0
        %4447 = vmatprep.subr.mxu0 0.0
        %4448 = vmatpush2.msra.mxu0 0.0
        %4449 = vmatprep.subr.mxu0 0.0
        %4450 = vmatpush2.msra.mxu0 0.0
        %4451 = vmatprep.subr.mxu0 0.0
        %4452 = vmatpush2.msra.mxu0 0.0
        %4453 = vmatprep.subr.mxu0 0.0
        %4454 = vmatpush2.msra.mxu0 0.0
        %4455 = vmatprep.subr.mxu0 0.0
        %4456 = vmatpush2.msra.mxu0 0.0
        %4457 = vmatprep.subr.mxu0 0.0
        %4458 = vmatpush2.msra.mxu0 0.0
        %4459 = vmatprep.subr.mxu0 0.0
        %4460 = vmatpush2.msra.mxu0 0.0
        %4461 = vmatprep.subr.mxu0 0.0
        %4462 = vmatpush2.msra.mxu0 0.0
        %4463 = vmatprep.subr.mxu0 0.0
        %4464 = vmatpush2.msra.mxu0 0.0
        %4465 = vmatprep.subr.mxu0 0.0
        %4466 = vmatpush2.msra.mxu0 0.0
        %4467 = vmatprep.subr.mxu0 0.0
        %4468 = vmatpush2.msra.mxu0 0.0
        %4469 = vmatprep.subr.mxu0 0.0
        %4470 = vmatpush2.msra.mxu0 0.0
        %4471 = vmatprep.subr.mxu0 0.0
        %4472 = vmatpush2.msra.mxu0 0.0
        %4473 = vmatprep.mubr.f32.mxu0 0.0
        %4474 = vmatmul.mubr.f32.gmra.mxu0 %v4249
        %v4475 = vpop.f32.mrf.mxu0
        %v4476 = vadd.f32 0.0, %v4475
        %v4477 = vpop.f32.mrf.mxu0
        %v4478 = vadd.f32 0.0, %v4477
        %4479 = vdwg.mxu0
        %4480 = vmatprep.subr.mxu0 0.0
        %4481 = vmatpush1.msra.mxu0 0.0
        %4482 = vmatprep.subr.mxu0 0.0
        %4483 = vmatpush1.msra.mxu0 0.0
        %4484 = vmatprep.subr.mxu0 0.0
        %4485 = vmatpush1.msra.mxu0 0.0
        %4486 = vmatprep.subr.mxu0 0.0
        %4487 = vmatpush1.msra.mxu0 0.0
        %4488 = vmatprep.subr.mxu0 0.0
        %4489 = vmatpush1.msra.mxu0 0.0
        %4490 = vmatprep.subr.mxu0 0.0
        %4491 = vmatpush1.msra.mxu0 0.0
        %4492 = vmatprep.subr.mxu0 0.0
        %4493 = vmatpush1.msra.mxu0 0.0
        %4494 = vmatprep.subr.mxu0 0.0
        %4495 = vmatpush1.msra.mxu0 0.0
        %4496 = vmatprep.subr.mxu0 0.0
        %4497 = vmatpush1.msra.mxu0 0.0
        %4498 = vmatprep.subr.mxu0 0.0
        %4499 = vmatpush1.msra.mxu0 0.0
        %4500 = vmatprep.subr.mxu0 0.0
        %4501 = vmatpush1.msra.mxu0 0.0
        %4502 = vmatprep.subr.mxu0 0.0
        %4503 = vmatpush1.msra.mxu0 0.0
        %4504 = vmatprep.subr.mxu0 0.0
        %4505 = vmatpush1.msra.mxu0 0.0
        %4506 = vmatprep.subr.mxu0 0.0
        %4507 = vmatpush1.msra.mxu0 0.0
        %4508 = vmatprep.subr.mxu0 0.0
        %4509 = vmatpush1.msra.mxu0 0.0
        %4510 = vmatprep.subr.mxu0 %v4265
        %4511 = vmatpush1.msra.mxu0 %v4263
        %4512 = vmatprep.subr.mxu0 0.0
        %4513 = vmatpush2.msra.mxu0 0.0
        %4514 = vmatprep.subr.mxu0 0.0
        %4515 = vmatpush2.msra.mxu0 0.0
        %4516 = vmatprep.subr.mxu0 0.0
        %4517 = vmatpush2.msra.mxu0 0.0
        %4518 = vmatprep.subr.mxu0 0.0
        %4519 = vmatpush2.msra.mxu0 0.0
        %4520 = vmatprep.subr.mxu0 0.0
        %4521 = vmatpush2.msra.mxu0 0.0
        %4522 = vmatprep.subr.mxu0 0.0
        %4523 = vmatpush2.msra.mxu0 0.0
        %4524 = vmatprep.subr.mxu0 0.0
        %4525 = vmatpush2.msra.mxu0 0.0
        %4526 = vmatprep.subr.mxu0 0.0
        %4527 = vmatpush2.msra.mxu0 0.0
        %4528 = vmatprep.subr.mxu0 0.0
        %4529 = vmatpush2.msra.mxu0 0.0
        %4530 = vmatprep.subr.mxu0 0.0
        %4531 = vmatpush2.msra.mxu0 0.0
        %4532 = vmatprep.subr.mxu0 0.0
        %4533 = vmatpush2.msra.mxu0 0.0
        %4534 = vmatprep.subr.mxu0 0.0
        %4535 = vmatpush2.msra.mxu0 0.0
        %4536 = vmatprep.subr.mxu0 0.0
        %4537 = vmatpush2.msra.mxu0 0.0
        %4538 = vmatprep.subr.mxu0 0.0
        %4539 = vmatpush2.msra.mxu0 0.0
        %4540 = vmatprep.subr.mxu0 0.0
        %4541 = vmatpush2.msra.mxu0 0.0
        %4542 = vmatprep.subr.mxu0 0.0
        %4543 = vmatpush2.msra.mxu0 0.0
        %4544 = vmatprep.mubr.f32.mxu0 0.0
        %4545 = vmatmul.mubr.f32.gmra.mxu0 %v4249
        %v4546 = vpop.f32.mrf.mxu0
        %v4547 = vadd.f32 0.0, %v4546
        %v4548 = vpop.f32.mrf.mxu0
        %v4549 = vadd.f32 0.0, %v4548
        %4550 = vdwg.mxu0
        %v4551 = vadd.f32 %v4216, %v4334
        %v4552 = vadd.f32 %v4217, %v4336
        %v4553 = vadd.f32 %v4218, %v4405
        %v4554 = vadd.f32 %v4219, %v4407
        %v4555 = vadd.f32 %v4220, %v4476
        %v4556 = vadd.f32 %v4221, %v4478
        %v4557 = vadd.f32 %v4222, %v4547
        %v4558 = vadd.f32 %v4223, %v4549
        %v4559 = vld [vmem:[%s6] sm:$0xf]
        %4561 = vset.pattern.permute.xlu0 0
        %4562 = vperm.xlu0 %4561, %v4559
        %v4563 = vpop.permute.xlu0 %4562
        %v4565 = vadd.f32 %v4551, %v4563
        %v4566 = vadd.f32 %v4552, %v4563
        %v4567 = vadd.f32 %v4553, %v4563
        %v4568 = vadd.f32 %v4554, %v4563
        %v4569 = vadd.f32 %v4555, %v4563
        %v4570 = vadd.f32 %v4556, %v4563
        %v4571 = vadd.f32 %v4557, %v4563
        %v4572 = vadd.f32 %v4558, %v4563
        %vm4573 = vcmp.ge.f32.partialorder %v4565, 0.0
        %vm4574 = vcmp.ge.f32.partialorder %v4566, 0.0
        %vm4575 = vcmp.ge.f32.partialorder %v4567, 0.0
        %vm4576 = vcmp.ge.f32.partialorder %v4568, 0.0
        %vm4577 = vcmp.ge.f32.partialorder %v4569, 0.0
        %vm4578 = vcmp.ge.f32.partialorder %v4570, 0.0
        %vm4579 = vcmp.ge.f32.partialorder %v4571, 0.0
        %vm4580 = vcmp.ge.f32.partialorder %v4572, 0.0
        %v4581 = vmul.f32 %v4565, 0.01
        %v4582 = vmul.f32 %v4566, 0.01
        %v4583 = vmul.f32 %v4567, 0.01
        %v4584 = vmul.f32 %v4568, 0.01
        %v4585 = vmul.f32 %v4569, 0.01
        %v4586 = vmul.f32 %v4570, 0.01
        %v4587 = vmul.f32 %v4571, 0.01
        %v4588 = vmul.f32 %v4572, 0.01
        %v4589 = vsel %vm4573, %v4565, %v4581
        %v4590 = vsel %vm4574, %v4566, %v4582
        %v4591 = vsel %vm4575, %v4567, %v4583
        %v4592 = vsel %vm4576, %v4568, %v4584
        %v4593 = vsel %vm4577, %v4569, %v4585
        %v4594 = vsel %vm4578, %v4570, %v4586
        %v4595 = vsel %vm4579, %v4571, %v4587
        %v4596 = vsel %vm4580, %v4572, %v4588
        %v4597 = vld [vmem:[%s7] sm:$0xff]
        %4599 = vrot.lane.b32.xlu0 %v4597, 124
        %v4600 = vpop.permute.xlu0 %4599
        %4608 = vrot.lane.b32.xlu0 %v4589, 127
        %v4609 = vpop.permute.xlu0 %4608
        %4610 = vrot.lane.b32.xlu0 %v4590, 127
        %v4611 = vpop.permute.xlu0 %4610
        %4612 = vrot.lane.b32.xlu0 %v4591, 127
        %v4613 = vpop.permute.xlu0 %4612
        %4614 = vrot.lane.b32.xlu0 %v4592, 127
        %v4615 = vpop.permute.xlu0 %4614
        %4616 = vrot.lane.b32.xlu0 %v4593, 127
        %v4617 = vpop.permute.xlu0 %4616
        %4618 = vrot.lane.b32.xlu0 %v4594, 127
        %v4619 = vpop.permute.xlu0 %4618
        %4620 = vrot.lane.b32.xlu0 %v4595, 127
        %v4621 = vpop.permute.xlu0 %4620
        %v4622 = vsel %vm561, %v4609, %v4611
        %v4623 = vsel %vm561, %v4611, %v4613
        %v4624 = vsel %vm561, %v4613, %v4615
        %v4625 = vsel %vm561, %v4615, %v4617
        %v4626 = vsel %vm561, %v4617, %v4619
        %v4627 = vsel %vm561, %v4619, %v4621
        %v4628 = vsel %vm569, %v4600, 0
        %v4630 = vsel %vm572, %v4622, 0
        %v4632 = vsel %vm572, %v4623, 0
        %v4634 = vsel %vm572, %v4624, 0
        %v4636 = vsel %vm572, %v4625, 0
        %v4638 = vsel %vm572, %v4626, 0
        %v4640 = vsel %vm572, %v4627, 0
        %v4642 = vsel %vm572, %v4621, 0
        %4644 = vmatprep.subr.mxu0 0.0
        %4645 = vmatpush1.msra.mxu0 0.0
        %4646 = vmatprep.subr.mxu0 0.0
        %4647 = vmatpush1.msra.mxu0 0.0
        %4648 = vmatprep.subr.mxu0 0.0
        %4649 = vmatpush1.msra.mxu0 0.0
        %4650 = vmatprep.subr.mxu0 0.0
        %4651 = vmatpush1.msra.mxu0 0.0
        %4652 = vmatprep.subr.mxu0 0.0
        %4653 = vmatpush1.msra.mxu0 0.0
        %4654 = vmatprep.subr.mxu0 0.0
        %4655 = vmatpush1.msra.mxu0 0.0
        %4656 = vmatprep.subr.mxu0 0.0
        %4657 = vmatpush1.msra.mxu0 0.0
        %4658 = vmatprep.subr.mxu0 0.0
        %4659 = vmatpush1.msra.mxu0 0.0
        %4660 = vmatprep.subr.mxu0 0.0
        %4661 = vmatpush1.msra.mxu0 0.0
        %4662 = vmatprep.subr.mxu0 0.0
        %4663 = vmatpush1.msra.mxu0 0.0
        %4664 = vmatprep.subr.mxu0 0.0
        %4665 = vmatpush1.msra.mxu0 0.0
        %4666 = vmatprep.subr.mxu0 0.0
        %4667 = vmatpush1.msra.mxu0 0.0
        %4668 = vmatprep.subr.mxu0 0.0
        %4669 = vmatpush1.msra.mxu0 0.0
        %4670 = vmatprep.subr.mxu0 0.0
        %4671 = vmatpush1.msra.mxu0 0.0
        %4672 = vmatprep.subr.mxu0 0.0
        %4673 = vmatpush1.msra.mxu0 0.0
        %4674 = vmatprep.subr.mxu0 %v4632
        %4675 = vmatpush1.msra.mxu0 %v4630
        %4676 = vmatprep.subr.mxu0 0.0
        %4677 = vmatpush2.msra.mxu0 0.0
        %4678 = vmatprep.subr.mxu0 0.0
        %4679 = vmatpush2.msra.mxu0 0.0
        %4680 = vmatprep.subr.mxu0 0.0
        %4681 = vmatpush2.msra.mxu0 0.0
        %4682 = vmatprep.subr.mxu0 0.0
        %4683 = vmatpush2.msra.mxu0 0.0
        %4684 = vmatprep.subr.mxu0 0.0
        %4685 = vmatpush2.msra.mxu0 0.0
        %4686 = vmatprep.subr.mxu0 0.0
        %4687 = vmatpush2.msra.mxu0 0.0
        %4688 = vmatprep.subr.mxu0 0.0
        %4689 = vmatpush2.msra.mxu0 0.0
        %4690 = vmatprep.subr.mxu0 0.0
        %4691 = vmatpush2.msra.mxu0 0.0
        %4692 = vmatprep.subr.mxu0 0.0
        %4693 = vmatpush2.msra.mxu0 0.0
        %4694 = vmatprep.subr.mxu0 0.0
        %4695 = vmatpush2.msra.mxu0 0.0
        %4696 = vmatprep.subr.mxu0 0.0
        %4697 = vmatpush2.msra.mxu0 0.0
        %4698 = vmatprep.subr.mxu0 0.0
        %4699 = vmatpush2.msra.mxu0 0.0
        %4700 = vmatprep.subr.mxu0 0.0
        %4701 = vmatpush2.msra.mxu0 0.0
        %4702 = vmatprep.subr.mxu0 0.0
        %4703 = vmatpush2.msra.mxu0 0.0
        %4704 = vmatprep.subr.mxu0 0.0
        %4705 = vmatpush2.msra.mxu0 0.0
        %4706 = vmatprep.subr.mxu0 0.0
        %4707 = vmatpush2.msra.mxu0 0.0
        %4708 = vmatprep.mubr.f32.mxu0 0.0
        %4709 = vmatmul.mubr.f32.gmra.mxu0 %v4628
        %v4710 = vpop.f32.mrf.mxu0
        %v4711 = vadd.f32 0.0, %v4710
        %v4712 = vpop.f32.mrf.mxu0
        %v4713 = vadd.f32 0.0, %v4712
        %4714 = vdwg.mxu0
        %4715 = vmatprep.subr.mxu0 0.0
        %4716 = vmatpush1.msra.mxu0 0.0
        %4717 = vmatprep.subr.mxu0 0.0
        %4718 = vmatpush1.msra.mxu0 0.0
        %4719 = vmatprep.subr.mxu0 0.0
        %4720 = vmatpush1.msra.mxu0 0.0
        %4721 = vmatprep.subr.mxu0 0.0
        %4722 = vmatpush1.msra.mxu0 0.0
        %4723 = vmatprep.subr.mxu0 0.0
        %4724 = vmatpush1.msra.mxu0 0.0
        %4725 = vmatprep.subr.mxu0 0.0
        %4726 = vmatpush1.msra.mxu0 0.0
        %4727 = vmatprep.subr.mxu0 0.0
        %4728 = vmatpush1.msra.mxu0 0.0
        %4729 = vmatprep.subr.mxu0 0.0
        %4730 = vmatpush1.msra.mxu0 0.0
        %4731 = vmatprep.subr.mxu0 0.0
        %4732 = vmatpush1.msra.mxu0 0.0
        %4733 = vmatprep.subr.mxu0 0.0
        %4734 = vmatpush1.msra.mxu0 0.0
        %4735 = vmatprep.subr.mxu0 0.0
        %4736 = vmatpush1.msra.mxu0 0.0
        %4737 = vmatprep.subr.mxu0 0.0
        %4738 = vmatpush1.msra.mxu0 0.0
        %4739 = vmatprep.subr.mxu0 0.0
        %4740 = vmatpush1.msra.mxu0 0.0
        %4741 = vmatprep.subr.mxu0 0.0
        %4742 = vmatpush1.msra.mxu0 0.0
        %4743 = vmatprep.subr.mxu0 0.0
        %4744 = vmatpush1.msra.mxu0 0.0
        %4745 = vmatprep.subr.mxu0 %v4636
        %4746 = vmatpush1.msra.mxu0 %v4634
        %4747 = vmatprep.subr.mxu0 0.0
        %4748 = vmatpush2.msra.mxu0 0.0
        %4749 = vmatprep.subr.mxu0 0.0
        %4750 = vmatpush2.msra.mxu0 0.0
        %4751 = vmatprep.subr.mxu0 0.0
        %4752 = vmatpush2.msra.mxu0 0.0
        %4753 = vmatprep.subr.mxu0 0.0
        %4754 = vmatpush2.msra.mxu0 0.0
        %4755 = vmatprep.subr.mxu0 0.0
        %4756 = vmatpush2.msra.mxu0 0.0
        %4757 = vmatprep.subr.mxu0 0.0
        %4758 = vmatpush2.msra.mxu0 0.0
        %4759 = vmatprep.subr.mxu0 0.0
        %4760 = vmatpush2.msra.mxu0 0.0
        %4761 = vmatprep.subr.mxu0 0.0
        %4762 = vmatpush2.msra.mxu0 0.0
        %4763 = vmatprep.subr.mxu0 0.0
        %4764 = vmatpush2.msra.mxu0 0.0
        %4765 = vmatprep.subr.mxu0 0.0
        %4766 = vmatpush2.msra.mxu0 0.0
        %4767 = vmatprep.subr.mxu0 0.0
        %4768 = vmatpush2.msra.mxu0 0.0
        %4769 = vmatprep.subr.mxu0 0.0
        %4770 = vmatpush2.msra.mxu0 0.0
        %4771 = vmatprep.subr.mxu0 0.0
        %4772 = vmatpush2.msra.mxu0 0.0
        %4773 = vmatprep.subr.mxu0 0.0
        %4774 = vmatpush2.msra.mxu0 0.0
        %4775 = vmatprep.subr.mxu0 0.0
        %4776 = vmatpush2.msra.mxu0 0.0
        %4777 = vmatprep.subr.mxu0 0.0
        %4778 = vmatpush2.msra.mxu0 0.0
        %4779 = vmatprep.mubr.f32.mxu0 0.0
        %4780 = vmatmul.mubr.f32.gmra.mxu0 %v4628
        %v4781 = vpop.f32.mrf.mxu0
        %v4782 = vadd.f32 0.0, %v4781
        %v4783 = vpop.f32.mrf.mxu0
        %v4784 = vadd.f32 0.0, %v4783
        %4785 = vdwg.mxu0
        %4786 = vmatprep.subr.mxu0 0.0
        %4787 = vmatpush1.msra.mxu0 0.0
        %4788 = vmatprep.subr.mxu0 0.0
        %4789 = vmatpush1.msra.mxu0 0.0
        %4790 = vmatprep.subr.mxu0 0.0
        %4791 = vmatpush1.msra.mxu0 0.0
        %4792 = vmatprep.subr.mxu0 0.0
        %4793 = vmatpush1.msra.mxu0 0.0
        %4794 = vmatprep.subr.mxu0 0.0
        %4795 = vmatpush1.msra.mxu0 0.0
        %4796 = vmatprep.subr.mxu0 0.0
        %4797 = vmatpush1.msra.mxu0 0.0
        %4798 = vmatprep.subr.mxu0 0.0
        %4799 = vmatpush1.msra.mxu0 0.0
        %4800 = vmatprep.subr.mxu0 0.0
        %4801 = vmatpush1.msra.mxu0 0.0
        %4802 = vmatprep.subr.mxu0 0.0
        %4803 = vmatpush1.msra.mxu0 0.0
        %4804 = vmatprep.subr.mxu0 0.0
        %4805 = vmatpush1.msra.mxu0 0.0
        %4806 = vmatprep.subr.mxu0 0.0
        %4807 = vmatpush1.msra.mxu0 0.0
        %4808 = vmatprep.subr.mxu0 0.0
        %4809 = vmatpush1.msra.mxu0 0.0
        %4810 = vmatprep.subr.mxu0 0.0
        %4811 = vmatpush1.msra.mxu0 0.0
        %4812 = vmatprep.subr.mxu0 0.0
        %4813 = vmatpush1.msra.mxu0 0.0
        %4814 = vmatprep.subr.mxu0 0.0
        %4815 = vmatpush1.msra.mxu0 0.0
        %4816 = vmatprep.subr.mxu0 %v4640
        %4817 = vmatpush1.msra.mxu0 %v4638
        %4818 = vmatprep.subr.mxu0 0.0
        %4819 = vmatpush2.msra.mxu0 0.0
        %4820 = vmatprep.subr.mxu0 0.0
        %4821 = vmatpush2.msra.mxu0 0.0
        %4822 = vmatprep.subr.mxu0 0.0
        %4823 = vmatpush2.msra.mxu0 0.0
        %4824 = vmatprep.subr.mxu0 0.0
        %4825 = vmatpush2.msra.mxu0 0.0
        %4826 = vmatprep.subr.mxu0 0.0
        %4827 = vmatpush2.msra.mxu0 0.0
        %4828 = vmatprep.subr.mxu0 0.0
        %4829 = vmatpush2.msra.mxu0 0.0
        %4830 = vmatprep.subr.mxu0 0.0
        %4831 = vmatpush2.msra.mxu0 0.0
        %4832 = vmatprep.subr.mxu0 0.0
        %4833 = vmatpush2.msra.mxu0 0.0
        %4834 = vmatprep.subr.mxu0 0.0
        %4835 = vmatpush2.msra.mxu0 0.0
        %4836 = vmatprep.subr.mxu0 0.0
        %4837 = vmatpush2.msra.mxu0 0.0
        %4838 = vmatprep.subr.mxu0 0.0
        %4839 = vmatpush2.msra.mxu0 0.0
        %4840 = vmatprep.subr.mxu0 0.0
        %4841 = vmatpush2.msra.mxu0 0.0
        %4842 = vmatprep.subr.mxu0 0.0
        %4843 = vmatpush2.msra.mxu0 0.0
        %4844 = vmatprep.subr.mxu0 0.0
        %4845 = vmatpush2.msra.mxu0 0.0
        %4846 = vmatprep.subr.mxu0 0.0
        %4847 = vmatpush2.msra.mxu0 0.0
        %4848 = vmatprep.subr.mxu0 0.0
        %4849 = vmatpush2.msra.mxu0 0.0
        %4850 = vmatprep.mubr.f32.mxu0 0.0
        %4851 = vmatmul.mubr.f32.gmra.mxu0 %v4628
        %v4852 = vpop.f32.mrf.mxu0
        %v4853 = vadd.f32 0.0, %v4852
        %v4854 = vpop.f32.mrf.mxu0
        %v4855 = vadd.f32 0.0, %v4854
        %4856 = vdwg.mxu0
        %4857 = vmatprep.subr.mxu0 0.0
        %4858 = vmatpush1.msra.mxu0 0.0
        %4859 = vmatprep.subr.mxu0 0.0
        %4860 = vmatpush1.msra.mxu0 0.0
        %4861 = vmatprep.subr.mxu0 0.0
        %4862 = vmatpush1.msra.mxu0 0.0
        %4863 = vmatprep.subr.mxu0 0.0
        %4864 = vmatpush1.msra.mxu0 0.0
        %4865 = vmatprep.subr.mxu0 0.0
        %4866 = vmatpush1.msra.mxu0 0.0
        %4867 = vmatprep.subr.mxu0 0.0
        %4868 = vmatpush1.msra.mxu0 0.0
        %4869 = vmatprep.subr.mxu0 0.0
        %4870 = vmatpush1.msra.mxu0 0.0
        %4871 = vmatprep.subr.mxu0 0.0
        %4872 = vmatpush1.msra.mxu0 0.0
        %4873 = vmatprep.subr.mxu0 0.0
        %4874 = vmatpush1.msra.mxu0 0.0
        %4875 = vmatprep.subr.mxu0 0.0
        %4876 = vmatpush1.msra.mxu0 0.0
        %4877 = vmatprep.subr.mxu0 0.0
        %4878 = vmatpush1.msra.mxu0 0.0
        %4879 = vmatprep.subr.mxu0 0.0
        %4880 = vmatpush1.msra.mxu0 0.0
        %4881 = vmatprep.subr.mxu0 0.0
        %4882 = vmatpush1.msra.mxu0 0.0
        %4883 = vmatprep.subr.mxu0 0.0
        %4884 = vmatpush1.msra.mxu0 0.0
        %4885 = vmatprep.subr.mxu0 0.0
        %4886 = vmatpush1.msra.mxu0 0.0
        %4887 = vmatprep.subr.mxu0 0.0
        %4888 = vmatpush1.msra.mxu0 %v4642
        %4889 = vmatprep.subr.mxu0 0.0
        %4890 = vmatpush2.msra.mxu0 0.0
        %4891 = vmatprep.subr.mxu0 0.0
        %4892 = vmatpush2.msra.mxu0 0.0
        %4893 = vmatprep.subr.mxu0 0.0
        %4894 = vmatpush2.msra.mxu0 0.0
        %4895 = vmatprep.subr.mxu0 0.0
        %4896 = vmatpush2.msra.mxu0 0.0
        %4897 = vmatprep.subr.mxu0 0.0
        %4898 = vmatpush2.msra.mxu0 0.0
        %4899 = vmatprep.subr.mxu0 0.0
        %4900 = vmatpush2.msra.mxu0 0.0
        %4901 = vmatprep.subr.mxu0 0.0
        %4902 = vmatpush2.msra.mxu0 0.0
        %4903 = vmatprep.subr.mxu0 0.0
        %4904 = vmatpush2.msra.mxu0 0.0
        %4905 = vmatprep.subr.mxu0 0.0
        %4906 = vmatpush2.msra.mxu0 0.0
        %4907 = vmatprep.subr.mxu0 0.0
        %4908 = vmatpush2.msra.mxu0 0.0
        %4909 = vmatprep.subr.mxu0 0.0
        %4910 = vmatpush2.msra.mxu0 0.0
        %4911 = vmatprep.subr.mxu0 0.0
        %4912 = vmatpush2.msra.mxu0 0.0
        %4913 = vmatprep.subr.mxu0 0.0
        %4914 = vmatpush2.msra.mxu0 0.0
        %4915 = vmatprep.subr.mxu0 0.0
        %4916 = vmatpush2.msra.mxu0 0.0
        %4917 = vmatprep.subr.mxu0 0.0
        %4918 = vmatpush2.msra.mxu0 0.0
        %4919 = vmatprep.subr.mxu0 0.0
        %4920 = vmatpush2.msra.mxu0 0.0
        %4921 = vmatprep.mubr.f32.mxu0 0.0
        %4922 = vmatmul.mubr.f32.gmra.mxu0 %v4628
        %v4923 = vpop.f32.mrf.mxu0
        %v4924 = vadd.f32 0.0, %v4923
        %v4925 = vpop.f32.mrf.mxu0
        %4926 = vdwg.mxu0
        %v4927 = vsel %vm569, %v4597, 0
        %v4929 = vsel %vm572, %v4589, 0
        %v4931 = vsel %vm572, %v4590, 0
        %v4933 = vsel %vm572, %v4591, 0
        %v4935 = vsel %vm572, %v4592, 0
        %v4937 = vsel %vm572, %v4593, 0
        %v4939 = vsel %vm572, %v4594, 0
        %v4941 = vsel %vm572, %v4595, 0
        %4943 = vmatprep.subr.mxu0 0.0
        %4944 = vmatpush1.msra.mxu0 0.0
        %4945 = vmatprep.subr.mxu0 0.0
        %4946 = vmatpush1.msra.mxu0 0.0
        %4947 = vmatprep.subr.mxu0 0.0
        %4948 = vmatpush1.msra.mxu0 0.0
        %4949 = vmatprep.subr.mxu0 0.0
        %4950 = vmatpush1.msra.mxu0 0.0
        %4951 = vmatprep.subr.mxu0 0.0
        %4952 = vmatpush1.msra.mxu0 0.0
        %4953 = vmatprep.subr.mxu0 0.0
        %4954 = vmatpush1.msra.mxu0 0.0
        %4955 = vmatprep.subr.mxu0 0.0
        %4956 = vmatpush1.msra.mxu0 0.0
        %4957 = vmatprep.subr.mxu0 0.0
        %4958 = vmatpush1.msra.mxu0 0.0
        %4959 = vmatprep.subr.mxu0 0.0
        %4960 = vmatpush1.msra.mxu0 0.0
        %4961 = vmatprep.subr.mxu0 0.0
        %4962 = vmatpush1.msra.mxu0 0.0
        %4963 = vmatprep.subr.mxu0 0.0
        %4964 = vmatpush1.msra.mxu0 0.0
        %4965 = vmatprep.subr.mxu0 0.0
        %4966 = vmatpush1.msra.mxu0 0.0
        %4967 = vmatprep.subr.mxu0 0.0
        %4968 = vmatpush1.msra.mxu0 0.0
        %4969 = vmatprep.subr.mxu0 0.0
        %4970 = vmatpush1.msra.mxu0 0.0
        %4971 = vmatprep.subr.mxu0 0.0
        %4972 = vmatpush1.msra.mxu0 0.0
        %4973 = vmatprep.subr.mxu0 %v4931
        %4974 = vmatpush1.msra.mxu0 %v4929
        %4975 = vmatprep.subr.mxu0 0.0
        %4976 = vmatpush2.msra.mxu0 0.0
        %4977 = vmatprep.subr.mxu0 0.0
        %4978 = vmatpush2.msra.mxu0 0.0
        %4979 = vmatprep.subr.mxu0 0.0
        %4980 = vmatpush2.msra.mxu0 0.0
        %4981 = vmatprep.subr.mxu0 0.0
        %4982 = vmatpush2.msra.mxu0 0.0
        %4983 = vmatprep.subr.mxu0 0.0
        %4984 = vmatpush2.msra.mxu0 0.0
        %4985 = vmatprep.subr.mxu0 0.0
        %4986 = vmatpush2.msra.mxu0 0.0
        %4987 = vmatprep.subr.mxu0 0.0
        %4988 = vmatpush2.msra.mxu0 0.0
        %4989 = vmatprep.subr.mxu0 0.0
        %4990 = vmatpush2.msra.mxu0 0.0
        %4991 = vmatprep.subr.mxu0 0.0
        %4992 = vmatpush2.msra.mxu0 0.0
        %4993 = vmatprep.subr.mxu0 0.0
        %4994 = vmatpush2.msra.mxu0 0.0
        %4995 = vmatprep.subr.mxu0 0.0
        %4996 = vmatpush2.msra.mxu0 0.0
        %4997 = vmatprep.subr.mxu0 0.0
        %4998 = vmatpush2.msra.mxu0 0.0
        %4999 = vmatprep.subr.mxu0 0.0
        %5000 = vmatpush2.msra.mxu0 0.0
        %5001 = vmatprep.subr.mxu0 0.0
        %5002 = vmatpush2.msra.mxu0 0.0
        %5003 = vmatprep.subr.mxu0 0.0
        %5004 = vmatpush2.msra.mxu0 0.0
        %5005 = vmatprep.subr.mxu0 0.0
        %5006 = vmatpush2.msra.mxu0 0.0
        %5007 = vmatprep.mubr.f32.mxu0 0.0
        %5008 = vmatmul.mubr.f32.gmra.mxu0 %v4927
        %v5009 = vpop.f32.mrf.mxu0
        %v5010 = vadd.f32 %v4711, %v5009
        %v5011 = vpop.f32.mrf.mxu0
        %v5012 = vadd.f32 %v4713, %v5011
        %5013 = vdwg.mxu0
        %5014 = vmatprep.subr.mxu0 0.0
        %5015 = vmatpush1.msra.mxu0 0.0
        %5016 = vmatprep.subr.mxu0 0.0
        %5017 = vmatpush1.msra.mxu0 0.0
        %5018 = vmatprep.subr.mxu0 0.0
        %5019 = vmatpush1.msra.mxu0 0.0
        %5020 = vmatprep.subr.mxu0 0.0
        %5021 = vmatpush1.msra.mxu0 0.0
        %5022 = vmatprep.subr.mxu0 0.0
        %5023 = vmatpush1.msra.mxu0 0.0
        %5024 = vmatprep.subr.mxu0 0.0
        %5025 = vmatpush1.msra.mxu0 0.0
        %5026 = vmatprep.subr.mxu0 0.0
        %5027 = vmatpush1.msra.mxu0 0.0
        %5028 = vmatprep.subr.mxu0 0.0
        %5029 = vmatpush1.msra.mxu0 0.0
        %5030 = vmatprep.subr.mxu0 0.0
        %5031 = vmatpush1.msra.mxu0 0.0
        %5032 = vmatprep.subr.mxu0 0.0
        %5033 = vmatpush1.msra.mxu0 0.0
        %5034 = vmatprep.subr.mxu0 0.0
        %5035 = vmatpush1.msra.mxu0 0.0
        %5036 = vmatprep.subr.mxu0 0.0
        %5037 = vmatpush1.msra.mxu0 0.0
        %5038 = vmatprep.subr.mxu0 0.0
        %5039 = vmatpush1.msra.mxu0 0.0
        %5040 = vmatprep.subr.mxu0 0.0
        %5041 = vmatpush1.msra.mxu0 0.0
        %5042 = vmatprep.subr.mxu0 0.0
        %5043 = vmatpush1.msra.mxu0 0.0
        %5044 = vmatprep.subr.mxu0 %v4935
        %5045 = vmatpush1.msra.mxu0 %v4933
        %5046 = vmatprep.subr.mxu0 0.0
        %5047 = vmatpush2.msra.mxu0 0.0
        %5048 = vmatprep.subr.mxu0 0.0
        %5049 = vmatpush2.msra.mxu0 0.0
        %5050 = vmatprep.subr.mxu0 0.0
        %5051 = vmatpush2.msra.mxu0 0.0
        %5052 = vmatprep.subr.mxu0 0.0
        %5053 = vmatpush2.msra.mxu0 0.0
        %5054 = vmatprep.subr.mxu0 0.0
        %5055 = vmatpush2.msra.mxu0 0.0
        %5056 = vmatprep.subr.mxu0 0.0
        %5057 = vmatpush2.msra.mxu0 0.0
        %5058 = vmatprep.subr.mxu0 0.0
        %5059 = vmatpush2.msra.mxu0 0.0
        %5060 = vmatprep.subr.mxu0 0.0
        %5061 = vmatpush2.msra.mxu0 0.0
        %5062 = vmatprep.subr.mxu0 0.0
        %5063 = vmatpush2.msra.mxu0 0.0
        %5064 = vmatprep.subr.mxu0 0.0
        %5065 = vmatpush2.msra.mxu0 0.0
        %5066 = vmatprep.subr.mxu0 0.0
        %5067 = vmatpush2.msra.mxu0 0.0
        %5068 = vmatprep.subr.mxu0 0.0
        %5069 = vmatpush2.msra.mxu0 0.0
        %5070 = vmatprep.subr.mxu0 0.0
        %5071 = vmatpush2.msra.mxu0 0.0
        %5072 = vmatprep.subr.mxu0 0.0
        %5073 = vmatpush2.msra.mxu0 0.0
        %5074 = vmatprep.subr.mxu0 0.0
        %5075 = vmatpush2.msra.mxu0 0.0
        %5076 = vmatprep.subr.mxu0 0.0
        %5077 = vmatpush2.msra.mxu0 0.0
        %5078 = vmatprep.mubr.f32.mxu0 0.0
        %5079 = vmatmul.mubr.f32.gmra.mxu0 %v4927
        %v5080 = vpop.f32.mrf.mxu0
        %v5081 = vadd.f32 %v4782, %v5080
        %v5082 = vpop.f32.mrf.mxu0
        %v5083 = vadd.f32 %v4784, %v5082
        %5084 = vdwg.mxu0
        %5085 = vmatprep.subr.mxu0 0.0
        %5086 = vmatpush1.msra.mxu0 0.0
        %5087 = vmatprep.subr.mxu0 0.0
        %5088 = vmatpush1.msra.mxu0 0.0
        %5089 = vmatprep.subr.mxu0 0.0
        %5090 = vmatpush1.msra.mxu0 0.0
        %5091 = vmatprep.subr.mxu0 0.0
        %5092 = vmatpush1.msra.mxu0 0.0
        %5093 = vmatprep.subr.mxu0 0.0
        %5094 = vmatpush1.msra.mxu0 0.0
        %5095 = vmatprep.subr.mxu0 0.0
        %5096 = vmatpush1.msra.mxu0 0.0
        %5097 = vmatprep.subr.mxu0 0.0
        %5098 = vmatpush1.msra.mxu0 0.0
        %5099 = vmatprep.subr.mxu0 0.0
        %5100 = vmatpush1.msra.mxu0 0.0
        %5101 = vmatprep.subr.mxu0 0.0
        %5102 = vmatpush1.msra.mxu0 0.0
        %5103 = vmatprep.subr.mxu0 0.0
        %5104 = vmatpush1.msra.mxu0 0.0
        %5105 = vmatprep.subr.mxu0 0.0
        %5106 = vmatpush1.msra.mxu0 0.0
        %5107 = vmatprep.subr.mxu0 0.0
        %5108 = vmatpush1.msra.mxu0 0.0
        %5109 = vmatprep.subr.mxu0 0.0
        %5110 = vmatpush1.msra.mxu0 0.0
        %5111 = vmatprep.subr.mxu0 0.0
        %5112 = vmatpush1.msra.mxu0 0.0
        %5113 = vmatprep.subr.mxu0 0.0
        %5114 = vmatpush1.msra.mxu0 0.0
        %5115 = vmatprep.subr.mxu0 %v4939
        %5116 = vmatpush1.msra.mxu0 %v4937
        %5117 = vmatprep.subr.mxu0 0.0
        %5118 = vmatpush2.msra.mxu0 0.0
        %5119 = vmatprep.subr.mxu0 0.0
        %5120 = vmatpush2.msra.mxu0 0.0
        %5121 = vmatprep.subr.mxu0 0.0
        %5122 = vmatpush2.msra.mxu0 0.0
        %5123 = vmatprep.subr.mxu0 0.0
        %5124 = vmatpush2.msra.mxu0 0.0
        %5125 = vmatprep.subr.mxu0 0.0
        %5126 = vmatpush2.msra.mxu0 0.0
        %5127 = vmatprep.subr.mxu0 0.0
        %5128 = vmatpush2.msra.mxu0 0.0
        %5129 = vmatprep.subr.mxu0 0.0
        %5130 = vmatpush2.msra.mxu0 0.0
        %5131 = vmatprep.subr.mxu0 0.0
        %5132 = vmatpush2.msra.mxu0 0.0
        %5133 = vmatprep.subr.mxu0 0.0
        %5134 = vmatpush2.msra.mxu0 0.0
        %5135 = vmatprep.subr.mxu0 0.0
        %5136 = vmatpush2.msra.mxu0 0.0
        %5137 = vmatprep.subr.mxu0 0.0
        %5138 = vmatpush2.msra.mxu0 0.0
        %5139 = vmatprep.subr.mxu0 0.0
        %5140 = vmatpush2.msra.mxu0 0.0
        %5141 = vmatprep.subr.mxu0 0.0
        %5142 = vmatpush2.msra.mxu0 0.0
        %5143 = vmatprep.subr.mxu0 0.0
        %5144 = vmatpush2.msra.mxu0 0.0
        %5145 = vmatprep.subr.mxu0 0.0
        %5146 = vmatpush2.msra.mxu0 0.0
        %5147 = vmatprep.subr.mxu0 0.0
        %5148 = vmatpush2.msra.mxu0 0.0
        %5149 = vmatprep.mubr.f32.mxu0 0.0
        %5150 = vmatmul.mubr.f32.gmra.mxu0 %v4927
        %v5151 = vpop.f32.mrf.mxu0
        %v5152 = vadd.f32 %v4853, %v5151
        %v5153 = vpop.f32.mrf.mxu0
        %v5154 = vadd.f32 %v4855, %v5153
        %5155 = vdwg.mxu0
        %5156 = vmatprep.subr.mxu0 0.0
        %5157 = vmatpush1.msra.mxu0 0.0
        %5158 = vmatprep.subr.mxu0 0.0
        %5159 = vmatpush1.msra.mxu0 0.0
        %5160 = vmatprep.subr.mxu0 0.0
        %5161 = vmatpush1.msra.mxu0 0.0
        %5162 = vmatprep.subr.mxu0 0.0
        %5163 = vmatpush1.msra.mxu0 0.0
        %5164 = vmatprep.subr.mxu0 0.0
        %5165 = vmatpush1.msra.mxu0 0.0
        %5166 = vmatprep.subr.mxu0 0.0
        %5167 = vmatpush1.msra.mxu0 0.0
        %5168 = vmatprep.subr.mxu0 0.0
        %5169 = vmatpush1.msra.mxu0 0.0
        %5170 = vmatprep.subr.mxu0 0.0
        %5171 = vmatpush1.msra.mxu0 0.0
        %5172 = vmatprep.subr.mxu0 0.0
        %5173 = vmatpush1.msra.mxu0 0.0
        %5174 = vmatprep.subr.mxu0 0.0
        %5175 = vmatpush1.msra.mxu0 0.0
        %5176 = vmatprep.subr.mxu0 0.0
        %5177 = vmatpush1.msra.mxu0 0.0
        %5178 = vmatprep.subr.mxu0 0.0
        %5179 = vmatpush1.msra.mxu0 0.0
        %5180 = vmatprep.subr.mxu0 0.0
        %5181 = vmatpush1.msra.mxu0 0.0
        %5182 = vmatprep.subr.mxu0 0.0
        %5183 = vmatpush1.msra.mxu0 0.0
        %5184 = vmatprep.subr.mxu0 0.0
        %5185 = vmatpush1.msra.mxu0 0.0
        %5186 = vmatprep.subr.mxu0 0.0
        %5187 = vmatpush1.msra.mxu0 %v4941
        %5188 = vmatprep.subr.mxu0 0.0
        %5189 = vmatpush2.msra.mxu0 0.0
        %5190 = vmatprep.subr.mxu0 0.0
        %5191 = vmatpush2.msra.mxu0 0.0
        %5192 = vmatprep.subr.mxu0 0.0
        %5193 = vmatpush2.msra.mxu0 0.0
        %5194 = vmatprep.subr.mxu0 0.0
        %5195 = vmatpush2.msra.mxu0 0.0
        %5196 = vmatprep.subr.mxu0 0.0
        %5197 = vmatpush2.msra.mxu0 0.0
        %5198 = vmatprep.subr.mxu0 0.0
        %5199 = vmatpush2.msra.mxu0 0.0
        %5200 = vmatprep.subr.mxu0 0.0
        %5201 = vmatpush2.msra.mxu0 0.0
        %5202 = vmatprep.subr.mxu0 0.0
        %5203 = vmatpush2.msra.mxu0 0.0
        %5204 = vmatprep.subr.mxu0 0.0
        %5205 = vmatpush2.msra.mxu0 0.0
        %5206 = vmatprep.subr.mxu0 0.0
        %5207 = vmatpush2.msra.mxu0 0.0
        %5208 = vmatprep.subr.mxu0 0.0
        %5209 = vmatpush2.msra.mxu0 0.0
        %5210 = vmatprep.subr.mxu0 0.0
        %5211 = vmatpush2.msra.mxu0 0.0
        %5212 = vmatprep.subr.mxu0 0.0
        %5213 = vmatpush2.msra.mxu0 0.0
        %5214 = vmatprep.subr.mxu0 0.0
        %5215 = vmatpush2.msra.mxu0 0.0
        %5216 = vmatprep.subr.mxu0 0.0
        %5217 = vmatpush2.msra.mxu0 0.0
        %5218 = vmatprep.subr.mxu0 0.0
        %5219 = vmatpush2.msra.mxu0 0.0
        %5220 = vmatprep.mubr.f32.mxu0 0.0
        %5221 = vmatmul.mubr.f32.gmra.mxu0 %v4927
        %v5222 = vpop.f32.mrf.mxu0
        %v5223 = vadd.f32 %v4924, %v5222
        %v5224 = vpop.f32.mrf.mxu0
        %5225 = vdwg.mxu0
        %5226 = vrot.lane.b32.xlu0 %v4597, 120
        %v5227 = vpop.permute.xlu0 %5226
        %5229 = vrot.lane.b32.xlu0 %v4589, 96
        %v5230 = vpop.permute.xlu0 %5229
        %5231 = vrot.lane.b32.xlu0 %v4590, 96
        %v5232 = vpop.permute.xlu0 %5231
        %5233 = vrot.lane.b32.xlu0 %v4591, 96
        %v5234 = vpop.permute.xlu0 %5233
        %5235 = vrot.lane.b32.xlu0 %v4592, 96
        %v5236 = vpop.permute.xlu0 %5235
        %5237 = vrot.lane.b32.xlu0 %v4593, 96
        %v5238 = vpop.permute.xlu0 %5237
        %5239 = vrot.lane.b32.xlu0 %v4594, 96
        %v5240 = vpop.permute.xlu0 %5239
        %5241 = vrot.lane.b32.xlu0 %v4595, 96
        %v5242 = vpop.permute.xlu0 %5241
        %5243 = vrot.lane.b32.xlu0 %v4596, 96
        %v5244 = vpop.permute.xlu0 %5243
        %v5245 = vsel %vm1195, %v5230, %v5232
        %v5246 = vsel %vm1195, %v5232, %v5234
        %v5247 = vsel %vm1195, %v5234, %v5236
        %v5248 = vsel %vm1195, %v5236, %v5238
        %v5249 = vsel %vm1195, %v5238, %v5240
        %v5250 = vsel %vm1195, %v5240, %v5242
        %v5251 = vsel %vm1195, %v5242, %v5244
        %v5252 = vsel %vm569, %v5227, 0
        %v5254 = vsel %vm572, %v5245, 0
        %v5256 = vsel %vm572, %v5246, 0
        %v5258 = vsel %vm572, %v5247, 0
        %v5260 = vsel %vm572, %v5248, 0
        %v5262 = vsel %vm572, %v5249, 0
        %v5264 = vsel %vm572, %v5250, 0
        %v5266 = vsel %vm572, %v5251, 0
        %5268 = vmatprep.subr.mxu0 0.0
        %5269 = vmatpush1.msra.mxu0 0.0
        %5270 = vmatprep.subr.mxu0 0.0
        %5271 = vmatpush1.msra.mxu0 0.0
        %5272 = vmatprep.subr.mxu0 0.0
        %5273 = vmatpush1.msra.mxu0 0.0
        %5274 = vmatprep.subr.mxu0 0.0
        %5275 = vmatpush1.msra.mxu0 0.0
        %5276 = vmatprep.subr.mxu0 0.0
        %5277 = vmatpush1.msra.mxu0 0.0
        %5278 = vmatprep.subr.mxu0 0.0
        %5279 = vmatpush1.msra.mxu0 0.0
        %5280 = vmatprep.subr.mxu0 0.0
        %5281 = vmatpush1.msra.mxu0 0.0
        %5282 = vmatprep.subr.mxu0 0.0
        %5283 = vmatpush1.msra.mxu0 0.0
        %5284 = vmatprep.subr.mxu0 0.0
        %5285 = vmatpush1.msra.mxu0 0.0
        %5286 = vmatprep.subr.mxu0 0.0
        %5287 = vmatpush1.msra.mxu0 0.0
        %5288 = vmatprep.subr.mxu0 0.0
        %5289 = vmatpush1.msra.mxu0 0.0
        %5290 = vmatprep.subr.mxu0 0.0
        %5291 = vmatpush1.msra.mxu0 0.0
        %5292 = vmatprep.subr.mxu0 0.0
        %5293 = vmatpush1.msra.mxu0 0.0
        %5294 = vmatprep.subr.mxu0 0.0
        %5295 = vmatpush1.msra.mxu0 0.0
        %5296 = vmatprep.subr.mxu0 0.0
        %5297 = vmatpush1.msra.mxu0 0.0
        %5298 = vmatprep.subr.mxu0 %v5256
        %5299 = vmatpush1.msra.mxu0 %v5254
        %5300 = vmatprep.subr.mxu0 0.0
        %5301 = vmatpush2.msra.mxu0 0.0
        %5302 = vmatprep.subr.mxu0 0.0
        %5303 = vmatpush2.msra.mxu0 0.0
        %5304 = vmatprep.subr.mxu0 0.0
        %5305 = vmatpush2.msra.mxu0 0.0
        %5306 = vmatprep.subr.mxu0 0.0
        %5307 = vmatpush2.msra.mxu0 0.0
        %5308 = vmatprep.subr.mxu0 0.0
        %5309 = vmatpush2.msra.mxu0 0.0
        %5310 = vmatprep.subr.mxu0 0.0
        %5311 = vmatpush2.msra.mxu0 0.0
        %5312 = vmatprep.subr.mxu0 0.0
        %5313 = vmatpush2.msra.mxu0 0.0
        %5314 = vmatprep.subr.mxu0 0.0
        %5315 = vmatpush2.msra.mxu0 0.0
        %5316 = vmatprep.subr.mxu0 0.0
        %5317 = vmatpush2.msra.mxu0 0.0
        %5318 = vmatprep.subr.mxu0 0.0
        %5319 = vmatpush2.msra.mxu0 0.0
        %5320 = vmatprep.subr.mxu0 0.0
        %5321 = vmatpush2.msra.mxu0 0.0
        %5322 = vmatprep.subr.mxu0 0.0
        %5323 = vmatpush2.msra.mxu0 0.0
        %5324 = vmatprep.subr.mxu0 0.0
        %5325 = vmatpush2.msra.mxu0 0.0
        %5326 = vmatprep.subr.mxu0 0.0
        %5327 = vmatpush2.msra.mxu0 0.0
        %5328 = vmatprep.subr.mxu0 0.0
        %5329 = vmatpush2.msra.mxu0 0.0
        %5330 = vmatprep.subr.mxu0 0.0
        %5331 = vmatpush2.msra.mxu0 0.0
        %5332 = vmatprep.mubr.f32.mxu0 0.0
        %5333 = vmatmul.mubr.f32.gmra.mxu0 %v5252
        %v5334 = vpop.f32.mrf.mxu0
        %v5335 = vadd.f32 0.0, %v5334
        %v5336 = vpop.f32.mrf.mxu0
        %v5337 = vadd.f32 0.0, %v5336
        %5338 = vdwg.mxu0
        %5339 = vmatprep.subr.mxu0 0.0
        %5340 = vmatpush1.msra.mxu0 0.0
        %5341 = vmatprep.subr.mxu0 0.0
        %5342 = vmatpush1.msra.mxu0 0.0
        %5343 = vmatprep.subr.mxu0 0.0
        %5344 = vmatpush1.msra.mxu0 0.0
        %5345 = vmatprep.subr.mxu0 0.0
        %5346 = vmatpush1.msra.mxu0 0.0
        %5347 = vmatprep.subr.mxu0 0.0
        %5348 = vmatpush1.msra.mxu0 0.0
        %5349 = vmatprep.subr.mxu0 0.0
        %5350 = vmatpush1.msra.mxu0 0.0
        %5351 = vmatprep.subr.mxu0 0.0
        %5352 = vmatpush1.msra.mxu0 0.0
        %5353 = vmatprep.subr.mxu0 0.0
        %5354 = vmatpush1.msra.mxu0 0.0
        %5355 = vmatprep.subr.mxu0 0.0
        %5356 = vmatpush1.msra.mxu0 0.0
        %5357 = vmatprep.subr.mxu0 0.0
        %5358 = vmatpush1.msra.mxu0 0.0
        %5359 = vmatprep.subr.mxu0 0.0
        %5360 = vmatpush1.msra.mxu0 0.0
        %5361 = vmatprep.subr.mxu0 0.0
        %5362 = vmatpush1.msra.mxu0 0.0
        %5363 = vmatprep.subr.mxu0 0.0
        %5364 = vmatpush1.msra.mxu0 0.0
        %5365 = vmatprep.subr.mxu0 0.0
        %5366 = vmatpush1.msra.mxu0 0.0
        %5367 = vmatprep.subr.mxu0 0.0
        %5368 = vmatpush1.msra.mxu0 0.0
        %5369 = vmatprep.subr.mxu0 %v5260
        %5370 = vmatpush1.msra.mxu0 %v5258
        %5371 = vmatprep.subr.mxu0 0.0
        %5372 = vmatpush2.msra.mxu0 0.0
        %5373 = vmatprep.subr.mxu0 0.0
        %5374 = vmatpush2.msra.mxu0 0.0
        %5375 = vmatprep.subr.mxu0 0.0
        %5376 = vmatpush2.msra.mxu0 0.0
        %5377 = vmatprep.subr.mxu0 0.0
        %5378 = vmatpush2.msra.mxu0 0.0
        %5379 = vmatprep.subr.mxu0 0.0
        %5380 = vmatpush2.msra.mxu0 0.0
        %5381 = vmatprep.subr.mxu0 0.0
        %5382 = vmatpush2.msra.mxu0 0.0
        %5383 = vmatprep.subr.mxu0 0.0
        %5384 = vmatpush2.msra.mxu0 0.0
        %5385 = vmatprep.subr.mxu0 0.0
        %5386 = vmatpush2.msra.mxu0 0.0
        %5387 = vmatprep.subr.mxu0 0.0
        %5388 = vmatpush2.msra.mxu0 0.0
        %5389 = vmatprep.subr.mxu0 0.0
        %5390 = vmatpush2.msra.mxu0 0.0
        %5391 = vmatprep.subr.mxu0 0.0
        %5392 = vmatpush2.msra.mxu0 0.0
        %5393 = vmatprep.subr.mxu0 0.0
        %5394 = vmatpush2.msra.mxu0 0.0
        %5395 = vmatprep.subr.mxu0 0.0
        %5396 = vmatpush2.msra.mxu0 0.0
        %5397 = vmatprep.subr.mxu0 0.0
        %5398 = vmatpush2.msra.mxu0 0.0
        %5399 = vmatprep.subr.mxu0 0.0
        %5400 = vmatpush2.msra.mxu0 0.0
        %5401 = vmatprep.subr.mxu0 0.0
        %5402 = vmatpush2.msra.mxu0 0.0
        %5403 = vmatprep.mubr.f32.mxu0 0.0
        %5404 = vmatmul.mubr.f32.gmra.mxu0 %v5252
        %v5405 = vpop.f32.mrf.mxu0
        %v5406 = vadd.f32 0.0, %v5405
        %v5407 = vpop.f32.mrf.mxu0
        %v5408 = vadd.f32 0.0, %v5407
        %5409 = vdwg.mxu0
        %5410 = vmatprep.subr.mxu0 0.0
        %5411 = vmatpush1.msra.mxu0 0.0
        %5412 = vmatprep.subr.mxu0 0.0
        %5413 = vmatpush1.msra.mxu0 0.0
        %5414 = vmatprep.subr.mxu0 0.0
        %5415 = vmatpush1.msra.mxu0 0.0
        %5416 = vmatprep.subr.mxu0 0.0
        %5417 = vmatpush1.msra.mxu0 0.0
        %5418 = vmatprep.subr.mxu0 0.0
        %5419 = vmatpush1.msra.mxu0 0.0
        %5420 = vmatprep.subr.mxu0 0.0
        %5421 = vmatpush1.msra.mxu0 0.0
        %5422 = vmatprep.subr.mxu0 0.0
        %5423 = vmatpush1.msra.mxu0 0.0
        %5424 = vmatprep.subr.mxu0 0.0
        %5425 = vmatpush1.msra.mxu0 0.0
        %5426 = vmatprep.subr.mxu0 0.0
        %5427 = vmatpush1.msra.mxu0 0.0
        %5428 = vmatprep.subr.mxu0 0.0
        %5429 = vmatpush1.msra.mxu0 0.0
        %5430 = vmatprep.subr.mxu0 0.0
        %5431 = vmatpush1.msra.mxu0 0.0
        %5432 = vmatprep.subr.mxu0 0.0
        %5433 = vmatpush1.msra.mxu0 0.0
        %5434 = vmatprep.subr.mxu0 0.0
        %5435 = vmatpush1.msra.mxu0 0.0
        %5436 = vmatprep.subr.mxu0 0.0
        %5437 = vmatpush1.msra.mxu0 0.0
        %5438 = vmatprep.subr.mxu0 0.0
        %5439 = vmatpush1.msra.mxu0 0.0
        %5440 = vmatprep.subr.mxu0 %v5264
        %5441 = vmatpush1.msra.mxu0 %v5262
        %5442 = vmatprep.subr.mxu0 0.0
        %5443 = vmatpush2.msra.mxu0 0.0
        %5444 = vmatprep.subr.mxu0 0.0
        %5445 = vmatpush2.msra.mxu0 0.0
        %5446 = vmatprep.subr.mxu0 0.0
        %5447 = vmatpush2.msra.mxu0 0.0
        %5448 = vmatprep.subr.mxu0 0.0
        %5449 = vmatpush2.msra.mxu0 0.0
        %5450 = vmatprep.subr.mxu0 0.0
        %5451 = vmatpush2.msra.mxu0 0.0
        %5452 = vmatprep.subr.mxu0 0.0
        %5453 = vmatpush2.msra.mxu0 0.0
        %5454 = vmatprep.subr.mxu0 0.0
        %5455 = vmatpush2.msra.mxu0 0.0
        %5456 = vmatprep.subr.mxu0 0.0
        %5457 = vmatpush2.msra.mxu0 0.0
        %5458 = vmatprep.subr.mxu0 0.0
        %5459 = vmatpush2.msra.mxu0 0.0
        %5460 = vmatprep.subr.mxu0 0.0
        %5461 = vmatpush2.msra.mxu0 0.0
        %5462 = vmatprep.subr.mxu0 0.0
        %5463 = vmatpush2.msra.mxu0 0.0
        %5464 = vmatprep.subr.mxu0 0.0
        %5465 = vmatpush2.msra.mxu0 0.0
        %5466 = vmatprep.subr.mxu0 0.0
        %5467 = vmatpush2.msra.mxu0 0.0
        %5468 = vmatprep.subr.mxu0 0.0
        %5469 = vmatpush2.msra.mxu0 0.0
        %5470 = vmatprep.subr.mxu0 0.0
        %5471 = vmatpush2.msra.mxu0 0.0
        %5472 = vmatprep.subr.mxu0 0.0
        %5473 = vmatpush2.msra.mxu0 0.0
        %5474 = vmatprep.mubr.f32.mxu0 0.0
        %5475 = vmatmul.mubr.f32.gmra.mxu0 %v5252
        %v5476 = vpop.f32.mrf.mxu0
        %v5477 = vadd.f32 0.0, %v5476
        %v5478 = vpop.f32.mrf.mxu0
        %v5479 = vadd.f32 0.0, %v5478
        %5480 = vdwg.mxu0
        %5481 = vmatprep.subr.mxu0 0.0
        %5482 = vmatpush1.msra.mxu0 0.0
        %5483 = vmatprep.subr.mxu0 0.0
        %5484 = vmatpush1.msra.mxu0 0.0
        %5485 = vmatprep.subr.mxu0 0.0
        %5486 = vmatpush1.msra.mxu0 0.0
        %5487 = vmatprep.subr.mxu0 0.0
        %5488 = vmatpush1.msra.mxu0 0.0
        %5489 = vmatprep.subr.mxu0 0.0
        %5490 = vmatpush1.msra.mxu0 0.0
        %5491 = vmatprep.subr.mxu0 0.0
        %5492 = vmatpush1.msra.mxu0 0.0
        %5493 = vmatprep.subr.mxu0 0.0
        %5494 = vmatpush1.msra.mxu0 0.0
        %5495 = vmatprep.subr.mxu0 0.0
        %5496 = vmatpush1.msra.mxu0 0.0
        %5497 = vmatprep.subr.mxu0 0.0
        %5498 = vmatpush1.msra.mxu0 0.0
        %5499 = vmatprep.subr.mxu0 0.0
        %5500 = vmatpush1.msra.mxu0 0.0
        %5501 = vmatprep.subr.mxu0 0.0
        %5502 = vmatpush1.msra.mxu0 0.0
        %5503 = vmatprep.subr.mxu0 0.0
        %5504 = vmatpush1.msra.mxu0 0.0
        %5505 = vmatprep.subr.mxu0 0.0
        %5506 = vmatpush1.msra.mxu0 0.0
        %5507 = vmatprep.subr.mxu0 0.0
        %5508 = vmatpush1.msra.mxu0 0.0
        %5509 = vmatprep.subr.mxu0 0.0
        %5510 = vmatpush1.msra.mxu0 0.0
        %5511 = vmatprep.subr.mxu0 0.0
        %5512 = vmatpush1.msra.mxu0 %v5266
        %5513 = vmatprep.subr.mxu0 0.0
        %5514 = vmatpush2.msra.mxu0 0.0
        %5515 = vmatprep.subr.mxu0 0.0
        %5516 = vmatpush2.msra.mxu0 0.0
        %5517 = vmatprep.subr.mxu0 0.0
        %5518 = vmatpush2.msra.mxu0 0.0
        %5519 = vmatprep.subr.mxu0 0.0
        %5520 = vmatpush2.msra.mxu0 0.0
        %5521 = vmatprep.subr.mxu0 0.0
        %5522 = vmatpush2.msra.mxu0 0.0
        %5523 = vmatprep.subr.mxu0 0.0
        %5524 = vmatpush2.msra.mxu0 0.0
        %5525 = vmatprep.subr.mxu0 0.0
        %5526 = vmatpush2.msra.mxu0 0.0
        %5527 = vmatprep.subr.mxu0 0.0
        %5528 = vmatpush2.msra.mxu0 0.0
        %5529 = vmatprep.subr.mxu0 0.0
        %5530 = vmatpush2.msra.mxu0 0.0
        %5531 = vmatprep.subr.mxu0 0.0
        %5532 = vmatpush2.msra.mxu0 0.0
        %5533 = vmatprep.subr.mxu0 0.0
        %5534 = vmatpush2.msra.mxu0 0.0
        %5535 = vmatprep.subr.mxu0 0.0
        %5536 = vmatpush2.msra.mxu0 0.0
        %5537 = vmatprep.subr.mxu0 0.0
        %5538 = vmatpush2.msra.mxu0 0.0
        %5539 = vmatprep.subr.mxu0 0.0
        %5540 = vmatpush2.msra.mxu0 0.0
        %5541 = vmatprep.subr.mxu0 0.0
        %5542 = vmatpush2.msra.mxu0 0.0
        %5543 = vmatprep.subr.mxu0 0.0
        %5544 = vmatpush2.msra.mxu0 0.0
        %5545 = vmatprep.mubr.f32.mxu0 0.0
        %5546 = vmatmul.mubr.f32.gmra.mxu0 %v5252
        %v5547 = vpop.f32.mrf.mxu0
        %v5548 = vadd.f32 0.0, %v5547
        %v5549 = vpop.f32.mrf.mxu0
        %5550 = vdwg.mxu0
        %v5551 = vadd.f32 %v5010, %v5335
        %v5552 = vadd.f32 %v5012, %v5337
        %v5553 = vadd.f32 %v5081, %v5406
        %v5554 = vadd.f32 %v5083, %v5408
        %v5555 = vadd.f32 %v5152, %v5477
        %v5556 = vadd.f32 %v5154, %v5479
        %v5557 = vadd.f32 %v5223, %v5548
        %5558 = vrot.lane.b32.xlu0 %v4597, 116
        %v5559 = vpop.permute.xlu0 %5558
        %5560 = vrot.lane.b32.xlu0 %v4589, 95
        %v5561 = vpop.permute.xlu0 %5560
        %5562 = vrot.lane.b32.xlu0 %v4590, 95
        %v5563 = vpop.permute.xlu0 %5562
        %5564 = vrot.lane.b32.xlu0 %v4591, 95
        %v5565 = vpop.permute.xlu0 %5564
        %5566 = vrot.lane.b32.xlu0 %v4592, 95
        %v5567 = vpop.permute.xlu0 %5566
        %5568 = vrot.lane.b32.xlu0 %v4593, 95
        %v5569 = vpop.permute.xlu0 %5568
        %5570 = vrot.lane.b32.xlu0 %v4594, 95
        %v5571 = vpop.permute.xlu0 %5570
        %5572 = vrot.lane.b32.xlu0 %v4595, 95
        %v5573 = vpop.permute.xlu0 %5572
        %5574 = vrot.lane.b32.xlu0 %v4596, 95
        %v5575 = vpop.permute.xlu0 %5574
        %v5576 = vsel %vm1533, %v5561, %v5563
        %v5577 = vsel %vm1533, %v5563, %v5565
        %v5578 = vsel %vm1533, %v5565, %v5567
        %v5579 = vsel %vm1533, %v5567, %v5569
        %v5580 = vsel %vm1533, %v5569, %v5571
        %v5581 = vsel %vm1533, %v5571, %v5573
        %v5582 = vsel %vm1533, %v5573, %v5575
        %v5583 = vsel %vm569, %v5559, 0
        %v5585 = vsel %vm572, %v5576, 0
        %v5587 = vsel %vm572, %v5577, 0
        %v5589 = vsel %vm572, %v5578, 0
        %v5591 = vsel %vm572, %v5579, 0
        %v5593 = vsel %vm572, %v5580, 0
        %v5595 = vsel %vm572, %v5581, 0
        %v5597 = vsel %vm572, %v5582, 0
        %5599 = vmatprep.subr.mxu0 0.0
        %5600 = vmatpush1.msra.mxu0 0.0
        %5601 = vmatprep.subr.mxu0 0.0
        %5602 = vmatpush1.msra.mxu0 0.0
        %5603 = vmatprep.subr.mxu0 0.0
        %5604 = vmatpush1.msra.mxu0 0.0
        %5605 = vmatprep.subr.mxu0 0.0
        %5606 = vmatpush1.msra.mxu0 0.0
        %5607 = vmatprep.subr.mxu0 0.0
        %5608 = vmatpush1.msra.mxu0 0.0
        %5609 = vmatprep.subr.mxu0 0.0
        %5610 = vmatpush1.msra.mxu0 0.0
        %5611 = vmatprep.subr.mxu0 0.0
        %5612 = vmatpush1.msra.mxu0 0.0
        %5613 = vmatprep.subr.mxu0 0.0
        %5614 = vmatpush1.msra.mxu0 0.0
        %5615 = vmatprep.subr.mxu0 0.0
        %5616 = vmatpush1.msra.mxu0 0.0
        %5617 = vmatprep.subr.mxu0 0.0
        %5618 = vmatpush1.msra.mxu0 0.0
        %5619 = vmatprep.subr.mxu0 0.0
        %5620 = vmatpush1.msra.mxu0 0.0
        %5621 = vmatprep.subr.mxu0 0.0
        %5622 = vmatpush1.msra.mxu0 0.0
        %5623 = vmatprep.subr.mxu0 0.0
        %5624 = vmatpush1.msra.mxu0 0.0
        %5625 = vmatprep.subr.mxu0 0.0
        %5626 = vmatpush1.msra.mxu0 0.0
        %5627 = vmatprep.subr.mxu0 0.0
        %5628 = vmatpush1.msra.mxu0 0.0
        %5629 = vmatprep.subr.mxu0 %v5587
        %5630 = vmatpush1.msra.mxu0 %v5585
        %5631 = vmatprep.subr.mxu0 0.0
        %5632 = vmatpush2.msra.mxu0 0.0
        %5633 = vmatprep.subr.mxu0 0.0
        %5634 = vmatpush2.msra.mxu0 0.0
        %5635 = vmatprep.subr.mxu0 0.0
        %5636 = vmatpush2.msra.mxu0 0.0
        %5637 = vmatprep.subr.mxu0 0.0
        %5638 = vmatpush2.msra.mxu0 0.0
        %5639 = vmatprep.subr.mxu0 0.0
        %5640 = vmatpush2.msra.mxu0 0.0
        %5641 = vmatprep.subr.mxu0 0.0
        %5642 = vmatpush2.msra.mxu0 0.0
        %5643 = vmatprep.subr.mxu0 0.0
        %5644 = vmatpush2.msra.mxu0 0.0
        %5645 = vmatprep.subr.mxu0 0.0
        %5646 = vmatpush2.msra.mxu0 0.0
        %5647 = vmatprep.subr.mxu0 0.0
        %5648 = vmatpush2.msra.mxu0 0.0
        %5649 = vmatprep.subr.mxu0 0.0
        %5650 = vmatpush2.msra.mxu0 0.0
        %5651 = vmatprep.subr.mxu0 0.0
        %5652 = vmatpush2.msra.mxu0 0.0
        %5653 = vmatprep.subr.mxu0 0.0
        %5654 = vmatpush2.msra.mxu0 0.0
        %5655 = vmatprep.subr.mxu0 0.0
        %5656 = vmatpush2.msra.mxu0 0.0
        %5657 = vmatprep.subr.mxu0 0.0
        %5658 = vmatpush2.msra.mxu0 0.0
        %5659 = vmatprep.subr.mxu0 0.0
        %5660 = vmatpush2.msra.mxu0 0.0
        %5661 = vmatprep.subr.mxu0 0.0
        %5662 = vmatpush2.msra.mxu0 0.0
        %5663 = vmatprep.mubr.f32.mxu0 0.0
        %5664 = vmatmul.mubr.f32.gmra.mxu0 %v5583
        %v5665 = vpop.f32.mrf.mxu0
        %v5666 = vadd.f32 0.0, %v5665
        %v5667 = vpop.f32.mrf.mxu0
        %v5668 = vadd.f32 0.0, %v5667
        %5669 = vdwg.mxu0
        %5670 = vmatprep.subr.mxu0 0.0
        %5671 = vmatpush1.msra.mxu0 0.0
        %5672 = vmatprep.subr.mxu0 0.0
        %5673 = vmatpush1.msra.mxu0 0.0
        %5674 = vmatprep.subr.mxu0 0.0
        %5675 = vmatpush1.msra.mxu0 0.0
        %5676 = vmatprep.subr.mxu0 0.0
        %5677 = vmatpush1.msra.mxu0 0.0
        %5678 = vmatprep.subr.mxu0 0.0
        %5679 = vmatpush1.msra.mxu0 0.0
        %5680 = vmatprep.subr.mxu0 0.0
        %5681 = vmatpush1.msra.mxu0 0.0
        %5682 = vmatprep.subr.mxu0 0.0
        %5683 = vmatpush1.msra.mxu0 0.0
        %5684 = vmatprep.subr.mxu0 0.0
        %5685 = vmatpush1.msra.mxu0 0.0
        %5686 = vmatprep.subr.mxu0 0.0
        %5687 = vmatpush1.msra.mxu0 0.0
        %5688 = vmatprep.subr.mxu0 0.0
        %5689 = vmatpush1.msra.mxu0 0.0
        %5690 = vmatprep.subr.mxu0 0.0
        %5691 = vmatpush1.msra.mxu0 0.0
        %5692 = vmatprep.subr.mxu0 0.0
        %5693 = vmatpush1.msra.mxu0 0.0
        %5694 = vmatprep.subr.mxu0 0.0
        %5695 = vmatpush1.msra.mxu0 0.0
        %5696 = vmatprep.subr.mxu0 0.0
        %5697 = vmatpush1.msra.mxu0 0.0
        %5698 = vmatprep.subr.mxu0 0.0
        %5699 = vmatpush1.msra.mxu0 0.0
        %5700 = vmatprep.subr.mxu0 %v5591
        %5701 = vmatpush1.msra.mxu0 %v5589
        %5702 = vmatprep.subr.mxu0 0.0
        %5703 = vmatpush2.msra.mxu0 0.0
        %5704 = vmatprep.subr.mxu0 0.0
        %5705 = vmatpush2.msra.mxu0 0.0
        %5706 = vmatprep.subr.mxu0 0.0
        %5707 = vmatpush2.msra.mxu0 0.0
        %5708 = vmatprep.subr.mxu0 0.0
        %5709 = vmatpush2.msra.mxu0 0.0
        %5710 = vmatprep.subr.mxu0 0.0
        %5711 = vmatpush2.msra.mxu0 0.0
        %5712 = vmatprep.subr.mxu0 0.0
        %5713 = vmatpush2.msra.mxu0 0.0
        %5714 = vmatprep.subr.mxu0 0.0
        %5715 = vmatpush2.msra.mxu0 0.0
        %5716 = vmatprep.subr.mxu0 0.0
        %5717 = vmatpush2.msra.mxu0 0.0
        %5718 = vmatprep.subr.mxu0 0.0
        %5719 = vmatpush2.msra.mxu0 0.0
        %5720 = vmatprep.subr.mxu0 0.0
        %5721 = vmatpush2.msra.mxu0 0.0
        %5722 = vmatprep.subr.mxu0 0.0
        %5723 = vmatpush2.msra.mxu0 0.0
        %5724 = vmatprep.subr.mxu0 0.0
        %5725 = vmatpush2.msra.mxu0 0.0
        %5726 = vmatprep.subr.mxu0 0.0
        %5727 = vmatpush2.msra.mxu0 0.0
        %5728 = vmatprep.subr.mxu0 0.0
        %5729 = vmatpush2.msra.mxu0 0.0
        %5730 = vmatprep.subr.mxu0 0.0
        %5731 = vmatpush2.msra.mxu0 0.0
        %5732 = vmatprep.subr.mxu0 0.0
        %5733 = vmatpush2.msra.mxu0 0.0
        %5734 = vmatprep.mubr.f32.mxu0 0.0
        %5735 = vmatmul.mubr.f32.gmra.mxu0 %v5583
        %v5736 = vpop.f32.mrf.mxu0
        %v5737 = vadd.f32 0.0, %v5736
        %v5738 = vpop.f32.mrf.mxu0
        %v5739 = vadd.f32 0.0, %v5738
        %5740 = vdwg.mxu0
        %5741 = vmatprep.subr.mxu0 0.0
        %5742 = vmatpush1.msra.mxu0 0.0
        %5743 = vmatprep.subr.mxu0 0.0
        %5744 = vmatpush1.msra.mxu0 0.0
        %5745 = vmatprep.subr.mxu0 0.0
        %5746 = vmatpush1.msra.mxu0 0.0
        %5747 = vmatprep.subr.mxu0 0.0
        %5748 = vmatpush1.msra.mxu0 0.0
        %5749 = vmatprep.subr.mxu0 0.0
        %5750 = vmatpush1.msra.mxu0 0.0
        %5751 = vmatprep.subr.mxu0 0.0
        %5752 = vmatpush1.msra.mxu0 0.0
        %5753 = vmatprep.subr.mxu0 0.0
        %5754 = vmatpush1.msra.mxu0 0.0
        %5755 = vmatprep.subr.mxu0 0.0
        %5756 = vmatpush1.msra.mxu0 0.0
        %5757 = vmatprep.subr.mxu0 0.0
        %5758 = vmatpush1.msra.mxu0 0.0
        %5759 = vmatprep.subr.mxu0 0.0
        %5760 = vmatpush1.msra.mxu0 0.0
        %5761 = vmatprep.subr.mxu0 0.0
        %5762 = vmatpush1.msra.mxu0 0.0
        %5763 = vmatprep.subr.mxu0 0.0
        %5764 = vmatpush1.msra.mxu0 0.0
        %5765 = vmatprep.subr.mxu0 0.0
        %5766 = vmatpush1.msra.mxu0 0.0
        %5767 = vmatprep.subr.mxu0 0.0
        %5768 = vmatpush1.msra.mxu0 0.0
        %5769 = vmatprep.subr.mxu0 0.0
        %5770 = vmatpush1.msra.mxu0 0.0
        %5771 = vmatprep.subr.mxu0 %v5595
        %5772 = vmatpush1.msra.mxu0 %v5593
        %5773 = vmatprep.subr.mxu0 0.0
        %5774 = vmatpush2.msra.mxu0 0.0
        %5775 = vmatprep.subr.mxu0 0.0
        %5776 = vmatpush2.msra.mxu0 0.0
        %5777 = vmatprep.subr.mxu0 0.0
        %5778 = vmatpush2.msra.mxu0 0.0
        %5779 = vmatprep.subr.mxu0 0.0
        %5780 = vmatpush2.msra.mxu0 0.0
        %5781 = vmatprep.subr.mxu0 0.0
        %5782 = vmatpush2.msra.mxu0 0.0
        %5783 = vmatprep.subr.mxu0 0.0
        %5784 = vmatpush2.msra.mxu0 0.0
        %5785 = vmatprep.subr.mxu0 0.0
        %5786 = vmatpush2.msra.mxu0 0.0
        %5787 = vmatprep.subr.mxu0 0.0
        %5788 = vmatpush2.msra.mxu0 0.0
        %5789 = vmatprep.subr.mxu0 0.0
        %5790 = vmatpush2.msra.mxu0 0.0
        %5791 = vmatprep.subr.mxu0 0.0
        %5792 = vmatpush2.msra.mxu0 0.0
        %5793 = vmatprep.subr.mxu0 0.0
        %5794 = vmatpush2.msra.mxu0 0.0
        %5795 = vmatprep.subr.mxu0 0.0
        %5796 = vmatpush2.msra.mxu0 0.0
        %5797 = vmatprep.subr.mxu0 0.0
        %5798 = vmatpush2.msra.mxu0 0.0
        %5799 = vmatprep.subr.mxu0 0.0
        %5800 = vmatpush2.msra.mxu0 0.0
        %5801 = vmatprep.subr.mxu0 0.0
        %5802 = vmatpush2.msra.mxu0 0.0
        %5803 = vmatprep.subr.mxu0 0.0
        %5804 = vmatpush2.msra.mxu0 0.0
        %5805 = vmatprep.mubr.f32.mxu0 0.0
        %5806 = vmatmul.mubr.f32.gmra.mxu0 %v5583
        %v5807 = vpop.f32.mrf.mxu0
        %v5808 = vadd.f32 0.0, %v5807
        %v5809 = vpop.f32.mrf.mxu0
        %v5810 = vadd.f32 0.0, %v5809
        %5811 = vdwg.mxu0
        %5812 = vmatprep.subr.mxu0 0.0
        %5813 = vmatpush1.msra.mxu0 0.0
        %5814 = vmatprep.subr.mxu0 0.0
        %5815 = vmatpush1.msra.mxu0 0.0
        %5816 = vmatprep.subr.mxu0 0.0
        %5817 = vmatpush1.msra.mxu0 0.0
        %5818 = vmatprep.subr.mxu0 0.0
        %5819 = vmatpush1.msra.mxu0 0.0
        %5820 = vmatprep.subr.mxu0 0.0
        %5821 = vmatpush1.msra.mxu0 0.0
        %5822 = vmatprep.subr.mxu0 0.0
        %5823 = vmatpush1.msra.mxu0 0.0
        %5824 = vmatprep.subr.mxu0 0.0
        %5825 = vmatpush1.msra.mxu0 0.0
        %5826 = vmatprep.subr.mxu0 0.0
        %5827 = vmatpush1.msra.mxu0 0.0
        %5828 = vmatprep.subr.mxu0 0.0
        %5829 = vmatpush1.msra.mxu0 0.0
        %5830 = vmatprep.subr.mxu0 0.0
        %5831 = vmatpush1.msra.mxu0 0.0
        %5832 = vmatprep.subr.mxu0 0.0
        %5833 = vmatpush1.msra.mxu0 0.0
        %5834 = vmatprep.subr.mxu0 0.0
        %5835 = vmatpush1.msra.mxu0 0.0
        %5836 = vmatprep.subr.mxu0 0.0
        %5837 = vmatpush1.msra.mxu0 0.0
        %5838 = vmatprep.subr.mxu0 0.0
        %5839 = vmatpush1.msra.mxu0 0.0
        %5840 = vmatprep.subr.mxu0 0.0
        %5841 = vmatpush1.msra.mxu0 0.0
        %5842 = vmatprep.subr.mxu0 0.0
        %5843 = vmatpush1.msra.mxu0 %v5597
        %5844 = vmatprep.subr.mxu0 0.0
        %5845 = vmatpush2.msra.mxu0 0.0
        %5846 = vmatprep.subr.mxu0 0.0
        %5847 = vmatpush2.msra.mxu0 0.0
        %5848 = vmatprep.subr.mxu0 0.0
        %5849 = vmatpush2.msra.mxu0 0.0
        %5850 = vmatprep.subr.mxu0 0.0
        %5851 = vmatpush2.msra.mxu0 0.0
        %5852 = vmatprep.subr.mxu0 0.0
        %5853 = vmatpush2.msra.mxu0 0.0
        %5854 = vmatprep.subr.mxu0 0.0
        %5855 = vmatpush2.msra.mxu0 0.0
        %5856 = vmatprep.subr.mxu0 0.0
        %5857 = vmatpush2.msra.mxu0 0.0
        %5858 = vmatprep.subr.mxu0 0.0
        %5859 = vmatpush2.msra.mxu0 0.0
        %5860 = vmatprep.subr.mxu0 0.0
        %5861 = vmatpush2.msra.mxu0 0.0
        %5862 = vmatprep.subr.mxu0 0.0
        %5863 = vmatpush2.msra.mxu0 0.0
        %5864 = vmatprep.subr.mxu0 0.0
        %5865 = vmatpush2.msra.mxu0 0.0
        %5866 = vmatprep.subr.mxu0 0.0
        %5867 = vmatpush2.msra.mxu0 0.0
        %5868 = vmatprep.subr.mxu0 0.0
        %5869 = vmatpush2.msra.mxu0 0.0
        %5870 = vmatprep.subr.mxu0 0.0
        %5871 = vmatpush2.msra.mxu0 0.0
        %5872 = vmatprep.subr.mxu0 0.0
        %5873 = vmatpush2.msra.mxu0 0.0
        %5874 = vmatprep.subr.mxu0 0.0
        %5875 = vmatpush2.msra.mxu0 0.0
        %5876 = vmatprep.mubr.f32.mxu0 0.0
        %5877 = vmatmul.mubr.f32.gmra.mxu0 %v5583
        %v5878 = vpop.f32.mrf.mxu0
        %v5879 = vadd.f32 0.0, %v5878
        %v5880 = vpop.f32.mrf.mxu0
        %5881 = vdwg.mxu0
        %v5882 = vadd.f32 %v5551, %v5666
        %v5883 = vadd.f32 %v5552, %v5668
        %v5884 = vadd.f32 %v5553, %v5737
        %v5885 = vadd.f32 %v5554, %v5739
        %v5886 = vadd.f32 %v5555, %v5808
        %v5887 = vadd.f32 %v5556, %v5810
        %v5888 = vadd.f32 %v5557, %v5879
        %v5889 = vld [vmem:[%s8] sm:$0xff]
        %5891 = vset.pattern.permute.xlu0 0
        %5892 = vperm.xlu0 %5891, %v5889
        %v5893 = vpop.permute.xlu0 %5892
        %v5895 = vadd.f32 %v5882, %v5893
        %v5896 = vadd.f32 %v5883, %v5893
        %v5897 = vadd.f32 %v5884, %v5893
        %v5898 = vadd.f32 %v5885, %v5893
        %v5899 = vadd.f32 %v5886, %v5893
        %v5900 = vadd.f32 %v5887, %v5893
        %v5901 = vadd.f32 %v5888, %v5893
        %vm5902 = vcmp.ge.f32.partialorder %v5895, 0.0
        %vm5903 = vcmp.ge.f32.partialorder %v5896, 0.0
        %vm5904 = vcmp.ge.f32.partialorder %v5897, 0.0
        %vm5905 = vcmp.ge.f32.partialorder %v5898, 0.0
        %vm5906 = vcmp.ge.f32.partialorder %v5899, 0.0
        %vm5907 = vcmp.ge.f32.partialorder %v5900, 0.0
        %vm5908 = vcmp.ge.f32.partialorder %v5901, 0.0
        %v5909 = vmul.f32 %v5895, 0.01
        %v5910 = vmul.f32 %v5896, 0.01
        %v5911 = vmul.f32 %v5897, 0.01
        %v5912 = vmul.f32 %v5898, 0.01
        %v5913 = vmul.f32 %v5899, 0.01
        %v5914 = vmul.f32 %v5900, 0.01
        %v5915 = vmul.f32 %v5901, 0.01
        %v5916 = vsel %vm5902, %v5895, %v5909
        %v5917 = vsel %vm5903, %v5896, %v5910
        %v5918 = vsel %vm5904, %v5897, %v5911
        %v5919 = vsel %vm5905, %v5898, %v5912
        %v5920 = vsel %vm5906, %v5899, %v5913
        %v5921 = vsel %vm5907, %v5900, %v5914
        %v5922 = vsel %vm5908, %v5901, %v5915
        %v5930 = vcombine.low %v5916, %v5917
        %v5931 = vcombine.low %v5918, %v5919
        %v5932 = vcombine.low %v5920, %v5921
        %5936 = vst [vmem:[%s521] sm:$0xff] %v5930
        %5937 = vst [vmem:[%s521 + $0x8] sm:$0xff] %v5931
        %5938 = vst [vmem:[%s521 + $0x10] sm:$0xff] %v5932
        %vm5939 = vcmask 1010688
        %5940 = vst.msk [vmem:[%s521 + $0x18] sm:$0xf] %vm5939, %v5922
        %v5941 = vld [vmem:[%s9] sm:$0xf]
        %5943 = vrot.lane.b32.xlu0 %v5941, 124
        %v5944 = vpop.permute.xlu0 %5943
        %5945 = vrot.lane.b32.xlu0 %v5916, 127
        %v5946 = vpop.permute.xlu0 %5945
        %5947 = vrot.lane.b32.xlu0 %v5917, 127
        %v5948 = vpop.permute.xlu0 %5947
        %5949 = vrot.lane.b32.xlu0 %v5918, 127
        %v5950 = vpop.permute.xlu0 %5949
        %5951 = vrot.lane.b32.xlu0 %v5919, 127
        %v5952 = vpop.permute.xlu0 %5951
        %5953 = vrot.lane.b32.xlu0 %v5920, 127
        %v5954 = vpop.permute.xlu0 %5953
        %5955 = vrot.lane.b32.xlu0 %v5921, 127
        %v5956 = vpop.permute.xlu0 %5955
        %5957 = vrot.lane.b32.xlu0 %v5922, 127
        %v5958 = vpop.permute.xlu0 %5957
        %v5959 = vsel %vm561, %v5946, %v5948
        %v5960 = vsel %vm561, %v5948, %v5950
        %v5961 = vsel %vm561, %v5950, %v5952
        %v5962 = vsel %vm561, %v5952, %v5954
        %v5963 = vsel %vm561, %v5954, %v5956
        %v5964 = vsel %vm561, %v5956, %v5958
        %v5965 = vsel %vm569, %v5944, 0
        %v5967 = vsel %vm572, %v5959, 0
        %v5969 = vsel %vm572, %v5960, 0
        %v5971 = vsel %vm572, %v5961, 0
        %v5973 = vsel %vm572, %v5962, 0
        %v5975 = vsel %vm572, %v5963, 0
        %v5977 = vsel %vm572, %v5964, 0
        %v5979 = vsel %vm572, %v5958, 0
        %5981 = vmatprep.subr.mxu0 0.0
        %5982 = vmatpush1.msra.mxu0 0.0
        %5983 = vmatprep.subr.mxu0 0.0
        %5984 = vmatpush1.msra.mxu0 0.0
        %5985 = vmatprep.subr.mxu0 0.0
        %5986 = vmatpush1.msra.mxu0 0.0
        %5987 = vmatprep.subr.mxu0 0.0
        %5988 = vmatpush1.msra.mxu0 0.0
        %5989 = vmatprep.subr.mxu0 0.0
        %5990 = vmatpush1.msra.mxu0 0.0
        %5991 = vmatprep.subr.mxu0 0.0
        %5992 = vmatpush1.msra.mxu0 0.0
        %5993 = vmatprep.subr.mxu0 0.0
        %5994 = vmatpush1.msra.mxu0 0.0
        %5995 = vmatprep.subr.mxu0 0.0
        %5996 = vmatpush1.msra.mxu0 0.0
        %5997 = vmatprep.subr.mxu0 0.0
        %5998 = vmatpush1.msra.mxu0 0.0
        %5999 = vmatprep.subr.mxu0 0.0
        %6000 = vmatpush1.msra.mxu0 0.0
        %6001 = vmatprep.subr.mxu0 0.0
        %6002 = vmatpush1.msra.mxu0 0.0
        %6003 = vmatprep.subr.mxu0 0.0
        %6004 = vmatpush1.msra.mxu0 0.0
        %6005 = vmatprep.subr.mxu0 0.0
        %6006 = vmatpush1.msra.mxu0 0.0
        %6007 = vmatprep.subr.mxu0 0.0
        %6008 = vmatpush1.msra.mxu0 0.0
        %6009 = vmatprep.subr.mxu0 0.0
        %6010 = vmatpush1.msra.mxu0 0.0
        %6011 = vmatprep.subr.mxu0 %v5969
        %6012 = vmatpush1.msra.mxu0 %v5967
        %6013 = vmatprep.subr.mxu0 0.0
        %6014 = vmatpush2.msra.mxu0 0.0
        %6015 = vmatprep.subr.mxu0 0.0
        %6016 = vmatpush2.msra.mxu0 0.0
        %6017 = vmatprep.subr.mxu0 0.0
        %6018 = vmatpush2.msra.mxu0 0.0
        %6019 = vmatprep.subr.mxu0 0.0
        %6020 = vmatpush2.msra.mxu0 0.0
        %6021 = vmatprep.subr.mxu0 0.0
        %6022 = vmatpush2.msra.mxu0 0.0
        %6023 = vmatprep.subr.mxu0 0.0
        %6024 = vmatpush2.msra.mxu0 0.0
        %6025 = vmatprep.subr.mxu0 0.0
        %6026 = vmatpush2.msra.mxu0 0.0
        %6027 = vmatprep.subr.mxu0 0.0
        %6028 = vmatpush2.msra.mxu0 0.0
        %6029 = vmatprep.subr.mxu0 0.0
        %6030 = vmatpush2.msra.mxu0 0.0
        %6031 = vmatprep.subr.mxu0 0.0
        %6032 = vmatpush2.msra.mxu0 0.0
        %6033 = vmatprep.subr.mxu0 0.0
        %6034 = vmatpush2.msra.mxu0 0.0
        %6035 = vmatprep.subr.mxu0 0.0
        %6036 = vmatpush2.msra.mxu0 0.0
        %6037 = vmatprep.subr.mxu0 0.0
        %6038 = vmatpush2.msra.mxu0 0.0
        %6039 = vmatprep.subr.mxu0 0.0
        %6040 = vmatpush2.msra.mxu0 0.0
        %6041 = vmatprep.subr.mxu0 0.0
        %6042 = vmatpush2.msra.mxu0 0.0
        %6043 = vmatprep.subr.mxu0 0.0
        %6044 = vmatpush2.msra.mxu0 0.0
        %6045 = vmatprep.mubr.f32.mxu0 0.0
        %6046 = vmatmul.mubr.f32.gmra.mxu0 %v5965
        %v6047 = vpop.f32.mrf.mxu0
        %v6048 = vadd.f32 0.0, %v6047
        %v6049 = vpop.f32.mrf.mxu0
        %v6050 = vadd.f32 0.0, %v6049
        %6051 = vdwg.mxu0
        %6052 = vmatprep.subr.mxu0 0.0
        %6053 = vmatpush1.msra.mxu0 0.0
        %6054 = vmatprep.subr.mxu0 0.0
        %6055 = vmatpush1.msra.mxu0 0.0
        %6056 = vmatprep.subr.mxu0 0.0
        %6057 = vmatpush1.msra.mxu0 0.0
        %6058 = vmatprep.subr.mxu0 0.0
        %6059 = vmatpush1.msra.mxu0 0.0
        %6060 = vmatprep.subr.mxu0 0.0
        %6061 = vmatpush1.msra.mxu0 0.0
        %6062 = vmatprep.subr.mxu0 0.0
        %6063 = vmatpush1.msra.mxu0 0.0
        %6064 = vmatprep.subr.mxu0 0.0
        %6065 = vmatpush1.msra.mxu0 0.0
        %6066 = vmatprep.subr.mxu0 0.0
        %6067 = vmatpush1.msra.mxu0 0.0
        %6068 = vmatprep.subr.mxu0 0.0
        %6069 = vmatpush1.msra.mxu0 0.0
        %6070 = vmatprep.subr.mxu0 0.0
        %6071 = vmatpush1.msra.mxu0 0.0
        %6072 = vmatprep.subr.mxu0 0.0
        %6073 = vmatpush1.msra.mxu0 0.0
        %6074 = vmatprep.subr.mxu0 0.0
        %6075 = vmatpush1.msra.mxu0 0.0
        %6076 = vmatprep.subr.mxu0 0.0
        %6077 = vmatpush1.msra.mxu0 0.0
        %6078 = vmatprep.subr.mxu0 0.0
        %6079 = vmatpush1.msra.mxu0 0.0
        %6080 = vmatprep.subr.mxu0 0.0
        %6081 = vmatpush1.msra.mxu0 0.0
        %6082 = vmatprep.subr.mxu0 %v5973
        %6083 = vmatpush1.msra.mxu0 %v5971
        %6084 = vmatprep.subr.mxu0 0.0
        %6085 = vmatpush2.msra.mxu0 0.0
        %6086 = vmatprep.subr.mxu0 0.0
        %6087 = vmatpush2.msra.mxu0 0.0
        %6088 = vmatprep.subr.mxu0 0.0
        %6089 = vmatpush2.msra.mxu0 0.0
        %6090 = vmatprep.subr.mxu0 0.0
        %6091 = vmatpush2.msra.mxu0 0.0
        %6092 = vmatprep.subr.mxu0 0.0
        %6093 = vmatpush2.msra.mxu0 0.0
        %6094 = vmatprep.subr.mxu0 0.0
        %6095 = vmatpush2.msra.mxu0 0.0
        %6096 = vmatprep.subr.mxu0 0.0
        %6097 = vmatpush2.msra.mxu0 0.0
        %6098 = vmatprep.subr.mxu0 0.0
        %6099 = vmatpush2.msra.mxu0 0.0
        %6100 = vmatprep.subr.mxu0 0.0
        %6101 = vmatpush2.msra.mxu0 0.0
        %6102 = vmatprep.subr.mxu0 0.0
        %6103 = vmatpush2.msra.mxu0 0.0
        %6104 = vmatprep.subr.mxu0 0.0
        %6105 = vmatpush2.msra.mxu0 0.0
        %6106 = vmatprep.subr.mxu0 0.0
        %6107 = vmatpush2.msra.mxu0 0.0
        %6108 = vmatprep.subr.mxu0 0.0
        %6109 = vmatpush2.msra.mxu0 0.0
        %6110 = vmatprep.subr.mxu0 0.0
        %6111 = vmatpush2.msra.mxu0 0.0
        %6112 = vmatprep.subr.mxu0 0.0
        %6113 = vmatpush2.msra.mxu0 0.0
        %6114 = vmatprep.subr.mxu0 0.0
        %6115 = vmatpush2.msra.mxu0 0.0
        %6116 = vmatprep.mubr.f32.mxu0 0.0
        %6117 = vmatmul.mubr.f32.gmra.mxu0 %v5965
        %v6118 = vpop.f32.mrf.mxu0
        %v6119 = vadd.f32 0.0, %v6118
        %v6120 = vpop.f32.mrf.mxu0
        %v6121 = vadd.f32 0.0, %v6120
        %6122 = vdwg.mxu0
        %6123 = vmatprep.subr.mxu0 0.0
        %6124 = vmatpush1.msra.mxu0 0.0
        %6125 = vmatprep.subr.mxu0 0.0
        %6126 = vmatpush1.msra.mxu0 0.0
        %6127 = vmatprep.subr.mxu0 0.0
        %6128 = vmatpush1.msra.mxu0 0.0
        %6129 = vmatprep.subr.mxu0 0.0
        %6130 = vmatpush1.msra.mxu0 0.0
        %6131 = vmatprep.subr.mxu0 0.0
        %6132 = vmatpush1.msra.mxu0 0.0
        %6133 = vmatprep.subr.mxu0 0.0
        %6134 = vmatpush1.msra.mxu0 0.0
        %6135 = vmatprep.subr.mxu0 0.0
        %6136 = vmatpush1.msra.mxu0 0.0
        %6137 = vmatprep.subr.mxu0 0.0
        %6138 = vmatpush1.msra.mxu0 0.0
        %6139 = vmatprep.subr.mxu0 0.0
        %6140 = vmatpush1.msra.mxu0 0.0
        %6141 = vmatprep.subr.mxu0 0.0
        %6142 = vmatpush1.msra.mxu0 0.0
        %6143 = vmatprep.subr.mxu0 0.0
        %6144 = vmatpush1.msra.mxu0 0.0
        %6145 = vmatprep.subr.mxu0 0.0
        %6146 = vmatpush1.msra.mxu0 0.0
        %6147 = vmatprep.subr.mxu0 0.0
        %6148 = vmatpush1.msra.mxu0 0.0
        %6149 = vmatprep.subr.mxu0 0.0
        %6150 = vmatpush1.msra.mxu0 0.0
        %6151 = vmatprep.subr.mxu0 0.0
        %6152 = vmatpush1.msra.mxu0 0.0
        %6153 = vmatprep.subr.mxu0 %v5977
        %6154 = vmatpush1.msra.mxu0 %v5975
        %6155 = vmatprep.subr.mxu0 0.0
        %6156 = vmatpush2.msra.mxu0 0.0
        %6157 = vmatprep.subr.mxu0 0.0
        %6158 = vmatpush2.msra.mxu0 0.0
        %6159 = vmatprep.subr.mxu0 0.0
        %6160 = vmatpush2.msra.mxu0 0.0
        %6161 = vmatprep.subr.mxu0 0.0
        %6162 = vmatpush2.msra.mxu0 0.0
        %6163 = vmatprep.subr.mxu0 0.0
        %6164 = vmatpush2.msra.mxu0 0.0
        %6165 = vmatprep.subr.mxu0 0.0
        %6166 = vmatpush2.msra.mxu0 0.0
        %6167 = vmatprep.subr.mxu0 0.0
        %6168 = vmatpush2.msra.mxu0 0.0
        %6169 = vmatprep.subr.mxu0 0.0
        %6170 = vmatpush2.msra.mxu0 0.0
        %6171 = vmatprep.subr.mxu0 0.0
        %6172 = vmatpush2.msra.mxu0 0.0
        %6173 = vmatprep.subr.mxu0 0.0
        %6174 = vmatpush2.msra.mxu0 0.0
        %6175 = vmatprep.subr.mxu0 0.0
        %6176 = vmatpush2.msra.mxu0 0.0
        %6177 = vmatprep.subr.mxu0 0.0
        %6178 = vmatpush2.msra.mxu0 0.0
        %6179 = vmatprep.subr.mxu0 0.0
        %6180 = vmatpush2.msra.mxu0 0.0
        %6181 = vmatprep.subr.mxu0 0.0
        %6182 = vmatpush2.msra.mxu0 0.0
        %6183 = vmatprep.subr.mxu0 0.0
        %6184 = vmatpush2.msra.mxu0 0.0
        %6185 = vmatprep.subr.mxu0 0.0
        %6186 = vmatpush2.msra.mxu0 0.0
        %6187 = vmatprep.mubr.f32.mxu0 0.0
        %6188 = vmatmul.mubr.f32.gmra.mxu0 %v5965
        %v6189 = vpop.f32.mrf.mxu0
        %v6190 = vadd.f32 0.0, %v6189
        %v6191 = vpop.f32.mrf.mxu0
        %v6192 = vadd.f32 0.0, %v6191
        %6193 = vdwg.mxu0
        %6194 = vmatprep.subr.mxu0 0.0
        %6195 = vmatpush1.msra.mxu0 0.0
        %6196 = vmatprep.subr.mxu0 0.0
        %6197 = vmatpush1.msra.mxu0 0.0
        %6198 = vmatprep.subr.mxu0 0.0
        %6199 = vmatpush1.msra.mxu0 0.0
        %6200 = vmatprep.subr.mxu0 0.0
        %6201 = vmatpush1.msra.mxu0 0.0
        %6202 = vmatprep.subr.mxu0 0.0
        %6203 = vmatpush1.msra.mxu0 0.0
        %6204 = vmatprep.subr.mxu0 0.0
        %6205 = vmatpush1.msra.mxu0 0.0
        %6206 = vmatprep.subr.mxu0 0.0
        %6207 = vmatpush1.msra.mxu0 0.0
        %6208 = vmatprep.subr.mxu0 0.0
        %6209 = vmatpush1.msra.mxu0 0.0
        %6210 = vmatprep.subr.mxu0 0.0
        %6211 = vmatpush1.msra.mxu0 0.0
        %6212 = vmatprep.subr.mxu0 0.0
        %6213 = vmatpush1.msra.mxu0 0.0
        %6214 = vmatprep.subr.mxu0 0.0
        %6215 = vmatpush1.msra.mxu0 0.0
        %6216 = vmatprep.subr.mxu0 0.0
        %6217 = vmatpush1.msra.mxu0 0.0
        %6218 = vmatprep.subr.mxu0 0.0
        %6219 = vmatpush1.msra.mxu0 0.0
        %6220 = vmatprep.subr.mxu0 0.0
        %6221 = vmatpush1.msra.mxu0 0.0
        %6222 = vmatprep.subr.mxu0 0.0
        %6223 = vmatpush1.msra.mxu0 0.0
        %6224 = vmatprep.subr.mxu0 0.0
        %6225 = vmatpush1.msra.mxu0 %v5979
        %6226 = vmatprep.subr.mxu0 0.0
        %6227 = vmatpush2.msra.mxu0 0.0
        %6228 = vmatprep.subr.mxu0 0.0
        %6229 = vmatpush2.msra.mxu0 0.0
        %6230 = vmatprep.subr.mxu0 0.0
        %6231 = vmatpush2.msra.mxu0 0.0
        %6232 = vmatprep.subr.mxu0 0.0
        %6233 = vmatpush2.msra.mxu0 0.0
        %6234 = vmatprep.subr.mxu0 0.0
        %6235 = vmatpush2.msra.mxu0 0.0
        %6236 = vmatprep.subr.mxu0 0.0
        %6237 = vmatpush2.msra.mxu0 0.0
        %6238 = vmatprep.subr.mxu0 0.0
        %6239 = vmatpush2.msra.mxu0 0.0
        %6240 = vmatprep.subr.mxu0 0.0
        %6241 = vmatpush2.msra.mxu0 0.0
        %6242 = vmatprep.subr.mxu0 0.0
        %6243 = vmatpush2.msra.mxu0 0.0
        %6244 = vmatprep.subr.mxu0 0.0
        %6245 = vmatpush2.msra.mxu0 0.0
        %6246 = vmatprep.subr.mxu0 0.0
        %6247 = vmatpush2.msra.mxu0 0.0
        %6248 = vmatprep.subr.mxu0 0.0
        %6249 = vmatpush2.msra.mxu0 0.0
        %6250 = vmatprep.subr.mxu0 0.0
        %6251 = vmatpush2.msra.mxu0 0.0
        %6252 = vmatprep.subr.mxu0 0.0
        %6253 = vmatpush2.msra.mxu0 0.0
        %6254 = vmatprep.subr.mxu0 0.0
        %6255 = vmatpush2.msra.mxu0 0.0
        %6256 = vmatprep.subr.mxu0 0.0
        %6257 = vmatpush2.msra.mxu0 0.0
        %6258 = vmatprep.mubr.f32.mxu0 0.0
        %6259 = vmatmul.mubr.f32.gmra.mxu0 %v5965
        %v6260 = vpop.f32.mrf.mxu0
        %v6261 = vadd.f32 0.0, %v6260
        %v6262 = vpop.f32.mrf.mxu0
        %6263 = vdwg.mxu0
        %v6264 = vsel %vm569, %v5941, 0
        %v6266 = vsel %vm572, %v5916, 0
        %v6268 = vsel %vm572, %v5917, 0
        %v6270 = vsel %vm572, %v5918, 0
        %v6272 = vsel %vm572, %v5919, 0
        %v6274 = vsel %vm572, %v5920, 0
        %v6276 = vsel %vm572, %v5921, 0
        %v6278 = vsel %vm572, %v5922, 0
        %6280 = vmatprep.subr.mxu0 0.0
        %6281 = vmatpush1.msra.mxu0 0.0
        %6282 = vmatprep.subr.mxu0 0.0
        %6283 = vmatpush1.msra.mxu0 0.0
        %6284 = vmatprep.subr.mxu0 0.0
        %6285 = vmatpush1.msra.mxu0 0.0
        %6286 = vmatprep.subr.mxu0 0.0
        %6287 = vmatpush1.msra.mxu0 0.0
        %6288 = vmatprep.subr.mxu0 0.0
        %6289 = vmatpush1.msra.mxu0 0.0
        %6290 = vmatprep.subr.mxu0 0.0
        %6291 = vmatpush1.msra.mxu0 0.0
        %6292 = vmatprep.subr.mxu0 0.0
        %6293 = vmatpush1.msra.mxu0 0.0
        %6294 = vmatprep.subr.mxu0 0.0
        %6295 = vmatpush1.msra.mxu0 0.0
        %6296 = vmatprep.subr.mxu0 0.0
        %6297 = vmatpush1.msra.mxu0 0.0
        %6298 = vmatprep.subr.mxu0 0.0
        %6299 = vmatpush1.msra.mxu0 0.0
        %6300 = vmatprep.subr.mxu0 0.0
        %6301 = vmatpush1.msra.mxu0 0.0
        %6302 = vmatprep.subr.mxu0 0.0
        %6303 = vmatpush1.msra.mxu0 0.0
        %6304 = vmatprep.subr.mxu0 0.0
        %6305 = vmatpush1.msra.mxu0 0.0
        %6306 = vmatprep.subr.mxu0 0.0
        %6307 = vmatpush1.msra.mxu0 0.0
        %6308 = vmatprep.subr.mxu0 0.0
        %6309 = vmatpush1.msra.mxu0 0.0
        %6310 = vmatprep.subr.mxu0 %v6268
        %6311 = vmatpush1.msra.mxu0 %v6266
        %6312 = vmatprep.subr.mxu0 0.0
        %6313 = vmatpush2.msra.mxu0 0.0
        %6314 = vmatprep.subr.mxu0 0.0
        %6315 = vmatpush2.msra.mxu0 0.0
        %6316 = vmatprep.subr.mxu0 0.0
        %6317 = vmatpush2.msra.mxu0 0.0
        %6318 = vmatprep.subr.mxu0 0.0
        %6319 = vmatpush2.msra.mxu0 0.0
        %6320 = vmatprep.subr.mxu0 0.0
        %6321 = vmatpush2.msra.mxu0 0.0
        %6322 = vmatprep.subr.mxu0 0.0
        %6323 = vmatpush2.msra.mxu0 0.0
        %6324 = vmatprep.subr.mxu0 0.0
        %6325 = vmatpush2.msra.mxu0 0.0
        %6326 = vmatprep.subr.mxu0 0.0
        %6327 = vmatpush2.msra.mxu0 0.0
        %6328 = vmatprep.subr.mxu0 0.0
        %6329 = vmatpush2.msra.mxu0 0.0
        %6330 = vmatprep.subr.mxu0 0.0
        %6331 = vmatpush2.msra.mxu0 0.0
        %6332 = vmatprep.subr.mxu0 0.0
        %6333 = vmatpush2.msra.mxu0 0.0
        %6334 = vmatprep.subr.mxu0 0.0
        %6335 = vmatpush2.msra.mxu0 0.0
        %6336 = vmatprep.subr.mxu0 0.0
        %6337 = vmatpush2.msra.mxu0 0.0
        %6338 = vmatprep.subr.mxu0 0.0
        %6339 = vmatpush2.msra.mxu0 0.0
        %6340 = vmatprep.subr.mxu0 0.0
        %6341 = vmatpush2.msra.mxu0 0.0
        %6342 = vmatprep.subr.mxu0 0.0
        %6343 = vmatpush2.msra.mxu0 0.0
        %6344 = vmatprep.mubr.f32.mxu0 0.0
        %6345 = vmatmul.mubr.f32.gmra.mxu0 %v6264
        %v6346 = vpop.f32.mrf.mxu0
        %v6347 = vadd.f32 %v6048, %v6346
        %v6348 = vpop.f32.mrf.mxu0
        %v6349 = vadd.f32 %v6050, %v6348
        %6350 = vdwg.mxu0
        %6351 = vmatprep.subr.mxu0 0.0
        %6352 = vmatpush1.msra.mxu0 0.0
        %6353 = vmatprep.subr.mxu0 0.0
        %6354 = vmatpush1.msra.mxu0 0.0
        %6355 = vmatprep.subr.mxu0 0.0
        %6356 = vmatpush1.msra.mxu0 0.0
        %6357 = vmatprep.subr.mxu0 0.0
        %6358 = vmatpush1.msra.mxu0 0.0
        %6359 = vmatprep.subr.mxu0 0.0
        %6360 = vmatpush1.msra.mxu0 0.0
        %6361 = vmatprep.subr.mxu0 0.0
        %6362 = vmatpush1.msra.mxu0 0.0
        %6363 = vmatprep.subr.mxu0 0.0
        %6364 = vmatpush1.msra.mxu0 0.0
        %6365 = vmatprep.subr.mxu0 0.0
        %6366 = vmatpush1.msra.mxu0 0.0
        %6367 = vmatprep.subr.mxu0 0.0
        %6368 = vmatpush1.msra.mxu0 0.0
        %6369 = vmatprep.subr.mxu0 0.0
        %6370 = vmatpush1.msra.mxu0 0.0
        %6371 = vmatprep.subr.mxu0 0.0
        %6372 = vmatpush1.msra.mxu0 0.0
        %6373 = vmatprep.subr.mxu0 0.0
        %6374 = vmatpush1.msra.mxu0 0.0
        %6375 = vmatprep.subr.mxu0 0.0
        %6376 = vmatpush1.msra.mxu0 0.0
        %6377 = vmatprep.subr.mxu0 0.0
        %6378 = vmatpush1.msra.mxu0 0.0
        %6379 = vmatprep.subr.mxu0 0.0
        %6380 = vmatpush1.msra.mxu0 0.0
        %6381 = vmatprep.subr.mxu0 %v6272
        %6382 = vmatpush1.msra.mxu0 %v6270
        %6383 = vmatprep.subr.mxu0 0.0
        %6384 = vmatpush2.msra.mxu0 0.0
        %6385 = vmatprep.subr.mxu0 0.0
        %6386 = vmatpush2.msra.mxu0 0.0
        %6387 = vmatprep.subr.mxu0 0.0
        %6388 = vmatpush2.msra.mxu0 0.0
        %6389 = vmatprep.subr.mxu0 0.0
        %6390 = vmatpush2.msra.mxu0 0.0
        %6391 = vmatprep.subr.mxu0 0.0
        %6392 = vmatpush2.msra.mxu0 0.0
        %6393 = vmatprep.subr.mxu0 0.0
        %6394 = vmatpush2.msra.mxu0 0.0
        %6395 = vmatprep.subr.mxu0 0.0
        %6396 = vmatpush2.msra.mxu0 0.0
        %6397 = vmatprep.subr.mxu0 0.0
        %6398 = vmatpush2.msra.mxu0 0.0
        %6399 = vmatprep.subr.mxu0 0.0
        %6400 = vmatpush2.msra.mxu0 0.0
        %6401 = vmatprep.subr.mxu0 0.0
        %6402 = vmatpush2.msra.mxu0 0.0
        %6403 = vmatprep.subr.mxu0 0.0
        %6404 = vmatpush2.msra.mxu0 0.0
        %6405 = vmatprep.subr.mxu0 0.0
        %6406 = vmatpush2.msra.mxu0 0.0
        %6407 = vmatprep.subr.mxu0 0.0
        %6408 = vmatpush2.msra.mxu0 0.0
        %6409 = vmatprep.subr.mxu0 0.0
        %6410 = vmatpush2.msra.mxu0 0.0
        %6411 = vmatprep.subr.mxu0 0.0
        %6412 = vmatpush2.msra.mxu0 0.0
        %6413 = vmatprep.subr.mxu0 0.0
        %6414 = vmatpush2.msra.mxu0 0.0
        %6415 = vmatprep.mubr.f32.mxu0 0.0
        %6416 = vmatmul.mubr.f32.gmra.mxu0 %v6264
        %v6417 = vpop.f32.mrf.mxu0
        %v6418 = vadd.f32 %v6119, %v6417
        %v6419 = vpop.f32.mrf.mxu0
        %v6420 = vadd.f32 %v6121, %v6419
        %6421 = vdwg.mxu0
        %6422 = vmatprep.subr.mxu0 0.0
        %6423 = vmatpush1.msra.mxu0 0.0
        %6424 = vmatprep.subr.mxu0 0.0
        %6425 = vmatpush1.msra.mxu0 0.0
        %6426 = vmatprep.subr.mxu0 0.0
        %6427 = vmatpush1.msra.mxu0 0.0
        %6428 = vmatprep.subr.mxu0 0.0
        %6429 = vmatpush1.msra.mxu0 0.0
        %6430 = vmatprep.subr.mxu0 0.0
        %6431 = vmatpush1.msra.mxu0 0.0
        %6432 = vmatprep.subr.mxu0 0.0
        %6433 = vmatpush1.msra.mxu0 0.0
        %6434 = vmatprep.subr.mxu0 0.0
        %6435 = vmatpush1.msra.mxu0 0.0
        %6436 = vmatprep.subr.mxu0 0.0
        %6437 = vmatpush1.msra.mxu0 0.0
        %6438 = vmatprep.subr.mxu0 0.0
        %6439 = vmatpush1.msra.mxu0 0.0
        %6440 = vmatprep.subr.mxu0 0.0
        %6441 = vmatpush1.msra.mxu0 0.0
        %6442 = vmatprep.subr.mxu0 0.0
        %6443 = vmatpush1.msra.mxu0 0.0
        %6444 = vmatprep.subr.mxu0 0.0
        %6445 = vmatpush1.msra.mxu0 0.0
        %6446 = vmatprep.subr.mxu0 0.0
        %6447 = vmatpush1.msra.mxu0 0.0
        %6448 = vmatprep.subr.mxu0 0.0
        %6449 = vmatpush1.msra.mxu0 0.0
        %6450 = vmatprep.subr.mxu0 0.0
        %6451 = vmatpush1.msra.mxu0 0.0
        %6452 = vmatprep.subr.mxu0 %v6276
        %6453 = vmatpush1.msra.mxu0 %v6274
        %6454 = vmatprep.subr.mxu0 0.0
        %6455 = vmatpush2.msra.mxu0 0.0
        %6456 = vmatprep.subr.mxu0 0.0
        %6457 = vmatpush2.msra.mxu0 0.0
        %6458 = vmatprep.subr.mxu0 0.0
        %6459 = vmatpush2.msra.mxu0 0.0
        %6460 = vmatprep.subr.mxu0 0.0
        %6461 = vmatpush2.msra.mxu0 0.0
        %6462 = vmatprep.subr.mxu0 0.0
        %6463 = vmatpush2.msra.mxu0 0.0
        %6464 = vmatprep.subr.mxu0 0.0
        %6465 = vmatpush2.msra.mxu0 0.0
        %6466 = vmatprep.subr.mxu0 0.0
        %6467 = vmatpush2.msra.mxu0 0.0
        %6468 = vmatprep.subr.mxu0 0.0
        %6469 = vmatpush2.msra.mxu0 0.0
        %6470 = vmatprep.subr.mxu0 0.0
        %6471 = vmatpush2.msra.mxu0 0.0
        %6472 = vmatprep.subr.mxu0 0.0
        %6473 = vmatpush2.msra.mxu0 0.0
        %6474 = vmatprep.subr.mxu0 0.0
        %6475 = vmatpush2.msra.mxu0 0.0
        %6476 = vmatprep.subr.mxu0 0.0
        %6477 = vmatpush2.msra.mxu0 0.0
        %6478 = vmatprep.subr.mxu0 0.0
        %6479 = vmatpush2.msra.mxu0 0.0
        %6480 = vmatprep.subr.mxu0 0.0
        %6481 = vmatpush2.msra.mxu0 0.0
        %6482 = vmatprep.subr.mxu0 0.0
        %6483 = vmatpush2.msra.mxu0 0.0
        %6484 = vmatprep.subr.mxu0 0.0
        %6485 = vmatpush2.msra.mxu0 0.0
        %6486 = vmatprep.mubr.f32.mxu0 0.0
        %6487 = vmatmul.mubr.f32.gmra.mxu0 %v6264
        %v6488 = vpop.f32.mrf.mxu0
        %v6489 = vadd.f32 %v6190, %v6488
        %v6490 = vpop.f32.mrf.mxu0
        %v6491 = vadd.f32 %v6192, %v6490
        %6492 = vdwg.mxu0
        %6493 = vmatprep.subr.mxu0 0.0
        %6494 = vmatpush1.msra.mxu0 0.0
        %6495 = vmatprep.subr.mxu0 0.0
        %6496 = vmatpush1.msra.mxu0 0.0
        %6497 = vmatprep.subr.mxu0 0.0
        %6498 = vmatpush1.msra.mxu0 0.0
        %6499 = vmatprep.subr.mxu0 0.0
        %6500 = vmatpush1.msra.mxu0 0.0
        %6501 = vmatprep.subr.mxu0 0.0
        %6502 = vmatpush1.msra.mxu0 0.0
        %6503 = vmatprep.subr.mxu0 0.0
        %6504 = vmatpush1.msra.mxu0 0.0
        %6505 = vmatprep.subr.mxu0 0.0
        %6506 = vmatpush1.msra.mxu0 0.0
        %6507 = vmatprep.subr.mxu0 0.0
        %6508 = vmatpush1.msra.mxu0 0.0
        %6509 = vmatprep.subr.mxu0 0.0
        %6510 = vmatpush1.msra.mxu0 0.0
        %6511 = vmatprep.subr.mxu0 0.0
        %6512 = vmatpush1.msra.mxu0 0.0
        %6513 = vmatprep.subr.mxu0 0.0
        %6514 = vmatpush1.msra.mxu0 0.0
        %6515 = vmatprep.subr.mxu0 0.0
        %6516 = vmatpush1.msra.mxu0 0.0
        %6517 = vmatprep.subr.mxu0 0.0
        %6518 = vmatpush1.msra.mxu0 0.0
        %6519 = vmatprep.subr.mxu0 0.0
        %6520 = vmatpush1.msra.mxu0 0.0
        %6521 = vmatprep.subr.mxu0 0.0
        %6522 = vmatpush1.msra.mxu0 0.0
        %6523 = vmatprep.subr.mxu0 0.0
        %6524 = vmatpush1.msra.mxu0 %v6278
        %6525 = vmatprep.subr.mxu0 0.0
        %6526 = vmatpush2.msra.mxu0 0.0
        %6527 = vmatprep.subr.mxu0 0.0
        %6528 = vmatpush2.msra.mxu0 0.0
        %6529 = vmatprep.subr.mxu0 0.0
        %6530 = vmatpush2.msra.mxu0 0.0
        %6531 = vmatprep.subr.mxu0 0.0
        %6532 = vmatpush2.msra.mxu0 0.0
        %6533 = vmatprep.subr.mxu0 0.0
        %6534 = vmatpush2.msra.mxu0 0.0
        %6535 = vmatprep.subr.mxu0 0.0
        %6536 = vmatpush2.msra.mxu0 0.0
        %6537 = vmatprep.subr.mxu0 0.0
        %6538 = vmatpush2.msra.mxu0 0.0
        %6539 = vmatprep.subr.mxu0 0.0
        %6540 = vmatpush2.msra.mxu0 0.0
        %6541 = vmatprep.subr.mxu0 0.0
        %6542 = vmatpush2.msra.mxu0 0.0
        %6543 = vmatprep.subr.mxu0 0.0
        %6544 = vmatpush2.msra.mxu0 0.0
        %6545 = vmatprep.subr.mxu0 0.0
        %6546 = vmatpush2.msra.mxu0 0.0
        %6547 = vmatprep.subr.mxu0 0.0
        %6548 = vmatpush2.msra.mxu0 0.0
        %6549 = vmatprep.subr.mxu0 0.0
        %6550 = vmatpush2.msra.mxu0 0.0
        %6551 = vmatprep.subr.mxu0 0.0
        %6552 = vmatpush2.msra.mxu0 0.0
        %6553 = vmatprep.subr.mxu0 0.0
        %6554 = vmatpush2.msra.mxu0 0.0
        %6555 = vmatprep.subr.mxu0 0.0
        %6556 = vmatpush2.msra.mxu0 0.0
        %6557 = vmatprep.mubr.f32.mxu0 0.0
        %6558 = vmatmul.mubr.f32.gmra.mxu0 %v6264
        %v6559 = vpop.f32.mrf.mxu0
        %v6560 = vadd.f32 %v6261, %v6559
        %v6561 = vpop.f32.mrf.mxu0
        %6562 = vdwg.mxu0
        %6563 = vrot.lane.b32.xlu0 %v5941, 120
        %v6564 = vpop.permute.xlu0 %6563
        %6565 = vrot.lane.b32.xlu0 %v5916, 96
        %v6566 = vpop.permute.xlu0 %6565
        %6567 = vrot.lane.b32.xlu0 %v5917, 96
        %v6568 = vpop.permute.xlu0 %6567
        %6569 = vrot.lane.b32.xlu0 %v5918, 96
        %v6570 = vpop.permute.xlu0 %6569
        %6571 = vrot.lane.b32.xlu0 %v5919, 96
        %v6572 = vpop.permute.xlu0 %6571
        %6573 = vrot.lane.b32.xlu0 %v5920, 96
        %v6574 = vpop.permute.xlu0 %6573
        %6575 = vrot.lane.b32.xlu0 %v5921, 96
        %v6576 = vpop.permute.xlu0 %6575
        %6577 = vrot.lane.b32.xlu0 %v5922, 96
        %v6578 = vpop.permute.xlu0 %6577
        %v6579 = vsel %vm1195, %v6566, %v6568
        %v6580 = vsel %vm1195, %v6568, %v6570
        %v6581 = vsel %vm1195, %v6570, %v6572
        %v6582 = vsel %vm1195, %v6572, %v6574
        %v6583 = vsel %vm1195, %v6574, %v6576
        %v6584 = vsel %vm1195, %v6576, %v6578
        %v6585 = vsel %vm569, %v6564, 0
        %v6587 = vsel %vm572, %v6579, 0
        %v6589 = vsel %vm572, %v6580, 0
        %v6591 = vsel %vm572, %v6581, 0
        %v6593 = vsel %vm572, %v6582, 0
        %v6595 = vsel %vm572, %v6583, 0
        %v6597 = vsel %vm572, %v6584, 0
        %v6599 = vsel %vm572, %v6578, 0
        %6601 = vmatprep.subr.mxu0 0.0
        %6602 = vmatpush1.msra.mxu0 0.0
        %6603 = vmatprep.subr.mxu0 0.0
        %6604 = vmatpush1.msra.mxu0 0.0
        %6605 = vmatprep.subr.mxu0 0.0
        %6606 = vmatpush1.msra.mxu0 0.0
        %6607 = vmatprep.subr.mxu0 0.0
        %6608 = vmatpush1.msra.mxu0 0.0
        %6609 = vmatprep.subr.mxu0 0.0
        %6610 = vmatpush1.msra.mxu0 0.0
        %6611 = vmatprep.subr.mxu0 0.0
        %6612 = vmatpush1.msra.mxu0 0.0
        %6613 = vmatprep.subr.mxu0 0.0
        %6614 = vmatpush1.msra.mxu0 0.0
        %6615 = vmatprep.subr.mxu0 0.0
        %6616 = vmatpush1.msra.mxu0 0.0
        %6617 = vmatprep.subr.mxu0 0.0
        %6618 = vmatpush1.msra.mxu0 0.0
        %6619 = vmatprep.subr.mxu0 0.0
        %6620 = vmatpush1.msra.mxu0 0.0
        %6621 = vmatprep.subr.mxu0 0.0
        %6622 = vmatpush1.msra.mxu0 0.0
        %6623 = vmatprep.subr.mxu0 0.0
        %6624 = vmatpush1.msra.mxu0 0.0
        %6625 = vmatprep.subr.mxu0 0.0
        %6626 = vmatpush1.msra.mxu0 0.0
        %6627 = vmatprep.subr.mxu0 0.0
        %6628 = vmatpush1.msra.mxu0 0.0
        %6629 = vmatprep.subr.mxu0 0.0
        %6630 = vmatpush1.msra.mxu0 0.0
        %6631 = vmatprep.subr.mxu0 %v6589
        %6632 = vmatpush1.msra.mxu0 %v6587
        %6633 = vmatprep.subr.mxu0 0.0
        %6634 = vmatpush2.msra.mxu0 0.0
        %6635 = vmatprep.subr.mxu0 0.0
        %6636 = vmatpush2.msra.mxu0 0.0
        %6637 = vmatprep.subr.mxu0 0.0
        %6638 = vmatpush2.msra.mxu0 0.0
        %6639 = vmatprep.subr.mxu0 0.0
        %6640 = vmatpush2.msra.mxu0 0.0
        %6641 = vmatprep.subr.mxu0 0.0
        %6642 = vmatpush2.msra.mxu0 0.0
        %6643 = vmatprep.subr.mxu0 0.0
        %6644 = vmatpush2.msra.mxu0 0.0
        %6645 = vmatprep.subr.mxu0 0.0
        %6646 = vmatpush2.msra.mxu0 0.0
        %6647 = vmatprep.subr.mxu0 0.0
        %6648 = vmatpush2.msra.mxu0 0.0
        %6649 = vmatprep.subr.mxu0 0.0
        %6650 = vmatpush2.msra.mxu0 0.0
        %6651 = vmatprep.subr.mxu0 0.0
        %6652 = vmatpush2.msra.mxu0 0.0
        %6653 = vmatprep.subr.mxu0 0.0
        %6654 = vmatpush2.msra.mxu0 0.0
        %6655 = vmatprep.subr.mxu0 0.0
        %6656 = vmatpush2.msra.mxu0 0.0
        %6657 = vmatprep.subr.mxu0 0.0
        %6658 = vmatpush2.msra.mxu0 0.0
        %6659 = vmatprep.subr.mxu0 0.0
        %6660 = vmatpush2.msra.mxu0 0.0
        %6661 = vmatprep.subr.mxu0 0.0
        %6662 = vmatpush2.msra.mxu0 0.0
        %6663 = vmatprep.subr.mxu0 0.0
        %6664 = vmatpush2.msra.mxu0 0.0
        %6665 = vmatprep.mubr.f32.mxu0 0.0
        %6666 = vmatmul.mubr.f32.gmra.mxu0 %v6585
        %v6667 = vpop.f32.mrf.mxu0
        %v6668 = vadd.f32 0.0, %v6667
        %v6669 = vpop.f32.mrf.mxu0
        %v6670 = vadd.f32 0.0, %v6669
        %6671 = vdwg.mxu0
        %6672 = vmatprep.subr.mxu0 0.0
        %6673 = vmatpush1.msra.mxu0 0.0
        %6674 = vmatprep.subr.mxu0 0.0
        %6675 = vmatpush1.msra.mxu0 0.0
        %6676 = vmatprep.subr.mxu0 0.0
        %6677 = vmatpush1.msra.mxu0 0.0
        %6678 = vmatprep.subr.mxu0 0.0
        %6679 = vmatpush1.msra.mxu0 0.0
        %6680 = vmatprep.subr.mxu0 0.0
        %6681 = vmatpush1.msra.mxu0 0.0
        %6682 = vmatprep.subr.mxu0 0.0
        %6683 = vmatpush1.msra.mxu0 0.0
        %6684 = vmatprep.subr.mxu0 0.0
        %6685 = vmatpush1.msra.mxu0 0.0
        %6686 = vmatprep.subr.mxu0 0.0
        %6687 = vmatpush1.msra.mxu0 0.0
        %6688 = vmatprep.subr.mxu0 0.0
        %6689 = vmatpush1.msra.mxu0 0.0
        %6690 = vmatprep.subr.mxu0 0.0
        %6691 = vmatpush1.msra.mxu0 0.0
        %6692 = vmatprep.subr.mxu0 0.0
        %6693 = vmatpush1.msra.mxu0 0.0
        %6694 = vmatprep.subr.mxu0 0.0
        %6695 = vmatpush1.msra.mxu0 0.0
        %6696 = vmatprep.subr.mxu0 0.0
        %6697 = vmatpush1.msra.mxu0 0.0
        %6698 = vmatprep.subr.mxu0 0.0
        %6699 = vmatpush1.msra.mxu0 0.0
        %6700 = vmatprep.subr.mxu0 0.0
        %6701 = vmatpush1.msra.mxu0 0.0
        %6702 = vmatprep.subr.mxu0 %v6593
        %6703 = vmatpush1.msra.mxu0 %v6591
        %6704 = vmatprep.subr.mxu0 0.0
        %6705 = vmatpush2.msra.mxu0 0.0
        %6706 = vmatprep.subr.mxu0 0.0
        %6707 = vmatpush2.msra.mxu0 0.0
        %6708 = vmatprep.subr.mxu0 0.0
        %6709 = vmatpush2.msra.mxu0 0.0
        %6710 = vmatprep.subr.mxu0 0.0
        %6711 = vmatpush2.msra.mxu0 0.0
        %6712 = vmatprep.subr.mxu0 0.0
        %6713 = vmatpush2.msra.mxu0 0.0
        %6714 = vmatprep.subr.mxu0 0.0
        %6715 = vmatpush2.msra.mxu0 0.0
        %6716 = vmatprep.subr.mxu0 0.0
        %6717 = vmatpush2.msra.mxu0 0.0
        %6718 = vmatprep.subr.mxu0 0.0
        %6719 = vmatpush2.msra.mxu0 0.0
        %6720 = vmatprep.subr.mxu0 0.0
        %6721 = vmatpush2.msra.mxu0 0.0
        %6722 = vmatprep.subr.mxu0 0.0
        %6723 = vmatpush2.msra.mxu0 0.0
        %6724 = vmatprep.subr.mxu0 0.0
        %6725 = vmatpush2.msra.mxu0 0.0
        %6726 = vmatprep.subr.mxu0 0.0
        %6727 = vmatpush2.msra.mxu0 0.0
        %6728 = vmatprep.subr.mxu0 0.0
        %6729 = vmatpush2.msra.mxu0 0.0
        %6730 = vmatprep.subr.mxu0 0.0
        %6731 = vmatpush2.msra.mxu0 0.0
        %6732 = vmatprep.subr.mxu0 0.0
        %6733 = vmatpush2.msra.mxu0 0.0
        %6734 = vmatprep.subr.mxu0 0.0
        %6735 = vmatpush2.msra.mxu0 0.0
        %6736 = vmatprep.mubr.f32.mxu0 0.0
        %6737 = vmatmul.mubr.f32.gmra.mxu0 %v6585
        %v6738 = vpop.f32.mrf.mxu0
        %v6739 = vadd.f32 0.0, %v6738
        %v6740 = vpop.f32.mrf.mxu0
        %v6741 = vadd.f32 0.0, %v6740
        %6742 = vdwg.mxu0
        %6743 = vmatprep.subr.mxu0 0.0
        %6744 = vmatpush1.msra.mxu0 0.0
        %6745 = vmatprep.subr.mxu0 0.0
        %6746 = vmatpush1.msra.mxu0 0.0
        %6747 = vmatprep.subr.mxu0 0.0
        %6748 = vmatpush1.msra.mxu0 0.0
        %6749 = vmatprep.subr.mxu0 0.0
        %6750 = vmatpush1.msra.mxu0 0.0
        %6751 = vmatprep.subr.mxu0 0.0
        %6752 = vmatpush1.msra.mxu0 0.0
        %6753 = vmatprep.subr.mxu0 0.0
        %6754 = vmatpush1.msra.mxu0 0.0
        %6755 = vmatprep.subr.mxu0 0.0
        %6756 = vmatpush1.msra.mxu0 0.0
        %6757 = vmatprep.subr.mxu0 0.0
        %6758 = vmatpush1.msra.mxu0 0.0
        %6759 = vmatprep.subr.mxu0 0.0
        %6760 = vmatpush1.msra.mxu0 0.0
        %6761 = vmatprep.subr.mxu0 0.0
        %6762 = vmatpush1.msra.mxu0 0.0
        %6763 = vmatprep.subr.mxu0 0.0
        %6764 = vmatpush1.msra.mxu0 0.0
        %6765 = vmatprep.subr.mxu0 0.0
        %6766 = vmatpush1.msra.mxu0 0.0
        %6767 = vmatprep.subr.mxu0 0.0
        %6768 = vmatpush1.msra.mxu0 0.0
        %6769 = vmatprep.subr.mxu0 0.0
        %6770 = vmatpush1.msra.mxu0 0.0
        %6771 = vmatprep.subr.mxu0 0.0
        %6772 = vmatpush1.msra.mxu0 0.0
        %6773 = vmatprep.subr.mxu0 %v6597
        %6774 = vmatpush1.msra.mxu0 %v6595
        %6775 = vmatprep.subr.mxu0 0.0
        %6776 = vmatpush2.msra.mxu0 0.0
        %6777 = vmatprep.subr.mxu0 0.0
        %6778 = vmatpush2.msra.mxu0 0.0
        %6779 = vmatprep.subr.mxu0 0.0
        %6780 = vmatpush2.msra.mxu0 0.0
        %6781 = vmatprep.subr.mxu0 0.0
        %6782 = vmatpush2.msra.mxu0 0.0
        %6783 = vmatprep.subr.mxu0 0.0
        %6784 = vmatpush2.msra.mxu0 0.0
        %6785 = vmatprep.subr.mxu0 0.0
        %6786 = vmatpush2.msra.mxu0 0.0
        %6787 = vmatprep.subr.mxu0 0.0
        %6788 = vmatpush2.msra.mxu0 0.0
        %6789 = vmatprep.subr.mxu0 0.0
        %6790 = vmatpush2.msra.mxu0 0.0
        %6791 = vmatprep.subr.mxu0 0.0
        %6792 = vmatpush2.msra.mxu0 0.0
        %6793 = vmatprep.subr.mxu0 0.0
        %6794 = vmatpush2.msra.mxu0 0.0
        %6795 = vmatprep.subr.mxu0 0.0
        %6796 = vmatpush2.msra.mxu0 0.0
        %6797 = vmatprep.subr.mxu0 0.0
        %6798 = vmatpush2.msra.mxu0 0.0
        %6799 = vmatprep.subr.mxu0 0.0
        %6800 = vmatpush2.msra.mxu0 0.0
        %6801 = vmatprep.subr.mxu0 0.0
        %6802 = vmatpush2.msra.mxu0 0.0
        %6803 = vmatprep.subr.mxu0 0.0
        %6804 = vmatpush2.msra.mxu0 0.0
        %6805 = vmatprep.subr.mxu0 0.0
        %6806 = vmatpush2.msra.mxu0 0.0
        %6807 = vmatprep.mubr.f32.mxu0 0.0
        %6808 = vmatmul.mubr.f32.gmra.mxu0 %v6585
        %v6809 = vpop.f32.mrf.mxu0
        %v6810 = vadd.f32 0.0, %v6809
        %v6811 = vpop.f32.mrf.mxu0
        %v6812 = vadd.f32 0.0, %v6811
        %6813 = vdwg.mxu0
        %6814 = vmatprep.subr.mxu0 0.0
        %6815 = vmatpush1.msra.mxu0 0.0
        %6816 = vmatprep.subr.mxu0 0.0
        %6817 = vmatpush1.msra.mxu0 0.0
        %6818 = vmatprep.subr.mxu0 0.0
        %6819 = vmatpush1.msra.mxu0 0.0
        %6820 = vmatprep.subr.mxu0 0.0
        %6821 = vmatpush1.msra.mxu0 0.0
        %6822 = vmatprep.subr.mxu0 0.0
        %6823 = vmatpush1.msra.mxu0 0.0
        %6824 = vmatprep.subr.mxu0 0.0
        %6825 = vmatpush1.msra.mxu0 0.0
        %6826 = vmatprep.subr.mxu0 0.0
        %6827 = vmatpush1.msra.mxu0 0.0
        %6828 = vmatprep.subr.mxu0 0.0
        %6829 = vmatpush1.msra.mxu0 0.0
        %6830 = vmatprep.subr.mxu0 0.0
        %6831 = vmatpush1.msra.mxu0 0.0
        %6832 = vmatprep.subr.mxu0 0.0
        %6833 = vmatpush1.msra.mxu0 0.0
        %6834 = vmatprep.subr.mxu0 0.0
        %6835 = vmatpush1.msra.mxu0 0.0
        %6836 = vmatprep.subr.mxu0 0.0
        %6837 = vmatpush1.msra.mxu0 0.0
        %6838 = vmatprep.subr.mxu0 0.0
        %6839 = vmatpush1.msra.mxu0 0.0
        %6840 = vmatprep.subr.mxu0 0.0
        %6841 = vmatpush1.msra.mxu0 0.0
        %6842 = vmatprep.subr.mxu0 0.0
        %6843 = vmatpush1.msra.mxu0 0.0
        %6844 = vmatprep.subr.mxu0 0.0
        %6845 = vmatpush1.msra.mxu0 %v6599
        %6846 = vmatprep.subr.mxu0 0.0
        %6847 = vmatpush2.msra.mxu0 0.0
        %6848 = vmatprep.subr.mxu0 0.0
        %6849 = vmatpush2.msra.mxu0 0.0
        %6850 = vmatprep.subr.mxu0 0.0
        %6851 = vmatpush2.msra.mxu0 0.0
        %6852 = vmatprep.subr.mxu0 0.0
        %6853 = vmatpush2.msra.mxu0 0.0
        %6854 = vmatprep.subr.mxu0 0.0
        %6855 = vmatpush2.msra.mxu0 0.0
        %6856 = vmatprep.subr.mxu0 0.0
        %6857 = vmatpush2.msra.mxu0 0.0
        %6858 = vmatprep.subr.mxu0 0.0
        %6859 = vmatpush2.msra.mxu0 0.0
        %6860 = vmatprep.subr.mxu0 0.0
        %6861 = vmatpush2.msra.mxu0 0.0
        %6862 = vmatprep.subr.mxu0 0.0
        %6863 = vmatpush2.msra.mxu0 0.0
        %6864 = vmatprep.subr.mxu0 0.0
        %6865 = vmatpush2.msra.mxu0 0.0
        %6866 = vmatprep.subr.mxu0 0.0
        %6867 = vmatpush2.msra.mxu0 0.0
        %6868 = vmatprep.subr.mxu0 0.0
        %6869 = vmatpush2.msra.mxu0 0.0
        %6870 = vmatprep.subr.mxu0 0.0
        %6871 = vmatpush2.msra.mxu0 0.0
        %6872 = vmatprep.subr.mxu0 0.0
        %6873 = vmatpush2.msra.mxu0 0.0
        %6874 = vmatprep.subr.mxu0 0.0
        %6875 = vmatpush2.msra.mxu0 0.0
        %6876 = vmatprep.subr.mxu0 0.0
        %6877 = vmatpush2.msra.mxu0 0.0
        %6878 = vmatprep.mubr.f32.mxu0 0.0
        %6879 = vmatmul.mubr.f32.gmra.mxu0 %v6585
        %v6880 = vpop.f32.mrf.mxu0
        %v6881 = vadd.f32 0.0, %v6880
        %v6882 = vpop.f32.mrf.mxu0
        %6883 = vdwg.mxu0
        %v6884 = vadd.f32 %v6347, %v6668
        %v6885 = vadd.f32 %v6349, %v6670
        %v6886 = vadd.f32 %v6418, %v6739
        %v6887 = vadd.f32 %v6420, %v6741
        %v6888 = vadd.f32 %v6489, %v6810
        %v6889 = vadd.f32 %v6491, %v6812
        %v6890 = vadd.f32 %v6560, %v6881
        %6891 = vrot.lane.b32.xlu0 %v5941, 116
        %v6892 = vpop.permute.xlu0 %6891
        %6893 = vrot.lane.b32.xlu0 %v5916, 95
        %v6894 = vpop.permute.xlu0 %6893
        %6895 = vrot.lane.b32.xlu0 %v5917, 95
        %v6896 = vpop.permute.xlu0 %6895
        %6897 = vrot.lane.b32.xlu0 %v5918, 95
        %v6898 = vpop.permute.xlu0 %6897
        %6899 = vrot.lane.b32.xlu0 %v5919, 95
        %v6900 = vpop.permute.xlu0 %6899
        %6901 = vrot.lane.b32.xlu0 %v5920, 95
        %v6902 = vpop.permute.xlu0 %6901
        %6903 = vrot.lane.b32.xlu0 %v5921, 95
        %v6904 = vpop.permute.xlu0 %6903
        %6905 = vrot.lane.b32.xlu0 %v5922, 95
        %v6906 = vpop.permute.xlu0 %6905
        %v6907 = vsel %vm1533, %v6894, %v6896
        %v6908 = vsel %vm1533, %v6896, %v6898
        %v6909 = vsel %vm1533, %v6898, %v6900
        %v6910 = vsel %vm1533, %v6900, %v6902
        %v6911 = vsel %vm1533, %v6902, %v6904
        %v6912 = vsel %vm1533, %v6904, %v6906
        %v6913 = vsel %vm569, %v6892, 0
        %v6915 = vsel %vm572, %v6907, 0
        %v6917 = vsel %vm572, %v6908, 0
        %v6919 = vsel %vm572, %v6909, 0
        %v6921 = vsel %vm572, %v6910, 0
        %v6923 = vsel %vm572, %v6911, 0
        %v6925 = vsel %vm572, %v6912, 0
        %v6927 = vsel %vm572, %v6906, 0
        %6929 = vmatprep.subr.mxu0 0.0
        %6930 = vmatpush1.msra.mxu0 0.0
        %6931 = vmatprep.subr.mxu0 0.0
        %6932 = vmatpush1.msra.mxu0 0.0
        %6933 = vmatprep.subr.mxu0 0.0
        %6934 = vmatpush1.msra.mxu0 0.0
        %6935 = vmatprep.subr.mxu0 0.0
        %6936 = vmatpush1.msra.mxu0 0.0
        %6937 = vmatprep.subr.mxu0 0.0
        %6938 = vmatpush1.msra.mxu0 0.0
        %6939 = vmatprep.subr.mxu0 0.0
        %6940 = vmatpush1.msra.mxu0 0.0
        %6941 = vmatprep.subr.mxu0 0.0
        %6942 = vmatpush1.msra.mxu0 0.0
        %6943 = vmatprep.subr.mxu0 0.0
        %6944 = vmatpush1.msra.mxu0 0.0
        %6945 = vmatprep.subr.mxu0 0.0
        %6946 = vmatpush1.msra.mxu0 0.0
        %6947 = vmatprep.subr.mxu0 0.0
        %6948 = vmatpush1.msra.mxu0 0.0
        %6949 = vmatprep.subr.mxu0 0.0
        %6950 = vmatpush1.msra.mxu0 0.0
        %6951 = vmatprep.subr.mxu0 0.0
        %6952 = vmatpush1.msra.mxu0 0.0
        %6953 = vmatprep.subr.mxu0 0.0
        %6954 = vmatpush1.msra.mxu0 0.0
        %6955 = vmatprep.subr.mxu0 0.0
        %6956 = vmatpush1.msra.mxu0 0.0
        %6957 = vmatprep.subr.mxu0 0.0
        %6958 = vmatpush1.msra.mxu0 0.0
        %6959 = vmatprep.subr.mxu0 %v6917
        %6960 = vmatpush1.msra.mxu0 %v6915
        %6961 = vmatprep.subr.mxu0 0.0
        %6962 = vmatpush2.msra.mxu0 0.0
        %6963 = vmatprep.subr.mxu0 0.0
        %6964 = vmatpush2.msra.mxu0 0.0
        %6965 = vmatprep.subr.mxu0 0.0
        %6966 = vmatpush2.msra.mxu0 0.0
        %6967 = vmatprep.subr.mxu0 0.0
        %6968 = vmatpush2.msra.mxu0 0.0
        %6969 = vmatprep.subr.mxu0 0.0
        %6970 = vmatpush2.msra.mxu0 0.0
        %6971 = vmatprep.subr.mxu0 0.0
        %6972 = vmatpush2.msra.mxu0 0.0
        %6973 = vmatprep.subr.mxu0 0.0
        %6974 = vmatpush2.msra.mxu0 0.0
        %6975 = vmatprep.subr.mxu0 0.0
        %6976 = vmatpush2.msra.mxu0 0.0
        %6977 = vmatprep.subr.mxu0 0.0
        %6978 = vmatpush2.msra.mxu0 0.0
        %6979 = vmatprep.subr.mxu0 0.0
        %6980 = vmatpush2.msra.mxu0 0.0
        %6981 = vmatprep.subr.mxu0 0.0
        %6982 = vmatpush2.msra.mxu0 0.0
        %6983 = vmatprep.subr.mxu0 0.0
        %6984 = vmatpush2.msra.mxu0 0.0
        %6985 = vmatprep.subr.mxu0 0.0
        %6986 = vmatpush2.msra.mxu0 0.0
        %6987 = vmatprep.subr.mxu0 0.0
        %6988 = vmatpush2.msra.mxu0 0.0
        %6989 = vmatprep.subr.mxu0 0.0
        %6990 = vmatpush2.msra.mxu0 0.0
        %6991 = vmatprep.subr.mxu0 0.0
        %6992 = vmatpush2.msra.mxu0 0.0
        %6993 = vmatprep.mubr.f32.mxu0 0.0
        %6994 = vmatmul.mubr.f32.gmra.mxu0 %v6913
        %v6995 = vpop.f32.mrf.mxu0
        %v6996 = vadd.f32 0.0, %v6995
        %v6997 = vpop.f32.mrf.mxu0
        %v6998 = vadd.f32 0.0, %v6997
        %6999 = vdwg.mxu0
        %7000 = vmatprep.subr.mxu0 0.0
        %7001 = vmatpush1.msra.mxu0 0.0
        %7002 = vmatprep.subr.mxu0 0.0
        %7003 = vmatpush1.msra.mxu0 0.0
        %7004 = vmatprep.subr.mxu0 0.0
        %7005 = vmatpush1.msra.mxu0 0.0
        %7006 = vmatprep.subr.mxu0 0.0
        %7007 = vmatpush1.msra.mxu0 0.0
        %7008 = vmatprep.subr.mxu0 0.0
        %7009 = vmatpush1.msra.mxu0 0.0
        %7010 = vmatprep.subr.mxu0 0.0
        %7011 = vmatpush1.msra.mxu0 0.0
        %7012 = vmatprep.subr.mxu0 0.0
        %7013 = vmatpush1.msra.mxu0 0.0
        %7014 = vmatprep.subr.mxu0 0.0
        %7015 = vmatpush1.msra.mxu0 0.0
        %7016 = vmatprep.subr.mxu0 0.0
        %7017 = vmatpush1.msra.mxu0 0.0
        %7018 = vmatprep.subr.mxu0 0.0
        %7019 = vmatpush1.msra.mxu0 0.0
        %7020 = vmatprep.subr.mxu0 0.0
        %7021 = vmatpush1.msra.mxu0 0.0
        %7022 = vmatprep.subr.mxu0 0.0
        %7023 = vmatpush1.msra.mxu0 0.0
        %7024 = vmatprep.subr.mxu0 0.0
        %7025 = vmatpush1.msra.mxu0 0.0
        %7026 = vmatprep.subr.mxu0 0.0
        %7027 = vmatpush1.msra.mxu0 0.0
        %7028 = vmatprep.subr.mxu0 0.0
        %7029 = vmatpush1.msra.mxu0 0.0
        %7030 = vmatprep.subr.mxu0 %v6921
        %7031 = vmatpush1.msra.mxu0 %v6919
        %7032 = vmatprep.subr.mxu0 0.0
        %7033 = vmatpush2.msra.mxu0 0.0
        %7034 = vmatprep.subr.mxu0 0.0
        %7035 = vmatpush2.msra.mxu0 0.0
        %7036 = vmatprep.subr.mxu0 0.0
        %7037 = vmatpush2.msra.mxu0 0.0
        %7038 = vmatprep.subr.mxu0 0.0
        %7039 = vmatpush2.msra.mxu0 0.0
        %7040 = vmatprep.subr.mxu0 0.0
        %7041 = vmatpush2.msra.mxu0 0.0
        %7042 = vmatprep.subr.mxu0 0.0
        %7043 = vmatpush2.msra.mxu0 0.0
        %7044 = vmatprep.subr.mxu0 0.0
        %7045 = vmatpush2.msra.mxu0 0.0
        %7046 = vmatprep.subr.mxu0 0.0
        %7047 = vmatpush2.msra.mxu0 0.0
        %7048 = vmatprep.subr.mxu0 0.0
        %7049 = vmatpush2.msra.mxu0 0.0
        %7050 = vmatprep.subr.mxu0 0.0
        %7051 = vmatpush2.msra.mxu0 0.0
        %7052 = vmatprep.subr.mxu0 0.0
        %7053 = vmatpush2.msra.mxu0 0.0
        %7054 = vmatprep.subr.mxu0 0.0
        %7055 = vmatpush2.msra.mxu0 0.0
        %7056 = vmatprep.subr.mxu0 0.0
        %7057 = vmatpush2.msra.mxu0 0.0
        %7058 = vmatprep.subr.mxu0 0.0
        %7059 = vmatpush2.msra.mxu0 0.0
        %7060 = vmatprep.subr.mxu0 0.0
        %7061 = vmatpush2.msra.mxu0 0.0
        %7062 = vmatprep.subr.mxu0 0.0
        %7063 = vmatpush2.msra.mxu0 0.0
        %7064 = vmatprep.mubr.f32.mxu0 0.0
        %7065 = vmatmul.mubr.f32.gmra.mxu0 %v6913
        %v7066 = vpop.f32.mrf.mxu0
        %v7067 = vadd.f32 0.0, %v7066
        %v7068 = vpop.f32.mrf.mxu0
        %v7069 = vadd.f32 0.0, %v7068
        %7070 = vdwg.mxu0
        %7071 = vmatprep.subr.mxu0 0.0
        %7072 = vmatpush1.msra.mxu0 0.0
        %7073 = vmatprep.subr.mxu0 0.0
        %7074 = vmatpush1.msra.mxu0 0.0
        %7075 = vmatprep.subr.mxu0 0.0
        %7076 = vmatpush1.msra.mxu0 0.0
        %7077 = vmatprep.subr.mxu0 0.0
        %7078 = vmatpush1.msra.mxu0 0.0
        %7079 = vmatprep.subr.mxu0 0.0
        %7080 = vmatpush1.msra.mxu0 0.0
        %7081 = vmatprep.subr.mxu0 0.0
        %7082 = vmatpush1.msra.mxu0 0.0
        %7083 = vmatprep.subr.mxu0 0.0
        %7084 = vmatpush1.msra.mxu0 0.0
        %7085 = vmatprep.subr.mxu0 0.0
        %7086 = vmatpush1.msra.mxu0 0.0
        %7087 = vmatprep.subr.mxu0 0.0
        %7088 = vmatpush1.msra.mxu0 0.0
        %7089 = vmatprep.subr.mxu0 0.0
        %7090 = vmatpush1.msra.mxu0 0.0
        %7091 = vmatprep.subr.mxu0 0.0
        %7092 = vmatpush1.msra.mxu0 0.0
        %7093 = vmatprep.subr.mxu0 0.0
        %7094 = vmatpush1.msra.mxu0 0.0
        %7095 = vmatprep.subr.mxu0 0.0
        %7096 = vmatpush1.msra.mxu0 0.0
        %7097 = vmatprep.subr.mxu0 0.0
        %7098 = vmatpush1.msra.mxu0 0.0
        %7099 = vmatprep.subr.mxu0 0.0
        %7100 = vmatpush1.msra.mxu0 0.0
        %7101 = vmatprep.subr.mxu0 %v6925
        %7102 = vmatpush1.msra.mxu0 %v6923
        %7103 = vmatprep.subr.mxu0 0.0
        %7104 = vmatpush2.msra.mxu0 0.0
        %7105 = vmatprep.subr.mxu0 0.0
        %7106 = vmatpush2.msra.mxu0 0.0
        %7107 = vmatprep.subr.mxu0 0.0
        %7108 = vmatpush2.msra.mxu0 0.0
        %7109 = vmatprep.subr.mxu0 0.0
        %7110 = vmatpush2.msra.mxu0 0.0
        %7111 = vmatprep.subr.mxu0 0.0
        %7112 = vmatpush2.msra.mxu0 0.0
        %7113 = vmatprep.subr.mxu0 0.0
        %7114 = vmatpush2.msra.mxu0 0.0
        %7115 = vmatprep.subr.mxu0 0.0
        %7116 = vmatpush2.msra.mxu0 0.0
        %7117 = vmatprep.subr.mxu0 0.0
        %7118 = vmatpush2.msra.mxu0 0.0
        %7119 = vmatprep.subr.mxu0 0.0
        %7120 = vmatpush2.msra.mxu0 0.0
        %7121 = vmatprep.subr.mxu0 0.0
        %7122 = vmatpush2.msra.mxu0 0.0
        %7123 = vmatprep.subr.mxu0 0.0
        %7124 = vmatpush2.msra.mxu0 0.0
        %7125 = vmatprep.subr.mxu0 0.0
        %7126 = vmatpush2.msra.mxu0 0.0
        %7127 = vmatprep.subr.mxu0 0.0
        %7128 = vmatpush2.msra.mxu0 0.0
        %7129 = vmatprep.subr.mxu0 0.0
        %7130 = vmatpush2.msra.mxu0 0.0
        %7131 = vmatprep.subr.mxu0 0.0
        %7132 = vmatpush2.msra.mxu0 0.0
        %7133 = vmatprep.subr.mxu0 0.0
        %7134 = vmatpush2.msra.mxu0 0.0
        %7135 = vmatprep.mubr.f32.mxu0 0.0
        %7136 = vmatmul.mubr.f32.gmra.mxu0 %v6913
        %v7137 = vpop.f32.mrf.mxu0
        %v7138 = vadd.f32 0.0, %v7137
        %v7139 = vpop.f32.mrf.mxu0
        %v7140 = vadd.f32 0.0, %v7139
        %7141 = vdwg.mxu0
        %7142 = vmatprep.subr.mxu0 0.0
        %7143 = vmatpush1.msra.mxu0 0.0
        %7144 = vmatprep.subr.mxu0 0.0
        %7145 = vmatpush1.msra.mxu0 0.0
        %7146 = vmatprep.subr.mxu0 0.0
        %7147 = vmatpush1.msra.mxu0 0.0
        %7148 = vmatprep.subr.mxu0 0.0
        %7149 = vmatpush1.msra.mxu0 0.0
        %7150 = vmatprep.subr.mxu0 0.0
        %7151 = vmatpush1.msra.mxu0 0.0
        %7152 = vmatprep.subr.mxu0 0.0
        %7153 = vmatpush1.msra.mxu0 0.0
        %7154 = vmatprep.subr.mxu0 0.0
        %7155 = vmatpush1.msra.mxu0 0.0
        %7156 = vmatprep.subr.mxu0 0.0
        %7157 = vmatpush1.msra.mxu0 0.0
        %7158 = vmatprep.subr.mxu0 0.0
        %7159 = vmatpush1.msra.mxu0 0.0
        %7160 = vmatprep.subr.mxu0 0.0
        %7161 = vmatpush1.msra.mxu0 0.0
        %7162 = vmatprep.subr.mxu0 0.0
        %7163 = vmatpush1.msra.mxu0 0.0
        %7164 = vmatprep.subr.mxu0 0.0
        %7165 = vmatpush1.msra.mxu0 0.0
        %7166 = vmatprep.subr.mxu0 0.0
        %7167 = vmatpush1.msra.mxu0 0.0
        %7168 = vmatprep.subr.mxu0 0.0
        %7169 = vmatpush1.msra.mxu0 0.0
        %7170 = vmatprep.subr.mxu0 0.0
        %7171 = vmatpush1.msra.mxu0 0.0
        %7172 = vmatprep.subr.mxu0 0.0
        %7173 = vmatpush1.msra.mxu0 %v6927
        %7174 = vmatprep.subr.mxu0 0.0
        %7175 = vmatpush2.msra.mxu0 0.0
        %7176 = vmatprep.subr.mxu0 0.0
        %7177 = vmatpush2.msra.mxu0 0.0
        %7178 = vmatprep.subr.mxu0 0.0
        %7179 = vmatpush2.msra.mxu0 0.0
        %7180 = vmatprep.subr.mxu0 0.0
        %7181 = vmatpush2.msra.mxu0 0.0
        %7182 = vmatprep.subr.mxu0 0.0
        %7183 = vmatpush2.msra.mxu0 0.0
        %7184 = vmatprep.subr.mxu0 0.0
        %7185 = vmatpush2.msra.mxu0 0.0
        %7186 = vmatprep.subr.mxu0 0.0
        %7187 = vmatpush2.msra.mxu0 0.0
        %7188 = vmatprep.subr.mxu0 0.0
        %7189 = vmatpush2.msra.mxu0 0.0
        %7190 = vmatprep.subr.mxu0 0.0
        %7191 = vmatpush2.msra.mxu0 0.0
        %7192 = vmatprep.subr.mxu0 0.0
        %7193 = vmatpush2.msra.mxu0 0.0
        %7194 = vmatprep.subr.mxu0 0.0
        %7195 = vmatpush2.msra.mxu0 0.0
        %7196 = vmatprep.subr.mxu0 0.0
        %7197 = vmatpush2.msra.mxu0 0.0
        %7198 = vmatprep.subr.mxu0 0.0
        %7199 = vmatpush2.msra.mxu0 0.0
        %7200 = vmatprep.subr.mxu0 0.0
        %7201 = vmatpush2.msra.mxu0 0.0
        %7202 = vmatprep.subr.mxu0 0.0
        %7203 = vmatpush2.msra.mxu0 0.0
        %7204 = vmatprep.subr.mxu0 0.0
        %7205 = vmatpush2.msra.mxu0 0.0
        %7206 = vmatprep.mubr.f32.mxu0 0.0
        %7207 = vmatmul.mubr.f32.gmra.mxu0 %v6913
        %v7208 = vpop.f32.mrf.mxu0
        %v7209 = vadd.f32 0.0, %v7208
        %v7210 = vpop.f32.mrf.mxu0
        %7211 = vdwg.mxu0
        %v7212 = vadd.f32 %v6884, %v6996
        %v7213 = vadd.f32 %v6885, %v6998
        %v7214 = vadd.f32 %v6886, %v7067
        %v7215 = vadd.f32 %v6887, %v7069
        %v7216 = vadd.f32 %v6888, %v7138
        %v7217 = vadd.f32 %v6889, %v7140
        %v7218 = vadd.f32 %v6890, %v7209
        %v7219 = vld [vmem:[%s10] sm:$0xf]
        %7221 = vset.pattern.permute.xlu0 0
        %7222 = vperm.xlu0 %7221, %v7219
        %v7223 = vpop.permute.xlu0 %7222
        %v7225 = vadd.f32 %v7212, %v7223
        %v7226 = vadd.f32 %v7213, %v7223
        %v7227 = vadd.f32 %v7214, %v7223
        %v7228 = vadd.f32 %v7215, %v7223
        %v7229 = vadd.f32 %v7216, %v7223
        %v7230 = vadd.f32 %v7217, %v7223
        %v7231 = vadd.f32 %v7218, %v7223
        %vm7232 = vcmp.ge.f32.partialorder %v7225, 0.0
        %vm7233 = vcmp.ge.f32.partialorder %v7226, 0.0
        %vm7234 = vcmp.ge.f32.partialorder %v7227, 0.0
        %vm7235 = vcmp.ge.f32.partialorder %v7228, 0.0
        %vm7236 = vcmp.ge.f32.partialorder %v7229, 0.0
        %vm7237 = vcmp.ge.f32.partialorder %v7230, 0.0
        %vm7238 = vcmp.ge.f32.partialorder %v7231, 0.0
        %v7239 = vmul.f32 %v7225, 0.01
        %v7240 = vmul.f32 %v7226, 0.01
        %v7241 = vmul.f32 %v7227, 0.01
        %v7242 = vmul.f32 %v7228, 0.01
        %v7243 = vmul.f32 %v7229, 0.01
        %v7244 = vmul.f32 %v7230, 0.01
        %v7245 = vmul.f32 %v7231, 0.01
        %v7246 = vsel %vm7232, %v7225, %v7239
        %v7247 = vsel %vm7233, %v7226, %v7240
        %v7248 = vsel %vm7234, %v7227, %v7241
        %v7249 = vsel %vm7235, %v7228, %v7242
        %v7250 = vsel %vm7236, %v7229, %v7243
        %v7251 = vsel %vm7237, %v7230, %v7244
        %v7252 = vsel %vm7238, %v7231, %v7245
        %v7253 = vld [vmem:[%s11] sm:$0xff]
        %7255 = vrot.lane.b32.xlu0 %v7253, 124
        %v7256 = vpop.permute.xlu0 %7255
        %7264 = vrot.lane.b32.xlu0 %v7246, 127
        %v7265 = vpop.permute.xlu0 %7264
        %7266 = vrot.lane.b32.xlu0 %v7247, 127
        %v7267 = vpop.permute.xlu0 %7266
        %7268 = vrot.lane.b32.xlu0 %v7248, 127
        %v7269 = vpop.permute.xlu0 %7268
        %7270 = vrot.lane.b32.xlu0 %v7249, 127
        %v7271 = vpop.permute.xlu0 %7270
        %7272 = vrot.lane.b32.xlu0 %v7250, 127
        %v7273 = vpop.permute.xlu0 %7272
        %7274 = vrot.lane.b32.xlu0 %v7251, 127
        %v7275 = vpop.permute.xlu0 %7274
        %7276 = vrot.lane.b32.xlu0 %v7252, 127
        %v7277 = vpop.permute.xlu0 %7276
        %v7278 = vsel %vm561, %v7265, %v7267
        %v7279 = vsel %vm561, %v7267, %v7269
        %v7280 = vsel %vm561, %v7269, %v7271
        %v7281 = vsel %vm561, %v7271, %v7273
        %v7282 = vsel %vm561, %v7273, %v7275
        %v7283 = vsel %vm561, %v7275, %v7277
        %v7284 = vsel %vm569, %v7256, 0
        %v7286 = vsel %vm572, %v7278, 0
        %v7288 = vsel %vm572, %v7279, 0
        %v7290 = vsel %vm572, %v7280, 0
        %v7292 = vsel %vm572, %v7281, 0
        %v7294 = vsel %vm572, %v7282, 0
        %v7296 = vsel %vm572, %v7283, 0
        %v7298 = vsel %vm572, %v7277, 0
        %7300 = vmatprep.subr.mxu0 0.0
        %7301 = vmatpush1.msra.mxu0 0.0
        %7302 = vmatprep.subr.mxu0 0.0
        %7303 = vmatpush1.msra.mxu0 0.0
        %7304 = vmatprep.subr.mxu0 0.0
        %7305 = vmatpush1.msra.mxu0 0.0
        %7306 = vmatprep.subr.mxu0 0.0
        %7307 = vmatpush1.msra.mxu0 0.0
        %7308 = vmatprep.subr.mxu0 0.0
        %7309 = vmatpush1.msra.mxu0 0.0
        %7310 = vmatprep.subr.mxu0 0.0
        %7311 = vmatpush1.msra.mxu0 0.0
        %7312 = vmatprep.subr.mxu0 0.0
        %7313 = vmatpush1.msra.mxu0 0.0
        %7314 = vmatprep.subr.mxu0 0.0
        %7315 = vmatpush1.msra.mxu0 0.0
        %7316 = vmatprep.subr.mxu0 0.0
        %7317 = vmatpush1.msra.mxu0 0.0
        %7318 = vmatprep.subr.mxu0 0.0
        %7319 = vmatpush1.msra.mxu0 0.0
        %7320 = vmatprep.subr.mxu0 0.0
        %7321 = vmatpush1.msra.mxu0 0.0
        %7322 = vmatprep.subr.mxu0 0.0
        %7323 = vmatpush1.msra.mxu0 0.0
        %7324 = vmatprep.subr.mxu0 0.0
        %7325 = vmatpush1.msra.mxu0 0.0
        %7326 = vmatprep.subr.mxu0 0.0
        %7327 = vmatpush1.msra.mxu0 0.0
        %7328 = vmatprep.subr.mxu0 0.0
        %7329 = vmatpush1.msra.mxu0 0.0
        %7330 = vmatprep.subr.mxu0 %v7288
        %7331 = vmatpush1.msra.mxu0 %v7286
        %7332 = vmatprep.subr.mxu0 0.0
        %7333 = vmatpush2.msra.mxu0 0.0
        %7334 = vmatprep.subr.mxu0 0.0
        %7335 = vmatpush2.msra.mxu0 0.0
        %7336 = vmatprep.subr.mxu0 0.0
        %7337 = vmatpush2.msra.mxu0 0.0
        %7338 = vmatprep.subr.mxu0 0.0
        %7339 = vmatpush2.msra.mxu0 0.0
        %7340 = vmatprep.subr.mxu0 0.0
        %7341 = vmatpush2.msra.mxu0 0.0
        %7342 = vmatprep.subr.mxu0 0.0
        %7343 = vmatpush2.msra.mxu0 0.0
        %7344 = vmatprep.subr.mxu0 0.0
        %7345 = vmatpush2.msra.mxu0 0.0
        %7346 = vmatprep.subr.mxu0 0.0
        %7347 = vmatpush2.msra.mxu0 0.0
        %7348 = vmatprep.subr.mxu0 0.0
        %7349 = vmatpush2.msra.mxu0 0.0
        %7350 = vmatprep.subr.mxu0 0.0
        %7351 = vmatpush2.msra.mxu0 0.0
        %7352 = vmatprep.subr.mxu0 0.0
        %7353 = vmatpush2.msra.mxu0 0.0
        %7354 = vmatprep.subr.mxu0 0.0
        %7355 = vmatpush2.msra.mxu0 0.0
        %7356 = vmatprep.subr.mxu0 0.0
        %7357 = vmatpush2.msra.mxu0 0.0
        %7358 = vmatprep.subr.mxu0 0.0
        %7359 = vmatpush2.msra.mxu0 0.0
        %7360 = vmatprep.subr.mxu0 0.0
        %7361 = vmatpush2.msra.mxu0 0.0
        %7362 = vmatprep.subr.mxu0 0.0
        %7363 = vmatpush2.msra.mxu0 0.0
        %7364 = vmatprep.mubr.f32.mxu0 0.0
        %7365 = vmatmul.mubr.f32.gmra.mxu0 %v7284
        %v7366 = vpop.f32.mrf.mxu0
        %v7367 = vadd.f32 0.0, %v7366
        %v7368 = vpop.f32.mrf.mxu0
        %v7369 = vadd.f32 0.0, %v7368
        %7370 = vdwg.mxu0
        %7371 = vmatprep.subr.mxu0 0.0
        %7372 = vmatpush1.msra.mxu0 0.0
        %7373 = vmatprep.subr.mxu0 0.0
        %7374 = vmatpush1.msra.mxu0 0.0
        %7375 = vmatprep.subr.mxu0 0.0
        %7376 = vmatpush1.msra.mxu0 0.0
        %7377 = vmatprep.subr.mxu0 0.0
        %7378 = vmatpush1.msra.mxu0 0.0
        %7379 = vmatprep.subr.mxu0 0.0
        %7380 = vmatpush1.msra.mxu0 0.0
        %7381 = vmatprep.subr.mxu0 0.0
        %7382 = vmatpush1.msra.mxu0 0.0
        %7383 = vmatprep.subr.mxu0 0.0
        %7384 = vmatpush1.msra.mxu0 0.0
        %7385 = vmatprep.subr.mxu0 0.0
        %7386 = vmatpush1.msra.mxu0 0.0
        %7387 = vmatprep.subr.mxu0 0.0
        %7388 = vmatpush1.msra.mxu0 0.0
        %7389 = vmatprep.subr.mxu0 0.0
        %7390 = vmatpush1.msra.mxu0 0.0
        %7391 = vmatprep.subr.mxu0 0.0
        %7392 = vmatpush1.msra.mxu0 0.0
        %7393 = vmatprep.subr.mxu0 0.0
        %7394 = vmatpush1.msra.mxu0 0.0
        %7395 = vmatprep.subr.mxu0 0.0
        %7396 = vmatpush1.msra.mxu0 0.0
        %7397 = vmatprep.subr.mxu0 0.0
        %7398 = vmatpush1.msra.mxu0 0.0
        %7399 = vmatprep.subr.mxu0 0.0
        %7400 = vmatpush1.msra.mxu0 0.0
        %7401 = vmatprep.subr.mxu0 %v7292
        %7402 = vmatpush1.msra.mxu0 %v7290
        %7403 = vmatprep.subr.mxu0 0.0
        %7404 = vmatpush2.msra.mxu0 0.0
        %7405 = vmatprep.subr.mxu0 0.0
        %7406 = vmatpush2.msra.mxu0 0.0
        %7407 = vmatprep.subr.mxu0 0.0
        %7408 = vmatpush2.msra.mxu0 0.0
        %7409 = vmatprep.subr.mxu0 0.0
        %7410 = vmatpush2.msra.mxu0 0.0
        %7411 = vmatprep.subr.mxu0 0.0
        %7412 = vmatpush2.msra.mxu0 0.0
        %7413 = vmatprep.subr.mxu0 0.0
        %7414 = vmatpush2.msra.mxu0 0.0
        %7415 = vmatprep.subr.mxu0 0.0
        %7416 = vmatpush2.msra.mxu0 0.0
        %7417 = vmatprep.subr.mxu0 0.0
        %7418 = vmatpush2.msra.mxu0 0.0
        %7419 = vmatprep.subr.mxu0 0.0
        %7420 = vmatpush2.msra.mxu0 0.0
        %7421 = vmatprep.subr.mxu0 0.0
        %7422 = vmatpush2.msra.mxu0 0.0
        %7423 = vmatprep.subr.mxu0 0.0
        %7424 = vmatpush2.msra.mxu0 0.0
        %7425 = vmatprep.subr.mxu0 0.0
        %7426 = vmatpush2.msra.mxu0 0.0
        %7427 = vmatprep.subr.mxu0 0.0
        %7428 = vmatpush2.msra.mxu0 0.0
        %7429 = vmatprep.subr.mxu0 0.0
        %7430 = vmatpush2.msra.mxu0 0.0
        %7431 = vmatprep.subr.mxu0 0.0
        %7432 = vmatpush2.msra.mxu0 0.0
        %7433 = vmatprep.subr.mxu0 0.0
        %7434 = vmatpush2.msra.mxu0 0.0
        %7435 = vmatprep.mubr.f32.mxu0 0.0
        %7436 = vmatmul.mubr.f32.gmra.mxu0 %v7284
        %v7437 = vpop.f32.mrf.mxu0
        %v7438 = vadd.f32 0.0, %v7437
        %v7439 = vpop.f32.mrf.mxu0
        %v7440 = vadd.f32 0.0, %v7439
        %7441 = vdwg.mxu0
        %7442 = vmatprep.subr.mxu0 0.0
        %7443 = vmatpush1.msra.mxu0 0.0
        %7444 = vmatprep.subr.mxu0 0.0
        %7445 = vmatpush1.msra.mxu0 0.0
        %7446 = vmatprep.subr.mxu0 0.0
        %7447 = vmatpush1.msra.mxu0 0.0
        %7448 = vmatprep.subr.mxu0 0.0
        %7449 = vmatpush1.msra.mxu0 0.0
        %7450 = vmatprep.subr.mxu0 0.0
        %7451 = vmatpush1.msra.mxu0 0.0
        %7452 = vmatprep.subr.mxu0 0.0
        %7453 = vmatpush1.msra.mxu0 0.0
        %7454 = vmatprep.subr.mxu0 0.0
        %7455 = vmatpush1.msra.mxu0 0.0
        %7456 = vmatprep.subr.mxu0 0.0
        %7457 = vmatpush1.msra.mxu0 0.0
        %7458 = vmatprep.subr.mxu0 0.0
        %7459 = vmatpush1.msra.mxu0 0.0
        %7460 = vmatprep.subr.mxu0 0.0
        %7461 = vmatpush1.msra.mxu0 0.0
        %7462 = vmatprep.subr.mxu0 0.0
        %7463 = vmatpush1.msra.mxu0 0.0
        %7464 = vmatprep.subr.mxu0 0.0
        %7465 = vmatpush1.msra.mxu0 0.0
        %7466 = vmatprep.subr.mxu0 0.0
        %7467 = vmatpush1.msra.mxu0 0.0
        %7468 = vmatprep.subr.mxu0 0.0
        %7469 = vmatpush1.msra.mxu0 0.0
        %7470 = vmatprep.subr.mxu0 0.0
        %7471 = vmatpush1.msra.mxu0 0.0
        %7472 = vmatprep.subr.mxu0 %v7296
        %7473 = vmatpush1.msra.mxu0 %v7294
        %7474 = vmatprep.subr.mxu0 0.0
        %7475 = vmatpush2.msra.mxu0 0.0
        %7476 = vmatprep.subr.mxu0 0.0
        %7477 = vmatpush2.msra.mxu0 0.0
        %7478 = vmatprep.subr.mxu0 0.0
        %7479 = vmatpush2.msra.mxu0 0.0
        %7480 = vmatprep.subr.mxu0 0.0
        %7481 = vmatpush2.msra.mxu0 0.0
        %7482 = vmatprep.subr.mxu0 0.0
        %7483 = vmatpush2.msra.mxu0 0.0
        %7484 = vmatprep.subr.mxu0 0.0
        %7485 = vmatpush2.msra.mxu0 0.0
        %7486 = vmatprep.subr.mxu0 0.0
        %7487 = vmatpush2.msra.mxu0 0.0
        %7488 = vmatprep.subr.mxu0 0.0
        %7489 = vmatpush2.msra.mxu0 0.0
        %7490 = vmatprep.subr.mxu0 0.0
        %7491 = vmatpush2.msra.mxu0 0.0
        %7492 = vmatprep.subr.mxu0 0.0
        %7493 = vmatpush2.msra.mxu0 0.0
        %7494 = vmatprep.subr.mxu0 0.0
        %7495 = vmatpush2.msra.mxu0 0.0
        %7496 = vmatprep.subr.mxu0 0.0
        %7497 = vmatpush2.msra.mxu0 0.0
        %7498 = vmatprep.subr.mxu0 0.0
        %7499 = vmatpush2.msra.mxu0 0.0
        %7500 = vmatprep.subr.mxu0 0.0
        %7501 = vmatpush2.msra.mxu0 0.0
        %7502 = vmatprep.subr.mxu0 0.0
        %7503 = vmatpush2.msra.mxu0 0.0
        %7504 = vmatprep.subr.mxu0 0.0
        %7505 = vmatpush2.msra.mxu0 0.0
        %7506 = vmatprep.mubr.f32.mxu0 0.0
        %7507 = vmatmul.mubr.f32.gmra.mxu0 %v7284
        %v7508 = vpop.f32.mrf.mxu0
        %v7509 = vadd.f32 0.0, %v7508
        %v7510 = vpop.f32.mrf.mxu0
        %v7511 = vadd.f32 0.0, %v7510
        %7512 = vdwg.mxu0
        %7513 = vmatprep.subr.mxu0 0.0
        %7514 = vmatpush1.msra.mxu0 0.0
        %7515 = vmatprep.subr.mxu0 0.0
        %7516 = vmatpush1.msra.mxu0 0.0
        %7517 = vmatprep.subr.mxu0 0.0
        %7518 = vmatpush1.msra.mxu0 0.0
        %7519 = vmatprep.subr.mxu0 0.0
        %7520 = vmatpush1.msra.mxu0 0.0
        %7521 = vmatprep.subr.mxu0 0.0
        %7522 = vmatpush1.msra.mxu0 0.0
        %7523 = vmatprep.subr.mxu0 0.0
        %7524 = vmatpush1.msra.mxu0 0.0
        %7525 = vmatprep.subr.mxu0 0.0
        %7526 = vmatpush1.msra.mxu0 0.0
        %7527 = vmatprep.subr.mxu0 0.0
        %7528 = vmatpush1.msra.mxu0 0.0
        %7529 = vmatprep.subr.mxu0 0.0
        %7530 = vmatpush1.msra.mxu0 0.0
        %7531 = vmatprep.subr.mxu0 0.0
        %7532 = vmatpush1.msra.mxu0 0.0
        %7533 = vmatprep.subr.mxu0 0.0
        %7534 = vmatpush1.msra.mxu0 0.0
        %7535 = vmatprep.subr.mxu0 0.0
        %7536 = vmatpush1.msra.mxu0 0.0
        %7537 = vmatprep.subr.mxu0 0.0
        %7538 = vmatpush1.msra.mxu0 0.0
        %7539 = vmatprep.subr.mxu0 0.0
        %7540 = vmatpush1.msra.mxu0 0.0
        %7541 = vmatprep.subr.mxu0 0.0
        %7542 = vmatpush1.msra.mxu0 0.0
        %7543 = vmatprep.subr.mxu0 0.0
        %7544 = vmatpush1.msra.mxu0 %v7298
        %7545 = vmatprep.subr.mxu0 0.0
        %7546 = vmatpush2.msra.mxu0 0.0
        %7547 = vmatprep.subr.mxu0 0.0
        %7548 = vmatpush2.msra.mxu0 0.0
        %7549 = vmatprep.subr.mxu0 0.0
        %7550 = vmatpush2.msra.mxu0 0.0
        %7551 = vmatprep.subr.mxu0 0.0
        %7552 = vmatpush2.msra.mxu0 0.0
        %7553 = vmatprep.subr.mxu0 0.0
        %7554 = vmatpush2.msra.mxu0 0.0
        %7555 = vmatprep.subr.mxu0 0.0
        %7556 = vmatpush2.msra.mxu0 0.0
        %7557 = vmatprep.subr.mxu0 0.0
        %7558 = vmatpush2.msra.mxu0 0.0
        %7559 = vmatprep.subr.mxu0 0.0
        %7560 = vmatpush2.msra.mxu0 0.0
        %7561 = vmatprep.subr.mxu0 0.0
        %7562 = vmatpush2.msra.mxu0 0.0
        %7563 = vmatprep.subr.mxu0 0.0
        %7564 = vmatpush2.msra.mxu0 0.0
        %7565 = vmatprep.subr.mxu0 0.0
        %7566 = vmatpush2.msra.mxu0 0.0
        %7567 = vmatprep.subr.mxu0 0.0
        %7568 = vmatpush2.msra.mxu0 0.0
        %7569 = vmatprep.subr.mxu0 0.0
        %7570 = vmatpush2.msra.mxu0 0.0
        %7571 = vmatprep.subr.mxu0 0.0
        %7572 = vmatpush2.msra.mxu0 0.0
        %7573 = vmatprep.subr.mxu0 0.0
        %7574 = vmatpush2.msra.mxu0 0.0
        %7575 = vmatprep.subr.mxu0 0.0
        %7576 = vmatpush2.msra.mxu0 0.0
        %7577 = vmatprep.mubr.f32.mxu0 0.0
        %7578 = vmatmul.mubr.f32.gmra.mxu0 %v7284
        %v7579 = vpop.f32.mrf.mxu0
        %v7580 = vadd.f32 0.0, %v7579
        %v7581 = vpop.f32.mrf.mxu0
        %7582 = vdwg.mxu0
        %v7583 = vsel %vm569, %v7253, 0
        %v7585 = vsel %vm572, %v7246, 0
        %v7587 = vsel %vm572, %v7247, 0
        %v7589 = vsel %vm572, %v7248, 0
        %v7591 = vsel %vm572, %v7249, 0
        %v7593 = vsel %vm572, %v7250, 0
        %v7595 = vsel %vm572, %v7251, 0
        %v7597 = vsel %vm572, %v7252, 0
        %7599 = vmatprep.subr.mxu0 0.0
        %7600 = vmatpush1.msra.mxu0 0.0
        %7601 = vmatprep.subr.mxu0 0.0
        %7602 = vmatpush1.msra.mxu0 0.0
        %7603 = vmatprep.subr.mxu0 0.0
        %7604 = vmatpush1.msra.mxu0 0.0
        %7605 = vmatprep.subr.mxu0 0.0
        %7606 = vmatpush1.msra.mxu0 0.0
        %7607 = vmatprep.subr.mxu0 0.0
        %7608 = vmatpush1.msra.mxu0 0.0
        %7609 = vmatprep.subr.mxu0 0.0
        %7610 = vmatpush1.msra.mxu0 0.0
        %7611 = vmatprep.subr.mxu0 0.0
        %7612 = vmatpush1.msra.mxu0 0.0
        %7613 = vmatprep.subr.mxu0 0.0
        %7614 = vmatpush1.msra.mxu0 0.0
        %7615 = vmatprep.subr.mxu0 0.0
        %7616 = vmatpush1.msra.mxu0 0.0
        %7617 = vmatprep.subr.mxu0 0.0
        %7618 = vmatpush1.msra.mxu0 0.0
        %7619 = vmatprep.subr.mxu0 0.0
        %7620 = vmatpush1.msra.mxu0 0.0
        %7621 = vmatprep.subr.mxu0 0.0
        %7622 = vmatpush1.msra.mxu0 0.0
        %7623 = vmatprep.subr.mxu0 0.0
        %7624 = vmatpush1.msra.mxu0 0.0
        %7625 = vmatprep.subr.mxu0 0.0
        %7626 = vmatpush1.msra.mxu0 0.0
        %7627 = vmatprep.subr.mxu0 0.0
        %7628 = vmatpush1.msra.mxu0 0.0
        %7629 = vmatprep.subr.mxu0 %v7587
        %7630 = vmatpush1.msra.mxu0 %v7585
        %7631 = vmatprep.subr.mxu0 0.0
        %7632 = vmatpush2.msra.mxu0 0.0
        %7633 = vmatprep.subr.mxu0 0.0
        %7634 = vmatpush2.msra.mxu0 0.0
        %7635 = vmatprep.subr.mxu0 0.0
        %7636 = vmatpush2.msra.mxu0 0.0
        %7637 = vmatprep.subr.mxu0 0.0
        %7638 = vmatpush2.msra.mxu0 0.0
        %7639 = vmatprep.subr.mxu0 0.0
        %7640 = vmatpush2.msra.mxu0 0.0
        %7641 = vmatprep.subr.mxu0 0.0
        %7642 = vmatpush2.msra.mxu0 0.0
        %7643 = vmatprep.subr.mxu0 0.0
        %7644 = vmatpush2.msra.mxu0 0.0
        %7645 = vmatprep.subr.mxu0 0.0
        %7646 = vmatpush2.msra.mxu0 0.0
        %7647 = vmatprep.subr.mxu0 0.0
        %7648 = vmatpush2.msra.mxu0 0.0
        %7649 = vmatprep.subr.mxu0 0.0
        %7650 = vmatpush2.msra.mxu0 0.0
        %7651 = vmatprep.subr.mxu0 0.0
        %7652 = vmatpush2.msra.mxu0 0.0
        %7653 = vmatprep.subr.mxu0 0.0
        %7654 = vmatpush2.msra.mxu0 0.0
        %7655 = vmatprep.subr.mxu0 0.0
        %7656 = vmatpush2.msra.mxu0 0.0
        %7657 = vmatprep.subr.mxu0 0.0
        %7658 = vmatpush2.msra.mxu0 0.0
        %7659 = vmatprep.subr.mxu0 0.0
        %7660 = vmatpush2.msra.mxu0 0.0
        %7661 = vmatprep.subr.mxu0 0.0
        %7662 = vmatpush2.msra.mxu0 0.0
        %7663 = vmatprep.mubr.f32.mxu0 0.0
        %7664 = vmatmul.mubr.f32.gmra.mxu0 %v7583
        %v7665 = vpop.f32.mrf.mxu0
        %v7666 = vadd.f32 %v7367, %v7665
        %v7667 = vpop.f32.mrf.mxu0
        %v7668 = vadd.f32 %v7369, %v7667
        %7669 = vdwg.mxu0
        %7670 = vmatprep.subr.mxu0 0.0
        %7671 = vmatpush1.msra.mxu0 0.0
        %7672 = vmatprep.subr.mxu0 0.0
        %7673 = vmatpush1.msra.mxu0 0.0
        %7674 = vmatprep.subr.mxu0 0.0
        %7675 = vmatpush1.msra.mxu0 0.0
        %7676 = vmatprep.subr.mxu0 0.0
        %7677 = vmatpush1.msra.mxu0 0.0
        %7678 = vmatprep.subr.mxu0 0.0
        %7679 = vmatpush1.msra.mxu0 0.0
        %7680 = vmatprep.subr.mxu0 0.0
        %7681 = vmatpush1.msra.mxu0 0.0
        %7682 = vmatprep.subr.mxu0 0.0
        %7683 = vmatpush1.msra.mxu0 0.0
        %7684 = vmatprep.subr.mxu0 0.0
        %7685 = vmatpush1.msra.mxu0 0.0
        %7686 = vmatprep.subr.mxu0 0.0
        %7687 = vmatpush1.msra.mxu0 0.0
        %7688 = vmatprep.subr.mxu0 0.0
        %7689 = vmatpush1.msra.mxu0 0.0
        %7690 = vmatprep.subr.mxu0 0.0
        %7691 = vmatpush1.msra.mxu0 0.0
        %7692 = vmatprep.subr.mxu0 0.0
        %7693 = vmatpush1.msra.mxu0 0.0
        %7694 = vmatprep.subr.mxu0 0.0
        %7695 = vmatpush1.msra.mxu0 0.0
        %7696 = vmatprep.subr.mxu0 0.0
        %7697 = vmatpush1.msra.mxu0 0.0
        %7698 = vmatprep.subr.mxu0 0.0
        %7699 = vmatpush1.msra.mxu0 0.0
        %7700 = vmatprep.subr.mxu0 %v7591
        %7701 = vmatpush1.msra.mxu0 %v7589
        %7702 = vmatprep.subr.mxu0 0.0
        %7703 = vmatpush2.msra.mxu0 0.0
        %7704 = vmatprep.subr.mxu0 0.0
        %7705 = vmatpush2.msra.mxu0 0.0
        %7706 = vmatprep.subr.mxu0 0.0
        %7707 = vmatpush2.msra.mxu0 0.0
        %7708 = vmatprep.subr.mxu0 0.0
        %7709 = vmatpush2.msra.mxu0 0.0
        %7710 = vmatprep.subr.mxu0 0.0
        %7711 = vmatpush2.msra.mxu0 0.0
        %7712 = vmatprep.subr.mxu0 0.0
        %7713 = vmatpush2.msra.mxu0 0.0
        %7714 = vmatprep.subr.mxu0 0.0
        %7715 = vmatpush2.msra.mxu0 0.0
        %7716 = vmatprep.subr.mxu0 0.0
        %7717 = vmatpush2.msra.mxu0 0.0
        %7718 = vmatprep.subr.mxu0 0.0
        %7719 = vmatpush2.msra.mxu0 0.0
        %7720 = vmatprep.subr.mxu0 0.0
        %7721 = vmatpush2.msra.mxu0 0.0
        %7722 = vmatprep.subr.mxu0 0.0
        %7723 = vmatpush2.msra.mxu0 0.0
        %7724 = vmatprep.subr.mxu0 0.0
        %7725 = vmatpush2.msra.mxu0 0.0
        %7726 = vmatprep.subr.mxu0 0.0
        %7727 = vmatpush2.msra.mxu0 0.0
        %7728 = vmatprep.subr.mxu0 0.0
        %7729 = vmatpush2.msra.mxu0 0.0
        %7730 = vmatprep.subr.mxu0 0.0
        %7731 = vmatpush2.msra.mxu0 0.0
        %7732 = vmatprep.subr.mxu0 0.0
        %7733 = vmatpush2.msra.mxu0 0.0
        %7734 = vmatprep.mubr.f32.mxu0 0.0
        %7735 = vmatmul.mubr.f32.gmra.mxu0 %v7583
        %v7736 = vpop.f32.mrf.mxu0
        %v7737 = vadd.f32 %v7438, %v7736
        %v7738 = vpop.f32.mrf.mxu0
        %v7739 = vadd.f32 %v7440, %v7738
        %7740 = vdwg.mxu0
        %7741 = vmatprep.subr.mxu0 0.0
        %7742 = vmatpush1.msra.mxu0 0.0
        %7743 = vmatprep.subr.mxu0 0.0
        %7744 = vmatpush1.msra.mxu0 0.0
        %7745 = vmatprep.subr.mxu0 0.0
        %7746 = vmatpush1.msra.mxu0 0.0
        %7747 = vmatprep.subr.mxu0 0.0
        %7748 = vmatpush1.msra.mxu0 0.0
        %7749 = vmatprep.subr.mxu0 0.0
        %7750 = vmatpush1.msra.mxu0 0.0
        %7751 = vmatprep.subr.mxu0 0.0
        %7752 = vmatpush1.msra.mxu0 0.0
        %7753 = vmatprep.subr.mxu0 0.0
        %7754 = vmatpush1.msra.mxu0 0.0
        %7755 = vmatprep.subr.mxu0 0.0
        %7756 = vmatpush1.msra.mxu0 0.0
        %7757 = vmatprep.subr.mxu0 0.0
        %7758 = vmatpush1.msra.mxu0 0.0
        %7759 = vmatprep.subr.mxu0 0.0
        %7760 = vmatpush1.msra.mxu0 0.0
        %7761 = vmatprep.subr.mxu0 0.0
        %7762 = vmatpush1.msra.mxu0 0.0
        %7763 = vmatprep.subr.mxu0 0.0
        %7764 = vmatpush1.msra.mxu0 0.0
        %7765 = vmatprep.subr.mxu0 0.0
        %7766 = vmatpush1.msra.mxu0 0.0
        %7767 = vmatprep.subr.mxu0 0.0
        %7768 = vmatpush1.msra.mxu0 0.0
        %7769 = vmatprep.subr.mxu0 0.0
        %7770 = vmatpush1.msra.mxu0 0.0
        %7771 = vmatprep.subr.mxu0 %v7595
        %7772 = vmatpush1.msra.mxu0 %v7593
        %7773 = vmatprep.subr.mxu0 0.0
        %7774 = vmatpush2.msra.mxu0 0.0
        %7775 = vmatprep.subr.mxu0 0.0
        %7776 = vmatpush2.msra.mxu0 0.0
        %7777 = vmatprep.subr.mxu0 0.0
        %7778 = vmatpush2.msra.mxu0 0.0
        %7779 = vmatprep.subr.mxu0 0.0
        %7780 = vmatpush2.msra.mxu0 0.0
        %7781 = vmatprep.subr.mxu0 0.0
        %7782 = vmatpush2.msra.mxu0 0.0
        %7783 = vmatprep.subr.mxu0 0.0
        %7784 = vmatpush2.msra.mxu0 0.0
        %7785 = vmatprep.subr.mxu0 0.0
        %7786 = vmatpush2.msra.mxu0 0.0
        %7787 = vmatprep.subr.mxu0 0.0
        %7788 = vmatpush2.msra.mxu0 0.0
        %7789 = vmatprep.subr.mxu0 0.0
        %7790 = vmatpush2.msra.mxu0 0.0
        %7791 = vmatprep.subr.mxu0 0.0
        %7792 = vmatpush2.msra.mxu0 0.0
        %7793 = vmatprep.subr.mxu0 0.0
        %7794 = vmatpush2.msra.mxu0 0.0
        %7795 = vmatprep.subr.mxu0 0.0
        %7796 = vmatpush2.msra.mxu0 0.0
        %7797 = vmatprep.subr.mxu0 0.0
        %7798 = vmatpush2.msra.mxu0 0.0
        %7799 = vmatprep.subr.mxu0 0.0
        %7800 = vmatpush2.msra.mxu0 0.0
        %7801 = vmatprep.subr.mxu0 0.0
        %7802 = vmatpush2.msra.mxu0 0.0
        %7803 = vmatprep.subr.mxu0 0.0
        %7804 = vmatpush2.msra.mxu0 0.0
        %7805 = vmatprep.mubr.f32.mxu0 0.0
        %7806 = vmatmul.mubr.f32.gmra.mxu0 %v7583
        %v7807 = vpop.f32.mrf.mxu0
        %v7808 = vadd.f32 %v7509, %v7807
        %v7809 = vpop.f32.mrf.mxu0
        %v7810 = vadd.f32 %v7511, %v7809
        %7811 = vdwg.mxu0
        %7812 = vmatprep.subr.mxu0 0.0
        %7813 = vmatpush1.msra.mxu0 0.0
        %7814 = vmatprep.subr.mxu0 0.0
        %7815 = vmatpush1.msra.mxu0 0.0
        %7816 = vmatprep.subr.mxu0 0.0
        %7817 = vmatpush1.msra.mxu0 0.0
        %7818 = vmatprep.subr.mxu0 0.0
        %7819 = vmatpush1.msra.mxu0 0.0
        %7820 = vmatprep.subr.mxu0 0.0
        %7821 = vmatpush1.msra.mxu0 0.0
        %7822 = vmatprep.subr.mxu0 0.0
        %7823 = vmatpush1.msra.mxu0 0.0
        %7824 = vmatprep.subr.mxu0 0.0
        %7825 = vmatpush1.msra.mxu0 0.0
        %7826 = vmatprep.subr.mxu0 0.0
        %7827 = vmatpush1.msra.mxu0 0.0
        %7828 = vmatprep.subr.mxu0 0.0
        %7829 = vmatpush1.msra.mxu0 0.0
        %7830 = vmatprep.subr.mxu0 0.0
        %7831 = vmatpush1.msra.mxu0 0.0
        %7832 = vmatprep.subr.mxu0 0.0
        %7833 = vmatpush1.msra.mxu0 0.0
        %7834 = vmatprep.subr.mxu0 0.0
        %7835 = vmatpush1.msra.mxu0 0.0
        %7836 = vmatprep.subr.mxu0 0.0
        %7837 = vmatpush1.msra.mxu0 0.0
        %7838 = vmatprep.subr.mxu0 0.0
        %7839 = vmatpush1.msra.mxu0 0.0
        %7840 = vmatprep.subr.mxu0 0.0
        %7841 = vmatpush1.msra.mxu0 0.0
        %7842 = vmatprep.subr.mxu0 0.0
        %7843 = vmatpush1.msra.mxu0 %v7597
        %7844 = vmatprep.subr.mxu0 0.0
        %7845 = vmatpush2.msra.mxu0 0.0
        %7846 = vmatprep.subr.mxu0 0.0
        %7847 = vmatpush2.msra.mxu0 0.0
        %7848 = vmatprep.subr.mxu0 0.0
        %7849 = vmatpush2.msra.mxu0 0.0
        %7850 = vmatprep.subr.mxu0 0.0
        %7851 = vmatpush2.msra.mxu0 0.0
        %7852 = vmatprep.subr.mxu0 0.0
        %7853 = vmatpush2.msra.mxu0 0.0
        %7854 = vmatprep.subr.mxu0 0.0
        %7855 = vmatpush2.msra.mxu0 0.0
        %7856 = vmatprep.subr.mxu0 0.0
        %7857 = vmatpush2.msra.mxu0 0.0
        %7858 = vmatprep.subr.mxu0 0.0
        %7859 = vmatpush2.msra.mxu0 0.0
        %7860 = vmatprep.subr.mxu0 0.0
        %7861 = vmatpush2.msra.mxu0 0.0
        %7862 = vmatprep.subr.mxu0 0.0
        %7863 = vmatpush2.msra.mxu0 0.0
        %7864 = vmatprep.subr.mxu0 0.0
        %7865 = vmatpush2.msra.mxu0 0.0
        %7866 = vmatprep.subr.mxu0 0.0
        %7867 = vmatpush2.msra.mxu0 0.0
        %7868 = vmatprep.subr.mxu0 0.0
        %7869 = vmatpush2.msra.mxu0 0.0
        %7870 = vmatprep.subr.mxu0 0.0
        %7871 = vmatpush2.msra.mxu0 0.0
        %7872 = vmatprep.subr.mxu0 0.0
        %7873 = vmatpush2.msra.mxu0 0.0
        %7874 = vmatprep.subr.mxu0 0.0
        %7875 = vmatpush2.msra.mxu0 0.0
        %7876 = vmatprep.mubr.f32.mxu0 0.0
        %7877 = vmatmul.mubr.f32.gmra.mxu0 %v7583
        %v7878 = vpop.f32.mrf.mxu0
        %v7879 = vadd.f32 %v7580, %v7878
        %v7880 = vpop.f32.mrf.mxu0
        %7881 = vdwg.mxu0
        %7882 = vrot.lane.b32.xlu0 %v7253, 120
        %v7883 = vpop.permute.xlu0 %7882
        %7884 = vrot.lane.b32.xlu0 %v7246, 96
        %v7885 = vpop.permute.xlu0 %7884
        %7886 = vrot.lane.b32.xlu0 %v7247, 96
        %v7887 = vpop.permute.xlu0 %7886
        %7888 = vrot.lane.b32.xlu0 %v7248, 96
        %v7889 = vpop.permute.xlu0 %7888
        %7890 = vrot.lane.b32.xlu0 %v7249, 96
        %v7891 = vpop.permute.xlu0 %7890
        %7892 = vrot.lane.b32.xlu0 %v7250, 96
        %v7893 = vpop.permute.xlu0 %7892
        %7894 = vrot.lane.b32.xlu0 %v7251, 96
        %v7895 = vpop.permute.xlu0 %7894
        %7896 = vrot.lane.b32.xlu0 %v7252, 96
        %v7897 = vpop.permute.xlu0 %7896
        %v7898 = vsel %vm1195, %v7885, %v7887
        %v7899 = vsel %vm1195, %v7887, %v7889
        %v7900 = vsel %vm1195, %v7889, %v7891
        %v7901 = vsel %vm1195, %v7891, %v7893
        %v7902 = vsel %vm1195, %v7893, %v7895
        %v7903 = vsel %vm1195, %v7895, %v7897
        %v7904 = vsel %vm569, %v7883, 0
        %v7906 = vsel %vm572, %v7898, 0
        %v7908 = vsel %vm572, %v7899, 0
        %v7910 = vsel %vm572, %v7900, 0
        %v7912 = vsel %vm572, %v7901, 0
        %v7914 = vsel %vm572, %v7902, 0
        %v7916 = vsel %vm572, %v7903, 0
        %v7918 = vsel %vm572, %v7897, 0
        %7920 = vmatprep.subr.mxu0 0.0
        %7921 = vmatpush1.msra.mxu0 0.0
        %7922 = vmatprep.subr.mxu0 0.0
        %7923 = vmatpush1.msra.mxu0 0.0
        %7924 = vmatprep.subr.mxu0 0.0
        %7925 = vmatpush1.msra.mxu0 0.0
        %7926 = vmatprep.subr.mxu0 0.0
        %7927 = vmatpush1.msra.mxu0 0.0
        %7928 = vmatprep.subr.mxu0 0.0
        %7929 = vmatpush1.msra.mxu0 0.0
        %7930 = vmatprep.subr.mxu0 0.0
        %7931 = vmatpush1.msra.mxu0 0.0
        %7932 = vmatprep.subr.mxu0 0.0
        %7933 = vmatpush1.msra.mxu0 0.0
        %7934 = vmatprep.subr.mxu0 0.0
        %7935 = vmatpush1.msra.mxu0 0.0
        %7936 = vmatprep.subr.mxu0 0.0
        %7937 = vmatpush1.msra.mxu0 0.0
        %7938 = vmatprep.subr.mxu0 0.0
        %7939 = vmatpush1.msra.mxu0 0.0
        %7940 = vmatprep.subr.mxu0 0.0
        %7941 = vmatpush1.msra.mxu0 0.0
        %7942 = vmatprep.subr.mxu0 0.0
        %7943 = vmatpush1.msra.mxu0 0.0
        %7944 = vmatprep.subr.mxu0 0.0
        %7945 = vmatpush1.msra.mxu0 0.0
        %7946 = vmatprep.subr.mxu0 0.0
        %7947 = vmatpush1.msra.mxu0 0.0
        %7948 = vmatprep.subr.mxu0 0.0
        %7949 = vmatpush1.msra.mxu0 0.0
        %7950 = vmatprep.subr.mxu0 %v7908
        %7951 = vmatpush1.msra.mxu0 %v7906
        %7952 = vmatprep.subr.mxu0 0.0
        %7953 = vmatpush2.msra.mxu0 0.0
        %7954 = vmatprep.subr.mxu0 0.0
        %7955 = vmatpush2.msra.mxu0 0.0
        %7956 = vmatprep.subr.mxu0 0.0
        %7957 = vmatpush2.msra.mxu0 0.0
        %7958 = vmatprep.subr.mxu0 0.0
        %7959 = vmatpush2.msra.mxu0 0.0
        %7960 = vmatprep.subr.mxu0 0.0
        %7961 = vmatpush2.msra.mxu0 0.0
        %7962 = vmatprep.subr.mxu0 0.0
        %7963 = vmatpush2.msra.mxu0 0.0
        %7964 = vmatprep.subr.mxu0 0.0
        %7965 = vmatpush2.msra.mxu0 0.0
        %7966 = vmatprep.subr.mxu0 0.0
        %7967 = vmatpush2.msra.mxu0 0.0
        %7968 = vmatprep.subr.mxu0 0.0
        %7969 = vmatpush2.msra.mxu0 0.0
        %7970 = vmatprep.subr.mxu0 0.0
        %7971 = vmatpush2.msra.mxu0 0.0
        %7972 = vmatprep.subr.mxu0 0.0
        %7973 = vmatpush2.msra.mxu0 0.0
        %7974 = vmatprep.subr.mxu0 0.0
        %7975 = vmatpush2.msra.mxu0 0.0
        %7976 = vmatprep.subr.mxu0 0.0
        %7977 = vmatpush2.msra.mxu0 0.0
        %7978 = vmatprep.subr.mxu0 0.0
        %7979 = vmatpush2.msra.mxu0 0.0
        %7980 = vmatprep.subr.mxu0 0.0
        %7981 = vmatpush2.msra.mxu0 0.0
        %7982 = vmatprep.subr.mxu0 0.0
        %7983 = vmatpush2.msra.mxu0 0.0
        %7984 = vmatprep.mubr.f32.mxu0 0.0
        %7985 = vmatmul.mubr.f32.gmra.mxu0 %v7904
        %v7986 = vpop.f32.mrf.mxu0
        %v7987 = vadd.f32 0.0, %v7986
        %v7988 = vpop.f32.mrf.mxu0
        %v7989 = vadd.f32 0.0, %v7988
        %7990 = vdwg.mxu0
        %7991 = vmatprep.subr.mxu0 0.0
        %7992 = vmatpush1.msra.mxu0 0.0
        %7993 = vmatprep.subr.mxu0 0.0
        %7994 = vmatpush1.msra.mxu0 0.0
        %7995 = vmatprep.subr.mxu0 0.0
        %7996 = vmatpush1.msra.mxu0 0.0
        %7997 = vmatprep.subr.mxu0 0.0
        %7998 = vmatpush1.msra.mxu0 0.0
        %7999 = vmatprep.subr.mxu0 0.0
        %8000 = vmatpush1.msra.mxu0 0.0
        %8001 = vmatprep.subr.mxu0 0.0
        %8002 = vmatpush1.msra.mxu0 0.0
        %8003 = vmatprep.subr.mxu0 0.0
        %8004 = vmatpush1.msra.mxu0 0.0
        %8005 = vmatprep.subr.mxu0 0.0
        %8006 = vmatpush1.msra.mxu0 0.0
        %8007 = vmatprep.subr.mxu0 0.0
        %8008 = vmatpush1.msra.mxu0 0.0
        %8009 = vmatprep.subr.mxu0 0.0
        %8010 = vmatpush1.msra.mxu0 0.0
        %8011 = vmatprep.subr.mxu0 0.0
        %8012 = vmatpush1.msra.mxu0 0.0
        %8013 = vmatprep.subr.mxu0 0.0
        %8014 = vmatpush1.msra.mxu0 0.0
        %8015 = vmatprep.subr.mxu0 0.0
        %8016 = vmatpush1.msra.mxu0 0.0
        %8017 = vmatprep.subr.mxu0 0.0
        %8018 = vmatpush1.msra.mxu0 0.0
        %8019 = vmatprep.subr.mxu0 0.0
        %8020 = vmatpush1.msra.mxu0 0.0
        %8021 = vmatprep.subr.mxu0 %v7912
        %8022 = vmatpush1.msra.mxu0 %v7910
        %8023 = vmatprep.subr.mxu0 0.0
        %8024 = vmatpush2.msra.mxu0 0.0
        %8025 = vmatprep.subr.mxu0 0.0
        %8026 = vmatpush2.msra.mxu0 0.0
        %8027 = vmatprep.subr.mxu0 0.0
        %8028 = vmatpush2.msra.mxu0 0.0
        %8029 = vmatprep.subr.mxu0 0.0
        %8030 = vmatpush2.msra.mxu0 0.0
        %8031 = vmatprep.subr.mxu0 0.0
        %8032 = vmatpush2.msra.mxu0 0.0
        %8033 = vmatprep.subr.mxu0 0.0
        %8034 = vmatpush2.msra.mxu0 0.0
        %8035 = vmatprep.subr.mxu0 0.0
        %8036 = vmatpush2.msra.mxu0 0.0
        %8037 = vmatprep.subr.mxu0 0.0
        %8038 = vmatpush2.msra.mxu0 0.0
        %8039 = vmatprep.subr.mxu0 0.0
        %8040 = vmatpush2.msra.mxu0 0.0
        %8041 = vmatprep.subr.mxu0 0.0
        %8042 = vmatpush2.msra.mxu0 0.0
        %8043 = vmatprep.subr.mxu0 0.0
        %8044 = vmatpush2.msra.mxu0 0.0
        %8045 = vmatprep.subr.mxu0 0.0
        %8046 = vmatpush2.msra.mxu0 0.0
        %8047 = vmatprep.subr.mxu0 0.0
        %8048 = vmatpush2.msra.mxu0 0.0
        %8049 = vmatprep.subr.mxu0 0.0
        %8050 = vmatpush2.msra.mxu0 0.0
        %8051 = vmatprep.subr.mxu0 0.0
        %8052 = vmatpush2.msra.mxu0 0.0
        %8053 = vmatprep.subr.mxu0 0.0
        %8054 = vmatpush2.msra.mxu0 0.0
        %8055 = vmatprep.mubr.f32.mxu0 0.0
        %8056 = vmatmul.mubr.f32.gmra.mxu0 %v7904
        %v8057 = vpop.f32.mrf.mxu0
        %v8058 = vadd.f32 0.0, %v8057
        %v8059 = vpop.f32.mrf.mxu0
        %v8060 = vadd.f32 0.0, %v8059
        %8061 = vdwg.mxu0
        %8062 = vmatprep.subr.mxu0 0.0
        %8063 = vmatpush1.msra.mxu0 0.0
        %8064 = vmatprep.subr.mxu0 0.0
        %8065 = vmatpush1.msra.mxu0 0.0
        %8066 = vmatprep.subr.mxu0 0.0
        %8067 = vmatpush1.msra.mxu0 0.0
        %8068 = vmatprep.subr.mxu0 0.0
        %8069 = vmatpush1.msra.mxu0 0.0
        %8070 = vmatprep.subr.mxu0 0.0
        %8071 = vmatpush1.msra.mxu0 0.0
        %8072 = vmatprep.subr.mxu0 0.0
        %8073 = vmatpush1.msra.mxu0 0.0
        %8074 = vmatprep.subr.mxu0 0.0
        %8075 = vmatpush1.msra.mxu0 0.0
        %8076 = vmatprep.subr.mxu0 0.0
        %8077 = vmatpush1.msra.mxu0 0.0
        %8078 = vmatprep.subr.mxu0 0.0
        %8079 = vmatpush1.msra.mxu0 0.0
        %8080 = vmatprep.subr.mxu0 0.0
        %8081 = vmatpush1.msra.mxu0 0.0
        %8082 = vmatprep.subr.mxu0 0.0
        %8083 = vmatpush1.msra.mxu0 0.0
        %8084 = vmatprep.subr.mxu0 0.0
        %8085 = vmatpush1.msra.mxu0 0.0
        %8086 = vmatprep.subr.mxu0 0.0
        %8087 = vmatpush1.msra.mxu0 0.0
        %8088 = vmatprep.subr.mxu0 0.0
        %8089 = vmatpush1.msra.mxu0 0.0
        %8090 = vmatprep.subr.mxu0 0.0
        %8091 = vmatpush1.msra.mxu0 0.0
        %8092 = vmatprep.subr.mxu0 %v7916
        %8093 = vmatpush1.msra.mxu0 %v7914
        %8094 = vmatprep.subr.mxu0 0.0
        %8095 = vmatpush2.msra.mxu0 0.0
        %8096 = vmatprep.subr.mxu0 0.0
        %8097 = vmatpush2.msra.mxu0 0.0
        %8098 = vmatprep.subr.mxu0 0.0
        %8099 = vmatpush2.msra.mxu0 0.0
        %8100 = vmatprep.subr.mxu0 0.0
        %8101 = vmatpush2.msra.mxu0 0.0
        %8102 = vmatprep.subr.mxu0 0.0
        %8103 = vmatpush2.msra.mxu0 0.0
        %8104 = vmatprep.subr.mxu0 0.0
        %8105 = vmatpush2.msra.mxu0 0.0
        %8106 = vmatprep.subr.mxu0 0.0
        %8107 = vmatpush2.msra.mxu0 0.0
        %8108 = vmatprep.subr.mxu0 0.0
        %8109 = vmatpush2.msra.mxu0 0.0
        %8110 = vmatprep.subr.mxu0 0.0
        %8111 = vmatpush2.msra.mxu0 0.0
        %8112 = vmatprep.subr.mxu0 0.0
        %8113 = vmatpush2.msra.mxu0 0.0
        %8114 = vmatprep.subr.mxu0 0.0
        %8115 = vmatpush2.msra.mxu0 0.0
        %8116 = vmatprep.subr.mxu0 0.0
        %8117 = vmatpush2.msra.mxu0 0.0
        %8118 = vmatprep.subr.mxu0 0.0
        %8119 = vmatpush2.msra.mxu0 0.0
        %8120 = vmatprep.subr.mxu0 0.0
        %8121 = vmatpush2.msra.mxu0 0.0
        %8122 = vmatprep.subr.mxu0 0.0
        %8123 = vmatpush2.msra.mxu0 0.0
        %8124 = vmatprep.subr.mxu0 0.0
        %8125 = vmatpush2.msra.mxu0 0.0
        %8126 = vmatprep.mubr.f32.mxu0 0.0
        %8127 = vmatmul.mubr.f32.gmra.mxu0 %v7904
        %v8128 = vpop.f32.mrf.mxu0
        %v8129 = vadd.f32 0.0, %v8128
        %v8130 = vpop.f32.mrf.mxu0
        %v8131 = vadd.f32 0.0, %v8130
        %8132 = vdwg.mxu0
        %8133 = vmatprep.subr.mxu0 0.0
        %8134 = vmatpush1.msra.mxu0 0.0
        %8135 = vmatprep.subr.mxu0 0.0
        %8136 = vmatpush1.msra.mxu0 0.0
        %8137 = vmatprep.subr.mxu0 0.0
        %8138 = vmatpush1.msra.mxu0 0.0
        %8139 = vmatprep.subr.mxu0 0.0
        %8140 = vmatpush1.msra.mxu0 0.0
        %8141 = vmatprep.subr.mxu0 0.0
        %8142 = vmatpush1.msra.mxu0 0.0
        %8143 = vmatprep.subr.mxu0 0.0
        %8144 = vmatpush1.msra.mxu0 0.0
        %8145 = vmatprep.subr.mxu0 0.0
        %8146 = vmatpush1.msra.mxu0 0.0
        %8147 = vmatprep.subr.mxu0 0.0
        %8148 = vmatpush1.msra.mxu0 0.0
        %8149 = vmatprep.subr.mxu0 0.0
        %8150 = vmatpush1.msra.mxu0 0.0
        %8151 = vmatprep.subr.mxu0 0.0
        %8152 = vmatpush1.msra.mxu0 0.0
        %8153 = vmatprep.subr.mxu0 0.0
        %8154 = vmatpush1.msra.mxu0 0.0
        %8155 = vmatprep.subr.mxu0 0.0
        %8156 = vmatpush1.msra.mxu0 0.0
        %8157 = vmatprep.subr.mxu0 0.0
        %8158 = vmatpush1.msra.mxu0 0.0
        %8159 = vmatprep.subr.mxu0 0.0
        %8160 = vmatpush1.msra.mxu0 0.0
        %8161 = vmatprep.subr.mxu0 0.0
        %8162 = vmatpush1.msra.mxu0 0.0
        %8163 = vmatprep.subr.mxu0 0.0
        %8164 = vmatpush1.msra.mxu0 %v7918
        %8165 = vmatprep.subr.mxu0 0.0
        %8166 = vmatpush2.msra.mxu0 0.0
        %8167 = vmatprep.subr.mxu0 0.0
        %8168 = vmatpush2.msra.mxu0 0.0
        %8169 = vmatprep.subr.mxu0 0.0
        %8170 = vmatpush2.msra.mxu0 0.0
        %8171 = vmatprep.subr.mxu0 0.0
        %8172 = vmatpush2.msra.mxu0 0.0
        %8173 = vmatprep.subr.mxu0 0.0
        %8174 = vmatpush2.msra.mxu0 0.0
        %8175 = vmatprep.subr.mxu0 0.0
        %8176 = vmatpush2.msra.mxu0 0.0
        %8177 = vmatprep.subr.mxu0 0.0
        %8178 = vmatpush2.msra.mxu0 0.0
        %8179 = vmatprep.subr.mxu0 0.0
        %8180 = vmatpush2.msra.mxu0 0.0
        %8181 = vmatprep.subr.mxu0 0.0
        %8182 = vmatpush2.msra.mxu0 0.0
        %8183 = vmatprep.subr.mxu0 0.0
        %8184 = vmatpush2.msra.mxu0 0.0
        %8185 = vmatprep.subr.mxu0 0.0
        %8186 = vmatpush2.msra.mxu0 0.0
        %8187 = vmatprep.subr.mxu0 0.0
        %8188 = vmatpush2.msra.mxu0 0.0
        %8189 = vmatprep.subr.mxu0 0.0
        %8190 = vmatpush2.msra.mxu0 0.0
        %8191 = vmatprep.subr.mxu0 0.0
        %8192 = vmatpush2.msra.mxu0 0.0
        %8193 = vmatprep.subr.mxu0 0.0
        %8194 = vmatpush2.msra.mxu0 0.0
        %8195 = vmatprep.subr.mxu0 0.0
        %8196 = vmatpush2.msra.mxu0 0.0
        %8197 = vmatprep.mubr.f32.mxu0 0.0
        %8198 = vmatmul.mubr.f32.gmra.mxu0 %v7904
        %v8199 = vpop.f32.mrf.mxu0
        %v8200 = vadd.f32 0.0, %v8199
        %v8201 = vpop.f32.mrf.mxu0
        %8202 = vdwg.mxu0
        %v8203 = vadd.f32 %v7666, %v7987
        %v8204 = vadd.f32 %v7668, %v7989
        %v8205 = vadd.f32 %v7737, %v8058
        %v8206 = vadd.f32 %v7739, %v8060
        %v8207 = vadd.f32 %v7808, %v8129
        %v8208 = vadd.f32 %v7810, %v8131
        %v8209 = vadd.f32 %v7879, %v8200
        %8210 = vrot.lane.b32.xlu0 %v7253, 116
        %v8211 = vpop.permute.xlu0 %8210
        %8212 = vrot.lane.b32.xlu0 %v7246, 95
        %v8213 = vpop.permute.xlu0 %8212
        %8214 = vrot.lane.b32.xlu0 %v7247, 95
        %v8215 = vpop.permute.xlu0 %8214
        %8216 = vrot.lane.b32.xlu0 %v7248, 95
        %v8217 = vpop.permute.xlu0 %8216
        %8218 = vrot.lane.b32.xlu0 %v7249, 95
        %v8219 = vpop.permute.xlu0 %8218
        %8220 = vrot.lane.b32.xlu0 %v7250, 95
        %v8221 = vpop.permute.xlu0 %8220
        %8222 = vrot.lane.b32.xlu0 %v7251, 95
        %v8223 = vpop.permute.xlu0 %8222
        %8224 = vrot.lane.b32.xlu0 %v7252, 95
        %v8225 = vpop.permute.xlu0 %8224
        %v8226 = vsel %vm1533, %v8213, %v8215
        %v8227 = vsel %vm1533, %v8215, %v8217
        %v8228 = vsel %vm1533, %v8217, %v8219
        %v8229 = vsel %vm1533, %v8219, %v8221
        %v8230 = vsel %vm1533, %v8221, %v8223
        %v8231 = vsel %vm1533, %v8223, %v8225
        %v8232 = vsel %vm569, %v8211, 0
        %v8234 = vsel %vm572, %v8226, 0
        %v8236 = vsel %vm572, %v8227, 0
        %v8238 = vsel %vm572, %v8228, 0
        %v8240 = vsel %vm572, %v8229, 0
        %v8242 = vsel %vm572, %v8230, 0
        %v8244 = vsel %vm572, %v8231, 0
        %v8246 = vsel %vm572, %v8225, 0
        %8248 = vmatprep.subr.mxu0 0.0
        %8249 = vmatpush1.msra.mxu0 0.0
        %8250 = vmatprep.subr.mxu0 0.0
        %8251 = vmatpush1.msra.mxu0 0.0
        %8252 = vmatprep.subr.mxu0 0.0
        %8253 = vmatpush1.msra.mxu0 0.0
        %8254 = vmatprep.subr.mxu0 0.0
        %8255 = vmatpush1.msra.mxu0 0.0
        %8256 = vmatprep.subr.mxu0 0.0
        %8257 = vmatpush1.msra.mxu0 0.0
        %8258 = vmatprep.subr.mxu0 0.0
        %8259 = vmatpush1.msra.mxu0 0.0
        %8260 = vmatprep.subr.mxu0 0.0
        %8261 = vmatpush1.msra.mxu0 0.0
        %8262 = vmatprep.subr.mxu0 0.0
        %8263 = vmatpush1.msra.mxu0 0.0
        %8264 = vmatprep.subr.mxu0 0.0
        %8265 = vmatpush1.msra.mxu0 0.0
        %8266 = vmatprep.subr.mxu0 0.0
        %8267 = vmatpush1.msra.mxu0 0.0
        %8268 = vmatprep.subr.mxu0 0.0
        %8269 = vmatpush1.msra.mxu0 0.0
        %8270 = vmatprep.subr.mxu0 0.0
        %8271 = vmatpush1.msra.mxu0 0.0
        %8272 = vmatprep.subr.mxu0 0.0
        %8273 = vmatpush1.msra.mxu0 0.0
        %8274 = vmatprep.subr.mxu0 0.0
        %8275 = vmatpush1.msra.mxu0 0.0
        %8276 = vmatprep.subr.mxu0 0.0
        %8277 = vmatpush1.msra.mxu0 0.0
        %8278 = vmatprep.subr.mxu0 %v8236
        %8279 = vmatpush1.msra.mxu0 %v8234
        %8280 = vmatprep.subr.mxu0 0.0
        %8281 = vmatpush2.msra.mxu0 0.0
        %8282 = vmatprep.subr.mxu0 0.0
        %8283 = vmatpush2.msra.mxu0 0.0
        %8284 = vmatprep.subr.mxu0 0.0
        %8285 = vmatpush2.msra.mxu0 0.0
        %8286 = vmatprep.subr.mxu0 0.0
        %8287 = vmatpush2.msra.mxu0 0.0
        %8288 = vmatprep.subr.mxu0 0.0
        %8289 = vmatpush2.msra.mxu0 0.0
        %8290 = vmatprep.subr.mxu0 0.0
        %8291 = vmatpush2.msra.mxu0 0.0
        %8292 = vmatprep.subr.mxu0 0.0
        %8293 = vmatpush2.msra.mxu0 0.0
        %8294 = vmatprep.subr.mxu0 0.0
        %8295 = vmatpush2.msra.mxu0 0.0
        %8296 = vmatprep.subr.mxu0 0.0
        %8297 = vmatpush2.msra.mxu0 0.0
        %8298 = vmatprep.subr.mxu0 0.0
        %8299 = vmatpush2.msra.mxu0 0.0
        %8300 = vmatprep.subr.mxu0 0.0
        %8301 = vmatpush2.msra.mxu0 0.0
        %8302 = vmatprep.subr.mxu0 0.0
        %8303 = vmatpush2.msra.mxu0 0.0
        %8304 = vmatprep.subr.mxu0 0.0
        %8305 = vmatpush2.msra.mxu0 0.0
        %8306 = vmatprep.subr.mxu0 0.0
        %8307 = vmatpush2.msra.mxu0 0.0
        %8308 = vmatprep.subr.mxu0 0.0
        %8309 = vmatpush2.msra.mxu0 0.0
        %8310 = vmatprep.subr.mxu0 0.0
        %8311 = vmatpush2.msra.mxu0 0.0
        %8312 = vmatprep.mubr.f32.mxu0 0.0
        %8313 = vmatmul.mubr.f32.gmra.mxu0 %v8232
        %v8314 = vpop.f32.mrf.mxu0
        %v8315 = vadd.f32 0.0, %v8314
        %v8316 = vpop.f32.mrf.mxu0
        %v8317 = vadd.f32 0.0, %v8316
        %8318 = vdwg.mxu0
        %8319 = vmatprep.subr.mxu0 0.0
        %8320 = vmatpush1.msra.mxu0 0.0
        %8321 = vmatprep.subr.mxu0 0.0
        %8322 = vmatpush1.msra.mxu0 0.0
        %8323 = vmatprep.subr.mxu0 0.0
        %8324 = vmatpush1.msra.mxu0 0.0
        %8325 = vmatprep.subr.mxu0 0.0
        %8326 = vmatpush1.msra.mxu0 0.0
        %8327 = vmatprep.subr.mxu0 0.0
        %8328 = vmatpush1.msra.mxu0 0.0
        %8329 = vmatprep.subr.mxu0 0.0
        %8330 = vmatpush1.msra.mxu0 0.0
        %8331 = vmatprep.subr.mxu0 0.0
        %8332 = vmatpush1.msra.mxu0 0.0
        %8333 = vmatprep.subr.mxu0 0.0
        %8334 = vmatpush1.msra.mxu0 0.0
        %8335 = vmatprep.subr.mxu0 0.0
        %8336 = vmatpush1.msra.mxu0 0.0
        %8337 = vmatprep.subr.mxu0 0.0
        %8338 = vmatpush1.msra.mxu0 0.0
        %8339 = vmatprep.subr.mxu0 0.0
        %8340 = vmatpush1.msra.mxu0 0.0
        %8341 = vmatprep.subr.mxu0 0.0
        %8342 = vmatpush1.msra.mxu0 0.0
        %8343 = vmatprep.subr.mxu0 0.0
        %8344 = vmatpush1.msra.mxu0 0.0
        %8345 = vmatprep.subr.mxu0 0.0
        %8346 = vmatpush1.msra.mxu0 0.0
        %8347 = vmatprep.subr.mxu0 0.0
        %8348 = vmatpush1.msra.mxu0 0.0
        %8349 = vmatprep.subr.mxu0 %v8240
        %8350 = vmatpush1.msra.mxu0 %v8238
        %8351 = vmatprep.subr.mxu0 0.0
        %8352 = vmatpush2.msra.mxu0 0.0
        %8353 = vmatprep.subr.mxu0 0.0
        %8354 = vmatpush2.msra.mxu0 0.0
        %8355 = vmatprep.subr.mxu0 0.0
        %8356 = vmatpush2.msra.mxu0 0.0
        %8357 = vmatprep.subr.mxu0 0.0
        %8358 = vmatpush2.msra.mxu0 0.0
        %8359 = vmatprep.subr.mxu0 0.0
        %8360 = vmatpush2.msra.mxu0 0.0
        %8361 = vmatprep.subr.mxu0 0.0
        %8362 = vmatpush2.msra.mxu0 0.0
        %8363 = vmatprep.subr.mxu0 0.0
        %8364 = vmatpush2.msra.mxu0 0.0
        %8365 = vmatprep.subr.mxu0 0.0
        %8366 = vmatpush2.msra.mxu0 0.0
        %8367 = vmatprep.subr.mxu0 0.0
        %8368 = vmatpush2.msra.mxu0 0.0
        %8369 = vmatprep.subr.mxu0 0.0
        %8370 = vmatpush2.msra.mxu0 0.0
        %8371 = vmatprep.subr.mxu0 0.0
        %8372 = vmatpush2.msra.mxu0 0.0
        %8373 = vmatprep.subr.mxu0 0.0
        %8374 = vmatpush2.msra.mxu0 0.0
        %8375 = vmatprep.subr.mxu0 0.0
        %8376 = vmatpush2.msra.mxu0 0.0
        %8377 = vmatprep.subr.mxu0 0.0
        %8378 = vmatpush2.msra.mxu0 0.0
        %8379 = vmatprep.subr.mxu0 0.0
        %8380 = vmatpush2.msra.mxu0 0.0
        %8381 = vmatprep.subr.mxu0 0.0
        %8382 = vmatpush2.msra.mxu0 0.0
        %8383 = vmatprep.mubr.f32.mxu0 0.0
        %8384 = vmatmul.mubr.f32.gmra.mxu0 %v8232
        %v8385 = vpop.f32.mrf.mxu0
        %v8386 = vadd.f32 0.0, %v8385
        %v8387 = vpop.f32.mrf.mxu0
        %v8388 = vadd.f32 0.0, %v8387
        %8389 = vdwg.mxu0
        %8390 = vmatprep.subr.mxu0 0.0
        %8391 = vmatpush1.msra.mxu0 0.0
        %8392 = vmatprep.subr.mxu0 0.0
        %8393 = vmatpush1.msra.mxu0 0.0
        %8394 = vmatprep.subr.mxu0 0.0
        %8395 = vmatpush1.msra.mxu0 0.0
        %8396 = vmatprep.subr.mxu0 0.0
        %8397 = vmatpush1.msra.mxu0 0.0
        %8398 = vmatprep.subr.mxu0 0.0
        %8399 = vmatpush1.msra.mxu0 0.0
        %8400 = vmatprep.subr.mxu0 0.0
        %8401 = vmatpush1.msra.mxu0 0.0
        %8402 = vmatprep.subr.mxu0 0.0
        %8403 = vmatpush1.msra.mxu0 0.0
        %8404 = vmatprep.subr.mxu0 0.0
        %8405 = vmatpush1.msra.mxu0 0.0
        %8406 = vmatprep.subr.mxu0 0.0
        %8407 = vmatpush1.msra.mxu0 0.0
        %8408 = vmatprep.subr.mxu0 0.0
        %8409 = vmatpush1.msra.mxu0 0.0
        %8410 = vmatprep.subr.mxu0 0.0
        %8411 = vmatpush1.msra.mxu0 0.0
        %8412 = vmatprep.subr.mxu0 0.0
        %8413 = vmatpush1.msra.mxu0 0.0
        %8414 = vmatprep.subr.mxu0 0.0
        %8415 = vmatpush1.msra.mxu0 0.0
        %8416 = vmatprep.subr.mxu0 0.0
        %8417 = vmatpush1.msra.mxu0 0.0
        %8418 = vmatprep.subr.mxu0 0.0
        %8419 = vmatpush1.msra.mxu0 0.0
        %8420 = vmatprep.subr.mxu0 %v8244
        %8421 = vmatpush1.msra.mxu0 %v8242
        %8422 = vmatprep.subr.mxu0 0.0
        %8423 = vmatpush2.msra.mxu0 0.0
        %8424 = vmatprep.subr.mxu0 0.0
        %8425 = vmatpush2.msra.mxu0 0.0
        %8426 = vmatprep.subr.mxu0 0.0
        %8427 = vmatpush2.msra.mxu0 0.0
        %8428 = vmatprep.subr.mxu0 0.0
        %8429 = vmatpush2.msra.mxu0 0.0
        %8430 = vmatprep.subr.mxu0 0.0
        %8431 = vmatpush2.msra.mxu0 0.0
        %8432 = vmatprep.subr.mxu0 0.0
        %8433 = vmatpush2.msra.mxu0 0.0
        %8434 = vmatprep.subr.mxu0 0.0
        %8435 = vmatpush2.msra.mxu0 0.0
        %8436 = vmatprep.subr.mxu0 0.0
        %8437 = vmatpush2.msra.mxu0 0.0
        %8438 = vmatprep.subr.mxu0 0.0
        %8439 = vmatpush2.msra.mxu0 0.0
        %8440 = vmatprep.subr.mxu0 0.0
        %8441 = vmatpush2.msra.mxu0 0.0
        %8442 = vmatprep.subr.mxu0 0.0
        %8443 = vmatpush2.msra.mxu0 0.0
        %8444 = vmatprep.subr.mxu0 0.0
        %8445 = vmatpush2.msra.mxu0 0.0
        %8446 = vmatprep.subr.mxu0 0.0
        %8447 = vmatpush2.msra.mxu0 0.0
        %8448 = vmatprep.subr.mxu0 0.0
        %8449 = vmatpush2.msra.mxu0 0.0
        %8450 = vmatprep.subr.mxu0 0.0
        %8451 = vmatpush2.msra.mxu0 0.0
        %8452 = vmatprep.subr.mxu0 0.0
        %8453 = vmatpush2.msra.mxu0 0.0
        %8454 = vmatprep.mubr.f32.mxu0 0.0
        %8455 = vmatmul.mubr.f32.gmra.mxu0 %v8232
        %v8456 = vpop.f32.mrf.mxu0
        %v8457 = vadd.f32 0.0, %v8456
        %v8458 = vpop.f32.mrf.mxu0
        %v8459 = vadd.f32 0.0, %v8458
        %8460 = vdwg.mxu0
        %8461 = vmatprep.subr.mxu0 0.0
        %8462 = vmatpush1.msra.mxu0 0.0
        %8463 = vmatprep.subr.mxu0 0.0
        %8464 = vmatpush1.msra.mxu0 0.0
        %8465 = vmatprep.subr.mxu0 0.0
        %8466 = vmatpush1.msra.mxu0 0.0
        %8467 = vmatprep.subr.mxu0 0.0
        %8468 = vmatpush1.msra.mxu0 0.0
        %8469 = vmatprep.subr.mxu0 0.0
        %8470 = vmatpush1.msra.mxu0 0.0
        %8471 = vmatprep.subr.mxu0 0.0
        %8472 = vmatpush1.msra.mxu0 0.0
        %8473 = vmatprep.subr.mxu0 0.0
        %8474 = vmatpush1.msra.mxu0 0.0
        %8475 = vmatprep.subr.mxu0 0.0
        %8476 = vmatpush1.msra.mxu0 0.0
        %8477 = vmatprep.subr.mxu0 0.0
        %8478 = vmatpush1.msra.mxu0 0.0
        %8479 = vmatprep.subr.mxu0 0.0
        %8480 = vmatpush1.msra.mxu0 0.0
        %8481 = vmatprep.subr.mxu0 0.0
        %8482 = vmatpush1.msra.mxu0 0.0
        %8483 = vmatprep.subr.mxu0 0.0
        %8484 = vmatpush1.msra.mxu0 0.0
        %8485 = vmatprep.subr.mxu0 0.0
        %8486 = vmatpush1.msra.mxu0 0.0
        %8487 = vmatprep.subr.mxu0 0.0
        %8488 = vmatpush1.msra.mxu0 0.0
        %8489 = vmatprep.subr.mxu0 0.0
        %8490 = vmatpush1.msra.mxu0 0.0
        %8491 = vmatprep.subr.mxu0 0.0
        %8492 = vmatpush1.msra.mxu0 %v8246
        %8493 = vmatprep.subr.mxu0 0.0
        %8494 = vmatpush2.msra.mxu0 0.0
        %8495 = vmatprep.subr.mxu0 0.0
        %8496 = vmatpush2.msra.mxu0 0.0
        %8497 = vmatprep.subr.mxu0 0.0
        %8498 = vmatpush2.msra.mxu0 0.0
        %8499 = vmatprep.subr.mxu0 0.0
        %8500 = vmatpush2.msra.mxu0 0.0
        %8501 = vmatprep.subr.mxu0 0.0
        %8502 = vmatpush2.msra.mxu0 0.0
        %8503 = vmatprep.subr.mxu0 0.0
        %8504 = vmatpush2.msra.mxu0 0.0
        %8505 = vmatprep.subr.mxu0 0.0
        %8506 = vmatpush2.msra.mxu0 0.0
        %8507 = vmatprep.subr.mxu0 0.0
        %8508 = vmatpush2.msra.mxu0 0.0
        %8509 = vmatprep.subr.mxu0 0.0
        %8510 = vmatpush2.msra.mxu0 0.0
        %8511 = vmatprep.subr.mxu0 0.0
        %8512 = vmatpush2.msra.mxu0 0.0
        %8513 = vmatprep.subr.mxu0 0.0
        %8514 = vmatpush2.msra.mxu0 0.0
        %8515 = vmatprep.subr.mxu0 0.0
        %8516 = vmatpush2.msra.mxu0 0.0
        %8517 = vmatprep.subr.mxu0 0.0
        %8518 = vmatpush2.msra.mxu0 0.0
        %8519 = vmatprep.subr.mxu0 0.0
        %8520 = vmatpush2.msra.mxu0 0.0
        %8521 = vmatprep.subr.mxu0 0.0
        %8522 = vmatpush2.msra.mxu0 0.0
        %8523 = vmatprep.subr.mxu0 0.0
        %8524 = vmatpush2.msra.mxu0 0.0
        %8525 = vmatprep.mubr.f32.mxu0 0.0
        %8526 = vmatmul.mubr.f32.gmra.mxu0 %v8232
        %v8527 = vpop.f32.mrf.mxu0
        %v8528 = vadd.f32 0.0, %v8527
        %v8529 = vpop.f32.mrf.mxu0
        %8530 = vdwg.mxu0
        %v8531 = vadd.f32 %v8203, %v8315
        %v8532 = vadd.f32 %v8204, %v8317
        %v8533 = vadd.f32 %v8205, %v8386
        %v8534 = vadd.f32 %v8206, %v8388
        %v8535 = vadd.f32 %v8207, %v8457
        %v8536 = vadd.f32 %v8208, %v8459
        %v8537 = vadd.f32 %v8209, %v8528
        %v8538 = vld [vmem:[%s12] sm:$0xff]
        %8540 = vset.pattern.permute.xlu0 0
        %8541 = vperm.xlu0 %8540, %v8538
        %v8542 = vpop.permute.xlu0 %8541
        %v8544 = vadd.f32 %v8531, %v8542
        %v8545 = vadd.f32 %v8532, %v8542
        %v8546 = vadd.f32 %v8533, %v8542
        %v8547 = vadd.f32 %v8534, %v8542
        %v8548 = vadd.f32 %v8535, %v8542
        %v8549 = vadd.f32 %v8536, %v8542
        %v8550 = vadd.f32 %v8537, %v8542
        %vm8551 = vcmp.ge.f32.partialorder %v8544, 0.0
        %vm8552 = vcmp.ge.f32.partialorder %v8545, 0.0
        %vm8553 = vcmp.ge.f32.partialorder %v8546, 0.0
        %vm8554 = vcmp.ge.f32.partialorder %v8547, 0.0
        %vm8555 = vcmp.ge.f32.partialorder %v8548, 0.0
        %vm8556 = vcmp.ge.f32.partialorder %v8549, 0.0
        %vm8557 = vcmp.ge.f32.partialorder %v8550, 0.0
        %v8558 = vmul.f32 %v8544, 0.01
        %v8559 = vmul.f32 %v8545, 0.01
        %v8560 = vmul.f32 %v8546, 0.01
        %v8561 = vmul.f32 %v8547, 0.01
        %v8562 = vmul.f32 %v8548, 0.01
        %v8563 = vmul.f32 %v8549, 0.01
        %v8564 = vmul.f32 %v8550, 0.01
        %v8565 = vsel %vm8551, %v8544, %v8558
        %v8566 = vsel %vm8552, %v8545, %v8559
        %v8567 = vsel %vm8553, %v8546, %v8560
        %v8568 = vsel %vm8554, %v8547, %v8561
        %v8569 = vsel %vm8555, %v8548, %v8562
        %v8570 = vsel %vm8556, %v8549, %v8563
        %v8571 = vsel %vm8557, %v8550, %v8564
        %v8578 = vcombine.low %v8565, %v8566
        %v8579 = vcombine.low %v8567, %v8568
        %v8580 = vcombine.low %v8569, %v8570
        %8584 = vst [vmem:[%s528] sm:$0xff] %v8578
        %8585 = vst [vmem:[%s528 + $0x8] sm:$0xff] %v8579
        %8586 = vst [vmem:[%s528 + $0x10] sm:$0xff] %v8580
        %vm8587 = vcmask 470016
        %8588 = vst.msk [vmem:[%s528 + $0x18] sm:$0xf] %vm8587, %v8571
        %s8589 = sand.u32 %s322, 1
        %s8590 = scalar_lea.sflag [#allocation4], %s8589
        %s8591 = sand.u32 %s322, 1
        %s8592 = smul.addr %s8591, 32
        %s8593 = scalar_lea.vmem [#allocation5], %s8592
        %s8594 = sand.u32 %s36, 1
        %s8595 = scalar_lea.sflag [#allocation7], %s8594
        %s8596 = sand.u32 %s348, 1
        %s8597 = smul.addr %s8596, 28
        %s8598 = scalar_lea.vmem [#allocation6], %s8597
        %s8599 = sand.u32 %s36, 1
        %s8600 = scalar_lea.sflag [#allocation7], %s8599
        %s8601 = sand.u32 %s374, 1
        %s8602 = smul.addr %s8601, 28
        %s8603 = scalar_lea.vmem [#allocation8], %s8602
        // Predicated region
        $region77: #{tpu_custom_call.1} parent=71 // pred_check
          %p8604 = pneg %p332
        $region78: #{tpu_custom_call.1} parent=71 // pred_check_branch
          %8606 = sbr.rel (%p8604) target = $region80
        $region79: #{tpu_custom_call.1} parent=71 // pred_region
          %s8608 = ssub.s32 512, 512
          %8609 = vsyncadd %s8590, %s8608
          %s8610 = smul.addr %s36, 8
          %s8611 = smul.addr %s8610, 64
          %s8612 = scalar_lea.hbm %s13, %s8611
          %s8614 = sshll.u32 %s8593, 4
          %s8615 = int_to_ptr.vmem [resolvable:$true] %s8614
          %8617 = dma.vmem_to_hbm [thread:$0]  %s8615, 512, %s8612, %s8590
        $region80: #{tpu_custom_call.1} parent=71 // pred_fallthru
          _
        // Predicated region
        $region81: #{tpu_custom_call.1} parent=71 // pred_check
          %p8618 = pneg %p358
        $region82: #{tpu_custom_call.1} parent=71 // pred_check_branch
          %8620 = sbr.rel (%p8618) target = $region84
        $region83: #{tpu_custom_call.1} parent=71 // pred_region
          %s8622 = ssub.s32 448, 448
          %8623 = vsyncadd %s8595, %s8622
          %s8624 = smul.addr %s36, 7
          %s8625 = smul.addr %s8624, 64
          %s8626 = scalar_lea.hbm %s14, %s8625
          %s8628 = sshll.u32 %s8598, 4
          %s8629 = int_to_ptr.vmem [resolvable:$true] %s8628
          %8631 = dma.vmem_to_hbm [thread:$0]  %s8629, 448, %s8626, %s8595
        $region84: #{tpu_custom_call.1} parent=71 // pred_fallthru
          _
        // Predicated region
        $region85: #{tpu_custom_call.1} parent=71 // pred_check
          %p8632 = pneg %p384
        $region86: #{tpu_custom_call.1} parent=71 // pred_check_branch
          %8634 = sbr.rel (%p8632) target = $region88
        $region87: #{tpu_custom_call.1} parent=71 // pred_region
          %s8636 = ssub.s32 448, 448
          %8637 = vsyncadd %s8600, %s8636
          %s8638 = smul.addr %s36, 7
          %s8639 = smul.addr %s8638, 64
          %s8640 = scalar_lea.hbm %s15, %s8639
          %s8642 = sshll.u32 %s8603, 4
          %s8643 = int_to_ptr.vmem [resolvable:$true] %s8642
          %8645 = dma.vmem_to_hbm [thread:$0]  %s8643, 448, %s8640, %s8600
        $region88: #{tpu_custom_call.1} parent=71 // pred_fallthru
          _
      $region72: #{tpu_custom_call.1} parent=5 // pred_fallthru
        _
      %p8646 = scmp.le.s32.totalorder 2, %s31
      // Predicated region
      $region89: #{tpu_custom_call.1} parent=5 // pred_check
        %p8647 = pneg %p8646
      $region90: #{tpu_custom_call.1} parent=5 // pred_check_branch
        %8649 = sbr.rel (%p8647) target = $region92
      $region91: #{tpu_custom_call.1} parent=5 // pred_region
        %s8650 = ssub.s32 %s31, 2
        // Predicated region
        $region93: #{tpu_custom_call.1} parent=91 // pred_check
          %p8651 = pneg %p338
        $region94: #{tpu_custom_call.1} parent=91 // pred_check_branch
          %8653 = sbr.rel (%p8651) target = $region96
        $region95: #{tpu_custom_call.1} parent=91 // pred_region
          %s8654 = sand.u32 %s323, 1
          %s8655 = scalar_lea.sflag [#allocation4], %s8654
          %s8656 = sand.u32 %s323, 1
          %s8657 = smul.addr %s8656, 32
          %s8658 = scalar_lea.vmem [#allocation5], %s8657
          %8659 = dma.done %s8655, 512
        $region96: #{tpu_custom_call.1} parent=91 // pred_fallthru
          _
        // Predicated region
        $region97: #{tpu_custom_call.1} parent=91 // pred_check
          %p8660 = pneg %p364
        $region98: #{tpu_custom_call.1} parent=91 // pred_check_branch
          %8662 = sbr.rel (%p8660) target = $region100
        $region99: #{tpu_custom_call.1} parent=91 // pred_region
          %s8663 = sand.u32 %s37, 1
          %s8664 = scalar_lea.sflag [#allocation7], %s8663
          %s8665 = sand.u32 %s349, 1
          %s8666 = smul.addr %s8665, 28
          %s8667 = scalar_lea.vmem [#allocation6], %s8666
          %8668 = dma.done %s8664, 448
        $region100: #{tpu_custom_call.1} parent=91 // pred_fallthru
          _
        // Predicated region
        $region101: #{tpu_custom_call.1} parent=91 // pred_check
          %p8669 = pneg %p390
        $region102: #{tpu_custom_call.1} parent=91 // pred_check_branch
          %8671 = sbr.rel (%p8669) target = $region104
        $region103: #{tpu_custom_call.1} parent=91 // pred_region
          %s8672 = sand.u32 %s37, 1
          %s8673 = scalar_lea.sflag [#allocation7], %s8672
          %s8674 = sand.u32 %s375, 1
          %s8675 = smul.addr %s8674, 28
          %s8676 = scalar_lea.vmem [#allocation8], %s8675
          %8677 = dma.done %s8673, 448
        $region104: #{tpu_custom_call.1} parent=91 // pred_fallthru
          _
      $region92: #{tpu_custom_call.1} parent=5 // pred_fallthru
        _
    $region6: #{tpu_custom_call.1} parent=1 // loop_footer
      %s35 = sadd.s32 1, %s31
    $region7: #{tpu_custom_call.1} parent=1 // loop_footer_branch
      %30 = sbr.rel target = $region3
    $region8: #{tpu_custom_call.1} parent=1 // loop_exit
      _
    %8678 = vsyncpa [#allocation3], 1
    %s8679 = scalar_lea.sflag [#allocation3], 1
    %8680 = vsyncpa %s8679, 1
    %8681 = vsyncpa [#allocation4], 1
    %s8682 = scalar_lea.sflag [#allocation4], 1
    %8683 = vsyncpa %s8682, 1
    %8684 = vsyncpa [#allocation7], 1
    %s8685 = scalar_lea.sflag [#allocation7], 1
    %8686 = vsyncpa %s8685, 1

</llo_original>
